<compile_context>
chip_gen: v7x
topology: tpu7x:2x2x1
jax: 0.10.0
libtpu: 0.0.40
codegen_flags: <defaults>
</compile_context>

<pallas_src>
import functools

import jax
import jax.numpy as jnp
from jax import lax
from jax.experimental import pallas as pl
from jax.experimental.pallas import tpu as pltpu


def _resblock_kernel(xs_ref, xres_ref, mask_ref,
                     w1_ref, b1_ref, w2_ref, b2_ref,
                     fc1wt_ref, fc1b_ref, fc2w_ref, fc2b_ref,
                     out_ref,
                     col_ref, h1s_ref, h2_ref,
                     *, ksize, wp, hw, res_scale):
    # xs_ref   : (1, Hp*Wp + 2*pad, C) bf16  padded input, flattened + shifted
    # xres_ref : (1, M, C) f32              residual input in fat layout
    # mask_ref : (M, 1) f32                 1.0 at valid width positions
    # w1/w2    : (k*k*C, C) bf16            im2col-reshaped conv weights
    # b1/b2    : (1, C) f32
    # fc1wt    : (Cr, C) f32 ; fc1b: (Cr, 1) f32 ; fc2w: (Cr, C) f32 ; fc2b: (1, C) f32
    # out_ref  : (1, M, C) f32              fat output (halo stripped outside)
    # col_ref  : (M, k*k*C) bf16            im2col scratch (reused by both convs)
    # h1s_ref  : (Hp*Wp + 2*pad, C) bf16    flattened zero-padded h1
    # h2_ref   : (M, C) f32                 conv2 output
    M = out_ref.shape[1]
    C = out_ref.shape[2]
    pad = ksize // 2
    head = pad * wp + pad                     # rows before the h1 interior
    tail = h1s_ref.shape[0] - head - M        # rows after the h1 interior
    dims2d = (((1,), (0,)), ((), ()))

    def im2col(src_read):
        # Pack the k*k shifted row-slices side-by-side along lanes.
        for dy in range(ksize):
            for dx in range(ksize):
                t = dy * ksize + dx
                off = dy * wp + dx
                col_ref[:, t * C:(t + 1) * C] = src_read(off)

    # Zero only the small halo of the padded-h1 scratch (the interior rows are
    # fully overwritten below).  Done every step: cheap, and keeps per-core
    # scratch correct under "parallel" partitioning of the batch axis.
    h1s_ref[0:head, :] = jnp.zeros((head, C), h1s_ref.dtype)
    h1s_ref[head + M:head + M + tail, :] = jnp.zeros((tail, C), h1s_ref.dtype)

    # ---- conv1: im2col + one (M, 9C) x (9C, C) matmul on the MXU ----
    im2col(lambda off: xs_ref[0, off:off + M, :])
    h1 = lax.dot_general(col_ref[...], w1_ref[...], dims2d,
                         preferred_element_type=jnp.float32)       # (M, C) f32
    h1 = jnp.maximum(h1 + b1_ref[...], 0.0) * mask_ref[...]        # ReLU + zero halo cols
    h1s_ref[head:head + M, :] = h1.astype(h1s_ref.dtype)

    # ---- conv2: same im2col trick on the zero-padded h1 ----
    im2col(lambda off: h1s_ref[off:off + M, :])
    h2_ref[...] = lax.dot_general(col_ref[...], w2_ref[...], dims2d,
                                  preferred_element_type=jnp.float32) + b2_ref[...]

    # ---- channel attention: GAP -> Linear -> ReLU -> Linear -> sigmoid ----
    # Tiny (C x C/r): keep it on VPU/XLU (broadcast-mul + reductions).
    gap = jnp.sum(h2_ref[...] * mask_ref[...], axis=0, keepdims=True) \
        * (1.0 / float(hw))                                          # (1, C)
    f = jnp.maximum(jnp.sum(gap * fc1wt_ref[...], axis=1, keepdims=True)
                    + fc1b_ref[...], 0.0)                            # (Cr, 1)
    att = jax.nn.sigmoid(jnp.sum(f * fc2w_ref[...], axis=0, keepdims=True)
                         + fc2b_ref[...])                            # (1, C)

    # ---- residual: out = x + res_scale * (h2 * att) ----
    out_ref[0] = (xres_ref[0] + res_scale * (h2_ref[...] * att)).astype(out_ref.dtype)


def resblock_pallas(x_nhwc, params, *, ksize=3, res_scale=1.0):
    """x_nhwc: (B, H, W, C) float32."""
    B, H, W, C = x_nhwc.shape
    pad = ksize // 2
    Hp, Wp = H + 2 * pad, W + 2 * pad
    M = H * Wp                              # "fat" row count (width keeps its halo)
    KKC = ksize * ksize * C
    Cr = params["fc1w"].shape[1]

    # Padded input, flattened over (Hp, Wp) and shifted by `pad` rows so every
    # conv tap becomes a contiguous static row-offset slice inside the kernel.
    x_pad = jnp.pad(x_nhwc, ((0, 0), (pad, pad), (pad, pad), (0, 0)))
    xs = jnp.pad(x_pad.reshape(B, Hp * Wp, C),
                 ((0, 0), (pad, pad), (0, 0))).astype(jnp.bfloat16)
    # Residual input in the fat layout (junk in the width-halo columns is
    # discarded by the final slice below).
    x_fat = x_pad[:, pad:pad + H, :, :].reshape(B, M, C)
    # Valid-width-column mask for the fat layout.
    col_idx = jnp.arange(M, dtype=jnp.int32) % Wp
    mask = ((col_idx >= pad) & (col_idx < pad + W)).astype(jnp.float32)[:, None]

    # Weights: im2col layout (k*k*C, C), bf16 for the MXU.
    w1 = params["w1"].reshape(KKC, C).astype(jnp.bfloat16)
    w2 = params["w2"].reshape(KKC, C).astype(jnp.bfloat16)
    b1 = params["b1"].reshape(1, C)
    b2 = params["b2"].reshape(1, C)
    fc1wt = params["fc1w"].T                      # (Cr, C)
    fc1b = params["fc1b"].reshape(Cr, 1)
    fc2w = params["fc2w"]                         # (Cr, C)
    fc2b = params["fc2b"].reshape(1, C)

    kernel = functools.partial(_resblock_kernel, ksize=ksize, wp=Wp,
                               hw=H * W, res_scale=res_scale)

    grid_spec = pltpu.PrefetchScalarGridSpec(
        num_scalar_prefetch=0,
        grid=(B,),
        in_specs=[
            pl.BlockSpec((1, Hp * Wp + 2 * pad, C), lambda b: (b, 0, 0)),  # xs
            pl.BlockSpec((1, M, C), lambda b: (b, 0, 0)),                  # x_fat
            pl.BlockSpec((M, 1), lambda b: (0, 0)),                        # mask
            pl.BlockSpec((KKC, C), lambda b: (0, 0)),                      # w1
            pl.BlockSpec((1, C), lambda b: (0, 0)),                        # b1
            pl.BlockSpec((KKC, C), lambda b: (0, 0)),                      # w2
            pl.BlockSpec((1, C), lambda b: (0, 0)),                        # b2
            pl.BlockSpec((Cr, C), lambda b: (0, 0)),                       # fc1w^T
            pl.BlockSpec((Cr, 1), lambda b: (0, 0)),                       # fc1b
            pl.BlockSpec((Cr, C), lambda b: (0, 0)),                       # fc2w
            pl.BlockSpec((1, C), lambda b: (0, 0)),                        # fc2b
        ],
        out_specs=pl.BlockSpec((1, M, C), lambda b: (b, 0, 0)),
        scratch_shapes=[
            pltpu.VMEM((M, KKC), jnp.bfloat16),                 # im2col buffer
            pltpu.VMEM((Hp * Wp + 2 * pad, C), jnp.bfloat16),   # padded h1 (flat)
            pltpu.VMEM((M, C), jnp.float32),                    # h2
        ],
    )

    out_fat = pl.pallas_call(
        kernel,
        out_shape=jax.ShapeDtypeStruct((B, M, C), jnp.float32),
        grid_spec=grid_spec,
        compiler_params=pltpu.CompilerParams(
            dimension_semantics=("parallel",)),
    )(xs, x_fat, mask, w1, b1, w2, b2, fc1wt, fc1b, fc2w, fc2b)

    # Strip the width halo outside the kernel (cheap XLA slice).
    return out_fat.reshape(B, H, Wp, C)[:, :, pad:pad + W, :]


def resblock_reference(x_nhwc, params, *, ksize=3, res_scale=1.0):
    """Pure-JAX reference (NHWC / HWIO), with the same bf16 conv-operand
    quantization as the kernel (f32 accumulation)."""
    dn = lax.conv_dimension_numbers(x_nhwc.shape, params["w1"].shape,
                                    ("NHWC", "HWIO", "NHWC"))
    w1 = params["w1"].astype(jnp.bfloat16)
    w2 = params["w2"].astype(jnp.bfloat16)
    h1 = lax.conv_general_dilated(x_nhwc.astype(jnp.bfloat16), w1, (1, 1),
                                  "SAME", dimension_numbers=dn,
                                  preferred_element_type=jnp.float32)
    h1 = jnp.maximum(h1 + params["b1"].reshape(1, 1, 1, -1), 0.0)
    h2 = lax.conv_general_dilated(h1.astype(jnp.bfloat16), w2, (1, 1),
                                  "SAME", dimension_numbers=dn,
                                  preferred_element_type=jnp.float32)
    h2 = h2 + params["b2"].reshape(1, 1, 1, -1)
    gap = jnp.mean(h2, axis=(1, 2))                                   # (B, C)
    f = jnp.maximum(gap @ params["fc1w"] + params["fc1b"].reshape(1, -1), 0.0)
    att = jax.nn.sigmoid(f @ params["fc2w"] + params["fc2b"].reshape(1, -1))
    return x_nhwc + res_scale * (h2 * att[:, None, None, :])


def init_params(key, num_chans, ksize=3, reduction=16):
    c, k = num_chans, ksize
    cr = max(num_chans // reduction, 1)
    keys = jax.random.split(key, 8)
    scale_conv = 0.1
    scale_fc = 0.1
    return {
        "w1": scale_conv * jax.random.normal(keys[0], (k, k, c, c), jnp.float32),
        "b1": scale_conv * jax.random.normal(keys[1], (1, c), jnp.float32),
        "w2": scale_conv * jax.random.normal(keys[2], (k, k, c, c), jnp.float32),
        "b2": scale_conv * jax.random.normal(keys[3], (1, c), jnp.float32),
        "fc1w": scale_fc * jax.random.normal(keys[4], (c, cr), jnp.float32),
        "fc1b": scale_fc * jax.random.normal(keys[5], (1, cr), jnp.float32),
        "fc2w": scale_fc * jax.random.normal(keys[6], (cr, c), jnp.float32),
        "fc2b": scale_fc * jax.random.normal(keys[7], (1, c), jnp.float32),
    }


if __name__ == "__main__":
    B, H, W, C = 2, 16, 16, 32        # C=32 so C // reduction(16) = 2
    KSIZE = 3
    RES_SCALE = 0.5

    key = jax.random.PRNGKey(0)
    kx, kp = jax.random.split(key)
    x = jax.random.normal(kx, (B, H, W, C), jnp.float32)   # layout: NHWC
    params = init_params(kp, C, ksize=KSIZE, reduction=16)

    out = resblock_pallas(x, params, ksize=KSIZE, res_scale=RES_SCALE)
    out = jax.block_until_ready(out)

    ref = resblock_reference(x, params, ksize=KSIZE, res_scale=RES_SCALE)
    assert out.shape == (B, H, W, C)
    max_err = jnp.max(jnp.abs(out - ref))
    assert jnp.allclose(out, ref, rtol=2e-2, atol=2e-2), (
        f"max abs err {max_err}")

    print("KERNEL_OK")
</pallas_src>

<mosaic_0001>
module attributes {stable_mosaic.version = 11 : i64} {
  func.func @_resblock_kernel(%arg0: i32, %arg1: memref<1x326x32xbf16, #tpu.memory_space<vmem>>, %arg2: memref<1x288x32xf32, #tpu.memory_space<vmem>>, %arg3: memref<288x1xf32, #tpu.memory_space<vmem>>, %arg4: memref<288x32xbf16, #tpu.memory_space<vmem>>, %arg5: memref<1x32xf32, #tpu.memory_space<vmem>>, %arg6: memref<288x32xbf16, #tpu.memory_space<vmem>>, %arg7: memref<1x32xf32, #tpu.memory_space<vmem>>, %arg8: memref<2x32xf32, #tpu.memory_space<vmem>>, %arg9: memref<2x1xf32, #tpu.memory_space<vmem>>, %arg10: memref<2x32xf32, #tpu.memory_space<vmem>>, %arg11: memref<1x32xf32, #tpu.memory_space<vmem>>, %arg12: memref<1x288x32xf32, #tpu.memory_space<vmem>>, %arg13: memref<288x288xbf16, #tpu.memory_space<vmem>>, %arg14: memref<326x32xbf16, #tpu.memory_space<vmem>>, %arg15: memref<288x32xf32, #tpu.memory_space<vmem>>) attributes {dimension_semantics = [#tpu.dimension_semantics<parallel>], iteration_bounds = array<i64: 2>, scalar_prefetch = 0 : i64, scratch_operands = 3 : i64, tpu.core_type = #tpu.core_type<tc>, window_params = [{transform_indices = @transform_0, window_bounds = array<i64: 1, 326, 32>}, {transform_indices = @transform_1, window_bounds = array<i64: 1, 288, 32>}, {pipeline_mode = #tpu.pipeline_mode<synchronous>, transform_indices = @transform_2, window_bounds = array<i64: 288, 1>}, {pipeline_mode = #tpu.pipeline_mode<synchronous>, transform_indices = @transform_3, window_bounds = array<i64: 288, 32>}, {pipeline_mode = #tpu.pipeline_mode<synchronous>, transform_indices = @transform_4, window_bounds = array<i64: 1, 32>}, {pipeline_mode = #tpu.pipeline_mode<synchronous>, transform_indices = @transform_5, window_bounds = array<i64: 288, 32>}, {pipeline_mode = #tpu.pipeline_mode<synchronous>, transform_indices = @transform_6, window_bounds = array<i64: 1, 32>}, {pipeline_mode = #tpu.pipeline_mode<synchronous>, transform_indices = @transform_7, window_bounds = array<i64: 2, 32>}, {pipeline_mode = #tpu.pipeline_mode<synchronous>, transform_indices = @transform_8, window_bounds = array<i64: 2, 1>}, {pipeline_mode = #tpu.pipeline_mode<synchronous>, transform_indices = @transform_9, window_bounds = array<i64: 2, 32>}, {pipeline_mode = #tpu.pipeline_mode<synchronous>, transform_indices = @transform_10, window_bounds = array<i64: 1, 32>}, {transform_indices = @transform_11, window_bounds = array<i64: 1, 288, 32>}]} {
    %cst = arith.constant 0.000000e+00 : bf16
    %0 = vector.broadcast %cst : bf16 to vector<19x32xbf16>
    %c0 = arith.constant 0 : index
    %c0_0 = arith.constant 0 : index
    %1 = vector.load %arg14[%c0, %c0_0] : memref<326x32xbf16, #tpu.memory_space<vmem>>, vector<19x32xbf16>
    tpu.vector_store %arg14[%c0, %c0_0], %0 {strides = array<i32>} : memref<326x32xbf16, #tpu.memory_space<vmem>>, vector<19x32xbf16>,
    %cst_1 = arith.constant 0.000000e+00 : bf16
    %2 = vector.broadcast %cst_1 : bf16 to vector<19x32xbf16>
    %c307 = arith.constant 307 : index
    %c0_2 = arith.constant 0 : index
    %3 = vector.load %arg14[%c307, %c0_2] : memref<326x32xbf16, #tpu.memory_space<vmem>>, vector<19x32xbf16>
    tpu.vector_store %arg14[%c307, %c0_2], %2 {strides = array<i32>} : memref<326x32xbf16, #tpu.memory_space<vmem>>, vector<19x32xbf16>,
    %c0_3 = arith.constant 0 : index
    %c0_4 = arith.constant 0 : index
    %c0_5 = arith.constant 0 : index
    %4 = vector.load %arg1[%c0_3, %c0_4, %c0_5] : memref<1x326x32xbf16, #tpu.memory_space<vmem>>, vector<1x288x32xbf16>
    %5 = vector.shape_cast %4 : vector<1x288x32xbf16> to vector<288x32xbf16>
    %c0_6 = arith.constant 0 : index
    %c0_7 = arith.constant 0 : index
    %6 = vector.load %arg13[%c0_6, %c0_7] : memref<288x288xbf16, #tpu.memory_space<vmem>>, vector<288x32xbf16>
    tpu.vector_store %arg13[%c0_6, %c0_7], %5 {strides = array<i32>} : memref<288x288xbf16, #tpu.memory_space<vmem>>, vector<288x32xbf16>,
    %c0_8 = arith.constant 0 : index
    %c1 = arith.constant 1 : index
    %c0_9 = arith.constant 0 : index
    %7 = vector.load %arg1[%c0_8, %c1, %c0_9] : memref<1x326x32xbf16, #tpu.memory_space<vmem>>, vector<1x288x32xbf16>
    %8 = vector.shape_cast %7 : vector<1x288x32xbf16> to vector<288x32xbf16>
    %c0_10 = arith.constant 0 : index
    %c32 = arith.constant 32 : index
    %9 = vector.load %arg13[%c0_10, %c32] : memref<288x288xbf16, #tpu.memory_space<vmem>>, vector<288x32xbf16>
    tpu.vector_store %arg13[%c0_10, %c32], %8 {strides = array<i32>} : memref<288x288xbf16, #tpu.memory_space<vmem>>, vector<288x32xbf16>,
    %c0_11 = arith.constant 0 : index
    %c2 = arith.constant 2 : index
    %c0_12 = arith.constant 0 : index
    %10 = vector.load %arg1[%c0_11, %c2, %c0_12] : memref<1x326x32xbf16, #tpu.memory_space<vmem>>, vector<1x288x32xbf16>
    %11 = vector.shape_cast %10 : vector<1x288x32xbf16> to vector<288x32xbf16>
    %c0_13 = arith.constant 0 : index
    %c64 = arith.constant 64 : index
    %12 = vector.load %arg13[%c0_13, %c64] : memref<288x288xbf16, #tpu.memory_space<vmem>>, vector<288x32xbf16>
    tpu.vector_store %arg13[%c0_13, %c64], %11 {strides = array<i32>} : memref<288x288xbf16, #tpu.memory_space<vmem>>, vector<288x32xbf16>,
    %c0_14 = arith.constant 0 : index
    %c18 = arith.constant 18 : index
    %c0_15 = arith.constant 0 : index
    %13 = vector.load %arg1[%c0_14, %c18, %c0_15] : memref<1x326x32xbf16, #tpu.memory_space<vmem>>, vector<1x288x32xbf16>
    %14 = vector.shape_cast %13 : vector<1x288x32xbf16> to vector<288x32xbf16>
    %c0_16 = arith.constant 0 : index
    %c96 = arith.constant 96 : index
    %15 = vector.load %arg13[%c0_16, %c96] : memref<288x288xbf16, #tpu.memory_space<vmem>>, vector<288x32xbf16>
    tpu.vector_store %arg13[%c0_16, %c96], %14 {strides = array<i32>} : memref<288x288xbf16, #tpu.memory_space<vmem>>, vector<288x32xbf16>,
    %c0_17 = arith.constant 0 : index
    %c19 = arith.constant 19 : index
    %c0_18 = arith.constant 0 : index
    %16 = vector.load %arg1[%c0_17, %c19, %c0_18] : memref<1x326x32xbf16, #tpu.memory_space<vmem>>, vector<1x288x32xbf16>
    %17 = vector.shape_cast %16 : vector<1x288x32xbf16> to vector<288x32xbf16>
    %c0_19 = arith.constant 0 : index
    %c128 = arith.constant 128 : index
    %18 = vector.load %arg13[%c0_19, %c128] : memref<288x288xbf16, #tpu.memory_space<vmem>>, vector<288x32xbf16>
    tpu.vector_store %arg13[%c0_19, %c128], %17 {strides = array<i32>} : memref<288x288xbf16, #tpu.memory_space<vmem>>, vector<288x32xbf16>,
    %c0_20 = arith.constant 0 : index
    %c20 = arith.constant 20 : index
    %c0_21 = arith.constant 0 : index
    %19 = vector.load %arg1[%c0_20, %c20, %c0_21] : memref<1x326x32xbf16, #tpu.memory_space<vmem>>, vector<1x288x32xbf16>
    %20 = vector.shape_cast %19 : vector<1x288x32xbf16> to vector<288x32xbf16>
    %c0_22 = arith.constant 0 : index
    %c160 = arith.constant 160 : index
    %21 = vector.load %arg13[%c0_22, %c160] : memref<288x288xbf16, #tpu.memory_space<vmem>>, vector<288x32xbf16>
    tpu.vector_store %arg13[%c0_22, %c160], %20 {strides = array<i32>} : memref<288x288xbf16, #tpu.memory_space<vmem>>, vector<288x32xbf16>,
    %c0_23 = arith.constant 0 : index
    %c36 = arith.constant 36 : index
    %c0_24 = arith.constant 0 : index
    %22 = vector.load %arg1[%c0_23, %c36, %c0_24] : memref<1x326x32xbf16, #tpu.memory_space<vmem>>, vector<1x288x32xbf16>
    %23 = vector.shape_cast %22 : vector<1x288x32xbf16> to vector<288x32xbf16>
    %c0_25 = arith.constant 0 : index
    %c192 = arith.constant 192 : index
    %24 = vector.load %arg13[%c0_25, %c192] : memref<288x288xbf16, #tpu.memory_space<vmem>>, vector<288x32xbf16>
    tpu.vector_store %arg13[%c0_25, %c192], %23 {strides = array<i32>} : memref<288x288xbf16, #tpu.memory_space<vmem>>, vector<288x32xbf16>,
    %c0_26 = arith.constant 0 : index
    %c37 = arith.constant 37 : index
    %c0_27 = arith.constant 0 : index
    %25 = vector.load %arg1[%c0_26, %c37, %c0_27] : memref<1x326x32xbf16, #tpu.memory_space<vmem>>, vector<1x288x32xbf16>
    %26 = vector.shape_cast %25 : vector<1x288x32xbf16> to vector<288x32xbf16>
    %c0_28 = arith.constant 0 : index
    %c224 = arith.constant 224 : index
    %27 = vector.load %arg13[%c0_28, %c224] : memref<288x288xbf16, #tpu.memory_space<vmem>>, vector<288x32xbf16>
    tpu.vector_store %arg13[%c0_28, %c224], %26 {strides = array<i32>} : memref<288x288xbf16, #tpu.memory_space<vmem>>, vector<288x32xbf16>,
    %c0_29 = arith.constant 0 : index
    %c38 = arith.constant 38 : index
    %c0_30 = arith.constant 0 : index
    %28 = vector.load %arg1[%c0_29, %c38, %c0_30] : memref<1x326x32xbf16, #tpu.memory_space<vmem>>, vector<1x288x32xbf16>
    %29 = vector.shape_cast %28 : vector<1x288x32xbf16> to vector<288x32xbf16>
    %c0_31 = arith.constant 0 : index
    %c256 = arith.constant 256 : index
    %30 = vector.load %arg13[%c0_31, %c256] : memref<288x288xbf16, #tpu.memory_space<vmem>>, vector<288x32xbf16>
    tpu.vector_store %arg13[%c0_31, %c256], %29 {strides = array<i32>} : memref<288x288xbf16, #tpu.memory_space<vmem>>, vector<288x32xbf16>,
    %c0_32 = arith.constant 0 : index
    %c0_33 = arith.constant 0 : index
    %31 = vector.load %arg13[%c0_32, %c0_33] : memref<288x288xbf16, #tpu.memory_space<vmem>>, vector<288x288xbf16>
    %c0_34 = arith.constant 0 : index
    %c0_35 = arith.constant 0 : index
    %32 = vector.load %arg4[%c0_34, %c0_35] : memref<288x32xbf16, #tpu.memory_space<vmem>>, vector<288x32xbf16>
    %cst_36 = arith.constant dense<0.000000e+00> : vector<288x32xf32>
    %33 = tpu.matmul %31, %32, %cst_36 {dimension_numbers = #tpu.dot_dimension_numbers<[1], [0], [0], [1], [0, 0, 1, 1], [], []>} : vector<288x288xbf16>, vector<288x32xbf16>, vector<288x32xf32> -> vector<288x32xf32>
    %c0_37 = arith.constant 0 : index
    %c0_38 = arith.constant 0 : index
    %34 = vector.load %arg5[%c0_37, %c0_38] : memref<1x32xf32, #tpu.memory_space<vmem>>, vector<1x32xf32>
    %35 = vector.broadcast %34 : vector<1x32xf32> to vector<288x32xf32>
    %36 = arith.addf %33, %35 : vector<288x32xf32>
    %cst_39 = arith.constant 0.000000e+00 : f32
    %37 = vector.broadcast %cst_39 : f32 to vector<288x32xf32>
    %38 = arith.maximumf %36, %37 : vector<288x32xf32>
    %c0_40 = arith.constant 0 : index
    %c0_41 = arith.constant 0 : index
    %39 = vector.load %arg3[%c0_40, %c0_41] : memref<288x1xf32, #tpu.memory_space<vmem>>, vector<288x1xf32>
    %40 = vector.broadcast %39 : vector<288x1xf32> to vector<288x32xf32>
    %41 = arith.mulf %38, %40 : vector<288x32xf32>
    %42 = arith.truncf %41 : vector<288x32xf32> to vector<288x32xbf16>
    %c19_42 = arith.constant 19 : index
    %c0_43 = arith.constant 0 : index
    %43 = vector.load %arg14[%c19_42, %c0_43] : memref<326x32xbf16, #tpu.memory_space<vmem>>, vector<288x32xbf16>
    tpu.vector_store %arg14[%c19_42, %c0_43], %42 {strides = array<i32>} : memref<326x32xbf16, #tpu.memory_space<vmem>>, vector<288x32xbf16>,
    %c0_44 = arith.constant 0 : index
    %c0_45 = arith.constant 0 : index
    %44 = vector.load %arg14[%c0_44, %c0_45] : memref<326x32xbf16, #tpu.memory_space<vmem>>, vector<288x32xbf16>
    %c0_46 = arith.constant 0 : index
    %c0_47 = arith.constant 0 : index
    %45 = vector.load %arg13[%c0_46, %c0_47] : memref<288x288xbf16, #tpu.memory_space<vmem>>, vector<288x32xbf16>
    tpu.vector_store %arg13[%c0_46, %c0_47], %44 {strides = array<i32>} : memref<288x288xbf16, #tpu.memory_space<vmem>>, vector<288x32xbf16>,
    %c1_48 = arith.constant 1 : index
    %c0_49 = arith.constant 0 : index
    %46 = vector.load %arg14[%c1_48, %c0_49] : memref<326x32xbf16, #tpu.memory_space<vmem>>, vector<288x32xbf16>
    %c0_50 = arith.constant 0 : index
    %c32_51 = arith.constant 32 : index
    %47 = vector.load %arg13[%c0_50, %c32_51] : memref<288x288xbf16, #tpu.memory_space<vmem>>, vector<288x32xbf16>
    tpu.vector_store %arg13[%c0_50, %c32_51], %46 {strides = array<i32>} : memref<288x288xbf16, #tpu.memory_space<vmem>>, vector<288x32xbf16>,
    %c2_52 = arith.constant 2 : index
    %c0_53 = arith.constant 0 : index
    %48 = vector.load %arg14[%c2_52, %c0_53] : memref<326x32xbf16, #tpu.memory_space<vmem>>, vector<288x32xbf16>
    %c0_54 = arith.constant 0 : index
    %c64_55 = arith.constant 64 : index
    %49 = vector.load %arg13[%c0_54, %c64_55] : memref<288x288xbf16, #tpu.memory_space<vmem>>, vector<288x32xbf16>
    tpu.vector_store %arg13[%c0_54, %c64_55], %48 {strides = array<i32>} : memref<288x288xbf16, #tpu.memory_space<vmem>>, vector<288x32xbf16>,
    %c18_56 = arith.constant 18 : index
    %c0_57 = arith.constant 0 : index
    %50 = vector.load %arg14[%c18_56, %c0_57] : memref<326x32xbf16, #tpu.memory_space<vmem>>, vector<288x32xbf16>
    %c0_58 = arith.constant 0 : index
    %c96_59 = arith.constant 96 : index
    %51 = vector.load %arg13[%c0_58, %c96_59] : memref<288x288xbf16, #tpu.memory_space<vmem>>, vector<288x32xbf16>
    tpu.vector_store %arg13[%c0_58, %c96_59], %50 {strides = array<i32>} : memref<288x288xbf16, #tpu.memory_space<vmem>>, vector<288x32xbf16>,
    %c19_60 = arith.constant 19 : index
    %c0_61 = arith.constant 0 : index
    %52 = vector.load %arg14[%c19_60, %c0_61] : memref<326x32xbf16, #tpu.memory_space<vmem>>, vector<288x32xbf16>
    %c0_62 = arith.constant 0 : index
    %c128_63 = arith.constant 128 : index
    %53 = vector.load %arg13[%c0_62, %c128_63] : memref<288x288xbf16, #tpu.memory_space<vmem>>, vector<288x32xbf16>
    tpu.vector_store %arg13[%c0_62, %c128_63], %52 {strides = array<i32>} : memref<288x288xbf16, #tpu.memory_space<vmem>>, vector<288x32xbf16>,
    %c20_64 = arith.constant 20 : index
    %c0_65 = arith.constant 0 : index
    %54 = vector.load %arg14[%c20_64, %c0_65] : memref<326x32xbf16, #tpu.memory_space<vmem>>, vector<288x32xbf16>
    %c0_66 = arith.constant 0 : index
    %c160_67 = arith.constant 160 : index
    %55 = vector.load %arg13[%c0_66, %c160_67] : memref<288x288xbf16, #tpu.memory_space<vmem>>, vector<288x32xbf16>
    tpu.vector_store %arg13[%c0_66, %c160_67], %54 {strides = array<i32>} : memref<288x288xbf16, #tpu.memory_space<vmem>>, vector<288x32xbf16>,
    %c36_68 = arith.constant 36 : index
    %c0_69 = arith.constant 0 : index
    %56 = vector.load %arg14[%c36_68, %c0_69] : memref<326x32xbf16, #tpu.memory_space<vmem>>, vector<288x32xbf16>
    %c0_70 = arith.constant 0 : index
    %c192_71 = arith.constant 192 : index
    %57 = vector.load %arg13[%c0_70, %c192_71] : memref<288x288xbf16, #tpu.memory_space<vmem>>, vector<288x32xbf16>
    tpu.vector_store %arg13[%c0_70, %c192_71], %56 {strides = array<i32>} : memref<288x288xbf16, #tpu.memory_space<vmem>>, vector<288x32xbf16>,
    %c37_72 = arith.constant 37 : index
    %c0_73 = arith.constant 0 : index
    %58 = vector.load %arg14[%c37_72, %c0_73] : memref<326x32xbf16, #tpu.memory_space<vmem>>, vector<288x32xbf16>
    %c0_74 = arith.constant 0 : index
    %c224_75 = arith.constant 224 : index
    %59 = vector.load %arg13[%c0_74, %c224_75] : memref<288x288xbf16, #tpu.memory_space<vmem>>, vector<288x32xbf16>
    tpu.vector_store %arg13[%c0_74, %c224_75], %58 {strides = array<i32>} : memref<288x288xbf16, #tpu.memory_space<vmem>>, vector<288x32xbf16>,
    %c38_76 = arith.constant 38 : index
    %c0_77 = arith.constant 0 : index
    %60 = vector.load %arg14[%c38_76, %c0_77] : memref<326x32xbf16, #tpu.memory_space<vmem>>, vector<288x32xbf16>
    %c0_78 = arith.constant 0 : index
    %c256_79 = arith.constant 256 : index
    %61 = vector.load %arg13[%c0_78, %c256_79] : memref<288x288xbf16, #tpu.memory_space<vmem>>, vector<288x32xbf16>
    tpu.vector_store %arg13[%c0_78, %c256_79], %60 {strides = array<i32>} : memref<288x288xbf16, #tpu.memory_space<vmem>>, vector<288x32xbf16>,
    %c0_80 = arith.constant 0 : index
    %c0_81 = arith.constant 0 : index
    %62 = vector.load %arg13[%c0_80, %c0_81] : memref<288x288xbf16, #tpu.memory_space<vmem>>, vector<288x288xbf16>
    %c0_82 = arith.constant 0 : index
    %c0_83 = arith.constant 0 : index
    %63 = vector.load %arg6[%c0_82, %c0_83] : memref<288x32xbf16, #tpu.memory_space<vmem>>, vector<288x32xbf16>
    %cst_84 = arith.constant dense<0.000000e+00> : vector<288x32xf32>
    %64 = tpu.matmul %62, %63, %cst_84 {dimension_numbers = #tpu.dot_dimension_numbers<[1], [0], [0], [1], [0, 0, 1, 1], [], []>} : vector<288x288xbf16>, vector<288x32xbf16>, vector<288x32xf32> -> vector<288x32xf32>
    %c0_85 = arith.constant 0 : index
    %c0_86 = arith.constant 0 : index
    %65 = vector.load %arg7[%c0_85, %c0_86] : memref<1x32xf32, #tpu.memory_space<vmem>>, vector<1x32xf32>
    %66 = vector.broadcast %65 : vector<1x32xf32> to vector<288x32xf32>
    %67 = arith.addf %64, %66 : vector<288x32xf32>
    %c0_87 = arith.constant 0 : index
    %c0_88 = arith.constant 0 : index
    %68 = vector.load %arg15[%c0_87, %c0_88] : memref<288x32xf32, #tpu.memory_space<vmem>>, vector<288x32xf32>
    tpu.vector_store %arg15[%c0_87, %c0_88], %67 {strides = array<i32>} : memref<288x32xf32, #tpu.memory_space<vmem>>, vector<288x32xf32>,
    %c0_89 = arith.constant 0 : index
    %c0_90 = arith.constant 0 : index
    %69 = vector.load %arg15[%c0_89, %c0_90] : memref<288x32xf32, #tpu.memory_space<vmem>>, vector<288x32xf32>
    %c0_91 = arith.constant 0 : index
    %c0_92 = arith.constant 0 : index
    %70 = vector.load %arg3[%c0_91, %c0_92] : memref<288x1xf32, #tpu.memory_space<vmem>>, vector<288x1xf32>
    %71 = vector.broadcast %70 : vector<288x1xf32> to vector<288x32xf32>
    %72 = arith.mulf %69, %71 : vector<288x32xf32>
    %cst_93 = arith.constant dense<0.000000e+00> : vector<32xf32>
    %73 = vector.multi_reduction <add>, %72, %cst_93 [0] : vector<288x32xf32> to vector<32xf32>
    %74 = vector.shape_cast %73 : vector<32xf32> to vector<1x32xf32>
    %cst_94 = arith.constant 3.906250e-03 : f32
    %75 = vector.broadcast %cst_94 : f32 to vector<1x32xf32>
    %76 = arith.mulf %74, %75 : vector<1x32xf32>
    %c0_95 = arith.constant 0 : index
    %c0_96 = arith.constant 0 : index
    %77 = vector.load %arg8[%c0_95, %c0_96] : memref<2x32xf32, #tpu.memory_space<vmem>>, vector<2x32xf32>
    %78 = vector.broadcast %76 : vector<1x32xf32> to vector<2x32xf32>
    %79 = arith.mulf %78, %77 : vector<2x32xf32>
    %cst_97 = arith.constant dense<0.000000e+00> : vector<2xf32>
    %80 = vector.multi_reduction <add>, %79, %cst_97 [1] : vector<2x32xf32> to vector<2xf32>
    %81 = vector.shape_cast %80 : vector<2xf32> to vector<2x1xf32>
    %c0_98 = arith.constant 0 : index
    %c0_99 = arith.constant 0 : index
    %82 = vector.load %arg9[%c0_98, %c0_99] : memref<2x1xf32, #tpu.memory_space<vmem>>, vector<2x1xf32>
    %83 = arith.addf %81, %82 : vector<2x1xf32>
    %cst_100 = arith.constant 0.000000e+00 : f32
    %84 = vector.broadcast %cst_100 : f32 to vector<2x1xf32>
    %85 = arith.maximumf %83, %84 : vector<2x1xf32>
    %c0_101 = arith.constant 0 : index
    %c0_102 = arith.constant 0 : index
    %86 = vector.load %arg10[%c0_101, %c0_102] : memref<2x32xf32, #tpu.memory_space<vmem>>, vector<2x32xf32>
    %87 = vector.broadcast %85 : vector<2x1xf32> to vector<2x32xf32>
    %88 = arith.mulf %87, %86 : vector<2x32xf32>
    %cst_103 = arith.constant dense<0.000000e+00> : vector<32xf32>
    %89 = vector.multi_reduction <add>, %88, %cst_103 [0] : vector<2x32xf32> to vector<32xf32>
    %90 = vector.shape_cast %89 : vector<32xf32> to vector<1x32xf32>
    %c0_104 = arith.constant 0 : index
    %c0_105 = arith.constant 0 : index
    %91 = vector.load %arg11[%c0_104, %c0_105] : memref<1x32xf32, #tpu.memory_space<vmem>>, vector<1x32xf32>
    %92 = arith.addf %90, %91 : vector<1x32xf32>
    %93 = arith.negf %92 : vector<1x32xf32>
    %94 = math.exp %93 : vector<1x32xf32>
    %cst_106 = arith.constant 1.000000e+00 : f32
    %95 = vector.broadcast %cst_106 : f32 to vector<1x32xf32>
    %96 = arith.addf %95, %94 : vector<1x32xf32>
    %97 = arith.divf %95, %96 : vector<1x32xf32>
    %c0_107 = arith.constant 0 : index
    %c0_108 = arith.constant 0 : index
    %c0_109 = arith.constant 0 : index
    %98 = vector.load %arg2[%c0_107, %c0_108, %c0_109] : memref<1x288x32xf32, #tpu.memory_space<vmem>>, vector<1x288x32xf32>
    %99 = vector.shape_cast %98 : vector<1x288x32xf32> to vector<288x32xf32>
    %c0_110 = arith.constant 0 : index
    %c0_111 = arith.constant 0 : index
    %100 = vector.load %arg15[%c0_110, %c0_111] : memref<288x32xf32, #tpu.memory_space<vmem>>, vector<288x32xf32>
    %101 = vector.broadcast %97 : vector<1x32xf32> to vector<288x32xf32>
    %102 = arith.mulf %100, %101 : vector<288x32xf32>
    %cst_112 = arith.constant 5.000000e-01 : f32
    %103 = vector.broadcast %cst_112 : f32 to vector<288x32xf32>
    %104 = arith.mulf %103, %102 : vector<288x32xf32>
    %105 = arith.addf %99, %104 : vector<288x32xf32>
    %c0_113 = arith.constant 0 : index
    %c0_114 = arith.constant 0 : index
    %c0_115 = arith.constant 0 : index
    %106 = vector.load %arg12[%c0_113, %c0_114, %c0_115] : memref<1x288x32xf32, #tpu.memory_space<vmem>>, vector<1x288x32xf32>
    %107 = vector.shape_cast %106 : vector<1x288x32xf32> to vector<288x32xf32>
    %108 = vector.shape_cast %105 : vector<288x32xf32> to vector<1x288x32xf32>
    tpu.vector_store %arg12[%c0_113, %c0_114, %c0_115], %108 {strides = array<i32>} : memref<1x288x32xf32, #tpu.memory_space<vmem>>, vector<1x288x32xf32>,
    return
  }
  func.func @transform_0(%arg0: i32) -> (i32, i32, i32) {
    %c0_i32 = arith.constant 0 : i32
    %c0_i32_0 = arith.constant 0 : i32
    %c0_i32_1 = arith.constant 0 : i32
    return %arg0, %c0_i32, %c0_i32_0 : i32, i32, i32
  }
  func.func @transform_1(%arg0: i32) -> (i32, i32, i32) {
    %c0_i32 = arith.constant 0 : i32
    %c0_i32_0 = arith.constant 0 : i32
    %c0_i32_1 = arith.constant 0 : i32
    return %arg0, %c0_i32, %c0_i32_0 : i32, i32, i32
  }
  func.func @transform_2(%arg0: i32) -> (i32, i32) {
    %c0_i32 = arith.constant 0 : i32
    %c0_i32_0 = arith.constant 0 : i32
    %c0_i32_1 = arith.constant 0 : i32
    return %c0_i32, %c0_i32_0 : i32, i32
  }
  func.func @transform_3(%arg0: i32) -> (i32, i32) {
    %c0_i32 = arith.constant 0 : i32
    %c0_i32_0 = arith.constant 0 : i32
    %c0_i32_1 = arith.constant 0 : i32
    return %c0_i32, %c0_i32_0 : i32, i32
  }
  func.func @transform_4(%arg0: i32) -> (i32, i32) {
    %c0_i32 = arith.constant 0 : i32
    %c0_i32_0 = arith.constant 0 : i32
    %c0_i32_1 = arith.constant 0 : i32
    return %c0_i32, %c0_i32_0 : i32, i32
  }
  func.func @transform_5(%arg0: i32) -> (i32, i32) {
    %c0_i32 = arith.constant 0 : i32
    %c0_i32_0 = arith.constant 0 : i32
    %c0_i32_1 = arith.constant 0 : i32
    return %c0_i32, %c0_i32_0 : i32, i32
  }
  func.func @transform_6(%arg0: i32) -> (i32, i32) {
    %c0_i32 = arith.constant 0 : i32
    %c0_i32_0 = arith.constant 0 : i32
    %c0_i32_1 = arith.constant 0 : i32
    return %c0_i32, %c0_i32_0 : i32, i32
  }
  func.func @transform_7(%arg0: i32) -> (i32, i32) {
    %c0_i32 = arith.constant 0 : i32
    %c0_i32_0 = arith.constant 0 : i32
    %c0_i32_1 = arith.constant 0 : i32
    return %c0_i32, %c0_i32_0 : i32, i32
  }
  func.func @transform_8(%arg0: i32) -> (i32, i32) {
    %c0_i32 = arith.constant 0 : i32
    %c0_i32_0 = arith.constant 0 : i32
    %c0_i32_1 = arith.constant 0 : i32
    return %c0_i32, %c0_i32_0 : i32, i32
  }
  func.func @transform_9(%arg0: i32) -> (i32, i32) {
    %c0_i32 = arith.constant 0 : i32
    %c0_i32_0 = arith.constant 0 : i32
    %c0_i32_1 = arith.constant 0 : i32
    return %c0_i32, %c0_i32_0 : i32, i32
  }
  func.func @transform_10(%arg0: i32) -> (i32, i32) {
    %c0_i32 = arith.constant 0 : i32
    %c0_i32_0 = arith.constant 0 : i32
    %c0_i32_1 = arith.constant 0 : i32
    return %c0_i32, %c0_i32_0 : i32, i32
  }
  func.func @transform_11(%arg0: i32) -> (i32, i32, i32) {
    %c0_i32 = arith.constant 0 : i32
    %c0_i32_0 = arith.constant 0 : i32
    %c0_i32_1 = arith.constant 0 : i32
    return %arg0, %c0_i32, %c0_i32_0 : i32, i32, i32
  }
}

</mosaic_0001>

<llo_original>
// kernel: tpu_custom_call.1
$region0: #{tpu_custom_call.1}
  #allocation0 [shape = 'u32[]', space=smem, size = 0x4, offset = 0x4, fixed_abs, tag = 'smem constant byte address 0x4 - core index']
  #allocation1 [shape = 'u32[144,128]{1,0:T(1,128)}', space=vmem, size = 0x12000, scoped, tag = 'internal scratch']
  #allocation2 [shape = 'bf16[288,288]{1,0:T(16,128)(2,1)}', space=vmem, size = 0x36000, scoped, tag = 'scratch operand']
  #allocation3 [shape = 'bf16[326,32]{1,0:T(8,128)(2,1)}', space=vmem, size = 0x14800, scoped, tag = 'scratch operand']
  #allocation4 [shape = 'f32[288,32]{1,0:T(8,128)}', space=vmem, size = 0x24000, scoped, tag = 'scratch operand']
  %s0 = inlined_call_operand.vmem [shape: bf16[2,326,32], index: 0, kind: input, shape index: {}]
  %s1 = inlined_call_operand.vmem [shape: f32[2,288,32], index: 1, kind: input, shape index: {}]
  %s2 = inlined_call_operand.vmem [shape: f32[288,1], index: 2, kind: input, shape index: {}]
  %s3 = inlined_call_operand.vmem [shape: bf16[288,32], index: 3, kind: input, shape index: {}]
  %s4 = inlined_call_operand.vmem [shape: f32[1,32], index: 4, kind: input, shape index: {}]
  %s5 = inlined_call_operand.vmem [shape: bf16[288,32], index: 5, kind: input, shape index: {}]
  %s6 = inlined_call_operand.vmem [shape: f32[1,32], index: 6, kind: input, shape index: {}]
  %s7 = inlined_call_operand.vmem [shape: f32[2,32], index: 7, kind: input, shape index: {}]
  %s8 = inlined_call_operand.vmem [shape: f32[2,1], index: 8, kind: input, shape index: {}]
  %s9 = inlined_call_operand.vmem [shape: f32[2,32], index: 9, kind: input, shape index: {}]
  %s10 = inlined_call_operand.vmem [shape: f32[1,32], index: 10, kind: input, shape index: {}]
  %s11 = inlined_call_operand.vmem [shape: f32[2,288,32], index: 11, kind: output, shape index: {}]
  %s12 = sld [smem:[#allocation0]]
  $region77: #{tpu_custom_call.1} parent=0
    _
  %s14 = ssub.s32 1, %s12
  %s15 = scalar_select 0, %s14, %s12
  loop: start=0, step=1, limit=4
  $region2: #{tpu_custom_call.1} parent=0 // loop_pre_header
    _
  $region3: #{tpu_custom_call.1} parent=0 // loop_header
    %s17 = sphi 0, %s21
    %p18 = scmp.ge.s32.totalorder %s17, 4
    %s27 = sphi 0, %s29
    %s30 = sphi 0, %s27
    %s31 = sphi 0, %s30
    %s47 = sphi 0, %s31
    %s53 = sphi 0, %s55
    %s56 = sphi 0, %s53
    %s57 = sphi 0, %s56
    %s73 = sphi 0, %s57
    %s77 = sphi 0, %s77
    %s79 = sphi 0, %s77
    %s80 = sphi 0, %s79
    %s94 = sphi 0, %s80
    %s98 = sphi 0, %s98
    %s100 = sphi 0, %s98
    %s101 = sphi 0, %s100
    %s115 = sphi 0, %s101
    %s119 = sphi 0, %s119
    %s121 = sphi 0, %s119
    %s122 = sphi 0, %s121
    %s136 = sphi 0, %s122
    %s140 = sphi 0, %s140
    %s142 = sphi 0, %s140
    %s143 = sphi 0, %s142
    %s157 = sphi 0, %s143
    %s161 = sphi 0, %s161
    %s163 = sphi 0, %s161
    %s164 = sphi 0, %s163
    %s178 = sphi 0, %s164
    %s182 = sphi 0, %s182
    %s184 = sphi 0, %s182
    %s185 = sphi 0, %s184
    %s199 = sphi 0, %s185
    %s203 = sphi 0, %s203
    %s205 = sphi 0, %s203
    %s206 = sphi 0, %s205
    %s220 = sphi 0, %s206
    %s224 = sphi 0, %s224
    %s226 = sphi 0, %s224
    %s227 = sphi 0, %s226
    %s241 = sphi 0, %s227
    %s245 = sphi 0, %s245
    %s247 = sphi 0, %s245
    %s248 = sphi 0, %s247
    %s262 = sphi 0, %s248
    %s268 = sphi 0, %s270
    %s271 = sphi 0, %s268
    %s272 = sphi 0, %s271
    %s288 = sphi 0, %s272
  $region4: #{tpu_custom_call.1} parent=0 // loop_header_branch
    %20 = sbr.rel (%p18) target = $region8
  $region5: #{tpu_custom_call.1} parent=0 // loop_body
    %s22 = ssub.s32 %s17, 1
    %s23 = ssub.s32 %s17, 2
    %s24 = sadd.s32 %s17, 1
    %s25 = ssub.s32 %s17, %s24
    %p26 = scmp.eq.s32.totalorder %s25, 0
    %s28 = sadd.s32 %s27, 1
    %s29 = scalar_select %p26, %s27, %s28
    %p32 = pneg %p26
    %p33 = scmp.eq.s32.totalorder %s17, 1
    %p34 = por %p32, %p33
    %p35 = scmp.ne.s32.totalorder %s27, %s30
    %p36 = scmp.eq.s32.totalorder %s17, 0
    %p37 = por %p35, %p36
    %p38 = scmp.ne.s32.totalorder %s27, %s30
    %p39 = scmp.eq.s32.totalorder %s22, 1
    %p40 = por %p38, %p39
    %p41 = scmp.ne.s32.totalorder %s30, %s31
    %p42 = scmp.eq.s32.totalorder %s22, 0
    %p43 = por %p41, %p42
    %p44 = scmp.ne.s32.totalorder %s30, %s31
    %p45 = scmp.eq.s32.totalorder %s23, 1
    %p46 = por %p44, %p45
    %p48 = scmp.ne.s32.totalorder %s31, %s47
    %p49 = scmp.eq.s32.totalorder %s23, 0
    %p50 = por %p48, %p49
    %s51 = ssub.s32 %s17, %s24
    %p52 = scmp.eq.s32.totalorder %s51, 0
    %s54 = sadd.s32 %s53, 1
    %s55 = scalar_select %p52, %s53, %s54
    %p58 = pneg %p52
    %p59 = scmp.eq.s32.totalorder %s17, 1
    %p60 = por %p58, %p59
    %p61 = scmp.ne.s32.totalorder %s53, %s56
    %p62 = scmp.eq.s32.totalorder %s17, 0
    %p63 = por %p61, %p62
    %p64 = scmp.ne.s32.totalorder %s53, %s56
    %p65 = scmp.eq.s32.totalorder %s22, 1
    %p66 = por %p64, %p65
    %p67 = scmp.ne.s32.totalorder %s56, %s57
    %p68 = scmp.eq.s32.totalorder %s22, 0
    %p69 = por %p67, %p68
    %p70 = scmp.ne.s32.totalorder %s56, %s57
    %p71 = scmp.eq.s32.totalorder %s23, 1
    %p72 = por %p70, %p71
    %p74 = scmp.ne.s32.totalorder %s57, %s73
    %p75 = scmp.eq.s32.totalorder %s23, 0
    %p76 = por %p74, %p75
    %s78 = sadd.s32 %s77, 1
    %p81 = scmp.eq.s32.totalorder %s17, 1
    %p82 = scmp.ne.s32.totalorder %s77, %s79
    %p83 = scmp.eq.s32.totalorder %s17, 0
    %p84 = por %p82, %p83
    %p85 = scmp.ne.s32.totalorder %s77, %s79
    %p86 = scmp.eq.s32.totalorder %s22, 1
    %p87 = por %p85, %p86
    %p88 = scmp.ne.s32.totalorder %s79, %s80
    %p89 = scmp.eq.s32.totalorder %s22, 0
    %p90 = por %p88, %p89
    %p91 = scmp.ne.s32.totalorder %s79, %s80
    %p92 = scmp.eq.s32.totalorder %s23, 1
    %p93 = por %p91, %p92
    %p95 = scmp.ne.s32.totalorder %s80, %s94
    %p96 = scmp.eq.s32.totalorder %s23, 0
    %p97 = por %p95, %p96
    %s99 = sadd.s32 %s98, 1
    %p102 = scmp.eq.s32.totalorder %s17, 1
    %p103 = scmp.ne.s32.totalorder %s98, %s100
    %p104 = scmp.eq.s32.totalorder %s17, 0
    %p105 = por %p103, %p104
    %p106 = scmp.ne.s32.totalorder %s98, %s100
    %p107 = scmp.eq.s32.totalorder %s22, 1
    %p108 = por %p106, %p107
    %p109 = scmp.ne.s32.totalorder %s100, %s101
    %p110 = scmp.eq.s32.totalorder %s22, 0
    %p111 = por %p109, %p110
    %p112 = scmp.ne.s32.totalorder %s100, %s101
    %p113 = scmp.eq.s32.totalorder %s23, 1
    %p114 = por %p112, %p113
    %p116 = scmp.ne.s32.totalorder %s101, %s115
    %p117 = scmp.eq.s32.totalorder %s23, 0
    %p118 = por %p116, %p117
    %s120 = sadd.s32 %s119, 1
    %p123 = scmp.eq.s32.totalorder %s17, 1
    %p124 = scmp.ne.s32.totalorder %s119, %s121
    %p125 = scmp.eq.s32.totalorder %s17, 0
    %p126 = por %p124, %p125
    %p127 = scmp.ne.s32.totalorder %s119, %s121
    %p128 = scmp.eq.s32.totalorder %s22, 1
    %p129 = por %p127, %p128
    %p130 = scmp.ne.s32.totalorder %s121, %s122
    %p131 = scmp.eq.s32.totalorder %s22, 0
    %p132 = por %p130, %p131
    %p133 = scmp.ne.s32.totalorder %s121, %s122
    %p134 = scmp.eq.s32.totalorder %s23, 1
    %p135 = por %p133, %p134
    %p137 = scmp.ne.s32.totalorder %s122, %s136
    %p138 = scmp.eq.s32.totalorder %s23, 0
    %p139 = por %p137, %p138
    %s141 = sadd.s32 %s140, 1
    %p144 = scmp.eq.s32.totalorder %s17, 1
    %p145 = scmp.ne.s32.totalorder %s140, %s142
    %p146 = scmp.eq.s32.totalorder %s17, 0
    %p147 = por %p145, %p146
    %p148 = scmp.ne.s32.totalorder %s140, %s142
    %p149 = scmp.eq.s32.totalorder %s22, 1
    %p150 = por %p148, %p149
    %p151 = scmp.ne.s32.totalorder %s142, %s143
    %p152 = scmp.eq.s32.totalorder %s22, 0
    %p153 = por %p151, %p152
    %p154 = scmp.ne.s32.totalorder %s142, %s143
    %p155 = scmp.eq.s32.totalorder %s23, 1
    %p156 = por %p154, %p155
    %p158 = scmp.ne.s32.totalorder %s143, %s157
    %p159 = scmp.eq.s32.totalorder %s23, 0
    %p160 = por %p158, %p159
    %s162 = sadd.s32 %s161, 1
    %p165 = scmp.eq.s32.totalorder %s17, 1
    %p166 = scmp.ne.s32.totalorder %s161, %s163
    %p167 = scmp.eq.s32.totalorder %s17, 0
    %p168 = por %p166, %p167
    %p169 = scmp.ne.s32.totalorder %s161, %s163
    %p170 = scmp.eq.s32.totalorder %s22, 1
    %p171 = por %p169, %p170
    %p172 = scmp.ne.s32.totalorder %s163, %s164
    %p173 = scmp.eq.s32.totalorder %s22, 0
    %p174 = por %p172, %p173
    %p175 = scmp.ne.s32.totalorder %s163, %s164
    %p176 = scmp.eq.s32.totalorder %s23, 1
    %p177 = por %p175, %p176
    %p179 = scmp.ne.s32.totalorder %s164, %s178
    %p180 = scmp.eq.s32.totalorder %s23, 0
    %p181 = por %p179, %p180
    %s183 = sadd.s32 %s182, 1
    %p186 = scmp.eq.s32.totalorder %s17, 1
    %p187 = scmp.ne.s32.totalorder %s182, %s184
    %p188 = scmp.eq.s32.totalorder %s17, 0
    %p189 = por %p187, %p188
    %p190 = scmp.ne.s32.totalorder %s182, %s184
    %p191 = scmp.eq.s32.totalorder %s22, 1
    %p192 = por %p190, %p191
    %p193 = scmp.ne.s32.totalorder %s184, %s185
    %p194 = scmp.eq.s32.totalorder %s22, 0
    %p195 = por %p193, %p194
    %p196 = scmp.ne.s32.totalorder %s184, %s185
    %p197 = scmp.eq.s32.totalorder %s23, 1
    %p198 = por %p196, %p197
    %p200 = scmp.ne.s32.totalorder %s185, %s199
    %p201 = scmp.eq.s32.totalorder %s23, 0
    %p202 = por %p200, %p201
    %s204 = sadd.s32 %s203, 1
    %p207 = scmp.eq.s32.totalorder %s17, 1
    %p208 = scmp.ne.s32.totalorder %s203, %s205
    %p209 = scmp.eq.s32.totalorder %s17, 0
    %p210 = por %p208, %p209
    %p211 = scmp.ne.s32.totalorder %s203, %s205
    %p212 = scmp.eq.s32.totalorder %s22, 1
    %p213 = por %p211, %p212
    %p214 = scmp.ne.s32.totalorder %s205, %s206
    %p215 = scmp.eq.s32.totalorder %s22, 0
    %p216 = por %p214, %p215
    %p217 = scmp.ne.s32.totalorder %s205, %s206
    %p218 = scmp.eq.s32.totalorder %s23, 1
    %p219 = por %p217, %p218
    %p221 = scmp.ne.s32.totalorder %s206, %s220
    %p222 = scmp.eq.s32.totalorder %s23, 0
    %p223 = por %p221, %p222
    %s225 = sadd.s32 %s224, 1
    %p228 = scmp.eq.s32.totalorder %s17, 1
    %p229 = scmp.ne.s32.totalorder %s224, %s226
    %p230 = scmp.eq.s32.totalorder %s17, 0
    %p231 = por %p229, %p230
    %p232 = scmp.ne.s32.totalorder %s224, %s226
    %p233 = scmp.eq.s32.totalorder %s22, 1
    %p234 = por %p232, %p233
    %p235 = scmp.ne.s32.totalorder %s226, %s227
    %p236 = scmp.eq.s32.totalorder %s22, 0
    %p237 = por %p235, %p236
    %p238 = scmp.ne.s32.totalorder %s226, %s227
    %p239 = scmp.eq.s32.totalorder %s23, 1
    %p240 = por %p238, %p239
    %p242 = scmp.ne.s32.totalorder %s227, %s241
    %p243 = scmp.eq.s32.totalorder %s23, 0
    %p244 = por %p242, %p243
    %s246 = sadd.s32 %s245, 1
    %p249 = scmp.eq.s32.totalorder %s17, 1
    %p250 = scmp.ne.s32.totalorder %s245, %s247
    %p251 = scmp.eq.s32.totalorder %s17, 0
    %p252 = por %p250, %p251
    %p253 = scmp.ne.s32.totalorder %s245, %s247
    %p254 = scmp.eq.s32.totalorder %s22, 1
    %p255 = por %p253, %p254
    %p256 = scmp.ne.s32.totalorder %s247, %s248
    %p257 = scmp.eq.s32.totalorder %s22, 0
    %p258 = por %p256, %p257
    %p259 = scmp.ne.s32.totalorder %s247, %s248
    %p260 = scmp.eq.s32.totalorder %s23, 1
    %p261 = por %p259, %p260
    %p263 = scmp.ne.s32.totalorder %s248, %s262
    %p264 = scmp.eq.s32.totalorder %s23, 0
    %p265 = por %p263, %p264
    %s266 = ssub.s32 %s17, %s24
    %p267 = scmp.eq.s32.totalorder %s266, 0
    %s269 = sadd.s32 %s268, 1
    %s270 = scalar_select %p267, %s268, %s269
    %p273 = pneg %p267
    %p274 = scmp.eq.s32.totalorder %s17, 1
    %p275 = por %p273, %p274
    %p276 = scmp.ne.s32.totalorder %s268, %s271
    %p277 = scmp.eq.s32.totalorder %s17, 0
    %p278 = por %p276, %p277
    %p279 = scmp.ne.s32.totalorder %s268, %s271
    %p280 = scmp.eq.s32.totalorder %s22, 1
    %p281 = por %p279, %p280
    %p282 = scmp.ne.s32.totalorder %s271, %s272
    %p283 = scmp.eq.s32.totalorder %s22, 0
    %p284 = por %p282, %p283
    %p285 = scmp.ne.s32.totalorder %s271, %s272
    %p286 = scmp.eq.s32.totalorder %s23, 1
    %p287 = por %p285, %p286
    %p289 = scmp.ne.s32.totalorder %s272, %s288
    %p290 = scmp.eq.s32.totalorder %s23, 0
    %p291 = por %p289, %p290
    %p292 = scmp.le.s32.totalorder 1, %s17
    %p293 = scmp.lt.s32.totalorder %s17, 3
    %p294 = pnand %p292, %p293
    %p295 = pneg %p294
    // Predicated region
    $region9: #{tpu_custom_call.1} parent=5 // pred_check
      _
    $region10: #{tpu_custom_call.1} parent=5 // pred_check_branch
      %297 = sbr.rel (%p294) target = $region12
    $region11: #{tpu_custom_call.1} parent=5 // pred_region
      %s298 = ssub.s32 %s17, 1
      // Predicated region
      $region13: #{tpu_custom_call.1} parent=11 // pred_check
        %p299 = pneg %p90
      $region14: #{tpu_custom_call.1} parent=11 // pred_check_branch
        %301 = sbr.rel (%p299) target = $region16
      $region15: #{tpu_custom_call.1} parent=11 // pred_region
        _
      $region16: #{tpu_custom_call.1} parent=11 // pred_fallthru
        _
      // Predicated region
      $region17: #{tpu_custom_call.1} parent=11 // pred_check
        %p302 = pneg %p111
      $region18: #{tpu_custom_call.1} parent=11 // pred_check_branch
        %304 = sbr.rel (%p302) target = $region20
      $region19: #{tpu_custom_call.1} parent=11 // pred_region
        _
      $region20: #{tpu_custom_call.1} parent=11 // pred_fallthru
        _
      // Predicated region
      $region21: #{tpu_custom_call.1} parent=11 // pred_check
        %p305 = pneg %p132
      $region22: #{tpu_custom_call.1} parent=11 // pred_check_branch
        %307 = sbr.rel (%p305) target = $region24
      $region23: #{tpu_custom_call.1} parent=11 // pred_region
        _
      $region24: #{tpu_custom_call.1} parent=11 // pred_fallthru
        _
      // Predicated region
      $region25: #{tpu_custom_call.1} parent=11 // pred_check
        %p308 = pneg %p153
      $region26: #{tpu_custom_call.1} parent=11 // pred_check_branch
        %310 = sbr.rel (%p308) target = $region28
      $region27: #{tpu_custom_call.1} parent=11 // pred_region
        _
      $region28: #{tpu_custom_call.1} parent=11 // pred_fallthru
        _
      // Predicated region
      $region29: #{tpu_custom_call.1} parent=11 // pred_check
        %p311 = pneg %p174
      $region30: #{tpu_custom_call.1} parent=11 // pred_check_branch
        %313 = sbr.rel (%p311) target = $region32
      $region31: #{tpu_custom_call.1} parent=11 // pred_region
        _
      $region32: #{tpu_custom_call.1} parent=11 // pred_fallthru
        _
      // Predicated region
      $region33: #{tpu_custom_call.1} parent=11 // pred_check
        %p314 = pneg %p195
      $region34: #{tpu_custom_call.1} parent=11 // pred_check_branch
        %316 = sbr.rel (%p314) target = $region36
      $region35: #{tpu_custom_call.1} parent=11 // pred_region
        _
      $region36: #{tpu_custom_call.1} parent=11 // pred_fallthru
        _
      // Predicated region
      $region37: #{tpu_custom_call.1} parent=11 // pred_check
        %p317 = pneg %p216
      $region38: #{tpu_custom_call.1} parent=11 // pred_check_branch
        %319 = sbr.rel (%p317) target = $region40
      $region39: #{tpu_custom_call.1} parent=11 // pred_region
        _
      $region40: #{tpu_custom_call.1} parent=11 // pred_fallthru
        _
      // Predicated region
      $region41: #{tpu_custom_call.1} parent=11 // pred_check
        %p320 = pneg %p237
      $region42: #{tpu_custom_call.1} parent=11 // pred_check_branch
        %322 = sbr.rel (%p320) target = $region44
      $region43: #{tpu_custom_call.1} parent=11 // pred_region
        _
      $region44: #{tpu_custom_call.1} parent=11 // pred_fallthru
        _
      // Predicated region
      $region45: #{tpu_custom_call.1} parent=11 // pred_check
        %p323 = pneg %p258
      $region46: #{tpu_custom_call.1} parent=11 // pred_check_branch
        %325 = sbr.rel (%p323) target = $region48
      $region47: #{tpu_custom_call.1} parent=11 // pred_region
        _
      $region48: #{tpu_custom_call.1} parent=11 // pred_fallthru
        _
    $region12: #{tpu_custom_call.1} parent=5 // pred_fallthru
      _
    %p326 = scmp.lt.s32.totalorder %s17, 2
    // Predicated region
    $region49: #{tpu_custom_call.1} parent=5 // pred_check
      %p327 = pneg %p326
    $region50: #{tpu_custom_call.1} parent=5 // pred_check_branch
      %329 = sbr.rel (%p327) target = $region52
    $region51: #{tpu_custom_call.1} parent=5 // pred_region
      // Predicated region
      $region53: #{tpu_custom_call.1} parent=51 // pred_check
        %p330 = pneg %p37
      $region54: #{tpu_custom_call.1} parent=51 // pred_check_branch
        %332 = sbr.rel (%p330) target = $region56
      $region55: #{tpu_custom_call.1} parent=51 // pred_region
        %p333 = scmp.lt.s32.totalorder %s17, 1
        %s334 = scalar_select %p333, %s17, 1
        %s335 = smul.addr %s334, 41
        %s336 = smul.addr %s335, 4
        %s337 = scalar_lea.vmem %s0, %s336
      $region56: #{tpu_custom_call.1} parent=51 // pred_fallthru
        _
      // Predicated region
      $region57: #{tpu_custom_call.1} parent=51 // pred_check
        %p338 = pneg %p63
      $region58: #{tpu_custom_call.1} parent=51 // pred_check_branch
        %340 = sbr.rel (%p338) target = $region60
      $region59: #{tpu_custom_call.1} parent=51 // pred_region
        %p341 = scmp.lt.s32.totalorder %s17, 1
        %s342 = scalar_select %p341, %s17, 1
        %s343 = smul.addr %s342, 36
        %s344 = smul.addr %s343, 8
        %s345 = scalar_lea.vmem %s1, %s344
      $region60: #{tpu_custom_call.1} parent=51 // pred_fallthru
        _
    $region52: #{tpu_custom_call.1} parent=5 // pred_fallthru
      _
    %p346 = scmp.le.s32.totalorder 1, %s17
    %p347 = scmp.lt.s32.totalorder %s17, 3
    %p348 = pnand %p346, %p347
    %p349 = pneg %p348
    // Predicated region
    $region61: #{tpu_custom_call.1} parent=5 // pred_check
      _
    $region62: #{tpu_custom_call.1} parent=5 // pred_check_branch
      %351 = sbr.rel (%p348) target = $region64
    $region63: #{tpu_custom_call.1} parent=5 // pred_region
      %s352 = ssub.s32 %s17, 1
      %p353 = scmp.lt.s32.totalorder %s22, 1
      %s354 = scalar_select %p353, %s22, 1
      %s355 = smul.addr %s354, 41
      %s356 = smul.addr %s355, 4
      %s357 = scalar_lea.vmem %s0, %s356
      %p358 = pneg %p43
      %p359 = pneg %p40
      %p360 = scmp.lt.s32.totalorder %s22, 1
      %s361 = scalar_select %p360, %s22, 1
      %s362 = smul.addr %s361, 36
      %s363 = smul.addr %s362, 8
      %s364 = scalar_lea.vmem %s1, %s363
      %p365 = pneg %p69
      %p366 = pneg %p66
      %p367 = pneg %p90
      %p368 = pneg %p87
      %p369 = pneg %p111
      %p370 = pneg %p108
      %p371 = pneg %p132
      %p372 = pneg %p129
      %p373 = pneg %p153
      %p374 = pneg %p150
      %p375 = pneg %p174
      %p376 = pneg %p171
      %p377 = pneg %p195
      %p378 = pneg %p192
      %p379 = pneg %p216
      %p380 = pneg %p213
      %p381 = pneg %p237
      %p382 = pneg %p234
      %p383 = pneg %p258
      %p384 = pneg %p255
      %p385 = pneg %p284
      %p386 = pneg %p281
      %p387 = scmp.lt.s32.totalorder %s22, 1
      %s388 = scalar_select %p387, %s22, 1
      %s389 = smul.addr %s388, 36
      %s390 = smul.addr %s389, 8
      %s391 = scalar_lea.vmem %s11, %s390
      %p392 = scmp.lt.s32.totalorder %s22, 1
      %s393 = scalar_select %p392, %s22, 1
      %s394 = smul.addr %s393, 41
      %s395 = smul.addr %s394, 4
      %s396 = scalar_lea.vmem %s0, %s395
      %p397 = scmp.lt.s32.totalorder %s22, 1
      %s398 = scalar_select %p397, %s22, 1
      %s399 = smul.addr %s398, 36
      %s400 = smul.addr %s399, 8
      %s401 = scalar_lea.vmem %s1, %s400
      %p402 = scmp.lt.s32.totalorder %s22, 1
      %s403 = scalar_select %p402, %s22, 1
      %s404 = smul.addr %s403, 36
      %s405 = smul.addr %s404, 8
      %s406 = scalar_lea.vmem %s11, %s405
      %vm408 = vcmask 257024
      %409 = vst.msk [vmem:[#allocation3] sm:$0xf] %vm408, 0
      %410 = vst.msk [vmem:[#allocation3 + $0x4] sm:$0xf] %vm408, 0
      %vm411 = vcmask 254976
      %vm412 = vsmask.f32 1280
      %vm413 = vmand %vm411, %vm412
      %v414 = vld [vmem:[#allocation3 + $0x8] sm:$0x3]
      %v415 = vsel %vm413, 0, %v414
      %416 = vst [vmem:[#allocation3 + $0x8] sm:$0x3] %v415
      %vm417 = vcmask 257025
      %vm418 = vsmask.f32 7942
      %vm419 = vmand %vm417, %vm418
      %v420 = vld [vmem:[#allocation3 + $0x98] sm:$0xe]
      %v421 = vsel %vm419, 0, %v420
      %422 = vst [vmem:[#allocation3 + $0x98] sm:$0xe] %v421
      %423 = vst.msk [vmem:[#allocation3 + $0x9c] sm:$0xf] %vm408, 0
      %vm424 = vcmask 256000
      %425 = vst.msk [vmem:[#allocation3 + $0xa0] sm:$0x7] %vm424, 0
      %v426 = vld [vmem:[%s396] sm:$0xf]
      %v427 = vld [vmem:[%s396 + $0x4] sm:$0xf]
      %v428 = vld [vmem:[%s396 + $0x8] sm:$0xf]
      %v429 = vld [vmem:[%s396 + $0xc] sm:$0xf]
      %v430 = vld [vmem:[%s396 + $0x10] sm:$0xf]
      %v431 = vld [vmem:[%s396 + $0x14] sm:$0xf]
      %v432 = vld [vmem:[%s396 + $0x18] sm:$0xf]
      %v433 = vld [vmem:[%s396 + $0x1c] sm:$0xf]
      %v434 = vld [vmem:[%s396 + $0x20] sm:$0xf]
      %v435 = vld [vmem:[%s396 + $0x24] sm:$0xf]
      %v436 = vld [vmem:[%s396 + $0x28] sm:$0xf]
      %v437 = vld [vmem:[%s396 + $0x2c] sm:$0xf]
      %v438 = vld [vmem:[%s396 + $0x30] sm:$0xf]
      %v439 = vld [vmem:[%s396 + $0x34] sm:$0xf]
      %v440 = vld [vmem:[%s396 + $0x38] sm:$0xf]
      %v441 = vld [vmem:[%s396 + $0x3c] sm:$0xf]
      %v442 = vld [vmem:[%s396 + $0x40] sm:$0xf]
      %v443 = vld [vmem:[%s396 + $0x44] sm:$0xf]
      %v444 = vld [vmem:[%s396 + $0x48] sm:$0xf]
      %v445 = vld [vmem:[%s396 + $0x4c] sm:$0xf]
      %v446 = vld [vmem:[%s396 + $0x50] sm:$0xf]
      %v447 = vld [vmem:[%s396 + $0x54] sm:$0xf]
      %v448 = vld [vmem:[%s396 + $0x58] sm:$0xf]
      %v449 = vld [vmem:[%s396 + $0x5c] sm:$0xf]
      %v450 = vld [vmem:[%s396 + $0x60] sm:$0xf]
      %v451 = vld [vmem:[%s396 + $0x64] sm:$0xf]
      %v452 = vld [vmem:[%s396 + $0x68] sm:$0xf]
      %v453 = vld [vmem:[%s396 + $0x6c] sm:$0xf]
      %v454 = vld [vmem:[%s396 + $0x70] sm:$0xf]
      %v455 = vld [vmem:[%s396 + $0x74] sm:$0xf]
      %v456 = vld [vmem:[%s396 + $0x78] sm:$0xf]
      %v457 = vld [vmem:[%s396 + $0x7c] sm:$0xf]
      %v458 = vld [vmem:[%s396 + $0x80] sm:$0xf]
      %v459 = vld [vmem:[%s396 + $0x84] sm:$0xf]
      %v460 = vld [vmem:[%s396 + $0x88] sm:$0xf]
      %v461 = vld [vmem:[%s396 + $0x8c] sm:$0xf]
      %v498 = vunpack.c.l.b16 %v426
      %v499 = vunpack.c.l.b16 %v427
      %v500 = vunpack.c.l.b16 %v428
      %v501 = vunpack.c.l.b16 %v429
      %v502 = vunpack.c.l.b16 %v430
      %v503 = vunpack.c.l.b16 %v431
      %v504 = vunpack.c.l.b16 %v432
      %v505 = vunpack.c.l.b16 %v433
      %v506 = vunpack.c.l.b16 %v434
      %v507 = vunpack.c.l.b16 %v435
      %v508 = vunpack.c.l.b16 %v436
      %v509 = vunpack.c.l.b16 %v437
      %v510 = vunpack.c.l.b16 %v438
      %v511 = vunpack.c.l.b16 %v439
      %v512 = vunpack.c.l.b16 %v440
      %v513 = vunpack.c.l.b16 %v441
      %v514 = vunpack.c.l.b16 %v442
      %v515 = vunpack.c.l.b16 %v443
      %v516 = vunpack.c.l.b16 %v444
      %v517 = vunpack.c.l.b16 %v445
      %v518 = vunpack.c.l.b16 %v446
      %v519 = vunpack.c.l.b16 %v447
      %v520 = vunpack.c.l.b16 %v448
      %v521 = vunpack.c.l.b16 %v449
      %v522 = vunpack.c.l.b16 %v450
      %v523 = vunpack.c.l.b16 %v451
      %v524 = vunpack.c.l.b16 %v452
      %v525 = vunpack.c.l.b16 %v453
      %v526 = vunpack.c.l.b16 %v454
      %v527 = vunpack.c.l.b16 %v455
      %v528 = vunpack.c.l.b16 %v456
      %v529 = vunpack.c.l.b16 %v457
      %v530 = vunpack.c.l.b16 %v458
      %v531 = vunpack.c.l.b16 %v459
      %v532 = vunpack.c.l.b16 %v460
      %v533 = vunpack.c.l.b16 %v461
      %v534 = vpack.c.b16 %v499, %v498
      %v535 = vpack.c.b16 %v501, %v500
      %v536 = vpack.c.b16 %v503, %v502
      %v537 = vpack.c.b16 %v505, %v504
      %v538 = vpack.c.b16 %v507, %v506
      %v539 = vpack.c.b16 %v509, %v508
      %v540 = vpack.c.b16 %v511, %v510
      %v541 = vpack.c.b16 %v513, %v512
      %v542 = vpack.c.b16 %v515, %v514
      %v543 = vpack.c.b16 %v517, %v516
      %v544 = vpack.c.b16 %v519, %v518
      %v545 = vpack.c.b16 %v521, %v520
      %v546 = vpack.c.b16 %v523, %v522
      %v547 = vpack.c.b16 %v525, %v524
      %v548 = vpack.c.b16 %v527, %v526
      %v549 = vpack.c.b16 %v529, %v528
      %v550 = vpack.c.b16 %v531, %v530
      %v551 = vpack.c.b16 %v533, %v532
      %vm570 = vcmask 261120
      %571 = vst.msk [vmem:[#allocation2] sm:$0xff] %vm570, %v534
      %572 = vst.msk [vmem:[#allocation2 + $0x18] sm:$0xff] %vm570, %v535
      %573 = vst.msk [vmem:[#allocation2 + $0x30] sm:$0xff] %vm570, %v536
      %574 = vst.msk [vmem:[#allocation2 + $0x48] sm:$0xff] %vm570, %v537
      %575 = vst.msk [vmem:[#allocation2 + $0x60] sm:$0xff] %vm570, %v538
      %576 = vst.msk [vmem:[#allocation2 + $0x78] sm:$0xff] %vm570, %v539
      %577 = vst.msk [vmem:[#allocation2 + $0x90] sm:$0xff] %vm570, %v540
      %578 = vst.msk [vmem:[#allocation2 + $0xa8] sm:$0xff] %vm570, %v541
      %579 = vst.msk [vmem:[#allocation2 + $0xc0] sm:$0xff] %vm570, %v542
      %580 = vst.msk [vmem:[#allocation2 + $0xd8] sm:$0xff] %vm570, %v543
      %581 = vst.msk [vmem:[#allocation2 + $0xf0] sm:$0xff] %vm570, %v544
      %582 = vst.msk [vmem:[#allocation2 + $0x108] sm:$0xff] %vm570, %v545
      %583 = vst.msk [vmem:[#allocation2 + $0x120] sm:$0xff] %vm570, %v546
      %584 = vst.msk [vmem:[#allocation2 + $0x138] sm:$0xff] %vm570, %v547
      %585 = vst.msk [vmem:[#allocation2 + $0x150] sm:$0xff] %vm570, %v548
      %586 = vst.msk [vmem:[#allocation2 + $0x168] sm:$0xff] %vm570, %v549
      %587 = vst.msk [vmem:[#allocation2 + $0x180] sm:$0xff] %vm570, %v550
      %588 = vst.msk [vmem:[#allocation2 + $0x198] sm:$0xff] %vm570, %v551
      %v589 = vld [vmem:[%s396] sm:$0xf]
      %v590 = vld [vmem:[%s396 + $0x4] sm:$0xf]
      %v591 = vld [vmem:[%s396 + $0x8] sm:$0xf]
      %v592 = vld [vmem:[%s396 + $0xc] sm:$0xf]
      %v593 = vld [vmem:[%s396 + $0x10] sm:$0xf]
      %v594 = vld [vmem:[%s396 + $0x14] sm:$0xf]
      %v595 = vld [vmem:[%s396 + $0x18] sm:$0xf]
      %v596 = vld [vmem:[%s396 + $0x1c] sm:$0xf]
      %v597 = vld [vmem:[%s396 + $0x20] sm:$0xf]
      %v598 = vld [vmem:[%s396 + $0x24] sm:$0xf]
      %v599 = vld [vmem:[%s396 + $0x28] sm:$0xf]
      %v600 = vld [vmem:[%s396 + $0x2c] sm:$0xf]
      %v601 = vld [vmem:[%s396 + $0x30] sm:$0xf]
      %v602 = vld [vmem:[%s396 + $0x34] sm:$0xf]
      %v603 = vld [vmem:[%s396 + $0x38] sm:$0xf]
      %v604 = vld [vmem:[%s396 + $0x3c] sm:$0xf]
      %v605 = vld [vmem:[%s396 + $0x40] sm:$0xf]
      %v606 = vld [vmem:[%s396 + $0x44] sm:$0xf]
      %v607 = vld [vmem:[%s396 + $0x48] sm:$0xf]
      %v608 = vld [vmem:[%s396 + $0x4c] sm:$0xf]
      %v609 = vld [vmem:[%s396 + $0x50] sm:$0xf]
      %v610 = vld [vmem:[%s396 + $0x54] sm:$0xf]
      %v611 = vld [vmem:[%s396 + $0x58] sm:$0xf]
      %v612 = vld [vmem:[%s396 + $0x5c] sm:$0xf]
      %v613 = vld [vmem:[%s396 + $0x60] sm:$0xf]
      %v614 = vld [vmem:[%s396 + $0x64] sm:$0xf]
      %v615 = vld [vmem:[%s396 + $0x68] sm:$0xf]
      %v616 = vld [vmem:[%s396 + $0x6c] sm:$0xf]
      %v617 = vld [vmem:[%s396 + $0x70] sm:$0xf]
      %v618 = vld [vmem:[%s396 + $0x74] sm:$0xf]
      %v619 = vld [vmem:[%s396 + $0x78] sm:$0xf]
      %v620 = vld [vmem:[%s396 + $0x7c] sm:$0xf]
      %v621 = vld [vmem:[%s396 + $0x80] sm:$0xf]
      %v622 = vld [vmem:[%s396 + $0x84] sm:$0xf]
      %v623 = vld [vmem:[%s396 + $0x88] sm:$0xf]
      %v624 = vld [vmem:[%s396 + $0x8c] sm:$0xf]
      %v625 = vld [vmem:[%s396 + $0x90] sm:$0x1]
      %v663 = vunpack.c.l.b16 %v589
      %v664 = vunpack.c.l.b16 %v590
      %v665 = vunpack.c.l.b16 %v591
      %v666 = vunpack.c.l.b16 %v592
      %v667 = vunpack.c.l.b16 %v593
      %v668 = vunpack.c.l.b16 %v594
      %v669 = vunpack.c.l.b16 %v595
      %v670 = vunpack.c.l.b16 %v596
      %v671 = vunpack.c.l.b16 %v597
      %v672 = vunpack.c.l.b16 %v598
      %v673 = vunpack.c.l.b16 %v599
      %v674 = vunpack.c.l.b16 %v600
      %v675 = vunpack.c.l.b16 %v601
      %v676 = vunpack.c.l.b16 %v602
      %v677 = vunpack.c.l.b16 %v603
      %v678 = vunpack.c.l.b16 %v604
      %v679 = vunpack.c.l.b16 %v605
      %v680 = vunpack.c.l.b16 %v606
      %v681 = vunpack.c.l.b16 %v607
      %v682 = vunpack.c.l.b16 %v608
      %v683 = vunpack.c.l.b16 %v609
      %v684 = vunpack.c.l.b16 %v610
      %v685 = vunpack.c.l.b16 %v611
      %v686 = vunpack.c.l.b16 %v612
      %v687 = vunpack.c.l.b16 %v613
      %v688 = vunpack.c.l.b16 %v614
      %v689 = vunpack.c.l.b16 %v615
      %v690 = vunpack.c.l.b16 %v616
      %v691 = vunpack.c.l.b16 %v617
      %v692 = vunpack.c.l.b16 %v618
      %v693 = vunpack.c.l.b16 %v619
      %v694 = vunpack.c.l.b16 %v620
      %v695 = vunpack.c.l.b16 %v621
      %v696 = vunpack.c.l.b16 %v622
      %v697 = vunpack.c.l.b16 %v623
      %v698 = vunpack.c.l.b16 %v624
      %v699 = vunpack.c.l.b16 %v625
      %v700 = vpack.c.b16 %v664, %v663
      %v701 = vpack.c.b16 %v666, %v665
      %v702 = vpack.c.b16 %v668, %v667
      %v703 = vpack.c.b16 %v670, %v669
      %v704 = vpack.c.b16 %v672, %v671
      %v705 = vpack.c.b16 %v674, %v673
      %v706 = vpack.c.b16 %v676, %v675
      %v707 = vpack.c.b16 %v678, %v677
      %v708 = vpack.c.b16 %v680, %v679
      %v709 = vpack.c.b16 %v682, %v681
      %v710 = vpack.c.b16 %v684, %v683
      %v711 = vpack.c.b16 %v686, %v685
      %v712 = vpack.c.b16 %v688, %v687
      %v713 = vpack.c.b16 %v690, %v689
      %v714 = vpack.c.b16 %v692, %v691
      %v715 = vpack.c.b16 %v694, %v693
      %v716 = vpack.c.b16 %v696, %v695
      %v717 = vpack.c.b16 %v698, %v697
      %v718 = vpack.c.b16 %v699, %v699
      %vm719 = vsmask.f32 7424
      %v721 = vshrl.u32 %v700, 16
      %v723 = vshll.u32 %v700, 16
      %v725 = vrot.slane %v723, 1
      %v726 = vor.u32 %v721, %v725
      %v728 = vshll.u32 %v701, 16
      %v730 = vrot.slane %v728, 1
      %v731 = vsel %vm719, %v726, %v730
      %v732 = vshrl.u32 %v701, 16
      %v734 = vor.u32 %v732, %v730
      %v736 = vshll.u32 %v702, 16
      %v738 = vrot.slane %v736, 1
      %v739 = vsel %vm719, %v734, %v738
      %v740 = vshrl.u32 %v702, 16
      %v742 = vor.u32 %v740, %v738
      %v744 = vshll.u32 %v703, 16
      %v746 = vrot.slane %v744, 1
      %v747 = vsel %vm719, %v742, %v746
      %v748 = vshrl.u32 %v703, 16
      %v750 = vor.u32 %v748, %v746
      %v752 = vshll.u32 %v704, 16
      %v754 = vrot.slane %v752, 1
      %v755 = vsel %vm719, %v750, %v754
      %v756 = vshrl.u32 %v704, 16
      %v758 = vor.u32 %v756, %v754
      %v760 = vshll.u32 %v705, 16
      %v762 = vrot.slane %v760, 1
      %v763 = vsel %vm719, %v758, %v762
      %v764 = vshrl.u32 %v705, 16
      %v766 = vor.u32 %v764, %v762
      %v768 = vshll.u32 %v706, 16
      %v770 = vrot.slane %v768, 1
      %v771 = vsel %vm719, %v766, %v770
      %v772 = vshrl.u32 %v706, 16
      %v774 = vor.u32 %v772, %v770
      %v776 = vshll.u32 %v707, 16
      %v778 = vrot.slane %v776, 1
      %v779 = vsel %vm719, %v774, %v778
      %v780 = vshrl.u32 %v707, 16
      %v782 = vor.u32 %v780, %v778
      %v784 = vshll.u32 %v708, 16
      %v786 = vrot.slane %v784, 1
      %v787 = vsel %vm719, %v782, %v786
      %v788 = vshrl.u32 %v708, 16
      %v790 = vor.u32 %v788, %v786
      %v792 = vshll.u32 %v709, 16
      %v794 = vrot.slane %v792, 1
      %v795 = vsel %vm719, %v790, %v794
      %v796 = vshrl.u32 %v709, 16
      %v798 = vor.u32 %v796, %v794
      %v800 = vshll.u32 %v710, 16
      %v802 = vrot.slane %v800, 1
      %v803 = vsel %vm719, %v798, %v802
      %v804 = vshrl.u32 %v710, 16
      %v806 = vor.u32 %v804, %v802
      %v808 = vshll.u32 %v711, 16
      %v810 = vrot.slane %v808, 1
      %v811 = vsel %vm719, %v806, %v810
      %v812 = vshrl.u32 %v711, 16
      %v814 = vor.u32 %v812, %v810
      %v816 = vshll.u32 %v712, 16
      %v818 = vrot.slane %v816, 1
      %v819 = vsel %vm719, %v814, %v818
      %v820 = vshrl.u32 %v712, 16
      %v822 = vor.u32 %v820, %v818
      %v824 = vshll.u32 %v713, 16
      %v826 = vrot.slane %v824, 1
      %v827 = vsel %vm719, %v822, %v826
      %v828 = vshrl.u32 %v713, 16
      %v830 = vor.u32 %v828, %v826
      %v832 = vshll.u32 %v714, 16
      %v834 = vrot.slane %v832, 1
      %v835 = vsel %vm719, %v830, %v834
      %v836 = vshrl.u32 %v714, 16
      %v838 = vor.u32 %v836, %v834
      %v840 = vshll.u32 %v715, 16
      %v842 = vrot.slane %v840, 1
      %v843 = vsel %vm719, %v838, %v842
      %v844 = vshrl.u32 %v715, 16
      %v846 = vor.u32 %v844, %v842
      %v848 = vshll.u32 %v716, 16
      %v850 = vrot.slane %v848, 1
      %v851 = vsel %vm719, %v846, %v850
      %v852 = vshrl.u32 %v716, 16
      %v854 = vor.u32 %v852, %v850
      %v856 = vshll.u32 %v717, 16
      %v858 = vrot.slane %v856, 1
      %v859 = vsel %vm719, %v854, %v858
      %v860 = vshrl.u32 %v717, 16
      %v862 = vor.u32 %v860, %v858
      %v864 = vshll.u32 %v718, 16
      %v866 = vrot.slane %v864, 1
      %v867 = vsel %vm719, %v862, %v866
      %868 = vrot.lane.b32.xlu0 %v731, 32
      %v869 = vpop.permute.xlu0 %868
      %870 = vrot.lane.b32.xlu0 %v739, 32
      %v871 = vpop.permute.xlu0 %870
      %872 = vrot.lane.b32.xlu0 %v747, 32
      %v873 = vpop.permute.xlu0 %872
      %874 = vrot.lane.b32.xlu0 %v755, 32
      %v875 = vpop.permute.xlu0 %874
      %876 = vrot.lane.b32.xlu0 %v763, 32
      %v877 = vpop.permute.xlu0 %876
      %878 = vrot.lane.b32.xlu0 %v771, 32
      %v879 = vpop.permute.xlu0 %878
      %880 = vrot.lane.b32.xlu0 %v779, 32
      %v881 = vpop.permute.xlu0 %880
      %882 = vrot.lane.b32.xlu0 %v787, 32
      %v883 = vpop.permute.xlu0 %882
      %884 = vrot.lane.b32.xlu0 %v795, 32
      %v885 = vpop.permute.xlu0 %884
      %886 = vrot.lane.b32.xlu0 %v803, 32
      %v887 = vpop.permute.xlu0 %886
      %888 = vrot.lane.b32.xlu0 %v811, 32
      %v889 = vpop.permute.xlu0 %888
      %890 = vrot.lane.b32.xlu0 %v819, 32
      %v891 = vpop.permute.xlu0 %890
      %892 = vrot.lane.b32.xlu0 %v827, 32
      %v893 = vpop.permute.xlu0 %892
      %894 = vrot.lane.b32.xlu0 %v835, 32
      %v895 = vpop.permute.xlu0 %894
      %896 = vrot.lane.b32.xlu0 %v843, 32
      %v897 = vpop.permute.xlu0 %896
      %898 = vrot.lane.b32.xlu0 %v851, 32
      %v899 = vpop.permute.xlu0 %898
      %900 = vrot.lane.b32.xlu0 %v859, 32
      %v901 = vpop.permute.xlu0 %900
      %902 = vrot.lane.b32.xlu0 %v867, 32
      %v903 = vpop.permute.xlu0 %902
      %vm922 = vcmask 523520
      %923 = vst.msk [vmem:[#allocation2] sm:$0xff] %vm922, %v869
      %924 = vst.msk [vmem:[#allocation2 + $0x18] sm:$0xff] %vm922, %v871
      %925 = vst.msk [vmem:[#allocation2 + $0x30] sm:$0xff] %vm922, %v873
      %926 = vst.msk [vmem:[#allocation2 + $0x48] sm:$0xff] %vm922, %v875
      %927 = vst.msk [vmem:[#allocation2 + $0x60] sm:$0xff] %vm922, %v877
      %928 = vst.msk [vmem:[#allocation2 + $0x78] sm:$0xff] %vm922, %v879
      %929 = vst.msk [vmem:[#allocation2 + $0x90] sm:$0xff] %vm922, %v881
      %930 = vst.msk [vmem:[#allocation2 + $0xa8] sm:$0xff] %vm922, %v883
      %931 = vst.msk [vmem:[#allocation2 + $0xc0] sm:$0xff] %vm922, %v885
      %932 = vst.msk [vmem:[#allocation2 + $0xd8] sm:$0xff] %vm922, %v887
      %933 = vst.msk [vmem:[#allocation2 + $0xf0] sm:$0xff] %vm922, %v889
      %934 = vst.msk [vmem:[#allocation2 + $0x108] sm:$0xff] %vm922, %v891
      %935 = vst.msk [vmem:[#allocation2 + $0x120] sm:$0xff] %vm922, %v893
      %936 = vst.msk [vmem:[#allocation2 + $0x138] sm:$0xff] %vm922, %v895
      %937 = vst.msk [vmem:[#allocation2 + $0x150] sm:$0xff] %vm922, %v897
      %938 = vst.msk [vmem:[#allocation2 + $0x168] sm:$0xff] %vm922, %v899
      %939 = vst.msk [vmem:[#allocation2 + $0x180] sm:$0xff] %vm922, %v901
      %940 = vst.msk [vmem:[#allocation2 + $0x198] sm:$0xff] %vm922, %v903
      %v941 = vld [vmem:[%s396] sm:$0xe]
      %v942 = vld [vmem:[%s396 + $0x4] sm:$0xf]
      %v943 = vld [vmem:[%s396 + $0x8] sm:$0xf]
      %v944 = vld [vmem:[%s396 + $0xc] sm:$0xf]
      %v945 = vld [vmem:[%s396 + $0x10] sm:$0xf]
      %v946 = vld [vmem:[%s396 + $0x14] sm:$0xf]
      %v947 = vld [vmem:[%s396 + $0x18] sm:$0xf]
      %v948 = vld [vmem:[%s396 + $0x1c] sm:$0xf]
      %v949 = vld [vmem:[%s396 + $0x20] sm:$0xf]
      %v950 = vld [vmem:[%s396 + $0x24] sm:$0xf]
      %v951 = vld [vmem:[%s396 + $0x28] sm:$0xf]
      %v952 = vld [vmem:[%s396 + $0x2c] sm:$0xf]
      %v953 = vld [vmem:[%s396 + $0x30] sm:$0xf]
      %v954 = vld [vmem:[%s396 + $0x34] sm:$0xf]
      %v955 = vld [vmem:[%s396 + $0x38] sm:$0xf]
      %v956 = vld [vmem:[%s396 + $0x3c] sm:$0xf]
      %v957 = vld [vmem:[%s396 + $0x40] sm:$0xf]
      %v958 = vld [vmem:[%s396 + $0x44] sm:$0xf]
      %v959 = vld [vmem:[%s396 + $0x48] sm:$0xf]
      %v960 = vld [vmem:[%s396 + $0x4c] sm:$0xf]
      %v961 = vld [vmem:[%s396 + $0x50] sm:$0xf]
      %v962 = vld [vmem:[%s396 + $0x54] sm:$0xf]
      %v963 = vld [vmem:[%s396 + $0x58] sm:$0xf]
      %v964 = vld [vmem:[%s396 + $0x5c] sm:$0xf]
      %v965 = vld [vmem:[%s396 + $0x60] sm:$0xf]
      %v966 = vld [vmem:[%s396 + $0x64] sm:$0xf]
      %v967 = vld [vmem:[%s396 + $0x68] sm:$0xf]
      %v968 = vld [vmem:[%s396 + $0x6c] sm:$0xf]
      %v969 = vld [vmem:[%s396 + $0x70] sm:$0xf]
      %v970 = vld [vmem:[%s396 + $0x74] sm:$0xf]
      %v971 = vld [vmem:[%s396 + $0x78] sm:$0xf]
      %v972 = vld [vmem:[%s396 + $0x7c] sm:$0xf]
      %v973 = vld [vmem:[%s396 + $0x80] sm:$0xf]
      %v974 = vld [vmem:[%s396 + $0x84] sm:$0xf]
      %v975 = vld [vmem:[%s396 + $0x88] sm:$0xf]
      %v976 = vld [vmem:[%s396 + $0x8c] sm:$0xf]
      %v977 = vld [vmem:[%s396 + $0x90] sm:$0x1]
      %v1015 = vunpack.c.l.b16 %v941
      %v1016 = vunpack.c.l.b16 %v942
      %v1017 = vunpack.c.l.b16 %v943
      %v1018 = vunpack.c.l.b16 %v944
      %v1019 = vunpack.c.l.b16 %v945
      %v1020 = vunpack.c.l.b16 %v946
      %v1021 = vunpack.c.l.b16 %v947
      %v1022 = vunpack.c.l.b16 %v948
      %v1023 = vunpack.c.l.b16 %v949
      %v1024 = vunpack.c.l.b16 %v950
      %v1025 = vunpack.c.l.b16 %v951
      %v1026 = vunpack.c.l.b16 %v952
      %v1027 = vunpack.c.l.b16 %v953
      %v1028 = vunpack.c.l.b16 %v954
      %v1029 = vunpack.c.l.b16 %v955
      %v1030 = vunpack.c.l.b16 %v956
      %v1031 = vunpack.c.l.b16 %v957
      %v1032 = vunpack.c.l.b16 %v958
      %v1033 = vunpack.c.l.b16 %v959
      %v1034 = vunpack.c.l.b16 %v960
      %v1035 = vunpack.c.l.b16 %v961
      %v1036 = vunpack.c.l.b16 %v962
      %v1037 = vunpack.c.l.b16 %v963
      %v1038 = vunpack.c.l.b16 %v964
      %v1039 = vunpack.c.l.b16 %v965
      %v1040 = vunpack.c.l.b16 %v966
      %v1041 = vunpack.c.l.b16 %v967
      %v1042 = vunpack.c.l.b16 %v968
      %v1043 = vunpack.c.l.b16 %v969
      %v1044 = vunpack.c.l.b16 %v970
      %v1045 = vunpack.c.l.b16 %v971
      %v1046 = vunpack.c.l.b16 %v972
      %v1047 = vunpack.c.l.b16 %v973
      %v1048 = vunpack.c.l.b16 %v974
      %v1049 = vunpack.c.l.b16 %v975
      %v1050 = vunpack.c.l.b16 %v976
      %v1051 = vunpack.c.l.b16 %v977
      %v1052 = vpack.c.b16 %v1016, %v1015
      %v1053 = vpack.c.b16 %v1018, %v1017
      %v1054 = vpack.c.b16 %v1020, %v1019
      %v1055 = vpack.c.b16 %v1022, %v1021
      %v1056 = vpack.c.b16 %v1024, %v1023
      %v1057 = vpack.c.b16 %v1026, %v1025
      %v1058 = vpack.c.b16 %v1028, %v1027
      %v1059 = vpack.c.b16 %v1030, %v1029
      %v1060 = vpack.c.b16 %v1032, %v1031
      %v1061 = vpack.c.b16 %v1034, %v1033
      %v1062 = vpack.c.b16 %v1036, %v1035
      %v1063 = vpack.c.b16 %v1038, %v1037
      %v1064 = vpack.c.b16 %v1040, %v1039
      %v1065 = vpack.c.b16 %v1042, %v1041
      %v1066 = vpack.c.b16 %v1044, %v1043
      %v1067 = vpack.c.b16 %v1046, %v1045
      %v1068 = vpack.c.b16 %v1048, %v1047
      %v1069 = vpack.c.b16 %v1050, %v1049
      %v1070 = vpack.c.b16 %v1051, %v1051
      %vm1071 = vcmask 1046528
      %v1072 = vrot.slane %v1052, 1
      %v1073 = vrot.slane %v1053, 1
      %v1074 = vsel %vm1071, %v1072, %v1073
      %v1075 = vrot.slane %v1054, 1
      %v1076 = vsel %vm1071, %v1073, %v1075
      %v1077 = vrot.slane %v1055, 1
      %v1078 = vsel %vm1071, %v1075, %v1077
      %v1079 = vrot.slane %v1056, 1
      %v1080 = vsel %vm1071, %v1077, %v1079
      %v1081 = vrot.slane %v1057, 1
      %v1082 = vsel %vm1071, %v1079, %v1081
      %v1083 = vrot.slane %v1058, 1
      %v1084 = vsel %vm1071, %v1081, %v1083
      %v1085 = vrot.slane %v1059, 1
      %v1086 = vsel %vm1071, %v1083, %v1085
      %v1087 = vrot.slane %v1060, 1
      %v1088 = vsel %vm1071, %v1085, %v1087
      %v1089 = vrot.slane %v1061, 1
      %v1090 = vsel %vm1071, %v1087, %v1089
      %v1091 = vrot.slane %v1062, 1
      %v1092 = vsel %vm1071, %v1089, %v1091
      %v1093 = vrot.slane %v1063, 1
      %v1094 = vsel %vm1071, %v1091, %v1093
      %v1095 = vrot.slane %v1064, 1
      %v1096 = vsel %vm1071, %v1093, %v1095
      %v1097 = vrot.slane %v1065, 1
      %v1098 = vsel %vm1071, %v1095, %v1097
      %v1099 = vrot.slane %v1066, 1
      %v1100 = vsel %vm1071, %v1097, %v1099
      %v1101 = vrot.slane %v1067, 1
      %v1102 = vsel %vm1071, %v1099, %v1101
      %v1103 = vrot.slane %v1068, 1
      %v1104 = vsel %vm1071, %v1101, %v1103
      %v1105 = vrot.slane %v1069, 1
      %v1106 = vsel %vm1071, %v1103, %v1105
      %v1107 = vrot.slane %v1070, 1
      %v1108 = vsel %vm1071, %v1105, %v1107
      %1109 = vrot.lane.b32.xlu0 %v1074, 64
      %v1110 = vpop.permute.xlu0 %1109
      %1111 = vrot.lane.b32.xlu0 %v1076, 64
      %v1112 = vpop.permute.xlu0 %1111
      %1113 = vrot.lane.b32.xlu0 %v1078, 64
      %v1114 = vpop.permute.xlu0 %1113
      %1115 = vrot.lane.b32.xlu0 %v1080, 64
      %v1116 = vpop.permute.xlu0 %1115
      %1117 = vrot.lane.b32.xlu0 %v1082, 64
      %v1118 = vpop.permute.xlu0 %1117
      %1119 = vrot.lane.b32.xlu0 %v1084, 64
      %v1120 = vpop.permute.xlu0 %1119
      %1121 = vrot.lane.b32.xlu0 %v1086, 64
      %v1122 = vpop.permute.xlu0 %1121
      %1123 = vrot.lane.b32.xlu0 %v1088, 64
      %v1124 = vpop.permute.xlu0 %1123
      %1125 = vrot.lane.b32.xlu0 %v1090, 64
      %v1126 = vpop.permute.xlu0 %1125
      %1127 = vrot.lane.b32.xlu0 %v1092, 64
      %v1128 = vpop.permute.xlu0 %1127
      %1129 = vrot.lane.b32.xlu0 %v1094, 64
      %v1130 = vpop.permute.xlu0 %1129
      %1131 = vrot.lane.b32.xlu0 %v1096, 64
      %v1132 = vpop.permute.xlu0 %1131
      %1133 = vrot.lane.b32.xlu0 %v1098, 64
      %v1134 = vpop.permute.xlu0 %1133
      %1135 = vrot.lane.b32.xlu0 %v1100, 64
      %v1136 = vpop.permute.xlu0 %1135
      %1137 = vrot.lane.b32.xlu0 %v1102, 64
      %v1138 = vpop.permute.xlu0 %1137
      %1139 = vrot.lane.b32.xlu0 %v1104, 64
      %v1140 = vpop.permute.xlu0 %1139
      %1141 = vrot.lane.b32.xlu0 %v1106, 64
      %v1142 = vpop.permute.xlu0 %1141
      %1143 = vrot.lane.b32.xlu0 %v1108, 64
      %v1144 = vpop.permute.xlu0 %1143
      %vm1163 = vcmask 785920
      %1164 = vst.msk [vmem:[#allocation2] sm:$0xff] %vm1163, %v1110
      %1165 = vst.msk [vmem:[#allocation2 + $0x18] sm:$0xff] %vm1163, %v1112
      %1166 = vst.msk [vmem:[#allocation2 + $0x30] sm:$0xff] %vm1163, %v1114
      %1167 = vst.msk [vmem:[#allocation2 + $0x48] sm:$0xff] %vm1163, %v1116
      %1168 = vst.msk [vmem:[#allocation2 + $0x60] sm:$0xff] %vm1163, %v1118
      %1169 = vst.msk [vmem:[#allocation2 + $0x78] sm:$0xff] %vm1163, %v1120
      %1170 = vst.msk [vmem:[#allocation2 + $0x90] sm:$0xff] %vm1163, %v1122
      %1171 = vst.msk [vmem:[#allocation2 + $0xa8] sm:$0xff] %vm1163, %v1124
      %1172 = vst.msk [vmem:[#allocation2 + $0xc0] sm:$0xff] %vm1163, %v1126
      %1173 = vst.msk [vmem:[#allocation2 + $0xd8] sm:$0xff] %vm1163, %v1128
      %1174 = vst.msk [vmem:[#allocation2 + $0xf0] sm:$0xff] %vm1163, %v1130
      %1175 = vst.msk [vmem:[#allocation2 + $0x108] sm:$0xff] %vm1163, %v1132
      %1176 = vst.msk [vmem:[#allocation2 + $0x120] sm:$0xff] %vm1163, %v1134
      %1177 = vst.msk [vmem:[#allocation2 + $0x138] sm:$0xff] %vm1163, %v1136
      %1178 = vst.msk [vmem:[#allocation2 + $0x150] sm:$0xff] %vm1163, %v1138
      %1179 = vst.msk [vmem:[#allocation2 + $0x168] sm:$0xff] %vm1163, %v1140
      %1180 = vst.msk [vmem:[#allocation2 + $0x180] sm:$0xff] %vm1163, %v1142
      %1181 = vst.msk [vmem:[#allocation2 + $0x198] sm:$0xff] %vm1163, %v1144
      %v1182 = vld [vmem:[%s396 + $0x8] sm:$0xe]
      %v1183 = vld [vmem:[%s396 + $0xc] sm:$0xf]
      %v1184 = vld [vmem:[%s396 + $0x10] sm:$0xf]
      %v1185 = vld [vmem:[%s396 + $0x14] sm:$0xf]
      %v1186 = vld [vmem:[%s396 + $0x18] sm:$0xf]
      %v1187 = vld [vmem:[%s396 + $0x1c] sm:$0xf]
      %v1188 = vld [vmem:[%s396 + $0x20] sm:$0xf]
      %v1189 = vld [vmem:[%s396 + $0x24] sm:$0xf]
      %v1190 = vld [vmem:[%s396 + $0x28] sm:$0xf]
      %v1191 = vld [vmem:[%s396 + $0x2c] sm:$0xf]
      %v1192 = vld [vmem:[%s396 + $0x30] sm:$0xf]
      %v1193 = vld [vmem:[%s396 + $0x34] sm:$0xf]
      %v1194 = vld [vmem:[%s396 + $0x38] sm:$0xf]
      %v1195 = vld [vmem:[%s396 + $0x3c] sm:$0xf]
      %v1196 = vld [vmem:[%s396 + $0x40] sm:$0xf]
      %v1197 = vld [vmem:[%s396 + $0x44] sm:$0xf]
      %v1198 = vld [vmem:[%s396 + $0x48] sm:$0xf]
      %v1199 = vld [vmem:[%s396 + $0x4c] sm:$0xf]
      %v1200 = vld [vmem:[%s396 + $0x50] sm:$0xf]
      %v1201 = vld [vmem:[%s396 + $0x54] sm:$0xf]
      %v1202 = vld [vmem:[%s396 + $0x58] sm:$0xf]
      %v1203 = vld [vmem:[%s396 + $0x5c] sm:$0xf]
      %v1204 = vld [vmem:[%s396 + $0x60] sm:$0xf]
      %v1205 = vld [vmem:[%s396 + $0x64] sm:$0xf]
      %v1206 = vld [vmem:[%s396 + $0x68] sm:$0xf]
      %v1207 = vld [vmem:[%s396 + $0x6c] sm:$0xf]
      %v1208 = vld [vmem:[%s396 + $0x70] sm:$0xf]
      %v1209 = vld [vmem:[%s396 + $0x74] sm:$0xf]
      %v1210 = vld [vmem:[%s396 + $0x78] sm:$0xf]
      %v1211 = vld [vmem:[%s396 + $0x7c] sm:$0xf]
      %v1212 = vld [vmem:[%s396 + $0x80] sm:$0xf]
      %v1213 = vld [vmem:[%s396 + $0x84] sm:$0xf]
      %v1214 = vld [vmem:[%s396 + $0x88] sm:$0xf]
      %v1215 = vld [vmem:[%s396 + $0x8c] sm:$0xf]
      %v1216 = vld [vmem:[%s396 + $0x90] sm:$0xf]
      %v1217 = vld [vmem:[%s396 + $0x94] sm:$0xf]
      %v1218 = vld [vmem:[%s396 + $0x98] sm:$0x1]
      %v1256 = vunpack.c.l.b16 %v1182
      %v1257 = vunpack.c.l.b16 %v1183
      %v1258 = vunpack.c.l.b16 %v1184
      %v1259 = vunpack.c.l.b16 %v1185
      %v1260 = vunpack.c.l.b16 %v1186
      %v1261 = vunpack.c.l.b16 %v1187
      %v1262 = vunpack.c.l.b16 %v1188
      %v1263 = vunpack.c.l.b16 %v1189
      %v1264 = vunpack.c.l.b16 %v1190
      %v1265 = vunpack.c.l.b16 %v1191
      %v1266 = vunpack.c.l.b16 %v1192
      %v1267 = vunpack.c.l.b16 %v1193
      %v1268 = vunpack.c.l.b16 %v1194
      %v1269 = vunpack.c.l.b16 %v1195
      %v1270 = vunpack.c.l.b16 %v1196
      %v1271 = vunpack.c.l.b16 %v1197
      %v1272 = vunpack.c.l.b16 %v1198
      %v1273 = vunpack.c.l.b16 %v1199
      %v1274 = vunpack.c.l.b16 %v1200
      %v1275 = vunpack.c.l.b16 %v1201
      %v1276 = vunpack.c.l.b16 %v1202
      %v1277 = vunpack.c.l.b16 %v1203
      %v1278 = vunpack.c.l.b16 %v1204
      %v1279 = vunpack.c.l.b16 %v1205
      %v1280 = vunpack.c.l.b16 %v1206
      %v1281 = vunpack.c.l.b16 %v1207
      %v1282 = vunpack.c.l.b16 %v1208
      %v1283 = vunpack.c.l.b16 %v1209
      %v1284 = vunpack.c.l.b16 %v1210
      %v1285 = vunpack.c.l.b16 %v1211
      %v1286 = vunpack.c.l.b16 %v1212
      %v1287 = vunpack.c.l.b16 %v1213
      %v1288 = vunpack.c.l.b16 %v1214
      %v1289 = vunpack.c.l.b16 %v1215
      %v1290 = vunpack.c.l.b16 %v1216
      %v1291 = vunpack.c.l.b16 %v1217
      %v1292 = vunpack.c.l.b16 %v1218
      %v1293 = vpack.c.b16 %v1257, %v1256
      %v1294 = vpack.c.b16 %v1259, %v1258
      %v1295 = vpack.c.b16 %v1261, %v1260
      %v1296 = vpack.c.b16 %v1263, %v1262
      %v1297 = vpack.c.b16 %v1265, %v1264
      %v1298 = vpack.c.b16 %v1267, %v1266
      %v1299 = vpack.c.b16 %v1269, %v1268
      %v1300 = vpack.c.b16 %v1271, %v1270
      %v1301 = vpack.c.b16 %v1273, %v1272
      %v1302 = vpack.c.b16 %v1275, %v1274
      %v1303 = vpack.c.b16 %v1277, %v1276
      %v1304 = vpack.c.b16 %v1279, %v1278
      %v1305 = vpack.c.b16 %v1281, %v1280
      %v1306 = vpack.c.b16 %v1283, %v1282
      %v1307 = vpack.c.b16 %v1285, %v1284
      %v1308 = vpack.c.b16 %v1287, %v1286
      %v1309 = vpack.c.b16 %v1289, %v1288
      %v1310 = vpack.c.b16 %v1291, %v1290
      %v1311 = vpack.c.b16 %v1292, %v1292
      %v1312 = vrot.slane %v1293, 1
      %v1313 = vrot.slane %v1294, 1
      %v1314 = vsel %vm1071, %v1312, %v1313
      %v1315 = vrot.slane %v1295, 1
      %v1316 = vsel %vm1071, %v1313, %v1315
      %v1317 = vrot.slane %v1296, 1
      %v1318 = vsel %vm1071, %v1315, %v1317
      %v1319 = vrot.slane %v1297, 1
      %v1320 = vsel %vm1071, %v1317, %v1319
      %v1321 = vrot.slane %v1298, 1
      %v1322 = vsel %vm1071, %v1319, %v1321
      %v1323 = vrot.slane %v1299, 1
      %v1324 = vsel %vm1071, %v1321, %v1323
      %v1325 = vrot.slane %v1300, 1
      %v1326 = vsel %vm1071, %v1323, %v1325
      %v1327 = vrot.slane %v1301, 1
      %v1328 = vsel %vm1071, %v1325, %v1327
      %v1329 = vrot.slane %v1302, 1
      %v1330 = vsel %vm1071, %v1327, %v1329
      %v1331 = vrot.slane %v1303, 1
      %v1332 = vsel %vm1071, %v1329, %v1331
      %v1333 = vrot.slane %v1304, 1
      %v1334 = vsel %vm1071, %v1331, %v1333
      %v1335 = vrot.slane %v1305, 1
      %v1336 = vsel %vm1071, %v1333, %v1335
      %v1337 = vrot.slane %v1306, 1
      %v1338 = vsel %vm1071, %v1335, %v1337
      %v1339 = vrot.slane %v1307, 1
      %v1340 = vsel %vm1071, %v1337, %v1339
      %v1341 = vrot.slane %v1308, 1
      %v1342 = vsel %vm1071, %v1339, %v1341
      %v1343 = vrot.slane %v1309, 1
      %v1344 = vsel %vm1071, %v1341, %v1343
      %v1345 = vrot.slane %v1310, 1
      %v1346 = vsel %vm1071, %v1343, %v1345
      %v1347 = vrot.slane %v1311, 1
      %v1348 = vsel %vm1071, %v1345, %v1347
      %1349 = vrot.lane.b32.xlu0 %v1314, 96
      %v1350 = vpop.permute.xlu0 %1349
      %1351 = vrot.lane.b32.xlu0 %v1316, 96
      %v1352 = vpop.permute.xlu0 %1351
      %1353 = vrot.lane.b32.xlu0 %v1318, 96
      %v1354 = vpop.permute.xlu0 %1353
      %1355 = vrot.lane.b32.xlu0 %v1320, 96
      %v1356 = vpop.permute.xlu0 %1355
      %1357 = vrot.lane.b32.xlu0 %v1322, 96
      %v1358 = vpop.permute.xlu0 %1357
      %1359 = vrot.lane.b32.xlu0 %v1324, 96
      %v1360 = vpop.permute.xlu0 %1359
      %1361 = vrot.lane.b32.xlu0 %v1326, 96
      %v1362 = vpop.permute.xlu0 %1361
      %1363 = vrot.lane.b32.xlu0 %v1328, 96
      %v1364 = vpop.permute.xlu0 %1363
      %1365 = vrot.lane.b32.xlu0 %v1330, 96
      %v1366 = vpop.permute.xlu0 %1365
      %1367 = vrot.lane.b32.xlu0 %v1332, 96
      %v1368 = vpop.permute.xlu0 %1367
      %1369 = vrot.lane.b32.xlu0 %v1334, 96
      %v1370 = vpop.permute.xlu0 %1369
      %1371 = vrot.lane.b32.xlu0 %v1336, 96
      %v1372 = vpop.permute.xlu0 %1371
      %1373 = vrot.lane.b32.xlu0 %v1338, 96
      %v1374 = vpop.permute.xlu0 %1373
      %1375 = vrot.lane.b32.xlu0 %v1340, 96
      %v1376 = vpop.permute.xlu0 %1375
      %1377 = vrot.lane.b32.xlu0 %v1342, 96
      %v1378 = vpop.permute.xlu0 %1377
      %1379 = vrot.lane.b32.xlu0 %v1344, 96
      %v1380 = vpop.permute.xlu0 %1379
      %1381 = vrot.lane.b32.xlu0 %v1346, 96
      %v1382 = vpop.permute.xlu0 %1381
      %1383 = vrot.lane.b32.xlu0 %v1348, 96
      %v1384 = vpop.permute.xlu0 %1383
      %vm1403 = vcmask 1048320
      %1404 = vst.msk [vmem:[#allocation2] sm:$0xff] %vm1403, %v1350
      %1405 = vst.msk [vmem:[#allocation2 + $0x18] sm:$0xff] %vm1403, %v1352
      %1406 = vst.msk [vmem:[#allocation2 + $0x30] sm:$0xff] %vm1403, %v1354
      %1407 = vst.msk [vmem:[#allocation2 + $0x48] sm:$0xff] %vm1403, %v1356
      %1408 = vst.msk [vmem:[#allocation2 + $0x60] sm:$0xff] %vm1403, %v1358
      %1409 = vst.msk [vmem:[#allocation2 + $0x78] sm:$0xff] %vm1403, %v1360
      %1410 = vst.msk [vmem:[#allocation2 + $0x90] sm:$0xff] %vm1403, %v1362
      %1411 = vst.msk [vmem:[#allocation2 + $0xa8] sm:$0xff] %vm1403, %v1364
      %1412 = vst.msk [vmem:[#allocation2 + $0xc0] sm:$0xff] %vm1403, %v1366
      %1413 = vst.msk [vmem:[#allocation2 + $0xd8] sm:$0xff] %vm1403, %v1368
      %1414 = vst.msk [vmem:[#allocation2 + $0xf0] sm:$0xff] %vm1403, %v1370
      %1415 = vst.msk [vmem:[#allocation2 + $0x108] sm:$0xff] %vm1403, %v1372
      %1416 = vst.msk [vmem:[#allocation2 + $0x120] sm:$0xff] %vm1403, %v1374
      %1417 = vst.msk [vmem:[#allocation2 + $0x138] sm:$0xff] %vm1403, %v1376
      %1418 = vst.msk [vmem:[#allocation2 + $0x150] sm:$0xff] %vm1403, %v1378
      %1419 = vst.msk [vmem:[#allocation2 + $0x168] sm:$0xff] %vm1403, %v1380
      %1420 = vst.msk [vmem:[#allocation2 + $0x180] sm:$0xff] %vm1403, %v1382
      %1421 = vst.msk [vmem:[#allocation2 + $0x198] sm:$0xff] %vm1403, %v1384
      %v1422 = vld [vmem:[%s396 + $0x8] sm:$0xe]
      %v1423 = vld [vmem:[%s396 + $0xc] sm:$0xf]
      %v1424 = vld [vmem:[%s396 + $0x10] sm:$0xf]
      %v1425 = vld [vmem:[%s396 + $0x14] sm:$0xf]
      %v1426 = vld [vmem:[%s396 + $0x18] sm:$0xf]
      %v1427 = vld [vmem:[%s396 + $0x1c] sm:$0xf]
      %v1428 = vld [vmem:[%s396 + $0x20] sm:$0xf]
      %v1429 = vld [vmem:[%s396 + $0x24] sm:$0xf]
      %v1430 = vld [vmem:[%s396 + $0x28] sm:$0xf]
      %v1431 = vld [vmem:[%s396 + $0x2c] sm:$0xf]
      %v1432 = vld [vmem:[%s396 + $0x30] sm:$0xf]
      %v1433 = vld [vmem:[%s396 + $0x34] sm:$0xf]
      %v1434 = vld [vmem:[%s396 + $0x38] sm:$0xf]
      %v1435 = vld [vmem:[%s396 + $0x3c] sm:$0xf]
      %v1436 = vld [vmem:[%s396 + $0x40] sm:$0xf]
      %v1437 = vld [vmem:[%s396 + $0x44] sm:$0xf]
      %v1438 = vld [vmem:[%s396 + $0x48] sm:$0xf]
      %v1439 = vld [vmem:[%s396 + $0x4c] sm:$0xf]
      %v1440 = vld [vmem:[%s396 + $0x50] sm:$0xf]
      %v1441 = vld [vmem:[%s396 + $0x54] sm:$0xf]
      %v1442 = vld [vmem:[%s396 + $0x58] sm:$0xf]
      %v1443 = vld [vmem:[%s396 + $0x5c] sm:$0xf]
      %v1444 = vld [vmem:[%s396 + $0x60] sm:$0xf]
      %v1445 = vld [vmem:[%s396 + $0x64] sm:$0xf]
      %v1446 = vld [vmem:[%s396 + $0x68] sm:$0xf]
      %v1447 = vld [vmem:[%s396 + $0x6c] sm:$0xf]
      %v1448 = vld [vmem:[%s396 + $0x70] sm:$0xf]
      %v1449 = vld [vmem:[%s396 + $0x74] sm:$0xf]
      %v1450 = vld [vmem:[%s396 + $0x78] sm:$0xf]
      %v1451 = vld [vmem:[%s396 + $0x7c] sm:$0xf]
      %v1452 = vld [vmem:[%s396 + $0x80] sm:$0xf]
      %v1453 = vld [vmem:[%s396 + $0x84] sm:$0xf]
      %v1454 = vld [vmem:[%s396 + $0x88] sm:$0xf]
      %v1455 = vld [vmem:[%s396 + $0x8c] sm:$0xf]
      %v1456 = vld [vmem:[%s396 + $0x90] sm:$0xf]
      %v1457 = vld [vmem:[%s396 + $0x94] sm:$0xf]
      %v1458 = vld [vmem:[%s396 + $0x98] sm:$0x3]
      %v1496 = vunpack.c.l.b16 %v1422
      %v1497 = vunpack.c.l.b16 %v1423
      %v1498 = vunpack.c.l.b16 %v1424
      %v1499 = vunpack.c.l.b16 %v1425
      %v1500 = vunpack.c.l.b16 %v1426
      %v1501 = vunpack.c.l.b16 %v1427
      %v1502 = vunpack.c.l.b16 %v1428
      %v1503 = vunpack.c.l.b16 %v1429
      %v1504 = vunpack.c.l.b16 %v1430
      %v1505 = vunpack.c.l.b16 %v1431
      %v1506 = vunpack.c.l.b16 %v1432
      %v1507 = vunpack.c.l.b16 %v1433
      %v1508 = vunpack.c.l.b16 %v1434
      %v1509 = vunpack.c.l.b16 %v1435
      %v1510 = vunpack.c.l.b16 %v1436
      %v1511 = vunpack.c.l.b16 %v1437
      %v1512 = vunpack.c.l.b16 %v1438
      %v1513 = vunpack.c.l.b16 %v1439
      %v1514 = vunpack.c.l.b16 %v1440
      %v1515 = vunpack.c.l.b16 %v1441
      %v1516 = vunpack.c.l.b16 %v1442
      %v1517 = vunpack.c.l.b16 %v1443
      %v1518 = vunpack.c.l.b16 %v1444
      %v1519 = vunpack.c.l.b16 %v1445
      %v1520 = vunpack.c.l.b16 %v1446
      %v1521 = vunpack.c.l.b16 %v1447
      %v1522 = vunpack.c.l.b16 %v1448
      %v1523 = vunpack.c.l.b16 %v1449
      %v1524 = vunpack.c.l.b16 %v1450
      %v1525 = vunpack.c.l.b16 %v1451
      %v1526 = vunpack.c.l.b16 %v1452
      %v1527 = vunpack.c.l.b16 %v1453
      %v1528 = vunpack.c.l.b16 %v1454
      %v1529 = vunpack.c.l.b16 %v1455
      %v1530 = vunpack.c.l.b16 %v1456
      %v1531 = vunpack.c.l.b16 %v1457
      %v1532 = vunpack.c.l.b16 %v1458
      %v1533 = vpack.c.b16 %v1497, %v1496
      %v1534 = vpack.c.b16 %v1499, %v1498
      %v1535 = vpack.c.b16 %v1501, %v1500
      %v1536 = vpack.c.b16 %v1503, %v1502
      %v1537 = vpack.c.b16 %v1505, %v1504
      %v1538 = vpack.c.b16 %v1507, %v1506
      %v1539 = vpack.c.b16 %v1509, %v1508
      %v1540 = vpack.c.b16 %v1511, %v1510
      %v1541 = vpack.c.b16 %v1513, %v1512
      %v1542 = vpack.c.b16 %v1515, %v1514
      %v1543 = vpack.c.b16 %v1517, %v1516
      %v1544 = vpack.c.b16 %v1519, %v1518
      %v1545 = vpack.c.b16 %v1521, %v1520
      %v1546 = vpack.c.b16 %v1523, %v1522
      %v1547 = vpack.c.b16 %v1525, %v1524
      %v1548 = vpack.c.b16 %v1527, %v1526
      %v1549 = vpack.c.b16 %v1529, %v1528
      %v1550 = vpack.c.b16 %v1531, %v1530
      %v1551 = vpack.c.b16 %v1532, %v1532
      %vm1552 = vsmask.f32 6400
      %v1554 = vshrl.u32 %v1533, 16
      %v1556 = vrot.slane %v1554, 1
      %v1557 = vshll.u32 %v1533, 16
      %v1559 = vrot.slane %v1557, 2
      %v1560 = vor.u32 %v1556, %v1559
      %v1562 = vshrl.u32 %v1534, 16
      %v1564 = vrot.slane %v1562, 1
      %v1565 = vshll.u32 %v1534, 16
      %v1567 = vrot.slane %v1565, 2
      %v1568 = vor.u32 %v1564, %v1567
      %v1569 = vsel %vm1552, %v1560, %v1568
      %v1571 = vshrl.u32 %v1535, 16
      %v1573 = vrot.slane %v1571, 1
      %v1574 = vshll.u32 %v1535, 16
      %v1576 = vrot.slane %v1574, 2
      %v1577 = vor.u32 %v1573, %v1576
      %v1578 = vsel %vm1552, %v1568, %v1577
      %v1580 = vshrl.u32 %v1536, 16
      %v1582 = vrot.slane %v1580, 1
      %v1583 = vshll.u32 %v1536, 16
      %v1585 = vrot.slane %v1583, 2
      %v1586 = vor.u32 %v1582, %v1585
      %v1587 = vsel %vm1552, %v1577, %v1586
      %v1589 = vshrl.u32 %v1537, 16
      %v1591 = vrot.slane %v1589, 1
      %v1592 = vshll.u32 %v1537, 16
      %v1594 = vrot.slane %v1592, 2
      %v1595 = vor.u32 %v1591, %v1594
      %v1596 = vsel %vm1552, %v1586, %v1595
      %v1598 = vshrl.u32 %v1538, 16
      %v1600 = vrot.slane %v1598, 1
      %v1601 = vshll.u32 %v1538, 16
      %v1603 = vrot.slane %v1601, 2
      %v1604 = vor.u32 %v1600, %v1603
      %v1605 = vsel %vm1552, %v1595, %v1604
      %v1607 = vshrl.u32 %v1539, 16
      %v1609 = vrot.slane %v1607, 1
      %v1610 = vshll.u32 %v1539, 16
      %v1612 = vrot.slane %v1610, 2
      %v1613 = vor.u32 %v1609, %v1612
      %v1614 = vsel %vm1552, %v1604, %v1613
      %v1616 = vshrl.u32 %v1540, 16
      %v1618 = vrot.slane %v1616, 1
      %v1619 = vshll.u32 %v1540, 16
      %v1621 = vrot.slane %v1619, 2
      %v1622 = vor.u32 %v1618, %v1621
      %v1623 = vsel %vm1552, %v1613, %v1622
      %v1625 = vshrl.u32 %v1541, 16
      %v1627 = vrot.slane %v1625, 1
      %v1628 = vshll.u32 %v1541, 16
      %v1630 = vrot.slane %v1628, 2
      %v1631 = vor.u32 %v1627, %v1630
      %v1632 = vsel %vm1552, %v1622, %v1631
      %v1634 = vshrl.u32 %v1542, 16
      %v1636 = vrot.slane %v1634, 1
      %v1637 = vshll.u32 %v1542, 16
      %v1639 = vrot.slane %v1637, 2
      %v1640 = vor.u32 %v1636, %v1639
      %v1641 = vsel %vm1552, %v1631, %v1640
      %v1643 = vshrl.u32 %v1543, 16
      %v1645 = vrot.slane %v1643, 1
      %v1646 = vshll.u32 %v1543, 16
      %v1648 = vrot.slane %v1646, 2
      %v1649 = vor.u32 %v1645, %v1648
      %v1650 = vsel %vm1552, %v1640, %v1649
      %v1652 = vshrl.u32 %v1544, 16
      %v1654 = vrot.slane %v1652, 1
      %v1655 = vshll.u32 %v1544, 16
      %v1657 = vrot.slane %v1655, 2
      %v1658 = vor.u32 %v1654, %v1657
      %v1659 = vsel %vm1552, %v1649, %v1658
      %v1661 = vshrl.u32 %v1545, 16
      %v1663 = vrot.slane %v1661, 1
      %v1664 = vshll.u32 %v1545, 16
      %v1666 = vrot.slane %v1664, 2
      %v1667 = vor.u32 %v1663, %v1666
      %v1668 = vsel %vm1552, %v1658, %v1667
      %v1670 = vshrl.u32 %v1546, 16
      %v1672 = vrot.slane %v1670, 1
      %v1673 = vshll.u32 %v1546, 16
      %v1675 = vrot.slane %v1673, 2
      %v1676 = vor.u32 %v1672, %v1675
      %v1677 = vsel %vm1552, %v1667, %v1676
      %v1679 = vshrl.u32 %v1547, 16
      %v1681 = vrot.slane %v1679, 1
      %v1682 = vshll.u32 %v1547, 16
      %v1684 = vrot.slane %v1682, 2
      %v1685 = vor.u32 %v1681, %v1684
      %v1686 = vsel %vm1552, %v1676, %v1685
      %v1688 = vshrl.u32 %v1548, 16
      %v1690 = vrot.slane %v1688, 1
      %v1691 = vshll.u32 %v1548, 16
      %v1693 = vrot.slane %v1691, 2
      %v1694 = vor.u32 %v1690, %v1693
      %v1695 = vsel %vm1552, %v1685, %v1694
      %v1697 = vshrl.u32 %v1549, 16
      %v1699 = vrot.slane %v1697, 1
      %v1700 = vshll.u32 %v1549, 16
      %v1702 = vrot.slane %v1700, 2
      %v1703 = vor.u32 %v1699, %v1702
      %v1704 = vsel %vm1552, %v1694, %v1703
      %v1706 = vshrl.u32 %v1550, 16
      %v1708 = vrot.slane %v1706, 1
      %v1709 = vshll.u32 %v1550, 16
      %v1711 = vrot.slane %v1709, 2
      %v1712 = vor.u32 %v1708, %v1711
      %v1713 = vsel %vm1552, %v1703, %v1712
      %v1715 = vshrl.u32 %v1551, 16
      %v1717 = vrot.slane %v1715, 1
      %v1718 = vshll.u32 %v1551, 16
      %v1720 = vrot.slane %v1718, 2
      %v1721 = vor.u32 %v1717, %v1720
      %v1722 = vsel %vm1552, %v1712, %v1721
      %1741 = vst.msk [vmem:[#allocation2 + $0x8] sm:$0xff] %vm570, %v1569
      %1742 = vst.msk [vmem:[#allocation2 + $0x20] sm:$0xff] %vm570, %v1578
      %1743 = vst.msk [vmem:[#allocation2 + $0x38] sm:$0xff] %vm570, %v1587
      %1744 = vst.msk [vmem:[#allocation2 + $0x50] sm:$0xff] %vm570, %v1596
      %1745 = vst.msk [vmem:[#allocation2 + $0x68] sm:$0xff] %vm570, %v1605
      %1746 = vst.msk [vmem:[#allocation2 + $0x80] sm:$0xff] %vm570, %v1614
      %1747 = vst.msk [vmem:[#allocation2 + $0x98] sm:$0xff] %vm570, %v1623
      %1748 = vst.msk [vmem:[#allocation2 + $0xb0] sm:$0xff] %vm570, %v1632
      %1749 = vst.msk [vmem:[#allocation2 + $0xc8] sm:$0xff] %vm570, %v1641
      %1750 = vst.msk [vmem:[#allocation2 + $0xe0] sm:$0xff] %vm570, %v1650
      %1751 = vst.msk [vmem:[#allocation2 + $0xf8] sm:$0xff] %vm570, %v1659
      %1752 = vst.msk [vmem:[#allocation2 + $0x110] sm:$0xff] %vm570, %v1668
      %1753 = vst.msk [vmem:[#allocation2 + $0x128] sm:$0xff] %vm570, %v1677
      %1754 = vst.msk [vmem:[#allocation2 + $0x140] sm:$0xff] %vm570, %v1686
      %1755 = vst.msk [vmem:[#allocation2 + $0x158] sm:$0xff] %vm570, %v1695
      %1756 = vst.msk [vmem:[#allocation2 + $0x170] sm:$0xff] %vm570, %v1704
      %1757 = vst.msk [vmem:[#allocation2 + $0x188] sm:$0xff] %vm570, %v1713
      %1758 = vst.msk [vmem:[#allocation2 + $0x1a0] sm:$0xff] %vm570, %v1722
      %v1759 = vld [vmem:[%s396 + $0x8] sm:$0xc]
      %v1760 = vld [vmem:[%s396 + $0xc] sm:$0xf]
      %v1761 = vld [vmem:[%s396 + $0x10] sm:$0xf]
      %v1762 = vld [vmem:[%s396 + $0x14] sm:$0xf]
      %v1763 = vld [vmem:[%s396 + $0x18] sm:$0xf]
      %v1764 = vld [vmem:[%s396 + $0x1c] sm:$0xf]
      %v1765 = vld [vmem:[%s396 + $0x20] sm:$0xf]
      %v1766 = vld [vmem:[%s396 + $0x24] sm:$0xf]
      %v1767 = vld [vmem:[%s396 + $0x28] sm:$0xf]
      %v1768 = vld [vmem:[%s396 + $0x2c] sm:$0xf]
      %v1769 = vld [vmem:[%s396 + $0x30] sm:$0xf]
      %v1770 = vld [vmem:[%s396 + $0x34] sm:$0xf]
      %v1771 = vld [vmem:[%s396 + $0x38] sm:$0xf]
      %v1772 = vld [vmem:[%s396 + $0x3c] sm:$0xf]
      %v1773 = vld [vmem:[%s396 + $0x40] sm:$0xf]
      %v1774 = vld [vmem:[%s396 + $0x44] sm:$0xf]
      %v1775 = vld [vmem:[%s396 + $0x48] sm:$0xf]
      %v1776 = vld [vmem:[%s396 + $0x4c] sm:$0xf]
      %v1777 = vld [vmem:[%s396 + $0x50] sm:$0xf]
      %v1778 = vld [vmem:[%s396 + $0x54] sm:$0xf]
      %v1779 = vld [vmem:[%s396 + $0x58] sm:$0xf]
      %v1780 = vld [vmem:[%s396 + $0x5c] sm:$0xf]
      %v1781 = vld [vmem:[%s396 + $0x60] sm:$0xf]
      %v1782 = vld [vmem:[%s396 + $0x64] sm:$0xf]
      %v1783 = vld [vmem:[%s396 + $0x68] sm:$0xf]
      %v1784 = vld [vmem:[%s396 + $0x6c] sm:$0xf]
      %v1785 = vld [vmem:[%s396 + $0x70] sm:$0xf]
      %v1786 = vld [vmem:[%s396 + $0x74] sm:$0xf]
      %v1787 = vld [vmem:[%s396 + $0x78] sm:$0xf]
      %v1788 = vld [vmem:[%s396 + $0x7c] sm:$0xf]
      %v1789 = vld [vmem:[%s396 + $0x80] sm:$0xf]
      %v1790 = vld [vmem:[%s396 + $0x84] sm:$0xf]
      %v1791 = vld [vmem:[%s396 + $0x88] sm:$0xf]
      %v1792 = vld [vmem:[%s396 + $0x8c] sm:$0xf]
      %v1793 = vld [vmem:[%s396 + $0x90] sm:$0xf]
      %v1794 = vld [vmem:[%s396 + $0x94] sm:$0xf]
      %v1795 = vld [vmem:[%s396 + $0x98] sm:$0x3]
      %v1833 = vunpack.c.l.b16 %v1759
      %v1834 = vunpack.c.l.b16 %v1760
      %v1835 = vunpack.c.l.b16 %v1761
      %v1836 = vunpack.c.l.b16 %v1762
      %v1837 = vunpack.c.l.b16 %v1763
      %v1838 = vunpack.c.l.b16 %v1764
      %v1839 = vunpack.c.l.b16 %v1765
      %v1840 = vunpack.c.l.b16 %v1766
      %v1841 = vunpack.c.l.b16 %v1767
      %v1842 = vunpack.c.l.b16 %v1768
      %v1843 = vunpack.c.l.b16 %v1769
      %v1844 = vunpack.c.l.b16 %v1770
      %v1845 = vunpack.c.l.b16 %v1771
      %v1846 = vunpack.c.l.b16 %v1772
      %v1847 = vunpack.c.l.b16 %v1773
      %v1848 = vunpack.c.l.b16 %v1774
      %v1849 = vunpack.c.l.b16 %v1775
      %v1850 = vunpack.c.l.b16 %v1776
      %v1851 = vunpack.c.l.b16 %v1777
      %v1852 = vunpack.c.l.b16 %v1778
      %v1853 = vunpack.c.l.b16 %v1779
      %v1854 = vunpack.c.l.b16 %v1780
      %v1855 = vunpack.c.l.b16 %v1781
      %v1856 = vunpack.c.l.b16 %v1782
      %v1857 = vunpack.c.l.b16 %v1783
      %v1858 = vunpack.c.l.b16 %v1784
      %v1859 = vunpack.c.l.b16 %v1785
      %v1860 = vunpack.c.l.b16 %v1786
      %v1861 = vunpack.c.l.b16 %v1787
      %v1862 = vunpack.c.l.b16 %v1788
      %v1863 = vunpack.c.l.b16 %v1789
      %v1864 = vunpack.c.l.b16 %v1790
      %v1865 = vunpack.c.l.b16 %v1791
      %v1866 = vunpack.c.l.b16 %v1792
      %v1867 = vunpack.c.l.b16 %v1793
      %v1868 = vunpack.c.l.b16 %v1794
      %v1869 = vunpack.c.l.b16 %v1795
      %v1870 = vpack.c.b16 %v1834, %v1833
      %v1871 = vpack.c.b16 %v1836, %v1835
      %v1872 = vpack.c.b16 %v1838, %v1837
      %v1873 = vpack.c.b16 %v1840, %v1839
      %v1874 = vpack.c.b16 %v1842, %v1841
      %v1875 = vpack.c.b16 %v1844, %v1843
      %v1876 = vpack.c.b16 %v1846, %v1845
      %v1877 = vpack.c.b16 %v1848, %v1847
      %v1878 = vpack.c.b16 %v1850, %v1849
      %v1879 = vpack.c.b16 %v1852, %v1851
      %v1880 = vpack.c.b16 %v1854, %v1853
      %v1881 = vpack.c.b16 %v1856, %v1855
      %v1882 = vpack.c.b16 %v1858, %v1857
      %v1883 = vpack.c.b16 %v1860, %v1859
      %v1884 = vpack.c.b16 %v1862, %v1861
      %v1885 = vpack.c.b16 %v1864, %v1863
      %v1886 = vpack.c.b16 %v1866, %v1865
      %v1887 = vpack.c.b16 %v1868, %v1867
      %v1888 = vpack.c.b16 %v1869, %v1869
      %vm1889 = vcmask 1045504
      %v1890 = vrot.slane %v1870, 2
      %v1891 = vrot.slane %v1871, 2
      %v1892 = vsel %vm1889, %v1890, %v1891
      %v1893 = vrot.slane %v1872, 2
      %v1894 = vsel %vm1889, %v1891, %v1893
      %v1895 = vrot.slane %v1873, 2
      %v1896 = vsel %vm1889, %v1893, %v1895
      %v1897 = vrot.slane %v1874, 2
      %v1898 = vsel %vm1889, %v1895, %v1897
      %v1899 = vrot.slane %v1875, 2
      %v1900 = vsel %vm1889, %v1897, %v1899
      %v1901 = vrot.slane %v1876, 2
      %v1902 = vsel %vm1889, %v1899, %v1901
      %v1903 = vrot.slane %v1877, 2
      %v1904 = vsel %vm1889, %v1901, %v1903
      %v1905 = vrot.slane %v1878, 2
      %v1906 = vsel %vm1889, %v1903, %v1905
      %v1907 = vrot.slane %v1879, 2
      %v1908 = vsel %vm1889, %v1905, %v1907
      %v1909 = vrot.slane %v1880, 2
      %v1910 = vsel %vm1889, %v1907, %v1909
      %v1911 = vrot.slane %v1881, 2
      %v1912 = vsel %vm1889, %v1909, %v1911
      %v1913 = vrot.slane %v1882, 2
      %v1914 = vsel %vm1889, %v1911, %v1913
      %v1915 = vrot.slane %v1883, 2
      %v1916 = vsel %vm1889, %v1913, %v1915
      %v1917 = vrot.slane %v1884, 2
      %v1918 = vsel %vm1889, %v1915, %v1917
      %v1919 = vrot.slane %v1885, 2
      %v1920 = vsel %vm1889, %v1917, %v1919
      %v1921 = vrot.slane %v1886, 2
      %v1922 = vsel %vm1889, %v1919, %v1921
      %v1923 = vrot.slane %v1887, 2
      %v1924 = vsel %vm1889, %v1921, %v1923
      %v1925 = vrot.slane %v1888, 2
      %v1926 = vsel %vm1889, %v1923, %v1925
      %1927 = vrot.lane.b32.xlu0 %v1892, 32
      %v1928 = vpop.permute.xlu0 %1927
      %1929 = vrot.lane.b32.xlu0 %v1894, 32
      %v1930 = vpop.permute.xlu0 %1929
      %1931 = vrot.lane.b32.xlu0 %v1896, 32
      %v1932 = vpop.permute.xlu0 %1931
      %1933 = vrot.lane.b32.xlu0 %v1898, 32
      %v1934 = vpop.permute.xlu0 %1933
      %1935 = vrot.lane.b32.xlu0 %v1900, 32
      %v1936 = vpop.permute.xlu0 %1935
      %1937 = vrot.lane.b32.xlu0 %v1902, 32
      %v1938 = vpop.permute.xlu0 %1937
      %1939 = vrot.lane.b32.xlu0 %v1904, 32
      %v1940 = vpop.permute.xlu0 %1939
      %1941 = vrot.lane.b32.xlu0 %v1906, 32
      %v1942 = vpop.permute.xlu0 %1941
      %1943 = vrot.lane.b32.xlu0 %v1908, 32
      %v1944 = vpop.permute.xlu0 %1943
      %1945 = vrot.lane.b32.xlu0 %v1910, 32
      %v1946 = vpop.permute.xlu0 %1945
      %1947 = vrot.lane.b32.xlu0 %v1912, 32
      %v1948 = vpop.permute.xlu0 %1947
      %1949 = vrot.lane.b32.xlu0 %v1914, 32
      %v1950 = vpop.permute.xlu0 %1949
      %1951 = vrot.lane.b32.xlu0 %v1916, 32
      %v1952 = vpop.permute.xlu0 %1951
      %1953 = vrot.lane.b32.xlu0 %v1918, 32
      %v1954 = vpop.permute.xlu0 %1953
      %1955 = vrot.lane.b32.xlu0 %v1920, 32
      %v1956 = vpop.permute.xlu0 %1955
      %1957 = vrot.lane.b32.xlu0 %v1922, 32
      %v1958 = vpop.permute.xlu0 %1957
      %1959 = vrot.lane.b32.xlu0 %v1924, 32
      %v1960 = vpop.permute.xlu0 %1959
      %1961 = vrot.lane.b32.xlu0 %v1926, 32
      %v1962 = vpop.permute.xlu0 %1961
      %1981 = vst.msk [vmem:[#allocation2 + $0x8] sm:$0xff] %vm922, %v1928
      %1982 = vst.msk [vmem:[#allocation2 + $0x20] sm:$0xff] %vm922, %v1930
      %1983 = vst.msk [vmem:[#allocation2 + $0x38] sm:$0xff] %vm922, %v1932
      %1984 = vst.msk [vmem:[#allocation2 + $0x50] sm:$0xff] %vm922, %v1934
      %1985 = vst.msk [vmem:[#allocation2 + $0x68] sm:$0xff] %vm922, %v1936
      %1986 = vst.msk [vmem:[#allocation2 + $0x80] sm:$0xff] %vm922, %v1938
      %1987 = vst.msk [vmem:[#allocation2 + $0x98] sm:$0xff] %vm922, %v1940
      %1988 = vst.msk [vmem:[#allocation2 + $0xb0] sm:$0xff] %vm922, %v1942
      %1989 = vst.msk [vmem:[#allocation2 + $0xc8] sm:$0xff] %vm922, %v1944
      %1990 = vst.msk [vmem:[#allocation2 + $0xe0] sm:$0xff] %vm922, %v1946
      %1991 = vst.msk [vmem:[#allocation2 + $0xf8] sm:$0xff] %vm922, %v1948
      %1992 = vst.msk [vmem:[#allocation2 + $0x110] sm:$0xff] %vm922, %v1950
      %1993 = vst.msk [vmem:[#allocation2 + $0x128] sm:$0xff] %vm922, %v1952
      %1994 = vst.msk [vmem:[#allocation2 + $0x140] sm:$0xff] %vm922, %v1954
      %1995 = vst.msk [vmem:[#allocation2 + $0x158] sm:$0xff] %vm922, %v1956
      %1996 = vst.msk [vmem:[#allocation2 + $0x170] sm:$0xff] %vm922, %v1958
      %1997 = vst.msk [vmem:[#allocation2 + $0x188] sm:$0xff] %vm922, %v1960
      %1998 = vst.msk [vmem:[#allocation2 + $0x1a0] sm:$0xff] %vm922, %v1962
      %v1999 = vld [vmem:[%s396 + $0x10] sm:$0xc]
      %v2000 = vld [vmem:[%s396 + $0x14] sm:$0xf]
      %v2001 = vld [vmem:[%s396 + $0x18] sm:$0xf]
      %v2002 = vld [vmem:[%s396 + $0x1c] sm:$0xf]
      %v2003 = vld [vmem:[%s396 + $0x20] sm:$0xf]
      %v2004 = vld [vmem:[%s396 + $0x24] sm:$0xf]
      %v2005 = vld [vmem:[%s396 + $0x28] sm:$0xf]
      %v2006 = vld [vmem:[%s396 + $0x2c] sm:$0xf]
      %v2007 = vld [vmem:[%s396 + $0x30] sm:$0xf]
      %v2008 = vld [vmem:[%s396 + $0x34] sm:$0xf]
      %v2009 = vld [vmem:[%s396 + $0x38] sm:$0xf]
      %v2010 = vld [vmem:[%s396 + $0x3c] sm:$0xf]
      %v2011 = vld [vmem:[%s396 + $0x40] sm:$0xf]
      %v2012 = vld [vmem:[%s396 + $0x44] sm:$0xf]
      %v2013 = vld [vmem:[%s396 + $0x48] sm:$0xf]
      %v2014 = vld [vmem:[%s396 + $0x4c] sm:$0xf]
      %v2015 = vld [vmem:[%s396 + $0x50] sm:$0xf]
      %v2016 = vld [vmem:[%s396 + $0x54] sm:$0xf]
      %v2017 = vld [vmem:[%s396 + $0x58] sm:$0xf]
      %v2018 = vld [vmem:[%s396 + $0x5c] sm:$0xf]
      %v2019 = vld [vmem:[%s396 + $0x60] sm:$0xf]
      %v2020 = vld [vmem:[%s396 + $0x64] sm:$0xf]
      %v2021 = vld [vmem:[%s396 + $0x68] sm:$0xf]
      %v2022 = vld [vmem:[%s396 + $0x6c] sm:$0xf]
      %v2023 = vld [vmem:[%s396 + $0x70] sm:$0xf]
      %v2024 = vld [vmem:[%s396 + $0x74] sm:$0xf]
      %v2025 = vld [vmem:[%s396 + $0x78] sm:$0xf]
      %v2026 = vld [vmem:[%s396 + $0x7c] sm:$0xf]
      %v2027 = vld [vmem:[%s396 + $0x80] sm:$0xf]
      %v2028 = vld [vmem:[%s396 + $0x84] sm:$0xf]
      %v2029 = vld [vmem:[%s396 + $0x88] sm:$0xf]
      %v2030 = vld [vmem:[%s396 + $0x8c] sm:$0xf]
      %v2031 = vld [vmem:[%s396 + $0x90] sm:$0xf]
      %v2032 = vld [vmem:[%s396 + $0x94] sm:$0xf]
      %v2033 = vld [vmem:[%s396 + $0x98] sm:$0xf]
      %v2034 = vld [vmem:[%s396 + $0x9c] sm:$0xf]
      %v2035 = vld [vmem:[%s396 + $0xa0] sm:$0x3]
      %v2073 = vunpack.c.l.b16 %v1999
      %v2074 = vunpack.c.l.b16 %v2000
      %v2075 = vunpack.c.l.b16 %v2001
      %v2076 = vunpack.c.l.b16 %v2002
      %v2077 = vunpack.c.l.b16 %v2003
      %v2078 = vunpack.c.l.b16 %v2004
      %v2079 = vunpack.c.l.b16 %v2005
      %v2080 = vunpack.c.l.b16 %v2006
      %v2081 = vunpack.c.l.b16 %v2007
      %v2082 = vunpack.c.l.b16 %v2008
      %v2083 = vunpack.c.l.b16 %v2009
      %v2084 = vunpack.c.l.b16 %v2010
      %v2085 = vunpack.c.l.b16 %v2011
      %v2086 = vunpack.c.l.b16 %v2012
      %v2087 = vunpack.c.l.b16 %v2013
      %v2088 = vunpack.c.l.b16 %v2014
      %v2089 = vunpack.c.l.b16 %v2015
      %v2090 = vunpack.c.l.b16 %v2016
      %v2091 = vunpack.c.l.b16 %v2017
      %v2092 = vunpack.c.l.b16 %v2018
      %v2093 = vunpack.c.l.b16 %v2019
      %v2094 = vunpack.c.l.b16 %v2020
      %v2095 = vunpack.c.l.b16 %v2021
      %v2096 = vunpack.c.l.b16 %v2022
      %v2097 = vunpack.c.l.b16 %v2023
      %v2098 = vunpack.c.l.b16 %v2024
      %v2099 = vunpack.c.l.b16 %v2025
      %v2100 = vunpack.c.l.b16 %v2026
      %v2101 = vunpack.c.l.b16 %v2027
      %v2102 = vunpack.c.l.b16 %v2028
      %v2103 = vunpack.c.l.b16 %v2029
      %v2104 = vunpack.c.l.b16 %v2030
      %v2105 = vunpack.c.l.b16 %v2031
      %v2106 = vunpack.c.l.b16 %v2032
      %v2107 = vunpack.c.l.b16 %v2033
      %v2108 = vunpack.c.l.b16 %v2034
      %v2109 = vunpack.c.l.b16 %v2035
      %v2110 = vpack.c.b16 %v2074, %v2073
      %v2111 = vpack.c.b16 %v2076, %v2075
      %v2112 = vpack.c.b16 %v2078, %v2077
      %v2113 = vpack.c.b16 %v2080, %v2079
      %v2114 = vpack.c.b16 %v2082, %v2081
      %v2115 = vpack.c.b16 %v2084, %v2083
      %v2116 = vpack.c.b16 %v2086, %v2085
      %v2117 = vpack.c.b16 %v2088, %v2087
      %v2118 = vpack.c.b16 %v2090, %v2089
      %v2119 = vpack.c.b16 %v2092, %v2091
      %v2120 = vpack.c.b16 %v2094, %v2093
      %v2121 = vpack.c.b16 %v2096, %v2095
      %v2122 = vpack.c.b16 %v2098, %v2097
      %v2123 = vpack.c.b16 %v2100, %v2099
      %v2124 = vpack.c.b16 %v2102, %v2101
      %v2125 = vpack.c.b16 %v2104, %v2103
      %v2126 = vpack.c.b16 %v2106, %v2105
      %v2127 = vpack.c.b16 %v2108, %v2107
      %v2128 = vpack.c.b16 %v2109, %v2109
      %v2129 = vrot.slane %v2110, 2
      %v2130 = vrot.slane %v2111, 2
      %v2131 = vsel %vm1889, %v2129, %v2130
      %v2132 = vrot.slane %v2112, 2
      %v2133 = vsel %vm1889, %v2130, %v2132
      %v2134 = vrot.slane %v2113, 2
      %v2135 = vsel %vm1889, %v2132, %v2134
      %v2136 = vrot.slane %v2114, 2
      %v2137 = vsel %vm1889, %v2134, %v2136
      %v2138 = vrot.slane %v2115, 2
      %v2139 = vsel %vm1889, %v2136, %v2138
      %v2140 = vrot.slane %v2116, 2
      %v2141 = vsel %vm1889, %v2138, %v2140
      %v2142 = vrot.slane %v2117, 2
      %v2143 = vsel %vm1889, %v2140, %v2142
      %v2144 = vrot.slane %v2118, 2
      %v2145 = vsel %vm1889, %v2142, %v2144
      %v2146 = vrot.slane %v2119, 2
      %v2147 = vsel %vm1889, %v2144, %v2146
      %v2148 = vrot.slane %v2120, 2
      %v2149 = vsel %vm1889, %v2146, %v2148
      %v2150 = vrot.slane %v2121, 2
      %v2151 = vsel %vm1889, %v2148, %v2150
      %v2152 = vrot.slane %v2122, 2
      %v2153 = vsel %vm1889, %v2150, %v2152
      %v2154 = vrot.slane %v2123, 2
      %v2155 = vsel %vm1889, %v2152, %v2154
      %v2156 = vrot.slane %v2124, 2
      %v2157 = vsel %vm1889, %v2154, %v2156
      %v2158 = vrot.slane %v2125, 2
      %v2159 = vsel %vm1889, %v2156, %v2158
      %v2160 = vrot.slane %v2126, 2
      %v2161 = vsel %vm1889, %v2158, %v2160
      %v2162 = vrot.slane %v2127, 2
      %v2163 = vsel %vm1889, %v2160, %v2162
      %v2164 = vrot.slane %v2128, 2
      %v2165 = vsel %vm1889, %v2162, %v2164
      %2166 = vrot.lane.b32.xlu0 %v2131, 64
      %v2167 = vpop.permute.xlu0 %2166
      %2168 = vrot.lane.b32.xlu0 %v2133, 64
      %v2169 = vpop.permute.xlu0 %2168
      %2170 = vrot.lane.b32.xlu0 %v2135, 64
      %v2171 = vpop.permute.xlu0 %2170
      %2172 = vrot.lane.b32.xlu0 %v2137, 64
      %v2173 = vpop.permute.xlu0 %2172
      %2174 = vrot.lane.b32.xlu0 %v2139, 64
      %v2175 = vpop.permute.xlu0 %2174
      %2176 = vrot.lane.b32.xlu0 %v2141, 64
      %v2177 = vpop.permute.xlu0 %2176
      %2178 = vrot.lane.b32.xlu0 %v2143, 64
      %v2179 = vpop.permute.xlu0 %2178
      %2180 = vrot.lane.b32.xlu0 %v2145, 64
      %v2181 = vpop.permute.xlu0 %2180
      %2182 = vrot.lane.b32.xlu0 %v2147, 64
      %v2183 = vpop.permute.xlu0 %2182
      %2184 = vrot.lane.b32.xlu0 %v2149, 64
      %v2185 = vpop.permute.xlu0 %2184
      %2186 = vrot.lane.b32.xlu0 %v2151, 64
      %v2187 = vpop.permute.xlu0 %2186
      %2188 = vrot.lane.b32.xlu0 %v2153, 64
      %v2189 = vpop.permute.xlu0 %2188
      %2190 = vrot.lane.b32.xlu0 %v2155, 64
      %v2191 = vpop.permute.xlu0 %2190
      %2192 = vrot.lane.b32.xlu0 %v2157, 64
      %v2193 = vpop.permute.xlu0 %2192
      %2194 = vrot.lane.b32.xlu0 %v2159, 64
      %v2195 = vpop.permute.xlu0 %2194
      %2196 = vrot.lane.b32.xlu0 %v2161, 64
      %v2197 = vpop.permute.xlu0 %2196
      %2198 = vrot.lane.b32.xlu0 %v2163, 64
      %v2199 = vpop.permute.xlu0 %2198
      %2200 = vrot.lane.b32.xlu0 %v2165, 64
      %v2201 = vpop.permute.xlu0 %2200
      %2220 = vst.msk [vmem:[#allocation2 + $0x8] sm:$0xff] %vm1163, %v2167
      %2221 = vst.msk [vmem:[#allocation2 + $0x20] sm:$0xff] %vm1163, %v2169
      %2222 = vst.msk [vmem:[#allocation2 + $0x38] sm:$0xff] %vm1163, %v2171
      %2223 = vst.msk [vmem:[#allocation2 + $0x50] sm:$0xff] %vm1163, %v2173
      %2224 = vst.msk [vmem:[#allocation2 + $0x68] sm:$0xff] %vm1163, %v2175
      %2225 = vst.msk [vmem:[#allocation2 + $0x80] sm:$0xff] %vm1163, %v2177
      %2226 = vst.msk [vmem:[#allocation2 + $0x98] sm:$0xff] %vm1163, %v2179
      %2227 = vst.msk [vmem:[#allocation2 + $0xb0] sm:$0xff] %vm1163, %v2181
      %2228 = vst.msk [vmem:[#allocation2 + $0xc8] sm:$0xff] %vm1163, %v2183
      %2229 = vst.msk [vmem:[#allocation2 + $0xe0] sm:$0xff] %vm1163, %v2185
      %2230 = vst.msk [vmem:[#allocation2 + $0xf8] sm:$0xff] %vm1163, %v2187
      %2231 = vst.msk [vmem:[#allocation2 + $0x110] sm:$0xff] %vm1163, %v2189
      %2232 = vst.msk [vmem:[#allocation2 + $0x128] sm:$0xff] %vm1163, %v2191
      %2233 = vst.msk [vmem:[#allocation2 + $0x140] sm:$0xff] %vm1163, %v2193
      %2234 = vst.msk [vmem:[#allocation2 + $0x158] sm:$0xff] %vm1163, %v2195
      %2235 = vst.msk [vmem:[#allocation2 + $0x170] sm:$0xff] %vm1163, %v2197
      %2236 = vst.msk [vmem:[#allocation2 + $0x188] sm:$0xff] %vm1163, %v2199
      %2237 = vst.msk [vmem:[#allocation2 + $0x1a0] sm:$0xff] %vm1163, %v2201
      %v2238 = vld [vmem:[%s396 + $0x10] sm:$0xc]
      %v2239 = vld [vmem:[%s396 + $0x14] sm:$0xf]
      %v2240 = vld [vmem:[%s396 + $0x18] sm:$0xf]
      %v2241 = vld [vmem:[%s396 + $0x1c] sm:$0xf]
      %v2242 = vld [vmem:[%s396 + $0x20] sm:$0xf]
      %v2243 = vld [vmem:[%s396 + $0x24] sm:$0xf]
      %v2244 = vld [vmem:[%s396 + $0x28] sm:$0xf]
      %v2245 = vld [vmem:[%s396 + $0x2c] sm:$0xf]
      %v2246 = vld [vmem:[%s396 + $0x30] sm:$0xf]
      %v2247 = vld [vmem:[%s396 + $0x34] sm:$0xf]
      %v2248 = vld [vmem:[%s396 + $0x38] sm:$0xf]
      %v2249 = vld [vmem:[%s396 + $0x3c] sm:$0xf]
      %v2250 = vld [vmem:[%s396 + $0x40] sm:$0xf]
      %v2251 = vld [vmem:[%s396 + $0x44] sm:$0xf]
      %v2252 = vld [vmem:[%s396 + $0x48] sm:$0xf]
      %v2253 = vld [vmem:[%s396 + $0x4c] sm:$0xf]
      %v2254 = vld [vmem:[%s396 + $0x50] sm:$0xf]
      %v2255 = vld [vmem:[%s396 + $0x54] sm:$0xf]
      %v2256 = vld [vmem:[%s396 + $0x58] sm:$0xf]
      %v2257 = vld [vmem:[%s396 + $0x5c] sm:$0xf]
      %v2258 = vld [vmem:[%s396 + $0x60] sm:$0xf]
      %v2259 = vld [vmem:[%s396 + $0x64] sm:$0xf]
      %v2260 = vld [vmem:[%s396 + $0x68] sm:$0xf]
      %v2261 = vld [vmem:[%s396 + $0x6c] sm:$0xf]
      %v2262 = vld [vmem:[%s396 + $0x70] sm:$0xf]
      %v2263 = vld [vmem:[%s396 + $0x74] sm:$0xf]
      %v2264 = vld [vmem:[%s396 + $0x78] sm:$0xf]
      %v2265 = vld [vmem:[%s396 + $0x7c] sm:$0xf]
      %v2266 = vld [vmem:[%s396 + $0x80] sm:$0xf]
      %v2267 = vld [vmem:[%s396 + $0x84] sm:$0xf]
      %v2268 = vld [vmem:[%s396 + $0x88] sm:$0xf]
      %v2269 = vld [vmem:[%s396 + $0x8c] sm:$0xf]
      %v2270 = vld [vmem:[%s396 + $0x90] sm:$0xf]
      %v2271 = vld [vmem:[%s396 + $0x94] sm:$0xf]
      %v2272 = vld [vmem:[%s396 + $0x98] sm:$0xf]
      %v2273 = vld [vmem:[%s396 + $0x9c] sm:$0xf]
      %v2274 = vld [vmem:[%s396 + $0xa0] sm:$0x7]
      %v2312 = vunpack.c.l.b16 %v2238
      %v2313 = vunpack.c.l.b16 %v2239
      %v2314 = vunpack.c.l.b16 %v2240
      %v2315 = vunpack.c.l.b16 %v2241
      %v2316 = vunpack.c.l.b16 %v2242
      %v2317 = vunpack.c.l.b16 %v2243
      %v2318 = vunpack.c.l.b16 %v2244
      %v2319 = vunpack.c.l.b16 %v2245
      %v2320 = vunpack.c.l.b16 %v2246
      %v2321 = vunpack.c.l.b16 %v2247
      %v2322 = vunpack.c.l.b16 %v2248
      %v2323 = vunpack.c.l.b16 %v2249
      %v2324 = vunpack.c.l.b16 %v2250
      %v2325 = vunpack.c.l.b16 %v2251
      %v2326 = vunpack.c.l.b16 %v2252
      %v2327 = vunpack.c.l.b16 %v2253
      %v2328 = vunpack.c.l.b16 %v2254
      %v2329 = vunpack.c.l.b16 %v2255
      %v2330 = vunpack.c.l.b16 %v2256
      %v2331 = vunpack.c.l.b16 %v2257
      %v2332 = vunpack.c.l.b16 %v2258
      %v2333 = vunpack.c.l.b16 %v2259
      %v2334 = vunpack.c.l.b16 %v2260
      %v2335 = vunpack.c.l.b16 %v2261
      %v2336 = vunpack.c.l.b16 %v2262
      %v2337 = vunpack.c.l.b16 %v2263
      %v2338 = vunpack.c.l.b16 %v2264
      %v2339 = vunpack.c.l.b16 %v2265
      %v2340 = vunpack.c.l.b16 %v2266
      %v2341 = vunpack.c.l.b16 %v2267
      %v2342 = vunpack.c.l.b16 %v2268
      %v2343 = vunpack.c.l.b16 %v2269
      %v2344 = vunpack.c.l.b16 %v2270
      %v2345 = vunpack.c.l.b16 %v2271
      %v2346 = vunpack.c.l.b16 %v2272
      %v2347 = vunpack.c.l.b16 %v2273
      %v2348 = vunpack.c.l.b16 %v2274
      %v2349 = vpack.c.b16 %v2313, %v2312
      %v2350 = vpack.c.b16 %v2315, %v2314
      %v2351 = vpack.c.b16 %v2317, %v2316
      %v2352 = vpack.c.b16 %v2319, %v2318
      %v2353 = vpack.c.b16 %v2321, %v2320
      %v2354 = vpack.c.b16 %v2323, %v2322
      %v2355 = vpack.c.b16 %v2325, %v2324
      %v2356 = vpack.c.b16 %v2327, %v2326
      %v2357 = vpack.c.b16 %v2329, %v2328
      %v2358 = vpack.c.b16 %v2331, %v2330
      %v2359 = vpack.c.b16 %v2333, %v2332
      %v2360 = vpack.c.b16 %v2335, %v2334
      %v2361 = vpack.c.b16 %v2337, %v2336
      %v2362 = vpack.c.b16 %v2339, %v2338
      %v2363 = vpack.c.b16 %v2341, %v2340
      %v2364 = vpack.c.b16 %v2343, %v2342
      %v2365 = vpack.c.b16 %v2345, %v2344
      %v2366 = vpack.c.b16 %v2347, %v2346
      %v2367 = vpack.c.b16 %v2348, %v2348
      %vm2368 = vsmask.f32 5376
      %v2370 = vshrl.u32 %v2349, 16
      %v2372 = vrot.slane %v2370, 2
      %v2373 = vshll.u32 %v2349, 16
      %v2375 = vrot.slane %v2373, 3
      %v2376 = vor.u32 %v2372, %v2375
      %v2378 = vshrl.u32 %v2350, 16
      %v2380 = vrot.slane %v2378, 2
      %v2381 = vshll.u32 %v2350, 16
      %v2383 = vrot.slane %v2381, 3
      %v2384 = vor.u32 %v2380, %v2383
      %v2385 = vsel %vm2368, %v2376, %v2384
      %v2387 = vshrl.u32 %v2351, 16
      %v2389 = vrot.slane %v2387, 2
      %v2390 = vshll.u32 %v2351, 16
      %v2392 = vrot.slane %v2390, 3
      %v2393 = vor.u32 %v2389, %v2392
      %v2394 = vsel %vm2368, %v2384, %v2393
      %v2396 = vshrl.u32 %v2352, 16
      %v2398 = vrot.slane %v2396, 2
      %v2399 = vshll.u32 %v2352, 16
      %v2401 = vrot.slane %v2399, 3
      %v2402 = vor.u32 %v2398, %v2401
      %v2403 = vsel %vm2368, %v2393, %v2402
      %v2405 = vshrl.u32 %v2353, 16
      %v2407 = vrot.slane %v2405, 2
      %v2408 = vshll.u32 %v2353, 16
      %v2410 = vrot.slane %v2408, 3
      %v2411 = vor.u32 %v2407, %v2410
      %v2412 = vsel %vm2368, %v2402, %v2411
      %v2414 = vshrl.u32 %v2354, 16
      %v2416 = vrot.slane %v2414, 2
      %v2417 = vshll.u32 %v2354, 16
      %v2419 = vrot.slane %v2417, 3
      %v2420 = vor.u32 %v2416, %v2419
      %v2421 = vsel %vm2368, %v2411, %v2420
      %v2423 = vshrl.u32 %v2355, 16
      %v2425 = vrot.slane %v2423, 2
      %v2426 = vshll.u32 %v2355, 16
      %v2428 = vrot.slane %v2426, 3
      %v2429 = vor.u32 %v2425, %v2428
      %v2430 = vsel %vm2368, %v2420, %v2429
      %v2432 = vshrl.u32 %v2356, 16
      %v2434 = vrot.slane %v2432, 2
      %v2435 = vshll.u32 %v2356, 16
      %v2437 = vrot.slane %v2435, 3
      %v2438 = vor.u32 %v2434, %v2437
      %v2439 = vsel %vm2368, %v2429, %v2438
      %v2441 = vshrl.u32 %v2357, 16
      %v2443 = vrot.slane %v2441, 2
      %v2444 = vshll.u32 %v2357, 16
      %v2446 = vrot.slane %v2444, 3
      %v2447 = vor.u32 %v2443, %v2446
      %v2448 = vsel %vm2368, %v2438, %v2447
      %v2450 = vshrl.u32 %v2358, 16
      %v2452 = vrot.slane %v2450, 2
      %v2453 = vshll.u32 %v2358, 16
      %v2455 = vrot.slane %v2453, 3
      %v2456 = vor.u32 %v2452, %v2455
      %v2457 = vsel %vm2368, %v2447, %v2456
      %v2459 = vshrl.u32 %v2359, 16
      %v2461 = vrot.slane %v2459, 2
      %v2462 = vshll.u32 %v2359, 16
      %v2464 = vrot.slane %v2462, 3
      %v2465 = vor.u32 %v2461, %v2464
      %v2466 = vsel %vm2368, %v2456, %v2465
      %v2468 = vshrl.u32 %v2360, 16
      %v2470 = vrot.slane %v2468, 2
      %v2471 = vshll.u32 %v2360, 16
      %v2473 = vrot.slane %v2471, 3
      %v2474 = vor.u32 %v2470, %v2473
      %v2475 = vsel %vm2368, %v2465, %v2474
      %v2477 = vshrl.u32 %v2361, 16
      %v2479 = vrot.slane %v2477, 2
      %v2480 = vshll.u32 %v2361, 16
      %v2482 = vrot.slane %v2480, 3
      %v2483 = vor.u32 %v2479, %v2482
      %v2484 = vsel %vm2368, %v2474, %v2483
      %v2486 = vshrl.u32 %v2362, 16
      %v2488 = vrot.slane %v2486, 2
      %v2489 = vshll.u32 %v2362, 16
      %v2491 = vrot.slane %v2489, 3
      %v2492 = vor.u32 %v2488, %v2491
      %v2493 = vsel %vm2368, %v2483, %v2492
      %v2495 = vshrl.u32 %v2363, 16
      %v2497 = vrot.slane %v2495, 2
      %v2498 = vshll.u32 %v2363, 16
      %v2500 = vrot.slane %v2498, 3
      %v2501 = vor.u32 %v2497, %v2500
      %v2502 = vsel %vm2368, %v2492, %v2501
      %v2504 = vshrl.u32 %v2364, 16
      %v2506 = vrot.slane %v2504, 2
      %v2507 = vshll.u32 %v2364, 16
      %v2509 = vrot.slane %v2507, 3
      %v2510 = vor.u32 %v2506, %v2509
      %v2511 = vsel %vm2368, %v2501, %v2510
      %v2513 = vshrl.u32 %v2365, 16
      %v2515 = vrot.slane %v2513, 2
      %v2516 = vshll.u32 %v2365, 16
      %v2518 = vrot.slane %v2516, 3
      %v2519 = vor.u32 %v2515, %v2518
      %v2520 = vsel %vm2368, %v2510, %v2519
      %v2522 = vshrl.u32 %v2366, 16
      %v2524 = vrot.slane %v2522, 2
      %v2525 = vshll.u32 %v2366, 16
      %v2527 = vrot.slane %v2525, 3
      %v2528 = vor.u32 %v2524, %v2527
      %v2529 = vsel %vm2368, %v2519, %v2528
      %v2531 = vshrl.u32 %v2367, 16
      %v2533 = vrot.slane %v2531, 2
      %v2534 = vshll.u32 %v2367, 16
      %v2536 = vrot.slane %v2534, 3
      %v2537 = vor.u32 %v2533, %v2536
      %v2538 = vsel %vm2368, %v2528, %v2537
      %2539 = vrot.lane.b32.xlu0 %v2385, 96
      %v2540 = vpop.permute.xlu0 %2539
      %2541 = vrot.lane.b32.xlu0 %v2394, 96
      %v2542 = vpop.permute.xlu0 %2541
      %2543 = vrot.lane.b32.xlu0 %v2403, 96
      %v2544 = vpop.permute.xlu0 %2543
      %2545 = vrot.lane.b32.xlu0 %v2412, 96
      %v2546 = vpop.permute.xlu0 %2545
      %2547 = vrot.lane.b32.xlu0 %v2421, 96
      %v2548 = vpop.permute.xlu0 %2547
      %2549 = vrot.lane.b32.xlu0 %v2430, 96
      %v2550 = vpop.permute.xlu0 %2549
      %2551 = vrot.lane.b32.xlu0 %v2439, 96
      %v2552 = vpop.permute.xlu0 %2551
      %2553 = vrot.lane.b32.xlu0 %v2448, 96
      %v2554 = vpop.permute.xlu0 %2553
      %2555 = vrot.lane.b32.xlu0 %v2457, 96
      %v2556 = vpop.permute.xlu0 %2555
      %2557 = vrot.lane.b32.xlu0 %v2466, 96
      %v2558 = vpop.permute.xlu0 %2557
      %2559 = vrot.lane.b32.xlu0 %v2475, 96
      %v2560 = vpop.permute.xlu0 %2559
      %2561 = vrot.lane.b32.xlu0 %v2484, 96
      %v2562 = vpop.permute.xlu0 %2561
      %2563 = vrot.lane.b32.xlu0 %v2493, 96
      %v2564 = vpop.permute.xlu0 %2563
      %2565 = vrot.lane.b32.xlu0 %v2502, 96
      %v2566 = vpop.permute.xlu0 %2565
      %2567 = vrot.lane.b32.xlu0 %v2511, 96
      %v2568 = vpop.permute.xlu0 %2567
      %2569 = vrot.lane.b32.xlu0 %v2520, 96
      %v2570 = vpop.permute.xlu0 %2569
      %2571 = vrot.lane.b32.xlu0 %v2529, 96
      %v2572 = vpop.permute.xlu0 %2571
      %2573 = vrot.lane.b32.xlu0 %v2538, 96
      %v2574 = vpop.permute.xlu0 %2573
      %2593 = vst.msk [vmem:[#allocation2 + $0x8] sm:$0xff] %vm1403, %v2540
      %2594 = vst.msk [vmem:[#allocation2 + $0x20] sm:$0xff] %vm1403, %v2542
      %2595 = vst.msk [vmem:[#allocation2 + $0x38] sm:$0xff] %vm1403, %v2544
      %2596 = vst.msk [vmem:[#allocation2 + $0x50] sm:$0xff] %vm1403, %v2546
      %2597 = vst.msk [vmem:[#allocation2 + $0x68] sm:$0xff] %vm1403, %v2548
      %2598 = vst.msk [vmem:[#allocation2 + $0x80] sm:$0xff] %vm1403, %v2550
      %2599 = vst.msk [vmem:[#allocation2 + $0x98] sm:$0xff] %vm1403, %v2552
      %2600 = vst.msk [vmem:[#allocation2 + $0xb0] sm:$0xff] %vm1403, %v2554
      %2601 = vst.msk [vmem:[#allocation2 + $0xc8] sm:$0xff] %vm1403, %v2556
      %2602 = vst.msk [vmem:[#allocation2 + $0xe0] sm:$0xff] %vm1403, %v2558
      %2603 = vst.msk [vmem:[#allocation2 + $0xf8] sm:$0xff] %vm1403, %v2560
      %2604 = vst.msk [vmem:[#allocation2 + $0x110] sm:$0xff] %vm1403, %v2562
      %2605 = vst.msk [vmem:[#allocation2 + $0x128] sm:$0xff] %vm1403, %v2564
      %2606 = vst.msk [vmem:[#allocation2 + $0x140] sm:$0xff] %vm1403, %v2566
      %2607 = vst.msk [vmem:[#allocation2 + $0x158] sm:$0xff] %vm1403, %v2568
      %2608 = vst.msk [vmem:[#allocation2 + $0x170] sm:$0xff] %vm1403, %v2570
      %2609 = vst.msk [vmem:[#allocation2 + $0x188] sm:$0xff] %vm1403, %v2572
      %2610 = vst.msk [vmem:[#allocation2 + $0x1a0] sm:$0xff] %vm1403, %v2574
      %v2611 = vld [vmem:[%s396 + $0x10] sm:$0x8]
      %v2612 = vld [vmem:[%s396 + $0x14] sm:$0xf]
      %v2613 = vld [vmem:[%s396 + $0x18] sm:$0xf]
      %v2614 = vld [vmem:[%s396 + $0x1c] sm:$0xf]
      %v2615 = vld [vmem:[%s396 + $0x20] sm:$0xf]
      %v2616 = vld [vmem:[%s396 + $0x24] sm:$0xf]
      %v2617 = vld [vmem:[%s396 + $0x28] sm:$0xf]
      %v2618 = vld [vmem:[%s396 + $0x2c] sm:$0xf]
      %v2619 = vld [vmem:[%s396 + $0x30] sm:$0xf]
      %v2620 = vld [vmem:[%s396 + $0x34] sm:$0xf]
      %v2621 = vld [vmem:[%s396 + $0x38] sm:$0xf]
      %v2622 = vld [vmem:[%s396 + $0x3c] sm:$0xf]
      %v2623 = vld [vmem:[%s396 + $0x40] sm:$0xf]
      %v2624 = vld [vmem:[%s396 + $0x44] sm:$0xf]
      %v2625 = vld [vmem:[%s396 + $0x48] sm:$0xf]
      %v2626 = vld [vmem:[%s396 + $0x4c] sm:$0xf]
      %v2627 = vld [vmem:[%s396 + $0x50] sm:$0xf]
      %v2628 = vld [vmem:[%s396 + $0x54] sm:$0xf]
      %v2629 = vld [vmem:[%s396 + $0x58] sm:$0xf]
      %v2630 = vld [vmem:[%s396 + $0x5c] sm:$0xf]
      %v2631 = vld [vmem:[%s396 + $0x60] sm:$0xf]
      %v2632 = vld [vmem:[%s396 + $0x64] sm:$0xf]
      %v2633 = vld [vmem:[%s396 + $0x68] sm:$0xf]
      %v2634 = vld [vmem:[%s396 + $0x6c] sm:$0xf]
      %v2635 = vld [vmem:[%s396 + $0x70] sm:$0xf]
      %v2636 = vld [vmem:[%s396 + $0x74] sm:$0xf]
      %v2637 = vld [vmem:[%s396 + $0x78] sm:$0xf]
      %v2638 = vld [vmem:[%s396 + $0x7c] sm:$0xf]
      %v2639 = vld [vmem:[%s396 + $0x80] sm:$0xf]
      %v2640 = vld [vmem:[%s396 + $0x84] sm:$0xf]
      %v2641 = vld [vmem:[%s396 + $0x88] sm:$0xf]
      %v2642 = vld [vmem:[%s396 + $0x8c] sm:$0xf]
      %v2643 = vld [vmem:[%s396 + $0x90] sm:$0xf]
      %v2644 = vld [vmem:[%s396 + $0x94] sm:$0xf]
      %v2645 = vld [vmem:[%s396 + $0x98] sm:$0xf]
      %v2646 = vld [vmem:[%s396 + $0x9c] sm:$0xf]
      %v2647 = vld [vmem:[%s396 + $0xa0] sm:$0x7]
      %v2685 = vunpack.c.l.b16 %v2611
      %v2686 = vunpack.c.l.b16 %v2612
      %v2687 = vunpack.c.l.b16 %v2613
      %v2688 = vunpack.c.l.b16 %v2614
      %v2689 = vunpack.c.l.b16 %v2615
      %v2690 = vunpack.c.l.b16 %v2616
      %v2691 = vunpack.c.l.b16 %v2617
      %v2692 = vunpack.c.l.b16 %v2618
      %v2693 = vunpack.c.l.b16 %v2619
      %v2694 = vunpack.c.l.b16 %v2620
      %v2695 = vunpack.c.l.b16 %v2621
      %v2696 = vunpack.c.l.b16 %v2622
      %v2697 = vunpack.c.l.b16 %v2623
      %v2698 = vunpack.c.l.b16 %v2624
      %v2699 = vunpack.c.l.b16 %v2625
      %v2700 = vunpack.c.l.b16 %v2626
      %v2701 = vunpack.c.l.b16 %v2627
      %v2702 = vunpack.c.l.b16 %v2628
      %v2703 = vunpack.c.l.b16 %v2629
      %v2704 = vunpack.c.l.b16 %v2630
      %v2705 = vunpack.c.l.b16 %v2631
      %v2706 = vunpack.c.l.b16 %v2632
      %v2707 = vunpack.c.l.b16 %v2633
      %v2708 = vunpack.c.l.b16 %v2634
      %v2709 = vunpack.c.l.b16 %v2635
      %v2710 = vunpack.c.l.b16 %v2636
      %v2711 = vunpack.c.l.b16 %v2637
      %v2712 = vunpack.c.l.b16 %v2638
      %v2713 = vunpack.c.l.b16 %v2639
      %v2714 = vunpack.c.l.b16 %v2640
      %v2715 = vunpack.c.l.b16 %v2641
      %v2716 = vunpack.c.l.b16 %v2642
      %v2717 = vunpack.c.l.b16 %v2643
      %v2718 = vunpack.c.l.b16 %v2644
      %v2719 = vunpack.c.l.b16 %v2645
      %v2720 = vunpack.c.l.b16 %v2646
      %v2721 = vunpack.c.l.b16 %v2647
      %v2722 = vpack.c.b16 %v2686, %v2685
      %v2723 = vpack.c.b16 %v2688, %v2687
      %v2724 = vpack.c.b16 %v2690, %v2689
      %v2725 = vpack.c.b16 %v2692, %v2691
      %v2726 = vpack.c.b16 %v2694, %v2693
      %v2727 = vpack.c.b16 %v2696, %v2695
      %v2728 = vpack.c.b16 %v2698, %v2697
      %v2729 = vpack.c.b16 %v2700, %v2699
      %v2730 = vpack.c.b16 %v2702, %v2701
      %v2731 = vpack.c.b16 %v2704, %v2703
      %v2732 = vpack.c.b16 %v2706, %v2705
      %v2733 = vpack.c.b16 %v2708, %v2707
      %v2734 = vpack.c.b16 %v2710, %v2709
      %v2735 = vpack.c.b16 %v2712, %v2711
      %v2736 = vpack.c.b16 %v2714, %v2713
      %v2737 = vpack.c.b16 %v2716, %v2715
      %v2738 = vpack.c.b16 %v2718, %v2717
      %v2739 = vpack.c.b16 %v2720, %v2719
      %v2740 = vpack.c.b16 %v2721, %v2721
      %vm2741 = vcmask 1044480
      %v2742 = vrot.slane %v2722, 3
      %v2743 = vrot.slane %v2723, 3
      %v2744 = vsel %vm2741, %v2742, %v2743
      %v2745 = vrot.slane %v2724, 3
      %v2746 = vsel %vm2741, %v2743, %v2745
      %v2747 = vrot.slane %v2725, 3
      %v2748 = vsel %vm2741, %v2745, %v2747
      %v2749 = vrot.slane %v2726, 3
      %v2750 = vsel %vm2741, %v2747, %v2749
      %v2751 = vrot.slane %v2727, 3
      %v2752 = vsel %vm2741, %v2749, %v2751
      %v2753 = vrot.slane %v2728, 3
      %v2754 = vsel %vm2741, %v2751, %v2753
      %v2755 = vrot.slane %v2729, 3
      %v2756 = vsel %vm2741, %v2753, %v2755
      %v2757 = vrot.slane %v2730, 3
      %v2758 = vsel %vm2741, %v2755, %v2757
      %v2759 = vrot.slane %v2731, 3
      %v2760 = vsel %vm2741, %v2757, %v2759
      %v2761 = vrot.slane %v2732, 3
      %v2762 = vsel %vm2741, %v2759, %v2761
      %v2763 = vrot.slane %v2733, 3
      %v2764 = vsel %vm2741, %v2761, %v2763
      %v2765 = vrot.slane %v2734, 3
      %v2766 = vsel %vm2741, %v2763, %v2765
      %v2767 = vrot.slane %v2735, 3
      %v2768 = vsel %vm2741, %v2765, %v2767
      %v2769 = vrot.slane %v2736, 3
      %v2770 = vsel %vm2741, %v2767, %v2769
      %v2771 = vrot.slane %v2737, 3
      %v2772 = vsel %vm2741, %v2769, %v2771
      %v2773 = vrot.slane %v2738, 3
      %v2774 = vsel %vm2741, %v2771, %v2773
      %v2775 = vrot.slane %v2739, 3
      %v2776 = vsel %vm2741, %v2773, %v2775
      %v2777 = vrot.slane %v2740, 3
      %v2778 = vsel %vm2741, %v2775, %v2777
      %2797 = vst.msk [vmem:[#allocation2 + $0x10] sm:$0xff] %vm570, %v2744
      %2798 = vst.msk [vmem:[#allocation2 + $0x28] sm:$0xff] %vm570, %v2746
      %2799 = vst.msk [vmem:[#allocation2 + $0x40] sm:$0xff] %vm570, %v2748
      %2800 = vst.msk [vmem:[#allocation2 + $0x58] sm:$0xff] %vm570, %v2750
      %2801 = vst.msk [vmem:[#allocation2 + $0x70] sm:$0xff] %vm570, %v2752
      %2802 = vst.msk [vmem:[#allocation2 + $0x88] sm:$0xff] %vm570, %v2754
      %2803 = vst.msk [vmem:[#allocation2 + $0xa0] sm:$0xff] %vm570, %v2756
      %2804 = vst.msk [vmem:[#allocation2 + $0xb8] sm:$0xff] %vm570, %v2758
      %2805 = vst.msk [vmem:[#allocation2 + $0xd0] sm:$0xff] %vm570, %v2760
      %2806 = vst.msk [vmem:[#allocation2 + $0xe8] sm:$0xff] %vm570, %v2762
      %2807 = vst.msk [vmem:[#allocation2 + $0x100] sm:$0xff] %vm570, %v2764
      %2808 = vst.msk [vmem:[#allocation2 + $0x118] sm:$0xff] %vm570, %v2766
      %2809 = vst.msk [vmem:[#allocation2 + $0x130] sm:$0xff] %vm570, %v2768
      %2810 = vst.msk [vmem:[#allocation2 + $0x148] sm:$0xff] %vm570, %v2770
      %2811 = vst.msk [vmem:[#allocation2 + $0x160] sm:$0xff] %vm570, %v2772
      %2812 = vst.msk [vmem:[#allocation2 + $0x178] sm:$0xff] %vm570, %v2774
      %2813 = vst.msk [vmem:[#allocation2 + $0x190] sm:$0xff] %vm570, %v2776
      %2814 = vst.msk [vmem:[#allocation2 + $0x1a8] sm:$0xff] %vm570, %v2778
      %v2815 = vld [vmem:[#allocation2] sm:$0xff]
      %v2816 = vld [vmem:[#allocation2 + $0x8] sm:$0xff]
      %v2817 = vld [vmem:[#allocation2 + $0x10] sm:$0xff]
      %v2818 = vld [vmem:[#allocation2 + $0x18] sm:$0xff]
      %v2819 = vld [vmem:[#allocation2 + $0x20] sm:$0xff]
      %v2820 = vld [vmem:[#allocation2 + $0x28] sm:$0xff]
      %v2821 = vld [vmem:[#allocation2 + $0x30] sm:$0xff]
      %v2822 = vld [vmem:[#allocation2 + $0x38] sm:$0xff]
      %v2823 = vld [vmem:[#allocation2 + $0x40] sm:$0xff]
      %v2824 = vld [vmem:[#allocation2 + $0x48] sm:$0xff]
      %v2825 = vld [vmem:[#allocation2 + $0x50] sm:$0xff]
      %v2826 = vld [vmem:[#allocation2 + $0x58] sm:$0xff]
      %v2827 = vld [vmem:[#allocation2 + $0x60] sm:$0xff]
      %v2828 = vld [vmem:[#allocation2 + $0x68] sm:$0xff]
      %v2829 = vld [vmem:[#allocation2 + $0x70] sm:$0xff]
      %v2830 = vld [vmem:[#allocation2 + $0x78] sm:$0xff]
      %v2831 = vld [vmem:[#allocation2 + $0x80] sm:$0xff]
      %v2832 = vld [vmem:[#allocation2 + $0x88] sm:$0xff]
      %v2833 = vld [vmem:[#allocation2 + $0x90] sm:$0xff]
      %v2834 = vld [vmem:[#allocation2 + $0x98] sm:$0xff]
      %v2835 = vld [vmem:[#allocation2 + $0xa0] sm:$0xff]
      %v2836 = vld [vmem:[#allocation2 + $0xa8] sm:$0xff]
      %v2837 = vld [vmem:[#allocation2 + $0xb0] sm:$0xff]
      %v2838 = vld [vmem:[#allocation2 + $0xb8] sm:$0xff]
      %v2839 = vld [vmem:[#allocation2 + $0xc0] sm:$0xff]
      %v2840 = vld [vmem:[#allocation2 + $0xc8] sm:$0xff]
      %v2841 = vld [vmem:[#allocation2 + $0xd0] sm:$0xff]
      %v2842 = vld [vmem:[#allocation2 + $0xd8] sm:$0xff]
      %v2843 = vld [vmem:[#allocation2 + $0xe0] sm:$0xff]
      %v2844 = vld [vmem:[#allocation2 + $0xe8] sm:$0xff]
      %v2845 = vld [vmem:[#allocation2 + $0xf0] sm:$0xff]
      %v2846 = vld [vmem:[#allocation2 + $0xf8] sm:$0xff]
      %v2847 = vld [vmem:[#allocation2 + $0x100] sm:$0xff]
      %v2848 = vld [vmem:[#allocation2 + $0x108] sm:$0xff]
      %v2849 = vld [vmem:[#allocation2 + $0x110] sm:$0xff]
      %v2850 = vld [vmem:[#allocation2 + $0x118] sm:$0xff]
      %v2851 = vld [vmem:[#allocation2 + $0x120] sm:$0xff]
      %v2852 = vld [vmem:[#allocation2 + $0x128] sm:$0xff]
      %v2853 = vld [vmem:[#allocation2 + $0x130] sm:$0xff]
      %v2854 = vld [vmem:[#allocation2 + $0x138] sm:$0xff]
      %v2855 = vld [vmem:[#allocation2 + $0x140] sm:$0xff]
      %v2856 = vld [vmem:[#allocation2 + $0x148] sm:$0xff]
      %v2857 = vld [vmem:[#allocation2 + $0x150] sm:$0xff]
      %v2858 = vld [vmem:[#allocation2 + $0x158] sm:$0xff]
      %v2859 = vld [vmem:[#allocation2 + $0x160] sm:$0xff]
      %v2860 = vld [vmem:[#allocation2 + $0x168] sm:$0xff]
      %v2861 = vld [vmem:[#allocation2 + $0x170] sm:$0xff]
      %v2862 = vld [vmem:[#allocation2 + $0x178] sm:$0xff]
      %v2863 = vld [vmem:[#allocation2 + $0x180] sm:$0xff]
      %v2864 = vld [vmem:[#allocation2 + $0x188] sm:$0xff]
      %v2865 = vld [vmem:[#allocation2 + $0x190] sm:$0xff]
      %v2866 = vld [vmem:[#allocation2 + $0x198] sm:$0xff]
      %v2867 = vld [vmem:[#allocation2 + $0x1a0] sm:$0xff]
      %v2868 = vld [vmem:[#allocation2 + $0x1a8] sm:$0xff]
      %v2869 = vld [vmem:[%s3] sm:$0xf]
      %v2870 = vld [vmem:[%s3 + $0x4] sm:$0xf]
      %v2871 = vld [vmem:[%s3 + $0x8] sm:$0xf]
      %v2872 = vld [vmem:[%s3 + $0xc] sm:$0xf]
      %v2873 = vld [vmem:[%s3 + $0x10] sm:$0xf]
      %v2874 = vld [vmem:[%s3 + $0x14] sm:$0xf]
      %v2875 = vld [vmem:[%s3 + $0x18] sm:$0xf]
      %v2876 = vld [vmem:[%s3 + $0x1c] sm:$0xf]
      %v2877 = vld [vmem:[%s3 + $0x20] sm:$0xf]
      %v2878 = vld [vmem:[%s3 + $0x24] sm:$0xf]
      %v2879 = vld [vmem:[%s3 + $0x28] sm:$0xf]
      %v2880 = vld [vmem:[%s3 + $0x2c] sm:$0xf]
      %v2881 = vld [vmem:[%s3 + $0x30] sm:$0xf]
      %v2882 = vld [vmem:[%s3 + $0x34] sm:$0xf]
      %v2883 = vld [vmem:[%s3 + $0x38] sm:$0xf]
      %v2884 = vld [vmem:[%s3 + $0x3c] sm:$0xf]
      %v2885 = vld [vmem:[%s3 + $0x40] sm:$0xf]
      %v2886 = vld [vmem:[%s3 + $0x44] sm:$0xf]
      %v2887 = vld [vmem:[%s3 + $0x48] sm:$0xf]
      %v2888 = vld [vmem:[%s3 + $0x4c] sm:$0xf]
      %v2889 = vld [vmem:[%s3 + $0x50] sm:$0xf]
      %v2890 = vld [vmem:[%s3 + $0x54] sm:$0xf]
      %v2891 = vld [vmem:[%s3 + $0x58] sm:$0xf]
      %v2892 = vld [vmem:[%s3 + $0x5c] sm:$0xf]
      %v2893 = vld [vmem:[%s3 + $0x60] sm:$0xf]
      %v2894 = vld [vmem:[%s3 + $0x64] sm:$0xf]
      %v2895 = vld [vmem:[%s3 + $0x68] sm:$0xf]
      %v2896 = vld [vmem:[%s3 + $0x6c] sm:$0xf]
      %v2897 = vld [vmem:[%s3 + $0x70] sm:$0xf]
      %v2898 = vld [vmem:[%s3 + $0x74] sm:$0xf]
      %v2899 = vld [vmem:[%s3 + $0x78] sm:$0xf]
      %v2900 = vld [vmem:[%s3 + $0x7c] sm:$0xf]
      %v2901 = vld [vmem:[%s3 + $0x80] sm:$0xf]
      %v2902 = vld [vmem:[%s3 + $0x84] sm:$0xf]
      %v2903 = vld [vmem:[%s3 + $0x88] sm:$0xf]
      %v2904 = vld [vmem:[%s3 + $0x8c] sm:$0xf]
      %v2905 = vld [vmem:[%s4] sm:$0x1]
      %v2907 = vlaneseq
      %v2908 = vshrl.u32 %v2907, 7
      %v2909 = vsub.s32 0, %v2908
      %v2910 = vrot.slane %v2905, %v2909
      %v2948 = vunpack.c.l.b16 %v2869
      %v2949 = vunpack.c.l.b16 %v2870
      %v2950 = vunpack.c.l.b16 %v2871
      %v2951 = vunpack.c.l.b16 %v2872
      %v2952 = vunpack.c.l.b16 %v2873
      %v2953 = vunpack.c.l.b16 %v2874
      %v2954 = vunpack.c.l.b16 %v2875
      %v2955 = vunpack.c.l.b16 %v2876
      %v2956 = vunpack.c.l.b16 %v2877
      %v2957 = vunpack.c.l.b16 %v2878
      %v2958 = vunpack.c.l.b16 %v2879
      %v2959 = vunpack.c.l.b16 %v2880
      %v2960 = vunpack.c.l.b16 %v2881
      %v2961 = vunpack.c.l.b16 %v2882
      %v2962 = vunpack.c.l.b16 %v2883
      %v2963 = vunpack.c.l.b16 %v2884
      %v2964 = vunpack.c.l.b16 %v2885
      %v2965 = vunpack.c.l.b16 %v2886
      %v2966 = vunpack.c.l.b16 %v2887
      %v2967 = vunpack.c.l.b16 %v2888
      %v2968 = vunpack.c.l.b16 %v2889
      %v2969 = vunpack.c.l.b16 %v2890
      %v2970 = vunpack.c.l.b16 %v2891
      %v2971 = vunpack.c.l.b16 %v2892
      %v2972 = vunpack.c.l.b16 %v2893
      %v2973 = vunpack.c.l.b16 %v2894
      %v2974 = vunpack.c.l.b16 %v2895
      %v2975 = vunpack.c.l.b16 %v2896
      %v2976 = vunpack.c.l.b16 %v2897
      %v2977 = vunpack.c.l.b16 %v2898
      %v2978 = vunpack.c.l.b16 %v2899
      %v2979 = vunpack.c.l.b16 %v2900
      %v2980 = vunpack.c.l.b16 %v2901
      %v2981 = vunpack.c.l.b16 %v2902
      %v2982 = vunpack.c.l.b16 %v2903
      %v2983 = vunpack.c.l.b16 %v2904
      %v2984 = vpack.c.b16 %v2949, %v2948
      %v2985 = vpack.c.b16 %v2951, %v2950
      %v2986 = vpack.c.b16 %v2953, %v2952
      %v2987 = vpack.c.b16 %v2955, %v2954
      %v2988 = vpack.c.b16 %v2957, %v2956
      %v2989 = vpack.c.b16 %v2959, %v2958
      %v2990 = vpack.c.b16 %v2961, %v2960
      %v2991 = vpack.c.b16 %v2963, %v2962
      %v2992 = vpack.c.b16 %v2965, %v2964
      %v2993 = vpack.c.b16 %v2967, %v2966
      %v2994 = vpack.c.b16 %v2969, %v2968
      %v2995 = vpack.c.b16 %v2971, %v2970
      %v2996 = vpack.c.b16 %v2973, %v2972
      %v2997 = vpack.c.b16 %v2975, %v2974
      %v2998 = vpack.c.b16 %v2977, %v2976
      %v2999 = vpack.c.b16 %v2979, %v2978
      %v3000 = vpack.c.b16 %v2981, %v2980
      %v3001 = vpack.c.b16 %v2983, %v2982
      %v3021 = vsel %vm570, %v2817, 0
      %v3024 = vsel %vm570, %v2820, 0
      %v3027 = vsel %vm570, %v2823, 0
      %v3030 = vsel %vm570, %v2826, 0
      %v3033 = vsel %vm570, %v2829, 0
      %v3036 = vsel %vm570, %v2832, 0
      %v3039 = vsel %vm570, %v2835, 0
      %v3042 = vsel %vm570, %v2838, 0
      %v3045 = vsel %vm570, %v2841, 0
      %v3048 = vsel %vm570, %v2844, 0
      %v3051 = vsel %vm570, %v2847, 0
      %v3054 = vsel %vm570, %v2850, 0
      %v3057 = vsel %vm570, %v2853, 0
      %v3060 = vsel %vm570, %v2856, 0
      %v3063 = vsel %vm570, %v2859, 0
      %v3066 = vsel %vm570, %v2862, 0
      %v3069 = vsel %vm570, %v2865, 0
      %v3072 = vsel %vm570, %v2868, 0
      %3074 = vmatprep.subr.bf16.mxu0 0
      %3075 = vmatpush1.bf16.msra.mxu0 %v2984
      %3076 = vmatprep.subr.bf16.mxu0 0
      %3077 = vmatpush1.bf16.msra.mxu0 %v2985
      %3078 = vmatprep.subr.bf16.mxu0 0
      %3079 = vmatpush1.bf16.msra.mxu0 %v2986
      %3080 = vmatprep.subr.bf16.mxu0 0
      %3081 = vmatpush1.bf16.msra.mxu0 %v2987
      %3082 = vmatprep.subr.bf16.mxu0 0
      %3083 = vmatpush1.bf16.msra.mxu0 %v2988
      %3084 = vmatprep.subr.bf16.mxu0 0
      %3085 = vmatpush1.bf16.msra.mxu0 %v2989
      %3086 = vmatprep.subr.bf16.mxu0 0
      %3087 = vmatpush1.bf16.msra.mxu0 %v2990
      %3088 = vmatprep.subr.bf16.mxu0 0
      %3089 = vmatpush1.bf16.msra.mxu0 %v2991
      %3090 = vmatprep.subr.bf16.mxu0 0
      %3091 = vmatpush1.bf16.msra.mxu0 %v2992
      %3092 = vmatprep.subr.bf16.mxu0 0
      %3093 = vmatpush1.bf16.msra.mxu0 %v2993
      %3094 = vmatprep.subr.bf16.mxu0 0
      %3095 = vmatpush1.bf16.msra.mxu0 %v2994
      %3096 = vmatprep.subr.bf16.mxu0 0
      %3097 = vmatpush1.bf16.msra.mxu0 %v2995
      %3098 = vmatprep.subr.bf16.mxu0 0
      %3099 = vmatpush1.bf16.msra.mxu0 %v2996
      %3100 = vmatprep.subr.bf16.mxu0 0
      %3101 = vmatpush1.bf16.msra.mxu0 %v2997
      %3102 = vmatprep.subr.bf16.mxu0 0
      %3103 = vmatpush1.bf16.msra.mxu0 %v2998
      %3104 = vmatprep.subr.bf16.mxu0 0
      %3105 = vmatpush1.bf16.msra.mxu0 %v2999
      %3106 = vmatprep.mubr.bf16.mxu0 %v2816
      %3107 = vmatmul.mubr.bf16.gmra.mrb[0].mxu0 %v2815
      %v3108 = vpop.f32.mrb[0].mxu0
      %v3109 = vadd.f32 %v2910, %v3108
      %v3110 = vpop.f32.mrb[0].mxu0
      %v3111 = vpop.f32.mrb[0].mxu0
      %v3112 = vadd.f32 %v2910, %v3111
      %v3113 = vpop.f32.mrb[0].mxu0
      %3114 = vmatprep.mubr.bf16.mxu0 %v2819
      %3115 = vmatmul.mubr.bf16.gmra.mrb[0].mxu0 %v2818
      %v3116 = vpop.f32.mrb[0].mxu0
      %v3117 = vadd.f32 %v2910, %v3116
      %v3118 = vpop.f32.mrb[0].mxu0
      %v3119 = vpop.f32.mrb[0].mxu0
      %v3120 = vadd.f32 %v2910, %v3119
      %v3121 = vpop.f32.mrb[0].mxu0
      %3122 = vmatprep.mubr.bf16.mxu0 %v2822
      %3123 = vmatmul.mubr.bf16.gmra.mrb[0].mxu0 %v2821
      %v3124 = vpop.f32.mrb[0].mxu0
      %v3125 = vadd.f32 %v2910, %v3124
      %v3126 = vpop.f32.mrb[0].mxu0
      %v3127 = vpop.f32.mrb[0].mxu0
      %v3128 = vadd.f32 %v2910, %v3127
      %v3129 = vpop.f32.mrb[0].mxu0
      %3130 = vmatprep.mubr.bf16.mxu0 %v2825
      %3131 = vmatmul.mubr.bf16.gmra.mrb[0].mxu0 %v2824
      %v3132 = vpop.f32.mrb[0].mxu0
      %v3133 = vadd.f32 %v2910, %v3132
      %v3134 = vpop.f32.mrb[0].mxu0
      %v3135 = vpop.f32.mrb[0].mxu0
      %v3136 = vadd.f32 %v2910, %v3135
      %v3137 = vpop.f32.mrb[0].mxu0
      %3138 = vmatprep.mubr.bf16.mxu0 %v2828
      %3139 = vmatmul.mubr.bf16.gmra.mrb[0].mxu0 %v2827
      %v3140 = vpop.f32.mrb[0].mxu0
      %v3141 = vadd.f32 %v2910, %v3140
      %v3142 = vpop.f32.mrb[0].mxu0
      %v3143 = vpop.f32.mrb[0].mxu0
      %v3144 = vadd.f32 %v2910, %v3143
      %v3145 = vpop.f32.mrb[0].mxu0
      %3146 = vmatprep.mubr.bf16.mxu0 %v2831
      %3147 = vmatmul.mubr.bf16.gmra.mrb[0].mxu0 %v2830
      %v3148 = vpop.f32.mrb[0].mxu0
      %v3149 = vadd.f32 %v2910, %v3148
      %v3150 = vpop.f32.mrb[0].mxu0
      %v3151 = vpop.f32.mrb[0].mxu0
      %v3152 = vadd.f32 %v2910, %v3151
      %v3153 = vpop.f32.mrb[0].mxu0
      %3154 = vmatprep.mubr.bf16.mxu0 %v2834
      %3155 = vmatmul.mubr.bf16.gmra.mrb[0].mxu0 %v2833
      %v3156 = vpop.f32.mrb[0].mxu0
      %v3157 = vadd.f32 %v2910, %v3156
      %v3158 = vpop.f32.mrb[0].mxu0
      %v3159 = vpop.f32.mrb[0].mxu0
      %v3160 = vadd.f32 %v2910, %v3159
      %v3161 = vpop.f32.mrb[0].mxu0
      %3162 = vmatprep.mubr.bf16.mxu0 %v2837
      %3163 = vmatmul.mubr.bf16.gmra.mrb[0].mxu0 %v2836
      %v3164 = vpop.f32.mrb[0].mxu0
      %v3165 = vadd.f32 %v2910, %v3164
      %v3166 = vpop.f32.mrb[0].mxu0
      %v3167 = vpop.f32.mrb[0].mxu0
      %v3168 = vadd.f32 %v2910, %v3167
      %v3169 = vpop.f32.mrb[0].mxu0
      %3170 = vmatprep.mubr.bf16.mxu0 %v2840
      %3171 = vmatmul.mubr.bf16.gmra.mrb[0].mxu0 %v2839
      %v3172 = vpop.f32.mrb[0].mxu0
      %v3173 = vadd.f32 %v2910, %v3172
      %v3174 = vpop.f32.mrb[0].mxu0
      %v3175 = vpop.f32.mrb[0].mxu0
      %v3176 = vadd.f32 %v2910, %v3175
      %v3177 = vpop.f32.mrb[0].mxu0
      %3178 = vmatprep.mubr.bf16.mxu0 %v2843
      %3179 = vmatmul.mubr.bf16.gmra.mrb[0].mxu0 %v2842
      %v3180 = vpop.f32.mrb[0].mxu0
      %v3181 = vadd.f32 %v2910, %v3180
      %v3182 = vpop.f32.mrb[0].mxu0
      %v3183 = vpop.f32.mrb[0].mxu0
      %v3184 = vadd.f32 %v2910, %v3183
      %v3185 = vpop.f32.mrb[0].mxu0
      %3186 = vmatprep.mubr.bf16.mxu0 %v2846
      %3187 = vmatmul.mubr.bf16.gmra.mrb[0].mxu0 %v2845
      %v3188 = vpop.f32.mrb[0].mxu0
      %v3189 = vadd.f32 %v2910, %v3188
      %v3190 = vpop.f32.mrb[0].mxu0
      %v3191 = vpop.f32.mrb[0].mxu0
      %v3192 = vadd.f32 %v2910, %v3191
      %v3193 = vpop.f32.mrb[0].mxu0
      %3194 = vmatprep.mubr.bf16.mxu0 %v2849
      %3195 = vmatmul.mubr.bf16.gmra.mrb[0].mxu0 %v2848
      %v3196 = vpop.f32.mrb[0].mxu0
      %v3197 = vadd.f32 %v2910, %v3196
      %v3198 = vpop.f32.mrb[0].mxu0
      %v3199 = vpop.f32.mrb[0].mxu0
      %v3200 = vadd.f32 %v2910, %v3199
      %v3201 = vpop.f32.mrb[0].mxu0
      %3202 = vmatprep.mubr.bf16.mxu0 %v2852
      %3203 = vmatmul.mubr.bf16.gmra.mrb[0].mxu0 %v2851
      %v3204 = vpop.f32.mrb[0].mxu0
      %v3205 = vadd.f32 %v2910, %v3204
      %v3206 = vpop.f32.mrb[0].mxu0
      %v3207 = vpop.f32.mrb[0].mxu0
      %v3208 = vadd.f32 %v2910, %v3207
      %v3209 = vpop.f32.mrb[0].mxu0
      %3210 = vmatprep.mubr.bf16.mxu0 %v2855
      %3211 = vmatmul.mubr.bf16.gmra.mrb[0].mxu0 %v2854
      %v3212 = vpop.f32.mrb[0].mxu0
      %v3213 = vadd.f32 %v2910, %v3212
      %v3214 = vpop.f32.mrb[0].mxu0
      %v3215 = vpop.f32.mrb[0].mxu0
      %v3216 = vadd.f32 %v2910, %v3215
      %v3217 = vpop.f32.mrb[0].mxu0
      %3218 = vmatprep.mubr.bf16.mxu0 %v2858
      %3219 = vmatmul.mubr.bf16.gmra.mrb[0].mxu0 %v2857
      %v3220 = vpop.f32.mrb[0].mxu0
      %v3221 = vadd.f32 %v2910, %v3220
      %v3222 = vpop.f32.mrb[0].mxu0
      %v3223 = vpop.f32.mrb[0].mxu0
      %v3224 = vadd.f32 %v2910, %v3223
      %v3225 = vpop.f32.mrb[0].mxu0
      %3226 = vmatprep.mubr.bf16.mxu0 %v2861
      %3227 = vmatmul.mubr.bf16.gmra.mrb[0].mxu0 %v2860
      %v3228 = vpop.f32.mrb[0].mxu0
      %v3229 = vadd.f32 %v2910, %v3228
      %v3230 = vpop.f32.mrb[0].mxu0
      %v3231 = vpop.f32.mrb[0].mxu0
      %v3232 = vadd.f32 %v2910, %v3231
      %v3233 = vpop.f32.mrb[0].mxu0
      %3234 = vmatprep.mubr.bf16.mxu0 %v2864
      %3235 = vmatmul.mubr.bf16.gmra.mrb[0].mxu0 %v2863
      %v3236 = vpop.f32.mrb[0].mxu0
      %v3237 = vadd.f32 %v2910, %v3236
      %v3238 = vpop.f32.mrb[0].mxu0
      %v3239 = vpop.f32.mrb[0].mxu0
      %v3240 = vadd.f32 %v2910, %v3239
      %v3241 = vpop.f32.mrb[0].mxu0
      %3242 = vmatprep.mubr.bf16.mxu0 %v2867
      %3243 = vmatmul.mubr.bf16.gmra.mrb[0].mxu0 %v2866
      %v3244 = vpop.f32.mrb[0].mxu0
      %v3245 = vadd.f32 %v2910, %v3244
      %v3246 = vpop.f32.mrb[0].mxu0
      %v3247 = vpop.f32.mrb[0].mxu0
      %v3248 = vadd.f32 %v2910, %v3247
      %v3249 = vpop.f32.mrb[0].mxu0
      %3250 = vdwg.mxu0
      %3251 = vmatprep.subr.bf16.mxu0 0
      %3252 = vmatpush1.bf16.msra.mxu0 %v3000
      %3253 = vmatprep.subr.bf16.mxu0 0
      %3254 = vmatpush1.bf16.msra.mxu0 %v3001
      %3255 = vmatprep.subr.bf16.mxu0 0
      %3256 = vmatpush1.bf16.msra.mxu0 0
      %3257 = vmatprep.subr.bf16.mxu0 0
      %3258 = vmatpush1.bf16.msra.mxu0 0
      %3259 = vmatprep.subr.bf16.mxu0 0
      %3260 = vmatpush1.bf16.msra.mxu0 0
      %3261 = vmatprep.subr.bf16.mxu0 0
      %3262 = vmatpush1.bf16.msra.mxu0 0
      %3263 = vmatprep.subr.bf16.mxu0 0
      %3264 = vmatpush1.bf16.msra.mxu0 0
      %3265 = vmatprep.subr.bf16.mxu0 0
      %3266 = vmatpush1.bf16.msra.mxu0 0
      %3267 = vmatprep.subr.bf16.mxu0 0
      %3268 = vmatpush1.bf16.msra.mxu0 0
      %3269 = vmatprep.subr.bf16.mxu0 0
      %3270 = vmatpush1.bf16.msra.mxu0 0
      %3271 = vmatprep.subr.bf16.mxu0 0
      %3272 = vmatpush1.bf16.msra.mxu0 0
      %3273 = vmatprep.subr.bf16.mxu0 0
      %3274 = vmatpush1.bf16.msra.mxu0 0
      %3275 = vmatprep.subr.bf16.mxu0 0
      %3276 = vmatpush1.bf16.msra.mxu0 0
      %3277 = vmatprep.subr.bf16.mxu0 0
      %3278 = vmatpush1.bf16.msra.mxu0 0
      %3279 = vmatprep.subr.bf16.mxu0 0
      %3280 = vmatpush1.bf16.msra.mxu0 0
      %3281 = vmatprep.subr.bf16.mxu0 0
      %3282 = vmatpush1.bf16.msra.mxu0 0
      %3283 = vmatprep.mubr.bf16.mxu0 0
      %3284 = vmatmul.mubr.bf16.gmra.mrb[0].mxu0 %v3021
      %v3285 = vpop.f32.mrb[0].mxu0
      %v3286 = vadd.f32 %v3109, %v3285
      %v3287 = vpop.f32.mrb[0].mxu0
      %v3288 = vpop.f32.mrb[0].mxu0
      %v3289 = vadd.f32 %v3112, %v3288
      %v3290 = vpop.f32.mrb[0].mxu0
      %3291 = vmatprep.mubr.bf16.mxu0 0
      %3292 = vmatmul.mubr.bf16.gmra.mrb[0].mxu0 %v3024
      %v3293 = vpop.f32.mrb[0].mxu0
      %v3294 = vadd.f32 %v3117, %v3293
      %v3295 = vpop.f32.mrb[0].mxu0
      %v3296 = vpop.f32.mrb[0].mxu0
      %v3297 = vadd.f32 %v3120, %v3296
      %v3298 = vpop.f32.mrb[0].mxu0
      %3299 = vmatprep.mubr.bf16.mxu0 0
      %3300 = vmatmul.mubr.bf16.gmra.mrb[0].mxu0 %v3027
      %v3301 = vpop.f32.mrb[0].mxu0
      %v3302 = vadd.f32 %v3125, %v3301
      %v3303 = vpop.f32.mrb[0].mxu0
      %v3304 = vpop.f32.mrb[0].mxu0
      %v3305 = vadd.f32 %v3128, %v3304
      %v3306 = vpop.f32.mrb[0].mxu0
      %3307 = vmatprep.mubr.bf16.mxu0 0
      %3308 = vmatmul.mubr.bf16.gmra.mrb[0].mxu0 %v3030
      %v3309 = vpop.f32.mrb[0].mxu0
      %v3310 = vadd.f32 %v3133, %v3309
      %v3311 = vpop.f32.mrb[0].mxu0
      %v3312 = vpop.f32.mrb[0].mxu0
      %v3313 = vadd.f32 %v3136, %v3312
      %v3314 = vpop.f32.mrb[0].mxu0
      %3315 = vmatprep.mubr.bf16.mxu0 0
      %3316 = vmatmul.mubr.bf16.gmra.mrb[0].mxu0 %v3033
      %v3317 = vpop.f32.mrb[0].mxu0
      %v3318 = vadd.f32 %v3141, %v3317
      %v3319 = vpop.f32.mrb[0].mxu0
      %v3320 = vpop.f32.mrb[0].mxu0
      %v3321 = vadd.f32 %v3144, %v3320
      %v3322 = vpop.f32.mrb[0].mxu0
      %3323 = vmatprep.mubr.bf16.mxu0 0
      %3324 = vmatmul.mubr.bf16.gmra.mrb[0].mxu0 %v3036
      %v3325 = vpop.f32.mrb[0].mxu0
      %v3326 = vadd.f32 %v3149, %v3325
      %v3327 = vpop.f32.mrb[0].mxu0
      %v3328 = vpop.f32.mrb[0].mxu0
      %v3329 = vadd.f32 %v3152, %v3328
      %v3330 = vpop.f32.mrb[0].mxu0
      %3331 = vmatprep.mubr.bf16.mxu0 0
      %3332 = vmatmul.mubr.bf16.gmra.mrb[0].mxu0 %v3039
      %v3333 = vpop.f32.mrb[0].mxu0
      %v3334 = vadd.f32 %v3157, %v3333
      %v3335 = vpop.f32.mrb[0].mxu0
      %v3336 = vpop.f32.mrb[0].mxu0
      %v3337 = vadd.f32 %v3160, %v3336
      %v3338 = vpop.f32.mrb[0].mxu0
      %3339 = vmatprep.mubr.bf16.mxu0 0
      %3340 = vmatmul.mubr.bf16.gmra.mrb[0].mxu0 %v3042
      %v3341 = vpop.f32.mrb[0].mxu0
      %v3342 = vadd.f32 %v3165, %v3341
      %v3343 = vpop.f32.mrb[0].mxu0
      %v3344 = vpop.f32.mrb[0].mxu0
      %v3345 = vadd.f32 %v3168, %v3344
      %v3346 = vpop.f32.mrb[0].mxu0
      %3347 = vmatprep.mubr.bf16.mxu0 0
      %3348 = vmatmul.mubr.bf16.gmra.mrb[0].mxu0 %v3045
      %v3349 = vpop.f32.mrb[0].mxu0
      %v3350 = vadd.f32 %v3173, %v3349
      %v3351 = vpop.f32.mrb[0].mxu0
      %v3352 = vpop.f32.mrb[0].mxu0
      %v3353 = vadd.f32 %v3176, %v3352
      %v3354 = vpop.f32.mrb[0].mxu0
      %3355 = vmatprep.mubr.bf16.mxu0 0
      %3356 = vmatmul.mubr.bf16.gmra.mrb[0].mxu0 %v3048
      %v3357 = vpop.f32.mrb[0].mxu0
      %v3358 = vadd.f32 %v3181, %v3357
      %v3359 = vpop.f32.mrb[0].mxu0
      %v3360 = vpop.f32.mrb[0].mxu0
      %v3361 = vadd.f32 %v3184, %v3360
      %v3362 = vpop.f32.mrb[0].mxu0
      %3363 = vmatprep.mubr.bf16.mxu0 0
      %3364 = vmatmul.mubr.bf16.gmra.mrb[0].mxu0 %v3051
      %v3365 = vpop.f32.mrb[0].mxu0
      %v3366 = vadd.f32 %v3189, %v3365
      %v3367 = vpop.f32.mrb[0].mxu0
      %v3368 = vpop.f32.mrb[0].mxu0
      %v3369 = vadd.f32 %v3192, %v3368
      %v3370 = vpop.f32.mrb[0].mxu0
      %3371 = vmatprep.mubr.bf16.mxu0 0
      %3372 = vmatmul.mubr.bf16.gmra.mrb[0].mxu0 %v3054
      %v3373 = vpop.f32.mrb[0].mxu0
      %v3374 = vadd.f32 %v3197, %v3373
      %v3375 = vpop.f32.mrb[0].mxu0
      %v3376 = vpop.f32.mrb[0].mxu0
      %v3377 = vadd.f32 %v3200, %v3376
      %v3378 = vpop.f32.mrb[0].mxu0
      %3379 = vmatprep.mubr.bf16.mxu0 0
      %3380 = vmatmul.mubr.bf16.gmra.mrb[0].mxu0 %v3057
      %v3381 = vpop.f32.mrb[0].mxu0
      %v3382 = vadd.f32 %v3205, %v3381
      %v3383 = vpop.f32.mrb[0].mxu0
      %v3384 = vpop.f32.mrb[0].mxu0
      %v3385 = vadd.f32 %v3208, %v3384
      %v3386 = vpop.f32.mrb[0].mxu0
      %3387 = vmatprep.mubr.bf16.mxu0 0
      %3388 = vmatmul.mubr.bf16.gmra.mrb[0].mxu0 %v3060
      %v3389 = vpop.f32.mrb[0].mxu0
      %v3390 = vadd.f32 %v3213, %v3389
      %v3391 = vpop.f32.mrb[0].mxu0
      %v3392 = vpop.f32.mrb[0].mxu0
      %v3393 = vadd.f32 %v3216, %v3392
      %v3394 = vpop.f32.mrb[0].mxu0
      %3395 = vmatprep.mubr.bf16.mxu0 0
      %3396 = vmatmul.mubr.bf16.gmra.mrb[0].mxu0 %v3063
      %v3397 = vpop.f32.mrb[0].mxu0
      %v3398 = vadd.f32 %v3221, %v3397
      %v3399 = vpop.f32.mrb[0].mxu0
      %v3400 = vpop.f32.mrb[0].mxu0
      %v3401 = vadd.f32 %v3224, %v3400
      %v3402 = vpop.f32.mrb[0].mxu0
      %3403 = vmatprep.mubr.bf16.mxu0 0
      %3404 = vmatmul.mubr.bf16.gmra.mrb[0].mxu0 %v3066
      %v3405 = vpop.f32.mrb[0].mxu0
      %v3406 = vadd.f32 %v3229, %v3405
      %v3407 = vpop.f32.mrb[0].mxu0
      %v3408 = vpop.f32.mrb[0].mxu0
      %v3409 = vadd.f32 %v3232, %v3408
      %v3410 = vpop.f32.mrb[0].mxu0
      %3411 = vmatprep.mubr.bf16.mxu0 0
      %3412 = vmatmul.mubr.bf16.gmra.mrb[0].mxu0 %v3069
      %v3413 = vpop.f32.mrb[0].mxu0
      %v3414 = vadd.f32 %v3237, %v3413
      %v3415 = vpop.f32.mrb[0].mxu0
      %v3416 = vpop.f32.mrb[0].mxu0
      %v3417 = vadd.f32 %v3240, %v3416
      %v3418 = vpop.f32.mrb[0].mxu0
      %3419 = vmatprep.mubr.bf16.mxu0 0
      %3420 = vmatmul.mubr.bf16.gmra.mrb[0].mxu0 %v3072
      %v3421 = vpop.f32.mrb[0].mxu0
      %v3422 = vadd.f32 %v3245, %v3421
      %v3423 = vpop.f32.mrb[0].mxu0
      %v3424 = vpop.f32.mrb[0].mxu0
      %v3425 = vadd.f32 %v3248, %v3424
      %v3426 = vpop.f32.mrb[0].mxu0
      %3427 = vdwg.mxu0
      %v3428 = vmax.f32 %v3286, 0.0
      %v3429 = vmax.f32 %v3289, 0.0
      %v3430 = vmax.f32 %v3294, 0.0
      %v3431 = vmax.f32 %v3297, 0.0
      %v3432 = vmax.f32 %v3302, 0.0
      %v3433 = vmax.f32 %v3305, 0.0
      %v3434 = vmax.f32 %v3310, 0.0
      %v3435 = vmax.f32 %v3313, 0.0
      %v3436 = vmax.f32 %v3318, 0.0
      %v3437 = vmax.f32 %v3321, 0.0
      %v3438 = vmax.f32 %v3326, 0.0
      %v3439 = vmax.f32 %v3329, 0.0
      %v3440 = vmax.f32 %v3334, 0.0
      %v3441 = vmax.f32 %v3337, 0.0
      %v3442 = vmax.f32 %v3342, 0.0
      %v3443 = vmax.f32 %v3345, 0.0
      %v3444 = vmax.f32 %v3350, 0.0
      %v3445 = vmax.f32 %v3353, 0.0
      %v3446 = vmax.f32 %v3358, 0.0
      %v3447 = vmax.f32 %v3361, 0.0
      %v3448 = vmax.f32 %v3366, 0.0
      %v3449 = vmax.f32 %v3369, 0.0
      %v3450 = vmax.f32 %v3374, 0.0
      %v3451 = vmax.f32 %v3377, 0.0
      %v3452 = vmax.f32 %v3382, 0.0
      %v3453 = vmax.f32 %v3385, 0.0
      %v3454 = vmax.f32 %v3390, 0.0
      %v3455 = vmax.f32 %v3393, 0.0
      %v3456 = vmax.f32 %v3398, 0.0
      %v3457 = vmax.f32 %v3401, 0.0
      %v3458 = vmax.f32 %v3406, 0.0
      %v3459 = vmax.f32 %v3409, 0.0
      %v3460 = vmax.f32 %v3414, 0.0
      %v3461 = vmax.f32 %v3417, 0.0
      %v3462 = vmax.f32 %v3422, 0.0
      %v3463 = vmax.f32 %v3425, 0.0
      %v3464 = vld [vmem:[%s2] sm:$0xff]
      %v3465 = vld [vmem:[%s2 + $0x8] sm:$0xff]
      %v3466 = vld [vmem:[%s2 + $0x10] sm:$0xff]
      %v3467 = vld [vmem:[%s2 + $0x18] sm:$0xff]
      %v3468 = vld [vmem:[%s2 + $0x20] sm:$0xff]
      %v3469 = vld [vmem:[%s2 + $0x28] sm:$0xff]
      %v3470 = vld [vmem:[%s2 + $0x30] sm:$0xff]
      %v3471 = vld [vmem:[%s2 + $0x38] sm:$0xff]
      %v3472 = vld [vmem:[%s2 + $0x40] sm:$0xff]
      %v3473 = vld [vmem:[%s2 + $0x48] sm:$0xff]
      %v3474 = vld [vmem:[%s2 + $0x50] sm:$0xff]
      %v3475 = vld [vmem:[%s2 + $0x58] sm:$0xff]
      %v3476 = vld [vmem:[%s2 + $0x60] sm:$0xff]
      %v3477 = vld [vmem:[%s2 + $0x68] sm:$0xff]
      %v3478 = vld [vmem:[%s2 + $0x70] sm:$0xff]
      %v3479 = vld [vmem:[%s2 + $0x78] sm:$0xff]
      %v3480 = vld [vmem:[%s2 + $0x80] sm:$0xff]
      %v3481 = vld [vmem:[%s2 + $0x88] sm:$0xff]
      %v3482 = vld [vmem:[%s2 + $0x90] sm:$0xff]
      %v3483 = vld [vmem:[%s2 + $0x98] sm:$0xff]
      %v3484 = vld [vmem:[%s2 + $0xa0] sm:$0xff]
      %v3485 = vld [vmem:[%s2 + $0xa8] sm:$0xff]
      %v3486 = vld [vmem:[%s2 + $0xb0] sm:$0xff]
      %v3487 = vld [vmem:[%s2 + $0xb8] sm:$0xff]
      %v3488 = vld [vmem:[%s2 + $0xc0] sm:$0xff]
      %v3489 = vld [vmem:[%s2 + $0xc8] sm:$0xff]
      %v3490 = vld [vmem:[%s2 + $0xd0] sm:$0xff]
      %v3491 = vld [vmem:[%s2 + $0xd8] sm:$0xff]
      %v3492 = vld [vmem:[%s2 + $0xe0] sm:$0xff]
      %v3493 = vld [vmem:[%s2 + $0xe8] sm:$0xff]
      %v3494 = vld [vmem:[%s2 + $0xf0] sm:$0xff]
      %v3495 = vld [vmem:[%s2 + $0xf8] sm:$0xff]
      %v3496 = vld [vmem:[%s2 + $0x100] sm:$0xff]
      %v3497 = vld [vmem:[%s2 + $0x108] sm:$0xff]
      %v3498 = vld [vmem:[%s2 + $0x110] sm:$0xff]
      %v3499 = vld [vmem:[%s2 + $0x118] sm:$0xff]
      %3501 = vset.pattern.permute.xlu0 0
      %3502 = vperm.xlu0 %3501, %v3464
      %v3503 = vpop.permute.xlu0 %3502
      %3506 = vset.pattern.permute.xlu0 0
      %3507 = vperm.xlu0 %3506, %v3465
      %v3508 = vpop.permute.xlu0 %3507
      %3511 = vset.pattern.permute.xlu0 0
      %3512 = vperm.xlu0 %3511, %v3466
      %v3513 = vpop.permute.xlu0 %3512
      %3516 = vset.pattern.permute.xlu0 0
      %3517 = vperm.xlu0 %3516, %v3467
      %v3518 = vpop.permute.xlu0 %3517
      %3521 = vset.pattern.permute.xlu0 0
      %3522 = vperm.xlu0 %3521, %v3468
      %v3523 = vpop.permute.xlu0 %3522
      %3526 = vset.pattern.permute.xlu0 0
      %3527 = vperm.xlu0 %3526, %v3469
      %v3528 = vpop.permute.xlu0 %3527
      %3531 = vset.pattern.permute.xlu0 0
      %3532 = vperm.xlu0 %3531, %v3470
      %v3533 = vpop.permute.xlu0 %3532
      %3536 = vset.pattern.permute.xlu0 0
      %3537 = vperm.xlu0 %3536, %v3471
      %v3538 = vpop.permute.xlu0 %3537
      %3541 = vset.pattern.permute.xlu0 0
      %3542 = vperm.xlu0 %3541, %v3472
      %v3543 = vpop.permute.xlu0 %3542
      %3546 = vset.pattern.permute.xlu0 0
      %3547 = vperm.xlu0 %3546, %v3473
      %v3548 = vpop.permute.xlu0 %3547
      %3551 = vset.pattern.permute.xlu0 0
      %3552 = vperm.xlu0 %3551, %v3474
      %v3553 = vpop.permute.xlu0 %3552
      %3556 = vset.pattern.permute.xlu0 0
      %3557 = vperm.xlu0 %3556, %v3475
      %v3558 = vpop.permute.xlu0 %3557
      %3561 = vset.pattern.permute.xlu0 0
      %3562 = vperm.xlu0 %3561, %v3476
      %v3563 = vpop.permute.xlu0 %3562
      %3566 = vset.pattern.permute.xlu0 0
      %3567 = vperm.xlu0 %3566, %v3477
      %v3568 = vpop.permute.xlu0 %3567
      %3571 = vset.pattern.permute.xlu0 0
      %3572 = vperm.xlu0 %3571, %v3478
      %v3573 = vpop.permute.xlu0 %3572
      %3576 = vset.pattern.permute.xlu0 0
      %3577 = vperm.xlu0 %3576, %v3479
      %v3578 = vpop.permute.xlu0 %3577
      %3581 = vset.pattern.permute.xlu0 0
      %3582 = vperm.xlu0 %3581, %v3480
      %v3583 = vpop.permute.xlu0 %3582
      %3586 = vset.pattern.permute.xlu0 0
      %3587 = vperm.xlu0 %3586, %v3481
      %v3588 = vpop.permute.xlu0 %3587
      %3591 = vset.pattern.permute.xlu0 0
      %3592 = vperm.xlu0 %3591, %v3482
      %v3593 = vpop.permute.xlu0 %3592
      %3596 = vset.pattern.permute.xlu0 0
      %3597 = vperm.xlu0 %3596, %v3483
      %v3598 = vpop.permute.xlu0 %3597
      %3601 = vset.pattern.permute.xlu0 0
      %3602 = vperm.xlu0 %3601, %v3484
      %v3603 = vpop.permute.xlu0 %3602
      %3606 = vset.pattern.permute.xlu0 0
      %3607 = vperm.xlu0 %3606, %v3485
      %v3608 = vpop.permute.xlu0 %3607
      %3611 = vset.pattern.permute.xlu0 0
      %3612 = vperm.xlu0 %3611, %v3486
      %v3613 = vpop.permute.xlu0 %3612
      %3616 = vset.pattern.permute.xlu0 0
      %3617 = vperm.xlu0 %3616, %v3487
      %v3618 = vpop.permute.xlu0 %3617
      %3621 = vset.pattern.permute.xlu0 0
      %3622 = vperm.xlu0 %3621, %v3488
      %v3623 = vpop.permute.xlu0 %3622
      %3626 = vset.pattern.permute.xlu0 0
      %3627 = vperm.xlu0 %3626, %v3489
      %v3628 = vpop.permute.xlu0 %3627
      %3631 = vset.pattern.permute.xlu0 0
      %3632 = vperm.xlu0 %3631, %v3490
      %v3633 = vpop.permute.xlu0 %3632
      %3636 = vset.pattern.permute.xlu0 0
      %3637 = vperm.xlu0 %3636, %v3491
      %v3638 = vpop.permute.xlu0 %3637
      %3641 = vset.pattern.permute.xlu0 0
      %3642 = vperm.xlu0 %3641, %v3492
      %v3643 = vpop.permute.xlu0 %3642
      %3646 = vset.pattern.permute.xlu0 0
      %3647 = vperm.xlu0 %3646, %v3493
      %v3648 = vpop.permute.xlu0 %3647
      %3651 = vset.pattern.permute.xlu0 0
      %3652 = vperm.xlu0 %3651, %v3494
      %v3653 = vpop.permute.xlu0 %3652
      %3656 = vset.pattern.permute.xlu0 0
      %3657 = vperm.xlu0 %3656, %v3495
      %v3658 = vpop.permute.xlu0 %3657
      %3661 = vset.pattern.permute.xlu0 0
      %3662 = vperm.xlu0 %3661, %v3496
      %v3663 = vpop.permute.xlu0 %3662
      %3666 = vset.pattern.permute.xlu0 0
      %3667 = vperm.xlu0 %3666, %v3497
      %v3668 = vpop.permute.xlu0 %3667
      %3671 = vset.pattern.permute.xlu0 0
      %3672 = vperm.xlu0 %3671, %v3498
      %v3673 = vpop.permute.xlu0 %3672
      %3676 = vset.pattern.permute.xlu0 0
      %3677 = vperm.xlu0 %3676, %v3499
      %v3678 = vpop.permute.xlu0 %3677
      %v3680 = vmul.f32 %v3428, %v3503
      %v3681 = vmul.f32 %v3429, %v3508
      %v3682 = vmul.f32 %v3430, %v3513
      %v3683 = vmul.f32 %v3431, %v3518
      %v3684 = vmul.f32 %v3432, %v3523
      %v3685 = vmul.f32 %v3433, %v3528
      %v3686 = vmul.f32 %v3434, %v3533
      %v3687 = vmul.f32 %v3435, %v3538
      %v3688 = vmul.f32 %v3436, %v3543
      %v3689 = vmul.f32 %v3437, %v3548
      %v3690 = vmul.f32 %v3438, %v3553
      %v3691 = vmul.f32 %v3439, %v3558
      %v3692 = vmul.f32 %v3440, %v3563
      %v3693 = vmul.f32 %v3441, %v3568
      %v3694 = vmul.f32 %v3442, %v3573
      %v3695 = vmul.f32 %v3443, %v3578
      %v3696 = vmul.f32 %v3444, %v3583
      %v3697 = vmul.f32 %v3445, %v3588
      %v3698 = vmul.f32 %v3446, %v3593
      %v3699 = vmul.f32 %v3447, %v3598
      %v3700 = vmul.f32 %v3448, %v3603
      %v3701 = vmul.f32 %v3449, %v3608
      %v3702 = vmul.f32 %v3450, %v3613
      %v3703 = vmul.f32 %v3451, %v3618
      %v3704 = vmul.f32 %v3452, %v3623
      %v3705 = vmul.f32 %v3453, %v3628
      %v3706 = vmul.f32 %v3454, %v3633
      %v3707 = vmul.f32 %v3455, %v3638
      %v3708 = vmul.f32 %v3456, %v3643
      %v3709 = vmul.f32 %v3457, %v3648
      %v3710 = vmul.f32 %v3458, %v3653
      %v3711 = vmul.f32 %v3459, %v3658
      %v3712 = vmul.f32 %v3460, %v3663
      %v3713 = vmul.f32 %v3461, %v3668
      %v3714 = vmul.f32 %v3462, %v3673
      %v3715 = vmul.f32 %v3463, %v3678
      %v3716 = vpack.c.bf16 %v3681, %v3680
      %v3717 = vpack.c.bf16 %v3683, %v3682
      %v3718 = vpack.c.bf16 %v3685, %v3684
      %v3719 = vpack.c.bf16 %v3687, %v3686
      %v3720 = vpack.c.bf16 %v3689, %v3688
      %v3721 = vpack.c.bf16 %v3691, %v3690
      %v3722 = vpack.c.bf16 %v3693, %v3692
      %v3723 = vpack.c.bf16 %v3695, %v3694
      %v3724 = vpack.c.bf16 %v3697, %v3696
      %v3725 = vpack.c.bf16 %v3699, %v3698
      %v3726 = vpack.c.bf16 %v3701, %v3700
      %v3727 = vpack.c.bf16 %v3703, %v3702
      %v3728 = vpack.c.bf16 %v3705, %v3704
      %v3729 = vpack.c.bf16 %v3707, %v3706
      %v3730 = vpack.c.bf16 %v3709, %v3708
      %v3731 = vpack.c.bf16 %v3711, %v3710
      %v3732 = vpack.c.bf16 %v3713, %v3712
      %v3733 = vpack.c.bf16 %v3715, %v3714
      %v3752 = vunpack.c.l.b16 %v3716
      %v3753 = vunpack.c.h.b16 %v3716
      %v3754 = vunpack.c.l.b16 %v3717
      %v3755 = vunpack.c.h.b16 %v3717
      %v3756 = vunpack.c.l.b16 %v3718
      %v3757 = vunpack.c.h.b16 %v3718
      %v3758 = vunpack.c.l.b16 %v3719
      %v3759 = vunpack.c.h.b16 %v3719
      %v3760 = vunpack.c.l.b16 %v3720
      %v3761 = vunpack.c.h.b16 %v3720
      %v3762 = vunpack.c.l.b16 %v3721
      %v3763 = vunpack.c.h.b16 %v3721
      %v3764 = vunpack.c.l.b16 %v3722
      %v3765 = vunpack.c.h.b16 %v3722
      %v3766 = vunpack.c.l.b16 %v3723
      %v3767 = vunpack.c.h.b16 %v3723
      %v3768 = vunpack.c.l.b16 %v3724
      %v3769 = vunpack.c.h.b16 %v3724
      %v3770 = vunpack.c.l.b16 %v3725
      %v3771 = vunpack.c.h.b16 %v3725
      %v3772 = vunpack.c.l.b16 %v3726
      %v3773 = vunpack.c.h.b16 %v3726
      %v3774 = vunpack.c.l.b16 %v3727
      %v3775 = vunpack.c.h.b16 %v3727
      %v3776 = vunpack.c.l.b16 %v3728
      %v3777 = vunpack.c.h.b16 %v3728
      %v3778 = vunpack.c.l.b16 %v3729
      %v3779 = vunpack.c.h.b16 %v3729
      %v3780 = vunpack.c.l.b16 %v3730
      %v3781 = vunpack.c.h.b16 %v3730
      %v3782 = vunpack.c.l.b16 %v3731
      %v3783 = vunpack.c.h.b16 %v3731
      %v3784 = vunpack.c.l.b16 %v3732
      %v3785 = vunpack.c.h.b16 %v3732
      %v3786 = vunpack.c.l.b16 %v3733
      %v3787 = vunpack.c.h.b16 %v3733
      %v3788 = vpack.c.b16 %v3752, %v3752
      %v3789 = vpack.c.b16 %v3753, %v3753
      %v3790 = vpack.c.b16 %v3754, %v3754
      %v3791 = vpack.c.b16 %v3755, %v3755
      %v3792 = vpack.c.b16 %v3756, %v3756
      %v3793 = vpack.c.b16 %v3757, %v3757
      %v3794 = vpack.c.b16 %v3758, %v3758
      %v3795 = vpack.c.b16 %v3759, %v3759
      %v3796 = vpack.c.b16 %v3760, %v3760
      %v3797 = vpack.c.b16 %v3761, %v3761
      %v3798 = vpack.c.b16 %v3762, %v3762
      %v3799 = vpack.c.b16 %v3763, %v3763
      %v3800 = vpack.c.b16 %v3764, %v3764
      %v3801 = vpack.c.b16 %v3765, %v3765
      %v3802 = vpack.c.b16 %v3766, %v3766
      %v3803 = vpack.c.b16 %v3767, %v3767
      %v3804 = vpack.c.b16 %v3768, %v3768
      %v3805 = vpack.c.b16 %v3769, %v3769
      %v3806 = vpack.c.b16 %v3770, %v3770
      %v3807 = vpack.c.b16 %v3771, %v3771
      %v3808 = vpack.c.b16 %v3772, %v3772
      %v3809 = vpack.c.b16 %v3773, %v3773
      %v3810 = vpack.c.b16 %v3774, %v3774
      %v3811 = vpack.c.b16 %v3775, %v3775
      %v3812 = vpack.c.b16 %v3776, %v3776
      %v3813 = vpack.c.b16 %v3777, %v3777
      %v3814 = vpack.c.b16 %v3778, %v3778
      %v3815 = vpack.c.b16 %v3779, %v3779
      %v3816 = vpack.c.b16 %v3780, %v3780
      %v3817 = vpack.c.b16 %v3781, %v3781
      %v3818 = vpack.c.b16 %v3782, %v3782
      %v3819 = vpack.c.b16 %v3783, %v3783
      %v3820 = vpack.c.b16 %v3784, %v3784
      %v3821 = vpack.c.b16 %v3785, %v3785
      %v3822 = vpack.c.b16 %v3786, %v3786
      %v3823 = vpack.c.b16 %v3787, %v3787
      %vm3824 = vsmask.f32 5392
      %vm3825 = vmor %vm412, %vm3824
      %v3827 = vshrl.u32 %v3788, 16
      %v3829 = vrot.slane %v3827, 6
      %v3830 = vshll.u32 %v3788, 16
      %v3832 = vrot.slane %v3830, 7
      %v3833 = vor.u32 %v3829, %v3832
      %v3834 = vrot.slane %v3833, 4
      %v3836 = vshrl.u32 %v3789, 16
      %v3838 = vrot.slane %v3836, 6
      %v3839 = vshll.u32 %v3789, 16
      %v3841 = vrot.slane %v3839, 7
      %v3842 = vor.u32 %v3838, %v3841
      %v3843 = vsel %vm3825, %v3834, %v3842
      %v3844 = vrot.slane %v3842, 4
      %v3846 = vshrl.u32 %v3790, 16
      %v3848 = vrot.slane %v3846, 6
      %v3849 = vshll.u32 %v3790, 16
      %v3851 = vrot.slane %v3849, 7
      %v3852 = vor.u32 %v3848, %v3851
      %v3853 = vsel %vm3825, %v3844, %v3852
      %v3854 = vrot.slane %v3852, 4
      %v3856 = vshrl.u32 %v3791, 16
      %v3858 = vrot.slane %v3856, 6
      %v3859 = vshll.u32 %v3791, 16
      %v3861 = vrot.slane %v3859, 7
      %v3862 = vor.u32 %v3858, %v3861
      %v3863 = vsel %vm3825, %v3854, %v3862
      %v3864 = vrot.slane %v3862, 4
      %v3866 = vshrl.u32 %v3792, 16
      %v3868 = vrot.slane %v3866, 6
      %v3869 = vshll.u32 %v3792, 16
      %v3871 = vrot.slane %v3869, 7
      %v3872 = vor.u32 %v3868, %v3871
      %v3873 = vsel %vm3825, %v3864, %v3872
      %v3874 = vrot.slane %v3872, 4
      %v3876 = vshrl.u32 %v3793, 16
      %v3878 = vrot.slane %v3876, 6
      %v3879 = vshll.u32 %v3793, 16
      %v3881 = vrot.slane %v3879, 7
      %v3882 = vor.u32 %v3878, %v3881
      %v3883 = vsel %vm3825, %v3874, %v3882
      %v3884 = vrot.slane %v3882, 4
      %v3886 = vshrl.u32 %v3794, 16
      %v3888 = vrot.slane %v3886, 6
      %v3889 = vshll.u32 %v3794, 16
      %v3891 = vrot.slane %v3889, 7
      %v3892 = vor.u32 %v3888, %v3891
      %v3893 = vsel %vm3825, %v3884, %v3892
      %v3894 = vrot.slane %v3892, 4
      %v3896 = vshrl.u32 %v3795, 16
      %v3898 = vrot.slane %v3896, 6
      %v3899 = vshll.u32 %v3795, 16
      %v3901 = vrot.slane %v3899, 7
      %v3902 = vor.u32 %v3898, %v3901
      %v3903 = vsel %vm3825, %v3894, %v3902
      %v3904 = vrot.slane %v3902, 4
      %v3906 = vshrl.u32 %v3796, 16
      %v3908 = vrot.slane %v3906, 6
      %v3909 = vshll.u32 %v3796, 16
      %v3911 = vrot.slane %v3909, 7
      %v3912 = vor.u32 %v3908, %v3911
      %v3913 = vsel %vm3825, %v3904, %v3912
      %v3914 = vrot.slane %v3912, 4
      %v3916 = vshrl.u32 %v3797, 16
      %v3918 = vrot.slane %v3916, 6
      %v3919 = vshll.u32 %v3797, 16
      %v3921 = vrot.slane %v3919, 7
      %v3922 = vor.u32 %v3918, %v3921
      %v3923 = vsel %vm3825, %v3914, %v3922
      %v3924 = vrot.slane %v3922, 4
      %v3926 = vshrl.u32 %v3798, 16
      %v3928 = vrot.slane %v3926, 6
      %v3929 = vshll.u32 %v3798, 16
      %v3931 = vrot.slane %v3929, 7
      %v3932 = vor.u32 %v3928, %v3931
      %v3933 = vsel %vm3825, %v3924, %v3932
      %v3934 = vrot.slane %v3932, 4
      %v3936 = vshrl.u32 %v3799, 16
      %v3938 = vrot.slane %v3936, 6
      %v3939 = vshll.u32 %v3799, 16
      %v3941 = vrot.slane %v3939, 7
      %v3942 = vor.u32 %v3938, %v3941
      %v3943 = vsel %vm3825, %v3934, %v3942
      %v3944 = vrot.slane %v3942, 4
      %v3946 = vshrl.u32 %v3800, 16
      %v3948 = vrot.slane %v3946, 6
      %v3949 = vshll.u32 %v3800, 16
      %v3951 = vrot.slane %v3949, 7
      %v3952 = vor.u32 %v3948, %v3951
      %v3953 = vsel %vm3825, %v3944, %v3952
      %v3954 = vrot.slane %v3952, 4
      %v3956 = vshrl.u32 %v3801, 16
      %v3958 = vrot.slane %v3956, 6
      %v3959 = vshll.u32 %v3801, 16
      %v3961 = vrot.slane %v3959, 7
      %v3962 = vor.u32 %v3958, %v3961
      %v3963 = vsel %vm3825, %v3954, %v3962
      %v3964 = vrot.slane %v3962, 4
      %v3966 = vshrl.u32 %v3802, 16
      %v3968 = vrot.slane %v3966, 6
      %v3969 = vshll.u32 %v3802, 16
      %v3971 = vrot.slane %v3969, 7
      %v3972 = vor.u32 %v3968, %v3971
      %v3973 = vsel %vm3825, %v3964, %v3972
      %v3974 = vrot.slane %v3972, 4
      %v3976 = vshrl.u32 %v3803, 16
      %v3978 = vrot.slane %v3976, 6
      %v3979 = vshll.u32 %v3803, 16
      %v3981 = vrot.slane %v3979, 7
      %v3982 = vor.u32 %v3978, %v3981
      %v3983 = vsel %vm3825, %v3974, %v3982
      %v3984 = vrot.slane %v3982, 4
      %v3986 = vshrl.u32 %v3804, 16
      %v3988 = vrot.slane %v3986, 6
      %v3989 = vshll.u32 %v3804, 16
      %v3991 = vrot.slane %v3989, 7
      %v3992 = vor.u32 %v3988, %v3991
      %v3993 = vsel %vm3825, %v3984, %v3992
      %v3994 = vrot.slane %v3992, 4
      %v3996 = vshrl.u32 %v3805, 16
      %v3998 = vrot.slane %v3996, 6
      %v3999 = vshll.u32 %v3805, 16
      %v4001 = vrot.slane %v3999, 7
      %v4002 = vor.u32 %v3998, %v4001
      %v4003 = vsel %vm3825, %v3994, %v4002
      %v4004 = vrot.slane %v4002, 4
      %v4006 = vshrl.u32 %v3806, 16
      %v4008 = vrot.slane %v4006, 6
      %v4009 = vshll.u32 %v3806, 16
      %v4011 = vrot.slane %v4009, 7
      %v4012 = vor.u32 %v4008, %v4011
      %v4013 = vsel %vm3825, %v4004, %v4012
      %v4014 = vrot.slane %v4012, 4
      %v4016 = vshrl.u32 %v3807, 16
      %v4018 = vrot.slane %v4016, 6
      %v4019 = vshll.u32 %v3807, 16
      %v4021 = vrot.slane %v4019, 7
      %v4022 = vor.u32 %v4018, %v4021
      %v4023 = vsel %vm3825, %v4014, %v4022
      %v4024 = vrot.slane %v4022, 4
      %v4026 = vshrl.u32 %v3808, 16
      %v4028 = vrot.slane %v4026, 6
      %v4029 = vshll.u32 %v3808, 16
      %v4031 = vrot.slane %v4029, 7
      %v4032 = vor.u32 %v4028, %v4031
      %v4033 = vsel %vm3825, %v4024, %v4032
      %v4034 = vrot.slane %v4032, 4
      %v4036 = vshrl.u32 %v3809, 16
      %v4038 = vrot.slane %v4036, 6
      %v4039 = vshll.u32 %v3809, 16
      %v4041 = vrot.slane %v4039, 7
      %v4042 = vor.u32 %v4038, %v4041
      %v4043 = vsel %vm3825, %v4034, %v4042
      %v4044 = vrot.slane %v4042, 4
      %v4046 = vshrl.u32 %v3810, 16
      %v4048 = vrot.slane %v4046, 6
      %v4049 = vshll.u32 %v3810, 16
      %v4051 = vrot.slane %v4049, 7
      %v4052 = vor.u32 %v4048, %v4051
      %v4053 = vsel %vm3825, %v4044, %v4052
      %v4054 = vrot.slane %v4052, 4
      %v4056 = vshrl.u32 %v3811, 16
      %v4058 = vrot.slane %v4056, 6
      %v4059 = vshll.u32 %v3811, 16
      %v4061 = vrot.slane %v4059, 7
      %v4062 = vor.u32 %v4058, %v4061
      %v4063 = vsel %vm3825, %v4054, %v4062
      %v4064 = vrot.slane %v4062, 4
      %v4066 = vshrl.u32 %v3812, 16
      %v4068 = vrot.slane %v4066, 6
      %v4069 = vshll.u32 %v3812, 16
      %v4071 = vrot.slane %v4069, 7
      %v4072 = vor.u32 %v4068, %v4071
      %v4073 = vsel %vm3825, %v4064, %v4072
      %v4074 = vrot.slane %v4072, 4
      %v4076 = vshrl.u32 %v3813, 16
      %v4078 = vrot.slane %v4076, 6
      %v4079 = vshll.u32 %v3813, 16
      %v4081 = vrot.slane %v4079, 7
      %v4082 = vor.u32 %v4078, %v4081
      %v4083 = vsel %vm3825, %v4074, %v4082
      %v4084 = vrot.slane %v4082, 4
      %v4086 = vshrl.u32 %v3814, 16
      %v4088 = vrot.slane %v4086, 6
      %v4089 = vshll.u32 %v3814, 16
      %v4091 = vrot.slane %v4089, 7
      %v4092 = vor.u32 %v4088, %v4091
      %v4093 = vsel %vm3825, %v4084, %v4092
      %v4094 = vrot.slane %v4092, 4
      %v4096 = vshrl.u32 %v3815, 16
      %v4098 = vrot.slane %v4096, 6
      %v4099 = vshll.u32 %v3815, 16
      %v4101 = vrot.slane %v4099, 7
      %v4102 = vor.u32 %v4098, %v4101
      %v4103 = vsel %vm3825, %v4094, %v4102
      %v4104 = vrot.slane %v4102, 4
      %v4106 = vshrl.u32 %v3816, 16
      %v4108 = vrot.slane %v4106, 6
      %v4109 = vshll.u32 %v3816, 16
      %v4111 = vrot.slane %v4109, 7
      %v4112 = vor.u32 %v4108, %v4111
      %v4113 = vsel %vm3825, %v4104, %v4112
      %v4114 = vrot.slane %v4112, 4
      %v4116 = vshrl.u32 %v3817, 16
      %v4118 = vrot.slane %v4116, 6
      %v4119 = vshll.u32 %v3817, 16
      %v4121 = vrot.slane %v4119, 7
      %v4122 = vor.u32 %v4118, %v4121
      %v4123 = vsel %vm3825, %v4114, %v4122
      %v4124 = vrot.slane %v4122, 4
      %v4126 = vshrl.u32 %v3818, 16
      %v4128 = vrot.slane %v4126, 6
      %v4129 = vshll.u32 %v3818, 16
      %v4131 = vrot.slane %v4129, 7
      %v4132 = vor.u32 %v4128, %v4131
      %v4133 = vsel %vm3825, %v4124, %v4132
      %v4134 = vrot.slane %v4132, 4
      %v4136 = vshrl.u32 %v3819, 16
      %v4138 = vrot.slane %v4136, 6
      %v4139 = vshll.u32 %v3819, 16
      %v4141 = vrot.slane %v4139, 7
      %v4142 = vor.u32 %v4138, %v4141
      %v4143 = vsel %vm3825, %v4134, %v4142
      %v4144 = vrot.slane %v4142, 4
      %v4146 = vshrl.u32 %v3820, 16
      %v4148 = vrot.slane %v4146, 6
      %v4149 = vshll.u32 %v3820, 16
      %v4151 = vrot.slane %v4149, 7
      %v4152 = vor.u32 %v4148, %v4151
      %v4153 = vsel %vm3825, %v4144, %v4152
      %v4154 = vrot.slane %v4152, 4
      %v4156 = vshrl.u32 %v3821, 16
      %v4158 = vrot.slane %v4156, 6
      %v4159 = vshll.u32 %v3821, 16
      %v4161 = vrot.slane %v4159, 7
      %v4162 = vor.u32 %v4158, %v4161
      %v4163 = vsel %vm3825, %v4154, %v4162
      %v4164 = vrot.slane %v4162, 4
      %v4166 = vshrl.u32 %v3822, 16
      %v4168 = vrot.slane %v4166, 6
      %v4169 = vshll.u32 %v3822, 16
      %v4171 = vrot.slane %v4169, 7
      %v4172 = vor.u32 %v4168, %v4171
      %v4173 = vsel %vm3825, %v4164, %v4172
      %v4174 = vrot.slane %v4172, 4
      %v4176 = vshrl.u32 %v3823, 16
      %v4178 = vrot.slane %v4176, 6
      %v4179 = vshll.u32 %v3823, 16
      %v4181 = vrot.slane %v4179, 7
      %v4182 = vor.u32 %v4178, %v4181
      %v4183 = vsel %vm3825, %v4174, %v4182
      %v4184 = vrot.slane %v4182, 4
      %v4222 = vld [vmem:[#allocation3 + $0x8] sm:$0xe]
      %v4223 = vsel %vm419, %v3833, %v4222
      %4224 = vst [vmem:[#allocation3 + $0x8] sm:$0xe] %v4223
      %4225 = vst.msk [vmem:[#allocation3 + $0xc] sm:$0xf] %vm408, %v3843
      %4226 = vst.msk [vmem:[#allocation3 + $0x10] sm:$0xf] %vm408, %v3853
      %4227 = vst.msk [vmem:[#allocation3 + $0x14] sm:$0xf] %vm408, %v3863
      %4228 = vst.msk [vmem:[#allocation3 + $0x18] sm:$0xf] %vm408, %v3873
      %4229 = vst.msk [vmem:[#allocation3 + $0x1c] sm:$0xf] %vm408, %v3883
      %4230 = vst.msk [vmem:[#allocation3 + $0x20] sm:$0xf] %vm408, %v3893
      %4231 = vst.msk [vmem:[#allocation3 + $0x24] sm:$0xf] %vm408, %v3903
      %4232 = vst.msk [vmem:[#allocation3 + $0x28] sm:$0xf] %vm408, %v3913
      %4233 = vst.msk [vmem:[#allocation3 + $0x2c] sm:$0xf] %vm408, %v3923
      %4234 = vst.msk [vmem:[#allocation3 + $0x30] sm:$0xf] %vm408, %v3933
      %4235 = vst.msk [vmem:[#allocation3 + $0x34] sm:$0xf] %vm408, %v3943
      %4236 = vst.msk [vmem:[#allocation3 + $0x38] sm:$0xf] %vm408, %v3953
      %4237 = vst.msk [vmem:[#allocation3 + $0x3c] sm:$0xf] %vm408, %v3963
      %4238 = vst.msk [vmem:[#allocation3 + $0x40] sm:$0xf] %vm408, %v3973
      %4239 = vst.msk [vmem:[#allocation3 + $0x44] sm:$0xf] %vm408, %v3983
      %4240 = vst.msk [vmem:[#allocation3 + $0x48] sm:$0xf] %vm408, %v3993
      %4241 = vst.msk [vmem:[#allocation3 + $0x4c] sm:$0xf] %vm408, %v4003
      %4242 = vst.msk [vmem:[#allocation3 + $0x50] sm:$0xf] %vm408, %v4013
      %4243 = vst.msk [vmem:[#allocation3 + $0x54] sm:$0xf] %vm408, %v4023
      %4244 = vst.msk [vmem:[#allocation3 + $0x58] sm:$0xf] %vm408, %v4033
      %4245 = vst.msk [vmem:[#allocation3 + $0x5c] sm:$0xf] %vm408, %v4043
      %4246 = vst.msk [vmem:[#allocation3 + $0x60] sm:$0xf] %vm408, %v4053
      %4247 = vst.msk [vmem:[#allocation3 + $0x64] sm:$0xf] %vm408, %v4063
      %4248 = vst.msk [vmem:[#allocation3 + $0x68] sm:$0xf] %vm408, %v4073
      %4249 = vst.msk [vmem:[#allocation3 + $0x6c] sm:$0xf] %vm408, %v4083
      %4250 = vst.msk [vmem:[#allocation3 + $0x70] sm:$0xf] %vm408, %v4093
      %4251 = vst.msk [vmem:[#allocation3 + $0x74] sm:$0xf] %vm408, %v4103
      %4252 = vst.msk [vmem:[#allocation3 + $0x78] sm:$0xf] %vm408, %v4113
      %4253 = vst.msk [vmem:[#allocation3 + $0x7c] sm:$0xf] %vm408, %v4123
      %4254 = vst.msk [vmem:[#allocation3 + $0x80] sm:$0xf] %vm408, %v4133
      %4255 = vst.msk [vmem:[#allocation3 + $0x84] sm:$0xf] %vm408, %v4143
      %4256 = vst.msk [vmem:[#allocation3 + $0x88] sm:$0xf] %vm408, %v4153
      %4257 = vst.msk [vmem:[#allocation3 + $0x8c] sm:$0xf] %vm408, %v4163
      %4258 = vst.msk [vmem:[#allocation3 + $0x90] sm:$0xf] %vm408, %v4173
      %4259 = vst.msk [vmem:[#allocation3 + $0x94] sm:$0xf] %vm408, %v4183
      %v4260 = vld [vmem:[#allocation3 + $0x98] sm:$0x3]
      %v4261 = vsel %vm413, %v4184, %v4260
      %4262 = vst [vmem:[#allocation3 + $0x98] sm:$0x3] %v4261
      %v4263 = vld [vmem:[#allocation3] sm:$0xf]
      %v4264 = vld [vmem:[#allocation3 + $0x4] sm:$0xf]
      %v4265 = vld [vmem:[#allocation3 + $0x8] sm:$0xf]
      %v4266 = vld [vmem:[#allocation3 + $0xc] sm:$0xf]
      %v4267 = vld [vmem:[#allocation3 + $0x10] sm:$0xf]
      %v4268 = vld [vmem:[#allocation3 + $0x14] sm:$0xf]
      %v4269 = vld [vmem:[#allocation3 + $0x18] sm:$0xf]
      %v4270 = vld [vmem:[#allocation3 + $0x1c] sm:$0xf]
      %v4271 = vld [vmem:[#allocation3 + $0x20] sm:$0xf]
      %v4272 = vld [vmem:[#allocation3 + $0x24] sm:$0xf]
      %v4273 = vld [vmem:[#allocation3 + $0x28] sm:$0xf]
      %v4274 = vld [vmem:[#allocation3 + $0x2c] sm:$0xf]
      %v4275 = vld [vmem:[#allocation3 + $0x30] sm:$0xf]
      %v4276 = vld [vmem:[#allocation3 + $0x34] sm:$0xf]
      %v4277 = vld [vmem:[#allocation3 + $0x38] sm:$0xf]
      %v4278 = vld [vmem:[#allocation3 + $0x3c] sm:$0xf]
      %v4279 = vld [vmem:[#allocation3 + $0x40] sm:$0xf]
      %v4280 = vld [vmem:[#allocation3 + $0x44] sm:$0xf]
      %v4281 = vld [vmem:[#allocation3 + $0x48] sm:$0xf]
      %v4282 = vld [vmem:[#allocation3 + $0x4c] sm:$0xf]
      %v4283 = vld [vmem:[#allocation3 + $0x50] sm:$0xf]
      %v4284 = vld [vmem:[#allocation3 + $0x54] sm:$0xf]
      %v4285 = vld [vmem:[#allocation3 + $0x58] sm:$0xf]
      %v4286 = vld [vmem:[#allocation3 + $0x5c] sm:$0xf]
      %v4287 = vld [vmem:[#allocation3 + $0x60] sm:$0xf]
      %v4288 = vld [vmem:[#allocation3 + $0x64] sm:$0xf]
      %v4289 = vld [vmem:[#allocation3 + $0x68] sm:$0xf]
      %v4290 = vld [vmem:[#allocation3 + $0x6c] sm:$0xf]
      %v4291 = vld [vmem:[#allocation3 + $0x70] sm:$0xf]
      %v4292 = vld [vmem:[#allocation3 + $0x74] sm:$0xf]
      %v4293 = vld [vmem:[#allocation3 + $0x78] sm:$0xf]
      %v4294 = vld [vmem:[#allocation3 + $0x7c] sm:$0xf]
      %v4295 = vld [vmem:[#allocation3 + $0x80] sm:$0xf]
      %v4296 = vld [vmem:[#allocation3 + $0x84] sm:$0xf]
      %v4297 = vld [vmem:[#allocation3 + $0x88] sm:$0xf]
      %v4298 = vld [vmem:[#allocation3 + $0x8c] sm:$0xf]
      %v4335 = vunpack.c.l.b16 %v4263
      %v4336 = vunpack.c.l.b16 %v4264
      %v4337 = vunpack.c.l.b16 %v4265
      %v4338 = vunpack.c.l.b16 %v4266
      %v4339 = vunpack.c.l.b16 %v4267
      %v4340 = vunpack.c.l.b16 %v4268
      %v4341 = vunpack.c.l.b16 %v4269
      %v4342 = vunpack.c.l.b16 %v4270
      %v4343 = vunpack.c.l.b16 %v4271
      %v4344 = vunpack.c.l.b16 %v4272
      %v4345 = vunpack.c.l.b16 %v4273
      %v4346 = vunpack.c.l.b16 %v4274
      %v4347 = vunpack.c.l.b16 %v4275
      %v4348 = vunpack.c.l.b16 %v4276
      %v4349 = vunpack.c.l.b16 %v4277
      %v4350 = vunpack.c.l.b16 %v4278
      %v4351 = vunpack.c.l.b16 %v4279
      %v4352 = vunpack.c.l.b16 %v4280
      %v4353 = vunpack.c.l.b16 %v4281
      %v4354 = vunpack.c.l.b16 %v4282
      %v4355 = vunpack.c.l.b16 %v4283
      %v4356 = vunpack.c.l.b16 %v4284
      %v4357 = vunpack.c.l.b16 %v4285
      %v4358 = vunpack.c.l.b16 %v4286
      %v4359 = vunpack.c.l.b16 %v4287
      %v4360 = vunpack.c.l.b16 %v4288
      %v4361 = vunpack.c.l.b16 %v4289
      %v4362 = vunpack.c.l.b16 %v4290
      %v4363 = vunpack.c.l.b16 %v4291
      %v4364 = vunpack.c.l.b16 %v4292
      %v4365 = vunpack.c.l.b16 %v4293
      %v4366 = vunpack.c.l.b16 %v4294
      %v4367 = vunpack.c.l.b16 %v4295
      %v4368 = vunpack.c.l.b16 %v4296
      %v4369 = vunpack.c.l.b16 %v4297
      %v4370 = vunpack.c.l.b16 %v4298
      %v4371 = vpack.c.b16 %v4336, %v4335
      %v4372 = vpack.c.b16 %v4338, %v4337
      %v4373 = vpack.c.b16 %v4340, %v4339
      %v4374 = vpack.c.b16 %v4342, %v4341
      %v4375 = vpack.c.b16 %v4344, %v4343
      %v4376 = vpack.c.b16 %v4346, %v4345
      %v4377 = vpack.c.b16 %v4348, %v4347
      %v4378 = vpack.c.b16 %v4350, %v4349
      %v4379 = vpack.c.b16 %v4352, %v4351
      %v4380 = vpack.c.b16 %v4354, %v4353
      %v4381 = vpack.c.b16 %v4356, %v4355
      %v4382 = vpack.c.b16 %v4358, %v4357
      %v4383 = vpack.c.b16 %v4360, %v4359
      %v4384 = vpack.c.b16 %v4362, %v4361
      %v4385 = vpack.c.b16 %v4364, %v4363
      %v4386 = vpack.c.b16 %v4366, %v4365
      %v4387 = vpack.c.b16 %v4368, %v4367
      %v4388 = vpack.c.b16 %v4370, %v4369
      %4407 = vst.msk [vmem:[#allocation2] sm:$0xff] %vm570, %v4371
      %4408 = vst.msk [vmem:[#allocation2 + $0x18] sm:$0xff] %vm570, %v4372
      %4409 = vst.msk [vmem:[#allocation2 + $0x30] sm:$0xff] %vm570, %v4373
      %4410 = vst.msk [vmem:[#allocation2 + $0x48] sm:$0xff] %vm570, %v4374
      %4411 = vst.msk [vmem:[#allocation2 + $0x60] sm:$0xff] %vm570, %v4375
      %4412 = vst.msk [vmem:[#allocation2 + $0x78] sm:$0xff] %vm570, %v4376
      %4413 = vst.msk [vmem:[#allocation2 + $0x90] sm:$0xff] %vm570, %v4377
      %4414 = vst.msk [vmem:[#allocation2 + $0xa8] sm:$0xff] %vm570, %v4378
      %4415 = vst.msk [vmem:[#allocation2 + $0xc0] sm:$0xff] %vm570, %v4379
      %4416 = vst.msk [vmem:[#allocation2 + $0xd8] sm:$0xff] %vm570, %v4380
      %4417 = vst.msk [vmem:[#allocation2 + $0xf0] sm:$0xff] %vm570, %v4381
      %4418 = vst.msk [vmem:[#allocation2 + $0x108] sm:$0xff] %vm570, %v4382
      %4419 = vst.msk [vmem:[#allocation2 + $0x120] sm:$0xff] %vm570, %v4383
      %4420 = vst.msk [vmem:[#allocation2 + $0x138] sm:$0xff] %vm570, %v4384
      %4421 = vst.msk [vmem:[#allocation2 + $0x150] sm:$0xff] %vm570, %v4385
      %4422 = vst.msk [vmem:[#allocation2 + $0x168] sm:$0xff] %vm570, %v4386
      %4423 = vst.msk [vmem:[#allocation2 + $0x180] sm:$0xff] %vm570, %v4387
      %4424 = vst.msk [vmem:[#allocation2 + $0x198] sm:$0xff] %vm570, %v4388
      %v4425 = vld [vmem:[#allocation3] sm:$0xf]
      %v4426 = vld [vmem:[#allocation3 + $0x4] sm:$0xf]
      %v4427 = vld [vmem:[#allocation3 + $0x8] sm:$0xf]
      %v4428 = vld [vmem:[#allocation3 + $0xc] sm:$0xf]
      %v4429 = vld [vmem:[#allocation3 + $0x10] sm:$0xf]
      %v4430 = vld [vmem:[#allocation3 + $0x14] sm:$0xf]
      %v4431 = vld [vmem:[#allocation3 + $0x18] sm:$0xf]
      %v4432 = vld [vmem:[#allocation3 + $0x1c] sm:$0xf]
      %v4433 = vld [vmem:[#allocation3 + $0x20] sm:$0xf]
      %v4434 = vld [vmem:[#allocation3 + $0x24] sm:$0xf]
      %v4435 = vld [vmem:[#allocation3 + $0x28] sm:$0xf]
      %v4436 = vld [vmem:[#allocation3 + $0x2c] sm:$0xf]
      %v4437 = vld [vmem:[#allocation3 + $0x30] sm:$0xf]
      %v4438 = vld [vmem:[#allocation3 + $0x34] sm:$0xf]
      %v4439 = vld [vmem:[#allocation3 + $0x38] sm:$0xf]
      %v4440 = vld [vmem:[#allocation3 + $0x3c] sm:$0xf]
      %v4441 = vld [vmem:[#allocation3 + $0x40] sm:$0xf]
      %v4442 = vld [vmem:[#allocation3 + $0x44] sm:$0xf]
      %v4443 = vld [vmem:[#allocation3 + $0x48] sm:$0xf]
      %v4444 = vld [vmem:[#allocation3 + $0x4c] sm:$0xf]
      %v4445 = vld [vmem:[#allocation3 + $0x50] sm:$0xf]
      %v4446 = vld [vmem:[#allocation3 + $0x54] sm:$0xf]
      %v4447 = vld [vmem:[#allocation3 + $0x58] sm:$0xf]
      %v4448 = vld [vmem:[#allocation3 + $0x5c] sm:$0xf]
      %v4449 = vld [vmem:[#allocation3 + $0x60] sm:$0xf]
      %v4450 = vld [vmem:[#allocation3 + $0x64] sm:$0xf]
      %v4451 = vld [vmem:[#allocation3 + $0x68] sm:$0xf]
      %v4452 = vld [vmem:[#allocation3 + $0x6c] sm:$0xf]
      %v4453 = vld [vmem:[#allocation3 + $0x70] sm:$0xf]
      %v4454 = vld [vmem:[#allocation3 + $0x74] sm:$0xf]
      %v4455 = vld [vmem:[#allocation3 + $0x78] sm:$0xf]
      %v4456 = vld [vmem:[#allocation3 + $0x7c] sm:$0xf]
      %v4457 = vld [vmem:[#allocation3 + $0x80] sm:$0xf]
      %v4458 = vld [vmem:[#allocation3 + $0x84] sm:$0xf]
      %v4459 = vld [vmem:[#allocation3 + $0x88] sm:$0xf]
      %v4460 = vld [vmem:[#allocation3 + $0x8c] sm:$0xf]
      %v4461 = vld [vmem:[#allocation3 + $0x90] sm:$0x1]
      %v4499 = vunpack.c.l.b16 %v4425
      %v4500 = vunpack.c.l.b16 %v4426
      %v4501 = vunpack.c.l.b16 %v4427
      %v4502 = vunpack.c.l.b16 %v4428
      %v4503 = vunpack.c.l.b16 %v4429
      %v4504 = vunpack.c.l.b16 %v4430
      %v4505 = vunpack.c.l.b16 %v4431
      %v4506 = vunpack.c.l.b16 %v4432
      %v4507 = vunpack.c.l.b16 %v4433
      %v4508 = vunpack.c.l.b16 %v4434
      %v4509 = vunpack.c.l.b16 %v4435
      %v4510 = vunpack.c.l.b16 %v4436
      %v4511 = vunpack.c.l.b16 %v4437
      %v4512 = vunpack.c.l.b16 %v4438
      %v4513 = vunpack.c.l.b16 %v4439
      %v4514 = vunpack.c.l.b16 %v4440
      %v4515 = vunpack.c.l.b16 %v4441
      %v4516 = vunpack.c.l.b16 %v4442
      %v4517 = vunpack.c.l.b16 %v4443
      %v4518 = vunpack.c.l.b16 %v4444
      %v4519 = vunpack.c.l.b16 %v4445
      %v4520 = vunpack.c.l.b16 %v4446
      %v4521 = vunpack.c.l.b16 %v4447
      %v4522 = vunpack.c.l.b16 %v4448
      %v4523 = vunpack.c.l.b16 %v4449
      %v4524 = vunpack.c.l.b16 %v4450
      %v4525 = vunpack.c.l.b16 %v4451
      %v4526 = vunpack.c.l.b16 %v4452
      %v4527 = vunpack.c.l.b16 %v4453
      %v4528 = vunpack.c.l.b16 %v4454
      %v4529 = vunpack.c.l.b16 %v4455
      %v4530 = vunpack.c.l.b16 %v4456
      %v4531 = vunpack.c.l.b16 %v4457
      %v4532 = vunpack.c.l.b16 %v4458
      %v4533 = vunpack.c.l.b16 %v4459
      %v4534 = vunpack.c.l.b16 %v4460
      %v4535 = vunpack.c.l.b16 %v4461
      %v4536 = vpack.c.b16 %v4500, %v4499
      %v4537 = vpack.c.b16 %v4502, %v4501
      %v4538 = vpack.c.b16 %v4504, %v4503
      %v4539 = vpack.c.b16 %v4506, %v4505
      %v4540 = vpack.c.b16 %v4508, %v4507
      %v4541 = vpack.c.b16 %v4510, %v4509
      %v4542 = vpack.c.b16 %v4512, %v4511
      %v4543 = vpack.c.b16 %v4514, %v4513
      %v4544 = vpack.c.b16 %v4516, %v4515
      %v4545 = vpack.c.b16 %v4518, %v4517
      %v4546 = vpack.c.b16 %v4520, %v4519
      %v4547 = vpack.c.b16 %v4522, %v4521
      %v4548 = vpack.c.b16 %v4524, %v4523
      %v4549 = vpack.c.b16 %v4526, %v4525
      %v4550 = vpack.c.b16 %v4528, %v4527
      %v4551 = vpack.c.b16 %v4530, %v4529
      %v4552 = vpack.c.b16 %v4532, %v4531
      %v4553 = vpack.c.b16 %v4534, %v4533
      %v4554 = vpack.c.b16 %v4535, %v4535
      %v4556 = vshrl.u32 %v4536, 16
      %v4558 = vshll.u32 %v4536, 16
      %v4560 = vrot.slane %v4558, 1
      %v4561 = vor.u32 %v4556, %v4560
      %v4563 = vshll.u32 %v4537, 16
      %v4565 = vrot.slane %v4563, 1
      %v4566 = vsel %vm719, %v4561, %v4565
      %v4567 = vshrl.u32 %v4537, 16
      %v4569 = vor.u32 %v4567, %v4565
      %v4571 = vshll.u32 %v4538, 16
      %v4573 = vrot.slane %v4571, 1
      %v4574 = vsel %vm719, %v4569, %v4573
      %v4575 = vshrl.u32 %v4538, 16
      %v4577 = vor.u32 %v4575, %v4573
      %v4579 = vshll.u32 %v4539, 16
      %v4581 = vrot.slane %v4579, 1
      %v4582 = vsel %vm719, %v4577, %v4581
      %v4583 = vshrl.u32 %v4539, 16
      %v4585 = vor.u32 %v4583, %v4581
      %v4587 = vshll.u32 %v4540, 16
      %v4589 = vrot.slane %v4587, 1
      %v4590 = vsel %vm719, %v4585, %v4589
      %v4591 = vshrl.u32 %v4540, 16
      %v4593 = vor.u32 %v4591, %v4589
      %v4595 = vshll.u32 %v4541, 16
      %v4597 = vrot.slane %v4595, 1
      %v4598 = vsel %vm719, %v4593, %v4597
      %v4599 = vshrl.u32 %v4541, 16
      %v4601 = vor.u32 %v4599, %v4597
      %v4603 = vshll.u32 %v4542, 16
      %v4605 = vrot.slane %v4603, 1
      %v4606 = vsel %vm719, %v4601, %v4605
      %v4607 = vshrl.u32 %v4542, 16
      %v4609 = vor.u32 %v4607, %v4605
      %v4611 = vshll.u32 %v4543, 16
      %v4613 = vrot.slane %v4611, 1
      %v4614 = vsel %vm719, %v4609, %v4613
      %v4615 = vshrl.u32 %v4543, 16
      %v4617 = vor.u32 %v4615, %v4613
      %v4619 = vshll.u32 %v4544, 16
      %v4621 = vrot.slane %v4619, 1
      %v4622 = vsel %vm719, %v4617, %v4621
      %v4623 = vshrl.u32 %v4544, 16
      %v4625 = vor.u32 %v4623, %v4621
      %v4627 = vshll.u32 %v4545, 16
      %v4629 = vrot.slane %v4627, 1
      %v4630 = vsel %vm719, %v4625, %v4629
      %v4631 = vshrl.u32 %v4545, 16
      %v4633 = vor.u32 %v4631, %v4629
      %v4635 = vshll.u32 %v4546, 16
      %v4637 = vrot.slane %v4635, 1
      %v4638 = vsel %vm719, %v4633, %v4637
      %v4639 = vshrl.u32 %v4546, 16
      %v4641 = vor.u32 %v4639, %v4637
      %v4643 = vshll.u32 %v4547, 16
      %v4645 = vrot.slane %v4643, 1
      %v4646 = vsel %vm719, %v4641, %v4645
      %v4647 = vshrl.u32 %v4547, 16
      %v4649 = vor.u32 %v4647, %v4645
      %v4651 = vshll.u32 %v4548, 16
      %v4653 = vrot.slane %v4651, 1
      %v4654 = vsel %vm719, %v4649, %v4653
      %v4655 = vshrl.u32 %v4548, 16
      %v4657 = vor.u32 %v4655, %v4653
      %v4659 = vshll.u32 %v4549, 16
      %v4661 = vrot.slane %v4659, 1
      %v4662 = vsel %vm719, %v4657, %v4661
      %v4663 = vshrl.u32 %v4549, 16
      %v4665 = vor.u32 %v4663, %v4661
      %v4667 = vshll.u32 %v4550, 16
      %v4669 = vrot.slane %v4667, 1
      %v4670 = vsel %vm719, %v4665, %v4669
      %v4671 = vshrl.u32 %v4550, 16
      %v4673 = vor.u32 %v4671, %v4669
      %v4675 = vshll.u32 %v4551, 16
      %v4677 = vrot.slane %v4675, 1
      %v4678 = vsel %vm719, %v4673, %v4677
      %v4679 = vshrl.u32 %v4551, 16
      %v4681 = vor.u32 %v4679, %v4677
      %v4683 = vshll.u32 %v4552, 16
      %v4685 = vrot.slane %v4683, 1
      %v4686 = vsel %vm719, %v4681, %v4685
      %v4687 = vshrl.u32 %v4552, 16
      %v4689 = vor.u32 %v4687, %v4685
      %v4691 = vshll.u32 %v4553, 16
      %v4693 = vrot.slane %v4691, 1
      %v4694 = vsel %vm719, %v4689, %v4693
      %v4695 = vshrl.u32 %v4553, 16
      %v4697 = vor.u32 %v4695, %v4693
      %v4699 = vshll.u32 %v4554, 16
      %v4701 = vrot.slane %v4699, 1
      %v4702 = vsel %vm719, %v4697, %v4701
      %4703 = vrot.lane.b32.xlu0 %v4566, 32
      %v4704 = vpop.permute.xlu0 %4703
      %4705 = vrot.lane.b32.xlu0 %v4574, 32
      %v4706 = vpop.permute.xlu0 %4705
      %4707 = vrot.lane.b32.xlu0 %v4582, 32
      %v4708 = vpop.permute.xlu0 %4707
      %4709 = vrot.lane.b32.xlu0 %v4590, 32
      %v4710 = vpop.permute.xlu0 %4709
      %4711 = vrot.lane.b32.xlu0 %v4598, 32
      %v4712 = vpop.permute.xlu0 %4711
      %4713 = vrot.lane.b32.xlu0 %v4606, 32
      %v4714 = vpop.permute.xlu0 %4713
      %4715 = vrot.lane.b32.xlu0 %v4614, 32
      %v4716 = vpop.permute.xlu0 %4715
      %4717 = vrot.lane.b32.xlu0 %v4622, 32
      %v4718 = vpop.permute.xlu0 %4717
      %4719 = vrot.lane.b32.xlu0 %v4630, 32
      %v4720 = vpop.permute.xlu0 %4719
      %4721 = vrot.lane.b32.xlu0 %v4638, 32
      %v4722 = vpop.permute.xlu0 %4721
      %4723 = vrot.lane.b32.xlu0 %v4646, 32
      %v4724 = vpop.permute.xlu0 %4723
      %4725 = vrot.lane.b32.xlu0 %v4654, 32
      %v4726 = vpop.permute.xlu0 %4725
      %4727 = vrot.lane.b32.xlu0 %v4662, 32
      %v4728 = vpop.permute.xlu0 %4727
      %4729 = vrot.lane.b32.xlu0 %v4670, 32
      %v4730 = vpop.permute.xlu0 %4729
      %4731 = vrot.lane.b32.xlu0 %v4678, 32
      %v4732 = vpop.permute.xlu0 %4731
      %4733 = vrot.lane.b32.xlu0 %v4686, 32
      %v4734 = vpop.permute.xlu0 %4733
      %4735 = vrot.lane.b32.xlu0 %v4694, 32
      %v4736 = vpop.permute.xlu0 %4735
      %4737 = vrot.lane.b32.xlu0 %v4702, 32
      %v4738 = vpop.permute.xlu0 %4737
      %4757 = vst.msk [vmem:[#allocation2] sm:$0xff] %vm922, %v4704
      %4758 = vst.msk [vmem:[#allocation2 + $0x18] sm:$0xff] %vm922, %v4706
      %4759 = vst.msk [vmem:[#allocation2 + $0x30] sm:$0xff] %vm922, %v4708
      %4760 = vst.msk [vmem:[#allocation2 + $0x48] sm:$0xff] %vm922, %v4710
      %4761 = vst.msk [vmem:[#allocation2 + $0x60] sm:$0xff] %vm922, %v4712
      %4762 = vst.msk [vmem:[#allocation2 + $0x78] sm:$0xff] %vm922, %v4714
      %4763 = vst.msk [vmem:[#allocation2 + $0x90] sm:$0xff] %vm922, %v4716
      %4764 = vst.msk [vmem:[#allocation2 + $0xa8] sm:$0xff] %vm922, %v4718
      %4765 = vst.msk [vmem:[#allocation2 + $0xc0] sm:$0xff] %vm922, %v4720
      %4766 = vst.msk [vmem:[#allocation2 + $0xd8] sm:$0xff] %vm922, %v4722
      %4767 = vst.msk [vmem:[#allocation2 + $0xf0] sm:$0xff] %vm922, %v4724
      %4768 = vst.msk [vmem:[#allocation2 + $0x108] sm:$0xff] %vm922, %v4726
      %4769 = vst.msk [vmem:[#allocation2 + $0x120] sm:$0xff] %vm922, %v4728
      %4770 = vst.msk [vmem:[#allocation2 + $0x138] sm:$0xff] %vm922, %v4730
      %4771 = vst.msk [vmem:[#allocation2 + $0x150] sm:$0xff] %vm922, %v4732
      %4772 = vst.msk [vmem:[#allocation2 + $0x168] sm:$0xff] %vm922, %v4734
      %4773 = vst.msk [vmem:[#allocation2 + $0x180] sm:$0xff] %vm922, %v4736
      %4774 = vst.msk [vmem:[#allocation2 + $0x198] sm:$0xff] %vm922, %v4738
      %v4775 = vld [vmem:[#allocation3] sm:$0xe]
      %v4776 = vld [vmem:[#allocation3 + $0x4] sm:$0xf]
      %v4777 = vld [vmem:[#allocation3 + $0x8] sm:$0xf]
      %v4778 = vld [vmem:[#allocation3 + $0xc] sm:$0xf]
      %v4779 = vld [vmem:[#allocation3 + $0x10] sm:$0xf]
      %v4780 = vld [vmem:[#allocation3 + $0x14] sm:$0xf]
      %v4781 = vld [vmem:[#allocation3 + $0x18] sm:$0xf]
      %v4782 = vld [vmem:[#allocation3 + $0x1c] sm:$0xf]
      %v4783 = vld [vmem:[#allocation3 + $0x20] sm:$0xf]
      %v4784 = vld [vmem:[#allocation3 + $0x24] sm:$0xf]
      %v4785 = vld [vmem:[#allocation3 + $0x28] sm:$0xf]
      %v4786 = vld [vmem:[#allocation3 + $0x2c] sm:$0xf]
      %v4787 = vld [vmem:[#allocation3 + $0x30] sm:$0xf]
      %v4788 = vld [vmem:[#allocation3 + $0x34] sm:$0xf]
      %v4789 = vld [vmem:[#allocation3 + $0x38] sm:$0xf]
      %v4790 = vld [vmem:[#allocation3 + $0x3c] sm:$0xf]
      %v4791 = vld [vmem:[#allocation3 + $0x40] sm:$0xf]
      %v4792 = vld [vmem:[#allocation3 + $0x44] sm:$0xf]
      %v4793 = vld [vmem:[#allocation3 + $0x48] sm:$0xf]
      %v4794 = vld [vmem:[#allocation3 + $0x4c] sm:$0xf]
      %v4795 = vld [vmem:[#allocation3 + $0x50] sm:$0xf]
      %v4796 = vld [vmem:[#allocation3 + $0x54] sm:$0xf]
      %v4797 = vld [vmem:[#allocation3 + $0x58] sm:$0xf]
      %v4798 = vld [vmem:[#allocation3 + $0x5c] sm:$0xf]
      %v4799 = vld [vmem:[#allocation3 + $0x60] sm:$0xf]
      %v4800 = vld [vmem:[#allocation3 + $0x64] sm:$0xf]
      %v4801 = vld [vmem:[#allocation3 + $0x68] sm:$0xf]
      %v4802 = vld [vmem:[#allocation3 + $0x6c] sm:$0xf]
      %v4803 = vld [vmem:[#allocation3 + $0x70] sm:$0xf]
      %v4804 = vld [vmem:[#allocation3 + $0x74] sm:$0xf]
      %v4805 = vld [vmem:[#allocation3 + $0x78] sm:$0xf]
      %v4806 = vld [vmem:[#allocation3 + $0x7c] sm:$0xf]
      %v4807 = vld [vmem:[#allocation3 + $0x80] sm:$0xf]
      %v4808 = vld [vmem:[#allocation3 + $0x84] sm:$0xf]
      %v4809 = vld [vmem:[#allocation3 + $0x88] sm:$0xf]
      %v4810 = vld [vmem:[#allocation3 + $0x8c] sm:$0xf]
      %v4811 = vld [vmem:[#allocation3 + $0x90] sm:$0x1]
      %v4849 = vunpack.c.l.b16 %v4775
      %v4850 = vunpack.c.l.b16 %v4776
      %v4851 = vunpack.c.l.b16 %v4777
      %v4852 = vunpack.c.l.b16 %v4778
      %v4853 = vunpack.c.l.b16 %v4779
      %v4854 = vunpack.c.l.b16 %v4780
      %v4855 = vunpack.c.l.b16 %v4781
      %v4856 = vunpack.c.l.b16 %v4782
      %v4857 = vunpack.c.l.b16 %v4783
      %v4858 = vunpack.c.l.b16 %v4784
      %v4859 = vunpack.c.l.b16 %v4785
      %v4860 = vunpack.c.l.b16 %v4786
      %v4861 = vunpack.c.l.b16 %v4787
      %v4862 = vunpack.c.l.b16 %v4788
      %v4863 = vunpack.c.l.b16 %v4789
      %v4864 = vunpack.c.l.b16 %v4790
      %v4865 = vunpack.c.l.b16 %v4791
      %v4866 = vunpack.c.l.b16 %v4792
      %v4867 = vunpack.c.l.b16 %v4793
      %v4868 = vunpack.c.l.b16 %v4794
      %v4869 = vunpack.c.l.b16 %v4795
      %v4870 = vunpack.c.l.b16 %v4796
      %v4871 = vunpack.c.l.b16 %v4797
      %v4872 = vunpack.c.l.b16 %v4798
      %v4873 = vunpack.c.l.b16 %v4799
      %v4874 = vunpack.c.l.b16 %v4800
      %v4875 = vunpack.c.l.b16 %v4801
      %v4876 = vunpack.c.l.b16 %v4802
      %v4877 = vunpack.c.l.b16 %v4803
      %v4878 = vunpack.c.l.b16 %v4804
      %v4879 = vunpack.c.l.b16 %v4805
      %v4880 = vunpack.c.l.b16 %v4806
      %v4881 = vunpack.c.l.b16 %v4807
      %v4882 = vunpack.c.l.b16 %v4808
      %v4883 = vunpack.c.l.b16 %v4809
      %v4884 = vunpack.c.l.b16 %v4810
      %v4885 = vunpack.c.l.b16 %v4811
      %v4886 = vpack.c.b16 %v4850, %v4849
      %v4887 = vpack.c.b16 %v4852, %v4851
      %v4888 = vpack.c.b16 %v4854, %v4853
      %v4889 = vpack.c.b16 %v4856, %v4855
      %v4890 = vpack.c.b16 %v4858, %v4857
      %v4891 = vpack.c.b16 %v4860, %v4859
      %v4892 = vpack.c.b16 %v4862, %v4861
      %v4893 = vpack.c.b16 %v4864, %v4863
      %v4894 = vpack.c.b16 %v4866, %v4865
      %v4895 = vpack.c.b16 %v4868, %v4867
      %v4896 = vpack.c.b16 %v4870, %v4869
      %v4897 = vpack.c.b16 %v4872, %v4871
      %v4898 = vpack.c.b16 %v4874, %v4873
      %v4899 = vpack.c.b16 %v4876, %v4875
      %v4900 = vpack.c.b16 %v4878, %v4877
      %v4901 = vpack.c.b16 %v4880, %v4879
      %v4902 = vpack.c.b16 %v4882, %v4881
      %v4903 = vpack.c.b16 %v4884, %v4883
      %v4904 = vpack.c.b16 %v4885, %v4885
      %v4905 = vrot.slane %v4886, 1
      %v4906 = vrot.slane %v4887, 1
      %v4907 = vsel %vm1071, %v4905, %v4906
      %v4908 = vrot.slane %v4888, 1
      %v4909 = vsel %vm1071, %v4906, %v4908
      %v4910 = vrot.slane %v4889, 1
      %v4911 = vsel %vm1071, %v4908, %v4910
      %v4912 = vrot.slane %v4890, 1
      %v4913 = vsel %vm1071, %v4910, %v4912
      %v4914 = vrot.slane %v4891, 1
      %v4915 = vsel %vm1071, %v4912, %v4914
      %v4916 = vrot.slane %v4892, 1
      %v4917 = vsel %vm1071, %v4914, %v4916
      %v4918 = vrot.slane %v4893, 1
      %v4919 = vsel %vm1071, %v4916, %v4918
      %v4920 = vrot.slane %v4894, 1
      %v4921 = vsel %vm1071, %v4918, %v4920
      %v4922 = vrot.slane %v4895, 1
      %v4923 = vsel %vm1071, %v4920, %v4922
      %v4924 = vrot.slane %v4896, 1
      %v4925 = vsel %vm1071, %v4922, %v4924
      %v4926 = vrot.slane %v4897, 1
      %v4927 = vsel %vm1071, %v4924, %v4926
      %v4928 = vrot.slane %v4898, 1
      %v4929 = vsel %vm1071, %v4926, %v4928
      %v4930 = vrot.slane %v4899, 1
      %v4931 = vsel %vm1071, %v4928, %v4930
      %v4932 = vrot.slane %v4900, 1
      %v4933 = vsel %vm1071, %v4930, %v4932
      %v4934 = vrot.slane %v4901, 1
      %v4935 = vsel %vm1071, %v4932, %v4934
      %v4936 = vrot.slane %v4902, 1
      %v4937 = vsel %vm1071, %v4934, %v4936
      %v4938 = vrot.slane %v4903, 1
      %v4939 = vsel %vm1071, %v4936, %v4938
      %v4940 = vrot.slane %v4904, 1
      %v4941 = vsel %vm1071, %v4938, %v4940
      %4942 = vrot.lane.b32.xlu0 %v4907, 64
      %v4943 = vpop.permute.xlu0 %4942
      %4944 = vrot.lane.b32.xlu0 %v4909, 64
      %v4945 = vpop.permute.xlu0 %4944
      %4946 = vrot.lane.b32.xlu0 %v4911, 64
      %v4947 = vpop.permute.xlu0 %4946
      %4948 = vrot.lane.b32.xlu0 %v4913, 64
      %v4949 = vpop.permute.xlu0 %4948
      %4950 = vrot.lane.b32.xlu0 %v4915, 64
      %v4951 = vpop.permute.xlu0 %4950
      %4952 = vrot.lane.b32.xlu0 %v4917, 64
      %v4953 = vpop.permute.xlu0 %4952
      %4954 = vrot.lane.b32.xlu0 %v4919, 64
      %v4955 = vpop.permute.xlu0 %4954
      %4956 = vrot.lane.b32.xlu0 %v4921, 64
      %v4957 = vpop.permute.xlu0 %4956
      %4958 = vrot.lane.b32.xlu0 %v4923, 64
      %v4959 = vpop.permute.xlu0 %4958
      %4960 = vrot.lane.b32.xlu0 %v4925, 64
      %v4961 = vpop.permute.xlu0 %4960
      %4962 = vrot.lane.b32.xlu0 %v4927, 64
      %v4963 = vpop.permute.xlu0 %4962
      %4964 = vrot.lane.b32.xlu0 %v4929, 64
      %v4965 = vpop.permute.xlu0 %4964
      %4966 = vrot.lane.b32.xlu0 %v4931, 64
      %v4967 = vpop.permute.xlu0 %4966
      %4968 = vrot.lane.b32.xlu0 %v4933, 64
      %v4969 = vpop.permute.xlu0 %4968
      %4970 = vrot.lane.b32.xlu0 %v4935, 64
      %v4971 = vpop.permute.xlu0 %4970
      %4972 = vrot.lane.b32.xlu0 %v4937, 64
      %v4973 = vpop.permute.xlu0 %4972
      %4974 = vrot.lane.b32.xlu0 %v4939, 64
      %v4975 = vpop.permute.xlu0 %4974
      %4976 = vrot.lane.b32.xlu0 %v4941, 64
      %v4977 = vpop.permute.xlu0 %4976
      %4996 = vst.msk [vmem:[#allocation2] sm:$0xff] %vm1163, %v4943
      %4997 = vst.msk [vmem:[#allocation2 + $0x18] sm:$0xff] %vm1163, %v4945
      %4998 = vst.msk [vmem:[#allocation2 + $0x30] sm:$0xff] %vm1163, %v4947
      %4999 = vst.msk [vmem:[#allocation2 + $0x48] sm:$0xff] %vm1163, %v4949
      %5000 = vst.msk [vmem:[#allocation2 + $0x60] sm:$0xff] %vm1163, %v4951
      %5001 = vst.msk [vmem:[#allocation2 + $0x78] sm:$0xff] %vm1163, %v4953
      %5002 = vst.msk [vmem:[#allocation2 + $0x90] sm:$0xff] %vm1163, %v4955
      %5003 = vst.msk [vmem:[#allocation2 + $0xa8] sm:$0xff] %vm1163, %v4957
      %5004 = vst.msk [vmem:[#allocation2 + $0xc0] sm:$0xff] %vm1163, %v4959
      %5005 = vst.msk [vmem:[#allocation2 + $0xd8] sm:$0xff] %vm1163, %v4961
      %5006 = vst.msk [vmem:[#allocation2 + $0xf0] sm:$0xff] %vm1163, %v4963
      %5007 = vst.msk [vmem:[#allocation2 + $0x108] sm:$0xff] %vm1163, %v4965
      %5008 = vst.msk [vmem:[#allocation2 + $0x120] sm:$0xff] %vm1163, %v4967
      %5009 = vst.msk [vmem:[#allocation2 + $0x138] sm:$0xff] %vm1163, %v4969
      %5010 = vst.msk [vmem:[#allocation2 + $0x150] sm:$0xff] %vm1163, %v4971
      %5011 = vst.msk [vmem:[#allocation2 + $0x168] sm:$0xff] %vm1163, %v4973
      %5012 = vst.msk [vmem:[#allocation2 + $0x180] sm:$0xff] %vm1163, %v4975
      %5013 = vst.msk [vmem:[#allocation2 + $0x198] sm:$0xff] %vm1163, %v4977
      %v5014 = vld [vmem:[#allocation3 + $0x8] sm:$0xe]
      %v5015 = vld [vmem:[#allocation3 + $0xc] sm:$0xf]
      %v5016 = vld [vmem:[#allocation3 + $0x10] sm:$0xf]
      %v5017 = vld [vmem:[#allocation3 + $0x14] sm:$0xf]
      %v5018 = vld [vmem:[#allocation3 + $0x18] sm:$0xf]
      %v5019 = vld [vmem:[#allocation3 + $0x1c] sm:$0xf]
      %v5020 = vld [vmem:[#allocation3 + $0x20] sm:$0xf]
      %v5021 = vld [vmem:[#allocation3 + $0x24] sm:$0xf]
      %v5022 = vld [vmem:[#allocation3 + $0x28] sm:$0xf]
      %v5023 = vld [vmem:[#allocation3 + $0x2c] sm:$0xf]
      %v5024 = vld [vmem:[#allocation3 + $0x30] sm:$0xf]
      %v5025 = vld [vmem:[#allocation3 + $0x34] sm:$0xf]
      %v5026 = vld [vmem:[#allocation3 + $0x38] sm:$0xf]
      %v5027 = vld [vmem:[#allocation3 + $0x3c] sm:$0xf]
      %v5028 = vld [vmem:[#allocation3 + $0x40] sm:$0xf]
      %v5029 = vld [vmem:[#allocation3 + $0x44] sm:$0xf]
      %v5030 = vld [vmem:[#allocation3 + $0x48] sm:$0xf]
      %v5031 = vld [vmem:[#allocation3 + $0x4c] sm:$0xf]
      %v5032 = vld [vmem:[#allocation3 + $0x50] sm:$0xf]
      %v5033 = vld [vmem:[#allocation3 + $0x54] sm:$0xf]
      %v5034 = vld [vmem:[#allocation3 + $0x58] sm:$0xf]
      %v5035 = vld [vmem:[#allocation3 + $0x5c] sm:$0xf]
      %v5036 = vld [vmem:[#allocation3 + $0x60] sm:$0xf]
      %v5037 = vld [vmem:[#allocation3 + $0x64] sm:$0xf]
      %v5038 = vld [vmem:[#allocation3 + $0x68] sm:$0xf]
      %v5039 = vld [vmem:[#allocation3 + $0x6c] sm:$0xf]
      %v5040 = vld [vmem:[#allocation3 + $0x70] sm:$0xf]
      %v5041 = vld [vmem:[#allocation3 + $0x74] sm:$0xf]
      %v5042 = vld [vmem:[#allocation3 + $0x78] sm:$0xf]
      %v5043 = vld [vmem:[#allocation3 + $0x7c] sm:$0xf]
      %v5044 = vld [vmem:[#allocation3 + $0x80] sm:$0xf]
      %v5045 = vld [vmem:[#allocation3 + $0x84] sm:$0xf]
      %v5046 = vld [vmem:[#allocation3 + $0x88] sm:$0xf]
      %v5047 = vld [vmem:[#allocation3 + $0x8c] sm:$0xf]
      %v5048 = vld [vmem:[#allocation3 + $0x90] sm:$0xf]
      %v5049 = vld [vmem:[#allocation3 + $0x94] sm:$0xf]
      %v5050 = vld [vmem:[#allocation3 + $0x98] sm:$0x1]
      %v5088 = vunpack.c.l.b16 %v5014
      %v5089 = vunpack.c.l.b16 %v5015
      %v5090 = vunpack.c.l.b16 %v5016
      %v5091 = vunpack.c.l.b16 %v5017
      %v5092 = vunpack.c.l.b16 %v5018
      %v5093 = vunpack.c.l.b16 %v5019
      %v5094 = vunpack.c.l.b16 %v5020
      %v5095 = vunpack.c.l.b16 %v5021
      %v5096 = vunpack.c.l.b16 %v5022
      %v5097 = vunpack.c.l.b16 %v5023
      %v5098 = vunpack.c.l.b16 %v5024
      %v5099 = vunpack.c.l.b16 %v5025
      %v5100 = vunpack.c.l.b16 %v5026
      %v5101 = vunpack.c.l.b16 %v5027
      %v5102 = vunpack.c.l.b16 %v5028
      %v5103 = vunpack.c.l.b16 %v5029
      %v5104 = vunpack.c.l.b16 %v5030
      %v5105 = vunpack.c.l.b16 %v5031
      %v5106 = vunpack.c.l.b16 %v5032
      %v5107 = vunpack.c.l.b16 %v5033
      %v5108 = vunpack.c.l.b16 %v5034
      %v5109 = vunpack.c.l.b16 %v5035
      %v5110 = vunpack.c.l.b16 %v5036
      %v5111 = vunpack.c.l.b16 %v5037
      %v5112 = vunpack.c.l.b16 %v5038
      %v5113 = vunpack.c.l.b16 %v5039
      %v5114 = vunpack.c.l.b16 %v5040
      %v5115 = vunpack.c.l.b16 %v5041
      %v5116 = vunpack.c.l.b16 %v5042
      %v5117 = vunpack.c.l.b16 %v5043
      %v5118 = vunpack.c.l.b16 %v5044
      %v5119 = vunpack.c.l.b16 %v5045
      %v5120 = vunpack.c.l.b16 %v5046
      %v5121 = vunpack.c.l.b16 %v5047
      %v5122 = vunpack.c.l.b16 %v5048
      %v5123 = vunpack.c.l.b16 %v5049
      %v5124 = vunpack.c.l.b16 %v5050
      %v5125 = vpack.c.b16 %v5089, %v5088
      %v5126 = vpack.c.b16 %v5091, %v5090
      %v5127 = vpack.c.b16 %v5093, %v5092
      %v5128 = vpack.c.b16 %v5095, %v5094
      %v5129 = vpack.c.b16 %v5097, %v5096
      %v5130 = vpack.c.b16 %v5099, %v5098
      %v5131 = vpack.c.b16 %v5101, %v5100
      %v5132 = vpack.c.b16 %v5103, %v5102
      %v5133 = vpack.c.b16 %v5105, %v5104
      %v5134 = vpack.c.b16 %v5107, %v5106
      %v5135 = vpack.c.b16 %v5109, %v5108
      %v5136 = vpack.c.b16 %v5111, %v5110
      %v5137 = vpack.c.b16 %v5113, %v5112
      %v5138 = vpack.c.b16 %v5115, %v5114
      %v5139 = vpack.c.b16 %v5117, %v5116
      %v5140 = vpack.c.b16 %v5119, %v5118
      %v5141 = vpack.c.b16 %v5121, %v5120
      %v5142 = vpack.c.b16 %v5123, %v5122
      %v5143 = vpack.c.b16 %v5124, %v5124
      %v5144 = vrot.slane %v5125, 1
      %v5145 = vrot.slane %v5126, 1
      %v5146 = vsel %vm1071, %v5144, %v5145
      %v5147 = vrot.slane %v5127, 1
      %v5148 = vsel %vm1071, %v5145, %v5147
      %v5149 = vrot.slane %v5128, 1
      %v5150 = vsel %vm1071, %v5147, %v5149
      %v5151 = vrot.slane %v5129, 1
      %v5152 = vsel %vm1071, %v5149, %v5151
      %v5153 = vrot.slane %v5130, 1
      %v5154 = vsel %vm1071, %v5151, %v5153
      %v5155 = vrot.slane %v5131, 1
      %v5156 = vsel %vm1071, %v5153, %v5155
      %v5157 = vrot.slane %v5132, 1
      %v5158 = vsel %vm1071, %v5155, %v5157
      %v5159 = vrot.slane %v5133, 1
      %v5160 = vsel %vm1071, %v5157, %v5159
      %v5161 = vrot.slane %v5134, 1
      %v5162 = vsel %vm1071, %v5159, %v5161
      %v5163 = vrot.slane %v5135, 1
      %v5164 = vsel %vm1071, %v5161, %v5163
      %v5165 = vrot.slane %v5136, 1
      %v5166 = vsel %vm1071, %v5163, %v5165
      %v5167 = vrot.slane %v5137, 1
      %v5168 = vsel %vm1071, %v5165, %v5167
      %v5169 = vrot.slane %v5138, 1
      %v5170 = vsel %vm1071, %v5167, %v5169
      %v5171 = vrot.slane %v5139, 1
      %v5172 = vsel %vm1071, %v5169, %v5171
      %v5173 = vrot.slane %v5140, 1
      %v5174 = vsel %vm1071, %v5171, %v5173
      %v5175 = vrot.slane %v5141, 1
      %v5176 = vsel %vm1071, %v5173, %v5175
      %v5177 = vrot.slane %v5142, 1
      %v5178 = vsel %vm1071, %v5175, %v5177
      %v5179 = vrot.slane %v5143, 1
      %v5180 = vsel %vm1071, %v5177, %v5179
      %5181 = vrot.lane.b32.xlu0 %v5146, 96
      %v5182 = vpop.permute.xlu0 %5181
      %5183 = vrot.lane.b32.xlu0 %v5148, 96
      %v5184 = vpop.permute.xlu0 %5183
      %5185 = vrot.lane.b32.xlu0 %v5150, 96
      %v5186 = vpop.permute.xlu0 %5185
      %5187 = vrot.lane.b32.xlu0 %v5152, 96
      %v5188 = vpop.permute.xlu0 %5187
      %5189 = vrot.lane.b32.xlu0 %v5154, 96
      %v5190 = vpop.permute.xlu0 %5189
      %5191 = vrot.lane.b32.xlu0 %v5156, 96
      %v5192 = vpop.permute.xlu0 %5191
      %5193 = vrot.lane.b32.xlu0 %v5158, 96
      %v5194 = vpop.permute.xlu0 %5193
      %5195 = vrot.lane.b32.xlu0 %v5160, 96
      %v5196 = vpop.permute.xlu0 %5195
      %5197 = vrot.lane.b32.xlu0 %v5162, 96
      %v5198 = vpop.permute.xlu0 %5197
      %5199 = vrot.lane.b32.xlu0 %v5164, 96
      %v5200 = vpop.permute.xlu0 %5199
      %5201 = vrot.lane.b32.xlu0 %v5166, 96
      %v5202 = vpop.permute.xlu0 %5201
      %5203 = vrot.lane.b32.xlu0 %v5168, 96
      %v5204 = vpop.permute.xlu0 %5203
      %5205 = vrot.lane.b32.xlu0 %v5170, 96
      %v5206 = vpop.permute.xlu0 %5205
      %5207 = vrot.lane.b32.xlu0 %v5172, 96
      %v5208 = vpop.permute.xlu0 %5207
      %5209 = vrot.lane.b32.xlu0 %v5174, 96
      %v5210 = vpop.permute.xlu0 %5209
      %5211 = vrot.lane.b32.xlu0 %v5176, 96
      %v5212 = vpop.permute.xlu0 %5211
      %5213 = vrot.lane.b32.xlu0 %v5178, 96
      %v5214 = vpop.permute.xlu0 %5213
      %5215 = vrot.lane.b32.xlu0 %v5180, 96
      %v5216 = vpop.permute.xlu0 %5215
      %5235 = vst.msk [vmem:[#allocation2] sm:$0xff] %vm1403, %v5182
      %5236 = vst.msk [vmem:[#allocation2 + $0x18] sm:$0xff] %vm1403, %v5184
      %5237 = vst.msk [vmem:[#allocation2 + $0x30] sm:$0xff] %vm1403, %v5186
      %5238 = vst.msk [vmem:[#allocation2 + $0x48] sm:$0xff] %vm1403, %v5188
      %5239 = vst.msk [vmem:[#allocation2 + $0x60] sm:$0xff] %vm1403, %v5190
      %5240 = vst.msk [vmem:[#allocation2 + $0x78] sm:$0xff] %vm1403, %v5192
      %5241 = vst.msk [vmem:[#allocation2 + $0x90] sm:$0xff] %vm1403, %v5194
      %5242 = vst.msk [vmem:[#allocation2 + $0xa8] sm:$0xff] %vm1403, %v5196
      %5243 = vst.msk [vmem:[#allocation2 + $0xc0] sm:$0xff] %vm1403, %v5198
      %5244 = vst.msk [vmem:[#allocation2 + $0xd8] sm:$0xff] %vm1403, %v5200
      %5245 = vst.msk [vmem:[#allocation2 + $0xf0] sm:$0xff] %vm1403, %v5202
      %5246 = vst.msk [vmem:[#allocation2 + $0x108] sm:$0xff] %vm1403, %v5204
      %5247 = vst.msk [vmem:[#allocation2 + $0x120] sm:$0xff] %vm1403, %v5206
      %5248 = vst.msk [vmem:[#allocation2 + $0x138] sm:$0xff] %vm1403, %v5208
      %5249 = vst.msk [vmem:[#allocation2 + $0x150] sm:$0xff] %vm1403, %v5210
      %5250 = vst.msk [vmem:[#allocation2 + $0x168] sm:$0xff] %vm1403, %v5212
      %5251 = vst.msk [vmem:[#allocation2 + $0x180] sm:$0xff] %vm1403, %v5214
      %5252 = vst.msk [vmem:[#allocation2 + $0x198] sm:$0xff] %vm1403, %v5216
      %v5253 = vld [vmem:[#allocation3 + $0x8] sm:$0xe]
      %v5254 = vld [vmem:[#allocation3 + $0xc] sm:$0xf]
      %v5255 = vld [vmem:[#allocation3 + $0x10] sm:$0xf]
      %v5256 = vld [vmem:[#allocation3 + $0x14] sm:$0xf]
      %v5257 = vld [vmem:[#allocation3 + $0x18] sm:$0xf]
      %v5258 = vld [vmem:[#allocation3 + $0x1c] sm:$0xf]
      %v5259 = vld [vmem:[#allocation3 + $0x20] sm:$0xf]
      %v5260 = vld [vmem:[#allocation3 + $0x24] sm:$0xf]
      %v5261 = vld [vmem:[#allocation3 + $0x28] sm:$0xf]
      %v5262 = vld [vmem:[#allocation3 + $0x2c] sm:$0xf]
      %v5263 = vld [vmem:[#allocation3 + $0x30] sm:$0xf]
      %v5264 = vld [vmem:[#allocation3 + $0x34] sm:$0xf]
      %v5265 = vld [vmem:[#allocation3 + $0x38] sm:$0xf]
      %v5266 = vld [vmem:[#allocation3 + $0x3c] sm:$0xf]
      %v5267 = vld [vmem:[#allocation3 + $0x40] sm:$0xf]
      %v5268 = vld [vmem:[#allocation3 + $0x44] sm:$0xf]
      %v5269 = vld [vmem:[#allocation3 + $0x48] sm:$0xf]
      %v5270 = vld [vmem:[#allocation3 + $0x4c] sm:$0xf]
      %v5271 = vld [vmem:[#allocation3 + $0x50] sm:$0xf]
      %v5272 = vld [vmem:[#allocation3 + $0x54] sm:$0xf]
      %v5273 = vld [vmem:[#allocation3 + $0x58] sm:$0xf]
      %v5274 = vld [vmem:[#allocation3 + $0x5c] sm:$0xf]
      %v5275 = vld [vmem:[#allocation3 + $0x60] sm:$0xf]
      %v5276 = vld [vmem:[#allocation3 + $0x64] sm:$0xf]
      %v5277 = vld [vmem:[#allocation3 + $0x68] sm:$0xf]
      %v5278 = vld [vmem:[#allocation3 + $0x6c] sm:$0xf]
      %v5279 = vld [vmem:[#allocation3 + $0x70] sm:$0xf]
      %v5280 = vld [vmem:[#allocation3 + $0x74] sm:$0xf]
      %v5281 = vld [vmem:[#allocation3 + $0x78] sm:$0xf]
      %v5282 = vld [vmem:[#allocation3 + $0x7c] sm:$0xf]
      %v5283 = vld [vmem:[#allocation3 + $0x80] sm:$0xf]
      %v5284 = vld [vmem:[#allocation3 + $0x84] sm:$0xf]
      %v5285 = vld [vmem:[#allocation3 + $0x88] sm:$0xf]
      %v5286 = vld [vmem:[#allocation3 + $0x8c] sm:$0xf]
      %v5287 = vld [vmem:[#allocation3 + $0x90] sm:$0xf]
      %v5288 = vld [vmem:[#allocation3 + $0x94] sm:$0xf]
      %v5289 = vld [vmem:[#allocation3 + $0x98] sm:$0x3]
      %v5327 = vunpack.c.l.b16 %v5253
      %v5328 = vunpack.c.l.b16 %v5254
      %v5329 = vunpack.c.l.b16 %v5255
      %v5330 = vunpack.c.l.b16 %v5256
      %v5331 = vunpack.c.l.b16 %v5257
      %v5332 = vunpack.c.l.b16 %v5258
      %v5333 = vunpack.c.l.b16 %v5259
      %v5334 = vunpack.c.l.b16 %v5260
      %v5335 = vunpack.c.l.b16 %v5261
      %v5336 = vunpack.c.l.b16 %v5262
      %v5337 = vunpack.c.l.b16 %v5263
      %v5338 = vunpack.c.l.b16 %v5264
      %v5339 = vunpack.c.l.b16 %v5265
      %v5340 = vunpack.c.l.b16 %v5266
      %v5341 = vunpack.c.l.b16 %v5267
      %v5342 = vunpack.c.l.b16 %v5268
      %v5343 = vunpack.c.l.b16 %v5269
      %v5344 = vunpack.c.l.b16 %v5270
      %v5345 = vunpack.c.l.b16 %v5271
      %v5346 = vunpack.c.l.b16 %v5272
      %v5347 = vunpack.c.l.b16 %v5273
      %v5348 = vunpack.c.l.b16 %v5274
      %v5349 = vunpack.c.l.b16 %v5275
      %v5350 = vunpack.c.l.b16 %v5276
      %v5351 = vunpack.c.l.b16 %v5277
      %v5352 = vunpack.c.l.b16 %v5278
      %v5353 = vunpack.c.l.b16 %v5279
      %v5354 = vunpack.c.l.b16 %v5280
      %v5355 = vunpack.c.l.b16 %v5281
      %v5356 = vunpack.c.l.b16 %v5282
      %v5357 = vunpack.c.l.b16 %v5283
      %v5358 = vunpack.c.l.b16 %v5284
      %v5359 = vunpack.c.l.b16 %v5285
      %v5360 = vunpack.c.l.b16 %v5286
      %v5361 = vunpack.c.l.b16 %v5287
      %v5362 = vunpack.c.l.b16 %v5288
      %v5363 = vunpack.c.l.b16 %v5289
      %v5364 = vpack.c.b16 %v5328, %v5327
      %v5365 = vpack.c.b16 %v5330, %v5329
      %v5366 = vpack.c.b16 %v5332, %v5331
      %v5367 = vpack.c.b16 %v5334, %v5333
      %v5368 = vpack.c.b16 %v5336, %v5335
      %v5369 = vpack.c.b16 %v5338, %v5337
      %v5370 = vpack.c.b16 %v5340, %v5339
      %v5371 = vpack.c.b16 %v5342, %v5341
      %v5372 = vpack.c.b16 %v5344, %v5343
      %v5373 = vpack.c.b16 %v5346, %v5345
      %v5374 = vpack.c.b16 %v5348, %v5347
      %v5375 = vpack.c.b16 %v5350, %v5349
      %v5376 = vpack.c.b16 %v5352, %v5351
      %v5377 = vpack.c.b16 %v5354, %v5353
      %v5378 = vpack.c.b16 %v5356, %v5355
      %v5379 = vpack.c.b16 %v5358, %v5357
      %v5380 = vpack.c.b16 %v5360, %v5359
      %v5381 = vpack.c.b16 %v5362, %v5361
      %v5382 = vpack.c.b16 %v5363, %v5363
      %v5384 = vshrl.u32 %v5364, 16
      %v5386 = vrot.slane %v5384, 1
      %v5387 = vshll.u32 %v5364, 16
      %v5389 = vrot.slane %v5387, 2
      %v5390 = vor.u32 %v5386, %v5389
      %v5392 = vshrl.u32 %v5365, 16
      %v5394 = vrot.slane %v5392, 1
      %v5395 = vshll.u32 %v5365, 16
      %v5397 = vrot.slane %v5395, 2
      %v5398 = vor.u32 %v5394, %v5397
      %v5399 = vsel %vm1552, %v5390, %v5398
      %v5401 = vshrl.u32 %v5366, 16
      %v5403 = vrot.slane %v5401, 1
      %v5404 = vshll.u32 %v5366, 16
      %v5406 = vrot.slane %v5404, 2
      %v5407 = vor.u32 %v5403, %v5406
      %v5408 = vsel %vm1552, %v5398, %v5407
      %v5410 = vshrl.u32 %v5367, 16
      %v5412 = vrot.slane %v5410, 1
      %v5413 = vshll.u32 %v5367, 16
      %v5415 = vrot.slane %v5413, 2
      %v5416 = vor.u32 %v5412, %v5415
      %v5417 = vsel %vm1552, %v5407, %v5416
      %v5419 = vshrl.u32 %v5368, 16
      %v5421 = vrot.slane %v5419, 1
      %v5422 = vshll.u32 %v5368, 16
      %v5424 = vrot.slane %v5422, 2
      %v5425 = vor.u32 %v5421, %v5424
      %v5426 = vsel %vm1552, %v5416, %v5425
      %v5428 = vshrl.u32 %v5369, 16
      %v5430 = vrot.slane %v5428, 1
      %v5431 = vshll.u32 %v5369, 16
      %v5433 = vrot.slane %v5431, 2
      %v5434 = vor.u32 %v5430, %v5433
      %v5435 = vsel %vm1552, %v5425, %v5434
      %v5437 = vshrl.u32 %v5370, 16
      %v5439 = vrot.slane %v5437, 1
      %v5440 = vshll.u32 %v5370, 16
      %v5442 = vrot.slane %v5440, 2
      %v5443 = vor.u32 %v5439, %v5442
      %v5444 = vsel %vm1552, %v5434, %v5443
      %v5446 = vshrl.u32 %v5371, 16
      %v5448 = vrot.slane %v5446, 1
      %v5449 = vshll.u32 %v5371, 16
      %v5451 = vrot.slane %v5449, 2
      %v5452 = vor.u32 %v5448, %v5451
      %v5453 = vsel %vm1552, %v5443, %v5452
      %v5455 = vshrl.u32 %v5372, 16
      %v5457 = vrot.slane %v5455, 1
      %v5458 = vshll.u32 %v5372, 16
      %v5460 = vrot.slane %v5458, 2
      %v5461 = vor.u32 %v5457, %v5460
      %v5462 = vsel %vm1552, %v5452, %v5461
      %v5464 = vshrl.u32 %v5373, 16
      %v5466 = vrot.slane %v5464, 1
      %v5467 = vshll.u32 %v5373, 16
      %v5469 = vrot.slane %v5467, 2
      %v5470 = vor.u32 %v5466, %v5469
      %v5471 = vsel %vm1552, %v5461, %v5470
      %v5473 = vshrl.u32 %v5374, 16
      %v5475 = vrot.slane %v5473, 1
      %v5476 = vshll.u32 %v5374, 16
      %v5478 = vrot.slane %v5476, 2
      %v5479 = vor.u32 %v5475, %v5478
      %v5480 = vsel %vm1552, %v5470, %v5479
      %v5482 = vshrl.u32 %v5375, 16
      %v5484 = vrot.slane %v5482, 1
      %v5485 = vshll.u32 %v5375, 16
      %v5487 = vrot.slane %v5485, 2
      %v5488 = vor.u32 %v5484, %v5487
      %v5489 = vsel %vm1552, %v5479, %v5488
      %v5491 = vshrl.u32 %v5376, 16
      %v5493 = vrot.slane %v5491, 1
      %v5494 = vshll.u32 %v5376, 16
      %v5496 = vrot.slane %v5494, 2
      %v5497 = vor.u32 %v5493, %v5496
      %v5498 = vsel %vm1552, %v5488, %v5497
      %v5500 = vshrl.u32 %v5377, 16
      %v5502 = vrot.slane %v5500, 1
      %v5503 = vshll.u32 %v5377, 16
      %v5505 = vrot.slane %v5503, 2
      %v5506 = vor.u32 %v5502, %v5505
      %v5507 = vsel %vm1552, %v5497, %v5506
      %v5509 = vshrl.u32 %v5378, 16
      %v5511 = vrot.slane %v5509, 1
      %v5512 = vshll.u32 %v5378, 16
      %v5514 = vrot.slane %v5512, 2
      %v5515 = vor.u32 %v5511, %v5514
      %v5516 = vsel %vm1552, %v5506, %v5515
      %v5518 = vshrl.u32 %v5379, 16
      %v5520 = vrot.slane %v5518, 1
      %v5521 = vshll.u32 %v5379, 16
      %v5523 = vrot.slane %v5521, 2
      %v5524 = vor.u32 %v5520, %v5523
      %v5525 = vsel %vm1552, %v5515, %v5524
      %v5527 = vshrl.u32 %v5380, 16
      %v5529 = vrot.slane %v5527, 1
      %v5530 = vshll.u32 %v5380, 16
      %v5532 = vrot.slane %v5530, 2
      %v5533 = vor.u32 %v5529, %v5532
      %v5534 = vsel %vm1552, %v5524, %v5533
      %v5536 = vshrl.u32 %v5381, 16
      %v5538 = vrot.slane %v5536, 1
      %v5539 = vshll.u32 %v5381, 16
      %v5541 = vrot.slane %v5539, 2
      %v5542 = vor.u32 %v5538, %v5541
      %v5543 = vsel %vm1552, %v5533, %v5542
      %v5545 = vshrl.u32 %v5382, 16
      %v5547 = vrot.slane %v5545, 1
      %v5548 = vshll.u32 %v5382, 16
      %v5550 = vrot.slane %v5548, 2
      %v5551 = vor.u32 %v5547, %v5550
      %v5552 = vsel %vm1552, %v5542, %v5551
      %5571 = vst.msk [vmem:[#allocation2 + $0x8] sm:$0xff] %vm570, %v5399
      %5572 = vst.msk [vmem:[#allocation2 + $0x20] sm:$0xff] %vm570, %v5408
      %5573 = vst.msk [vmem:[#allocation2 + $0x38] sm:$0xff] %vm570, %v5417
      %5574 = vst.msk [vmem:[#allocation2 + $0x50] sm:$0xff] %vm570, %v5426
      %5575 = vst.msk [vmem:[#allocation2 + $0x68] sm:$0xff] %vm570, %v5435
      %5576 = vst.msk [vmem:[#allocation2 + $0x80] sm:$0xff] %vm570, %v5444
      %5577 = vst.msk [vmem:[#allocation2 + $0x98] sm:$0xff] %vm570, %v5453
      %5578 = vst.msk [vmem:[#allocation2 + $0xb0] sm:$0xff] %vm570, %v5462
      %5579 = vst.msk [vmem:[#allocation2 + $0xc8] sm:$0xff] %vm570, %v5471
      %5580 = vst.msk [vmem:[#allocation2 + $0xe0] sm:$0xff] %vm570, %v5480
      %5581 = vst.msk [vmem:[#allocation2 + $0xf8] sm:$0xff] %vm570, %v5489
      %5582 = vst.msk [vmem:[#allocation2 + $0x110] sm:$0xff] %vm570, %v5498
      %5583 = vst.msk [vmem:[#allocation2 + $0x128] sm:$0xff] %vm570, %v5507
      %5584 = vst.msk [vmem:[#allocation2 + $0x140] sm:$0xff] %vm570, %v5516
      %5585 = vst.msk [vmem:[#allocation2 + $0x158] sm:$0xff] %vm570, %v5525
      %5586 = vst.msk [vmem:[#allocation2 + $0x170] sm:$0xff] %vm570, %v5534
      %5587 = vst.msk [vmem:[#allocation2 + $0x188] sm:$0xff] %vm570, %v5543
      %5588 = vst.msk [vmem:[#allocation2 + $0x1a0] sm:$0xff] %vm570, %v5552
      %v5589 = vld [vmem:[#allocation3 + $0x8] sm:$0xc]
      %v5590 = vld [vmem:[#allocation3 + $0xc] sm:$0xf]
      %v5591 = vld [vmem:[#allocation3 + $0x10] sm:$0xf]
      %v5592 = vld [vmem:[#allocation3 + $0x14] sm:$0xf]
      %v5593 = vld [vmem:[#allocation3 + $0x18] sm:$0xf]
      %v5594 = vld [vmem:[#allocation3 + $0x1c] sm:$0xf]
      %v5595 = vld [vmem:[#allocation3 + $0x20] sm:$0xf]
      %v5596 = vld [vmem:[#allocation3 + $0x24] sm:$0xf]
      %v5597 = vld [vmem:[#allocation3 + $0x28] sm:$0xf]
      %v5598 = vld [vmem:[#allocation3 + $0x2c] sm:$0xf]
      %v5599 = vld [vmem:[#allocation3 + $0x30] sm:$0xf]
      %v5600 = vld [vmem:[#allocation3 + $0x34] sm:$0xf]
      %v5601 = vld [vmem:[#allocation3 + $0x38] sm:$0xf]
      %v5602 = vld [vmem:[#allocation3 + $0x3c] sm:$0xf]
      %v5603 = vld [vmem:[#allocation3 + $0x40] sm:$0xf]
      %v5604 = vld [vmem:[#allocation3 + $0x44] sm:$0xf]
      %v5605 = vld [vmem:[#allocation3 + $0x48] sm:$0xf]
      %v5606 = vld [vmem:[#allocation3 + $0x4c] sm:$0xf]
      %v5607 = vld [vmem:[#allocation3 + $0x50] sm:$0xf]
      %v5608 = vld [vmem:[#allocation3 + $0x54] sm:$0xf]
      %v5609 = vld [vmem:[#allocation3 + $0x58] sm:$0xf]
      %v5610 = vld [vmem:[#allocation3 + $0x5c] sm:$0xf]
      %v5611 = vld [vmem:[#allocation3 + $0x60] sm:$0xf]
      %v5612 = vld [vmem:[#allocation3 + $0x64] sm:$0xf]
      %v5613 = vld [vmem:[#allocation3 + $0x68] sm:$0xf]
      %v5614 = vld [vmem:[#allocation3 + $0x6c] sm:$0xf]
      %v5615 = vld [vmem:[#allocation3 + $0x70] sm:$0xf]
      %v5616 = vld [vmem:[#allocation3 + $0x74] sm:$0xf]
      %v5617 = vld [vmem:[#allocation3 + $0x78] sm:$0xf]
      %v5618 = vld [vmem:[#allocation3 + $0x7c] sm:$0xf]
      %v5619 = vld [vmem:[#allocation3 + $0x80] sm:$0xf]
      %v5620 = vld [vmem:[#allocation3 + $0x84] sm:$0xf]
      %v5621 = vld [vmem:[#allocation3 + $0x88] sm:$0xf]
      %v5622 = vld [vmem:[#allocation3 + $0x8c] sm:$0xf]
      %v5623 = vld [vmem:[#allocation3 + $0x90] sm:$0xf]
      %v5624 = vld [vmem:[#allocation3 + $0x94] sm:$0xf]
      %v5625 = vld [vmem:[#allocation3 + $0x98] sm:$0x3]
      %v5663 = vunpack.c.l.b16 %v5589
      %v5664 = vunpack.c.l.b16 %v5590
      %v5665 = vunpack.c.l.b16 %v5591
      %v5666 = vunpack.c.l.b16 %v5592
      %v5667 = vunpack.c.l.b16 %v5593
      %v5668 = vunpack.c.l.b16 %v5594
      %v5669 = vunpack.c.l.b16 %v5595
      %v5670 = vunpack.c.l.b16 %v5596
      %v5671 = vunpack.c.l.b16 %v5597
      %v5672 = vunpack.c.l.b16 %v5598
      %v5673 = vunpack.c.l.b16 %v5599
      %v5674 = vunpack.c.l.b16 %v5600
      %v5675 = vunpack.c.l.b16 %v5601
      %v5676 = vunpack.c.l.b16 %v5602
      %v5677 = vunpack.c.l.b16 %v5603
      %v5678 = vunpack.c.l.b16 %v5604
      %v5679 = vunpack.c.l.b16 %v5605
      %v5680 = vunpack.c.l.b16 %v5606
      %v5681 = vunpack.c.l.b16 %v5607
      %v5682 = vunpack.c.l.b16 %v5608
      %v5683 = vunpack.c.l.b16 %v5609
      %v5684 = vunpack.c.l.b16 %v5610
      %v5685 = vunpack.c.l.b16 %v5611
      %v5686 = vunpack.c.l.b16 %v5612
      %v5687 = vunpack.c.l.b16 %v5613
      %v5688 = vunpack.c.l.b16 %v5614
      %v5689 = vunpack.c.l.b16 %v5615
      %v5690 = vunpack.c.l.b16 %v5616
      %v5691 = vunpack.c.l.b16 %v5617
      %v5692 = vunpack.c.l.b16 %v5618
      %v5693 = vunpack.c.l.b16 %v5619
      %v5694 = vunpack.c.l.b16 %v5620
      %v5695 = vunpack.c.l.b16 %v5621
      %v5696 = vunpack.c.l.b16 %v5622
      %v5697 = vunpack.c.l.b16 %v5623
      %v5698 = vunpack.c.l.b16 %v5624
      %v5699 = vunpack.c.l.b16 %v5625
      %v5700 = vpack.c.b16 %v5664, %v5663
      %v5701 = vpack.c.b16 %v5666, %v5665
      %v5702 = vpack.c.b16 %v5668, %v5667
      %v5703 = vpack.c.b16 %v5670, %v5669
      %v5704 = vpack.c.b16 %v5672, %v5671
      %v5705 = vpack.c.b16 %v5674, %v5673
      %v5706 = vpack.c.b16 %v5676, %v5675
      %v5707 = vpack.c.b16 %v5678, %v5677
      %v5708 = vpack.c.b16 %v5680, %v5679
      %v5709 = vpack.c.b16 %v5682, %v5681
      %v5710 = vpack.c.b16 %v5684, %v5683
      %v5711 = vpack.c.b16 %v5686, %v5685
      %v5712 = vpack.c.b16 %v5688, %v5687
      %v5713 = vpack.c.b16 %v5690, %v5689
      %v5714 = vpack.c.b16 %v5692, %v5691
      %v5715 = vpack.c.b16 %v5694, %v5693
      %v5716 = vpack.c.b16 %v5696, %v5695
      %v5717 = vpack.c.b16 %v5698, %v5697
      %v5718 = vpack.c.b16 %v5699, %v5699
      %v5719 = vrot.slane %v5700, 2
      %v5720 = vrot.slane %v5701, 2
      %v5721 = vsel %vm1889, %v5719, %v5720
      %v5722 = vrot.slane %v5702, 2
      %v5723 = vsel %vm1889, %v5720, %v5722
      %v5724 = vrot.slane %v5703, 2
      %v5725 = vsel %vm1889, %v5722, %v5724
      %v5726 = vrot.slane %v5704, 2
      %v5727 = vsel %vm1889, %v5724, %v5726
      %v5728 = vrot.slane %v5705, 2
      %v5729 = vsel %vm1889, %v5726, %v5728
      %v5730 = vrot.slane %v5706, 2
      %v5731 = vsel %vm1889, %v5728, %v5730
      %v5732 = vrot.slane %v5707, 2
      %v5733 = vsel %vm1889, %v5730, %v5732
      %v5734 = vrot.slane %v5708, 2
      %v5735 = vsel %vm1889, %v5732, %v5734
      %v5736 = vrot.slane %v5709, 2
      %v5737 = vsel %vm1889, %v5734, %v5736
      %v5738 = vrot.slane %v5710, 2
      %v5739 = vsel %vm1889, %v5736, %v5738
      %v5740 = vrot.slane %v5711, 2
      %v5741 = vsel %vm1889, %v5738, %v5740
      %v5742 = vrot.slane %v5712, 2
      %v5743 = vsel %vm1889, %v5740, %v5742
      %v5744 = vrot.slane %v5713, 2
      %v5745 = vsel %vm1889, %v5742, %v5744
      %v5746 = vrot.slane %v5714, 2
      %v5747 = vsel %vm1889, %v5744, %v5746
      %v5748 = vrot.slane %v5715, 2
      %v5749 = vsel %vm1889, %v5746, %v5748
      %v5750 = vrot.slane %v5716, 2
      %v5751 = vsel %vm1889, %v5748, %v5750
      %v5752 = vrot.slane %v5717, 2
      %v5753 = vsel %vm1889, %v5750, %v5752
      %v5754 = vrot.slane %v5718, 2
      %v5755 = vsel %vm1889, %v5752, %v5754
      %5756 = vrot.lane.b32.xlu0 %v5721, 32
      %v5757 = vpop.permute.xlu0 %5756
      %5758 = vrot.lane.b32.xlu0 %v5723, 32
      %v5759 = vpop.permute.xlu0 %5758
      %5760 = vrot.lane.b32.xlu0 %v5725, 32
      %v5761 = vpop.permute.xlu0 %5760
      %5762 = vrot.lane.b32.xlu0 %v5727, 32
      %v5763 = vpop.permute.xlu0 %5762
      %5764 = vrot.lane.b32.xlu0 %v5729, 32
      %v5765 = vpop.permute.xlu0 %5764
      %5766 = vrot.lane.b32.xlu0 %v5731, 32
      %v5767 = vpop.permute.xlu0 %5766
      %5768 = vrot.lane.b32.xlu0 %v5733, 32
      %v5769 = vpop.permute.xlu0 %5768
      %5770 = vrot.lane.b32.xlu0 %v5735, 32
      %v5771 = vpop.permute.xlu0 %5770
      %5772 = vrot.lane.b32.xlu0 %v5737, 32
      %v5773 = vpop.permute.xlu0 %5772
      %5774 = vrot.lane.b32.xlu0 %v5739, 32
      %v5775 = vpop.permute.xlu0 %5774
      %5776 = vrot.lane.b32.xlu0 %v5741, 32
      %v5777 = vpop.permute.xlu0 %5776
      %5778 = vrot.lane.b32.xlu0 %v5743, 32
      %v5779 = vpop.permute.xlu0 %5778
      %5780 = vrot.lane.b32.xlu0 %v5745, 32
      %v5781 = vpop.permute.xlu0 %5780
      %5782 = vrot.lane.b32.xlu0 %v5747, 32
      %v5783 = vpop.permute.xlu0 %5782
      %5784 = vrot.lane.b32.xlu0 %v5749, 32
      %v5785 = vpop.permute.xlu0 %5784
      %5786 = vrot.lane.b32.xlu0 %v5751, 32
      %v5787 = vpop.permute.xlu0 %5786
      %5788 = vrot.lane.b32.xlu0 %v5753, 32
      %v5789 = vpop.permute.xlu0 %5788
      %5790 = vrot.lane.b32.xlu0 %v5755, 32
      %v5791 = vpop.permute.xlu0 %5790
      %5810 = vst.msk [vmem:[#allocation2 + $0x8] sm:$0xff] %vm922, %v5757
      %5811 = vst.msk [vmem:[#allocation2 + $0x20] sm:$0xff] %vm922, %v5759
      %5812 = vst.msk [vmem:[#allocation2 + $0x38] sm:$0xff] %vm922, %v5761
      %5813 = vst.msk [vmem:[#allocation2 + $0x50] sm:$0xff] %vm922, %v5763
      %5814 = vst.msk [vmem:[#allocation2 + $0x68] sm:$0xff] %vm922, %v5765
      %5815 = vst.msk [vmem:[#allocation2 + $0x80] sm:$0xff] %vm922, %v5767
      %5816 = vst.msk [vmem:[#allocation2 + $0x98] sm:$0xff] %vm922, %v5769
      %5817 = vst.msk [vmem:[#allocation2 + $0xb0] sm:$0xff] %vm922, %v5771
      %5818 = vst.msk [vmem:[#allocation2 + $0xc8] sm:$0xff] %vm922, %v5773
      %5819 = vst.msk [vmem:[#allocation2 + $0xe0] sm:$0xff] %vm922, %v5775
      %5820 = vst.msk [vmem:[#allocation2 + $0xf8] sm:$0xff] %vm922, %v5777
      %5821 = vst.msk [vmem:[#allocation2 + $0x110] sm:$0xff] %vm922, %v5779
      %5822 = vst.msk [vmem:[#allocation2 + $0x128] sm:$0xff] %vm922, %v5781
      %5823 = vst.msk [vmem:[#allocation2 + $0x140] sm:$0xff] %vm922, %v5783
      %5824 = vst.msk [vmem:[#allocation2 + $0x158] sm:$0xff] %vm922, %v5785
      %5825 = vst.msk [vmem:[#allocation2 + $0x170] sm:$0xff] %vm922, %v5787
      %5826 = vst.msk [vmem:[#allocation2 + $0x188] sm:$0xff] %vm922, %v5789
      %5827 = vst.msk [vmem:[#allocation2 + $0x1a0] sm:$0xff] %vm922, %v5791
      %v5828 = vld [vmem:[#allocation3 + $0x10] sm:$0xc]
      %v5829 = vld [vmem:[#allocation3 + $0x14] sm:$0xf]
      %v5830 = vld [vmem:[#allocation3 + $0x18] sm:$0xf]
      %v5831 = vld [vmem:[#allocation3 + $0x1c] sm:$0xf]
      %v5832 = vld [vmem:[#allocation3 + $0x20] sm:$0xf]
      %v5833 = vld [vmem:[#allocation3 + $0x24] sm:$0xf]
      %v5834 = vld [vmem:[#allocation3 + $0x28] sm:$0xf]
      %v5835 = vld [vmem:[#allocation3 + $0x2c] sm:$0xf]
      %v5836 = vld [vmem:[#allocation3 + $0x30] sm:$0xf]
      %v5837 = vld [vmem:[#allocation3 + $0x34] sm:$0xf]
      %v5838 = vld [vmem:[#allocation3 + $0x38] sm:$0xf]
      %v5839 = vld [vmem:[#allocation3 + $0x3c] sm:$0xf]
      %v5840 = vld [vmem:[#allocation3 + $0x40] sm:$0xf]
      %v5841 = vld [vmem:[#allocation3 + $0x44] sm:$0xf]
      %v5842 = vld [vmem:[#allocation3 + $0x48] sm:$0xf]
      %v5843 = vld [vmem:[#allocation3 + $0x4c] sm:$0xf]
      %v5844 = vld [vmem:[#allocation3 + $0x50] sm:$0xf]
      %v5845 = vld [vmem:[#allocation3 + $0x54] sm:$0xf]
      %v5846 = vld [vmem:[#allocation3 + $0x58] sm:$0xf]
      %v5847 = vld [vmem:[#allocation3 + $0x5c] sm:$0xf]
      %v5848 = vld [vmem:[#allocation3 + $0x60] sm:$0xf]
      %v5849 = vld [vmem:[#allocation3 + $0x64] sm:$0xf]
      %v5850 = vld [vmem:[#allocation3 + $0x68] sm:$0xf]
      %v5851 = vld [vmem:[#allocation3 + $0x6c] sm:$0xf]
      %v5852 = vld [vmem:[#allocation3 + $0x70] sm:$0xf]
      %v5853 = vld [vmem:[#allocation3 + $0x74] sm:$0xf]
      %v5854 = vld [vmem:[#allocation3 + $0x78] sm:$0xf]
      %v5855 = vld [vmem:[#allocation3 + $0x7c] sm:$0xf]
      %v5856 = vld [vmem:[#allocation3 + $0x80] sm:$0xf]
      %v5857 = vld [vmem:[#allocation3 + $0x84] sm:$0xf]
      %v5858 = vld [vmem:[#allocation3 + $0x88] sm:$0xf]
      %v5859 = vld [vmem:[#allocation3 + $0x8c] sm:$0xf]
      %v5860 = vld [vmem:[#allocation3 + $0x90] sm:$0xf]
      %v5861 = vld [vmem:[#allocation3 + $0x94] sm:$0xf]
      %v5862 = vld [vmem:[#allocation3 + $0x98] sm:$0xf]
      %v5863 = vld [vmem:[#allocation3 + $0x9c] sm:$0xf]
      %v5864 = vld [vmem:[#allocation3 + $0xa0] sm:$0x3]
      %v5902 = vunpack.c.l.b16 %v5828
      %v5903 = vunpack.c.l.b16 %v5829
      %v5904 = vunpack.c.l.b16 %v5830
      %v5905 = vunpack.c.l.b16 %v5831
      %v5906 = vunpack.c.l.b16 %v5832
      %v5907 = vunpack.c.l.b16 %v5833
      %v5908 = vunpack.c.l.b16 %v5834
      %v5909 = vunpack.c.l.b16 %v5835
      %v5910 = vunpack.c.l.b16 %v5836
      %v5911 = vunpack.c.l.b16 %v5837
      %v5912 = vunpack.c.l.b16 %v5838
      %v5913 = vunpack.c.l.b16 %v5839
      %v5914 = vunpack.c.l.b16 %v5840
      %v5915 = vunpack.c.l.b16 %v5841
      %v5916 = vunpack.c.l.b16 %v5842
      %v5917 = vunpack.c.l.b16 %v5843
      %v5918 = vunpack.c.l.b16 %v5844
      %v5919 = vunpack.c.l.b16 %v5845
      %v5920 = vunpack.c.l.b16 %v5846
      %v5921 = vunpack.c.l.b16 %v5847
      %v5922 = vunpack.c.l.b16 %v5848
      %v5923 = vunpack.c.l.b16 %v5849
      %v5924 = vunpack.c.l.b16 %v5850
      %v5925 = vunpack.c.l.b16 %v5851
      %v5926 = vunpack.c.l.b16 %v5852
      %v5927 = vunpack.c.l.b16 %v5853
      %v5928 = vunpack.c.l.b16 %v5854
      %v5929 = vunpack.c.l.b16 %v5855
      %v5930 = vunpack.c.l.b16 %v5856
      %v5931 = vunpack.c.l.b16 %v5857
      %v5932 = vunpack.c.l.b16 %v5858
      %v5933 = vunpack.c.l.b16 %v5859
      %v5934 = vunpack.c.l.b16 %v5860
      %v5935 = vunpack.c.l.b16 %v5861
      %v5936 = vunpack.c.l.b16 %v5862
      %v5937 = vunpack.c.l.b16 %v5863
      %v5938 = vunpack.c.l.b16 %v5864
      %v5939 = vpack.c.b16 %v5903, %v5902
      %v5940 = vpack.c.b16 %v5905, %v5904
      %v5941 = vpack.c.b16 %v5907, %v5906
      %v5942 = vpack.c.b16 %v5909, %v5908
      %v5943 = vpack.c.b16 %v5911, %v5910
      %v5944 = vpack.c.b16 %v5913, %v5912
      %v5945 = vpack.c.b16 %v5915, %v5914
      %v5946 = vpack.c.b16 %v5917, %v5916
      %v5947 = vpack.c.b16 %v5919, %v5918
      %v5948 = vpack.c.b16 %v5921, %v5920
      %v5949 = vpack.c.b16 %v5923, %v5922
      %v5950 = vpack.c.b16 %v5925, %v5924
      %v5951 = vpack.c.b16 %v5927, %v5926
      %v5952 = vpack.c.b16 %v5929, %v5928
      %v5953 = vpack.c.b16 %v5931, %v5930
      %v5954 = vpack.c.b16 %v5933, %v5932
      %v5955 = vpack.c.b16 %v5935, %v5934
      %v5956 = vpack.c.b16 %v5937, %v5936
      %v5957 = vpack.c.b16 %v5938, %v5938
      %v5958 = vrot.slane %v5939, 2
      %v5959 = vrot.slane %v5940, 2
      %v5960 = vsel %vm1889, %v5958, %v5959
      %v5961 = vrot.slane %v5941, 2
      %v5962 = vsel %vm1889, %v5959, %v5961
      %v5963 = vrot.slane %v5942, 2
      %v5964 = vsel %vm1889, %v5961, %v5963
      %v5965 = vrot.slane %v5943, 2
      %v5966 = vsel %vm1889, %v5963, %v5965
      %v5967 = vrot.slane %v5944, 2
      %v5968 = vsel %vm1889, %v5965, %v5967
      %v5969 = vrot.slane %v5945, 2
      %v5970 = vsel %vm1889, %v5967, %v5969
      %v5971 = vrot.slane %v5946, 2
      %v5972 = vsel %vm1889, %v5969, %v5971
      %v5973 = vrot.slane %v5947, 2
      %v5974 = vsel %vm1889, %v5971, %v5973
      %v5975 = vrot.slane %v5948, 2
      %v5976 = vsel %vm1889, %v5973, %v5975
      %v5977 = vrot.slane %v5949, 2
      %v5978 = vsel %vm1889, %v5975, %v5977
      %v5979 = vrot.slane %v5950, 2
      %v5980 = vsel %vm1889, %v5977, %v5979
      %v5981 = vrot.slane %v5951, 2
      %v5982 = vsel %vm1889, %v5979, %v5981
      %v5983 = vrot.slane %v5952, 2
      %v5984 = vsel %vm1889, %v5981, %v5983
      %v5985 = vrot.slane %v5953, 2
      %v5986 = vsel %vm1889, %v5983, %v5985
      %v5987 = vrot.slane %v5954, 2
      %v5988 = vsel %vm1889, %v5985, %v5987
      %v5989 = vrot.slane %v5955, 2
      %v5990 = vsel %vm1889, %v5987, %v5989
      %v5991 = vrot.slane %v5956, 2
      %v5992 = vsel %vm1889, %v5989, %v5991
      %v5993 = vrot.slane %v5957, 2
      %v5994 = vsel %vm1889, %v5991, %v5993
      %5995 = vrot.lane.b32.xlu0 %v5960, 64
      %v5996 = vpop.permute.xlu0 %5995
      %5997 = vrot.lane.b32.xlu0 %v5962, 64
      %v5998 = vpop.permute.xlu0 %5997
      %5999 = vrot.lane.b32.xlu0 %v5964, 64
      %v6000 = vpop.permute.xlu0 %5999
      %6001 = vrot.lane.b32.xlu0 %v5966, 64
      %v6002 = vpop.permute.xlu0 %6001
      %6003 = vrot.lane.b32.xlu0 %v5968, 64
      %v6004 = vpop.permute.xlu0 %6003
      %6005 = vrot.lane.b32.xlu0 %v5970, 64
      %v6006 = vpop.permute.xlu0 %6005
      %6007 = vrot.lane.b32.xlu0 %v5972, 64
      %v6008 = vpop.permute.xlu0 %6007
      %6009 = vrot.lane.b32.xlu0 %v5974, 64
      %v6010 = vpop.permute.xlu0 %6009
      %6011 = vrot.lane.b32.xlu0 %v5976, 64
      %v6012 = vpop.permute.xlu0 %6011
      %6013 = vrot.lane.b32.xlu0 %v5978, 64
      %v6014 = vpop.permute.xlu0 %6013
      %6015 = vrot.lane.b32.xlu0 %v5980, 64
      %v6016 = vpop.permute.xlu0 %6015
      %6017 = vrot.lane.b32.xlu0 %v5982, 64
      %v6018 = vpop.permute.xlu0 %6017
      %6019 = vrot.lane.b32.xlu0 %v5984, 64
      %v6020 = vpop.permute.xlu0 %6019
      %6021 = vrot.lane.b32.xlu0 %v5986, 64
      %v6022 = vpop.permute.xlu0 %6021
      %6023 = vrot.lane.b32.xlu0 %v5988, 64
      %v6024 = vpop.permute.xlu0 %6023
      %6025 = vrot.lane.b32.xlu0 %v5990, 64
      %v6026 = vpop.permute.xlu0 %6025
      %6027 = vrot.lane.b32.xlu0 %v5992, 64
      %v6028 = vpop.permute.xlu0 %6027
      %6029 = vrot.lane.b32.xlu0 %v5994, 64
      %v6030 = vpop.permute.xlu0 %6029
      %6049 = vst.msk [vmem:[#allocation2 + $0x8] sm:$0xff] %vm1163, %v5996
      %6050 = vst.msk [vmem:[#allocation2 + $0x20] sm:$0xff] %vm1163, %v5998
      %6051 = vst.msk [vmem:[#allocation2 + $0x38] sm:$0xff] %vm1163, %v6000
      %6052 = vst.msk [vmem:[#allocation2 + $0x50] sm:$0xff] %vm1163, %v6002
      %6053 = vst.msk [vmem:[#allocation2 + $0x68] sm:$0xff] %vm1163, %v6004
      %6054 = vst.msk [vmem:[#allocation2 + $0x80] sm:$0xff] %vm1163, %v6006
      %6055 = vst.msk [vmem:[#allocation2 + $0x98] sm:$0xff] %vm1163, %v6008
      %6056 = vst.msk [vmem:[#allocation2 + $0xb0] sm:$0xff] %vm1163, %v6010
      %6057 = vst.msk [vmem:[#allocation2 + $0xc8] sm:$0xff] %vm1163, %v6012
      %6058 = vst.msk [vmem:[#allocation2 + $0xe0] sm:$0xff] %vm1163, %v6014
      %6059 = vst.msk [vmem:[#allocation2 + $0xf8] sm:$0xff] %vm1163, %v6016
      %6060 = vst.msk [vmem:[#allocation2 + $0x110] sm:$0xff] %vm1163, %v6018
      %6061 = vst.msk [vmem:[#allocation2 + $0x128] sm:$0xff] %vm1163, %v6020
      %6062 = vst.msk [vmem:[#allocation2 + $0x140] sm:$0xff] %vm1163, %v6022
      %6063 = vst.msk [vmem:[#allocation2 + $0x158] sm:$0xff] %vm1163, %v6024
      %6064 = vst.msk [vmem:[#allocation2 + $0x170] sm:$0xff] %vm1163, %v6026
      %6065 = vst.msk [vmem:[#allocation2 + $0x188] sm:$0xff] %vm1163, %v6028
      %6066 = vst.msk [vmem:[#allocation2 + $0x1a0] sm:$0xff] %vm1163, %v6030
      %v6067 = vld [vmem:[#allocation3 + $0x10] sm:$0xc]
      %v6068 = vld [vmem:[#allocation3 + $0x14] sm:$0xf]
      %v6069 = vld [vmem:[#allocation3 + $0x18] sm:$0xf]
      %v6070 = vld [vmem:[#allocation3 + $0x1c] sm:$0xf]
      %v6071 = vld [vmem:[#allocation3 + $0x20] sm:$0xf]
      %v6072 = vld [vmem:[#allocation3 + $0x24] sm:$0xf]
      %v6073 = vld [vmem:[#allocation3 + $0x28] sm:$0xf]
      %v6074 = vld [vmem:[#allocation3 + $0x2c] sm:$0xf]
      %v6075 = vld [vmem:[#allocation3 + $0x30] sm:$0xf]
      %v6076 = vld [vmem:[#allocation3 + $0x34] sm:$0xf]
      %v6077 = vld [vmem:[#allocation3 + $0x38] sm:$0xf]
      %v6078 = vld [vmem:[#allocation3 + $0x3c] sm:$0xf]
      %v6079 = vld [vmem:[#allocation3 + $0x40] sm:$0xf]
      %v6080 = vld [vmem:[#allocation3 + $0x44] sm:$0xf]
      %v6081 = vld [vmem:[#allocation3 + $0x48] sm:$0xf]
      %v6082 = vld [vmem:[#allocation3 + $0x4c] sm:$0xf]
      %v6083 = vld [vmem:[#allocation3 + $0x50] sm:$0xf]
      %v6084 = vld [vmem:[#allocation3 + $0x54] sm:$0xf]
      %v6085 = vld [vmem:[#allocation3 + $0x58] sm:$0xf]
      %v6086 = vld [vmem:[#allocation3 + $0x5c] sm:$0xf]
      %v6087 = vld [vmem:[#allocation3 + $0x60] sm:$0xf]
      %v6088 = vld [vmem:[#allocation3 + $0x64] sm:$0xf]
      %v6089 = vld [vmem:[#allocation3 + $0x68] sm:$0xf]
      %v6090 = vld [vmem:[#allocation3 + $0x6c] sm:$0xf]
      %v6091 = vld [vmem:[#allocation3 + $0x70] sm:$0xf]
      %v6092 = vld [vmem:[#allocation3 + $0x74] sm:$0xf]
      %v6093 = vld [vmem:[#allocation3 + $0x78] sm:$0xf]
      %v6094 = vld [vmem:[#allocation3 + $0x7c] sm:$0xf]
      %v6095 = vld [vmem:[#allocation3 + $0x80] sm:$0xf]
      %v6096 = vld [vmem:[#allocation3 + $0x84] sm:$0xf]
      %v6097 = vld [vmem:[#allocation3 + $0x88] sm:$0xf]
      %v6098 = vld [vmem:[#allocation3 + $0x8c] sm:$0xf]
      %v6099 = vld [vmem:[#allocation3 + $0x90] sm:$0xf]
      %v6100 = vld [vmem:[#allocation3 + $0x94] sm:$0xf]
      %v6101 = vld [vmem:[#allocation3 + $0x98] sm:$0xf]
      %v6102 = vld [vmem:[#allocation3 + $0x9c] sm:$0xf]
      %v6103 = vld [vmem:[#allocation3 + $0xa0] sm:$0x7]
      %v6141 = vunpack.c.l.b16 %v6067
      %v6142 = vunpack.c.l.b16 %v6068
      %v6143 = vunpack.c.l.b16 %v6069
      %v6144 = vunpack.c.l.b16 %v6070
      %v6145 = vunpack.c.l.b16 %v6071
      %v6146 = vunpack.c.l.b16 %v6072
      %v6147 = vunpack.c.l.b16 %v6073
      %v6148 = vunpack.c.l.b16 %v6074
      %v6149 = vunpack.c.l.b16 %v6075
      %v6150 = vunpack.c.l.b16 %v6076
      %v6151 = vunpack.c.l.b16 %v6077
      %v6152 = vunpack.c.l.b16 %v6078
      %v6153 = vunpack.c.l.b16 %v6079
      %v6154 = vunpack.c.l.b16 %v6080
      %v6155 = vunpack.c.l.b16 %v6081
      %v6156 = vunpack.c.l.b16 %v6082
      %v6157 = vunpack.c.l.b16 %v6083
      %v6158 = vunpack.c.l.b16 %v6084
      %v6159 = vunpack.c.l.b16 %v6085
      %v6160 = vunpack.c.l.b16 %v6086
      %v6161 = vunpack.c.l.b16 %v6087
      %v6162 = vunpack.c.l.b16 %v6088
      %v6163 = vunpack.c.l.b16 %v6089
      %v6164 = vunpack.c.l.b16 %v6090
      %v6165 = vunpack.c.l.b16 %v6091
      %v6166 = vunpack.c.l.b16 %v6092
      %v6167 = vunpack.c.l.b16 %v6093
      %v6168 = vunpack.c.l.b16 %v6094
      %v6169 = vunpack.c.l.b16 %v6095
      %v6170 = vunpack.c.l.b16 %v6096
      %v6171 = vunpack.c.l.b16 %v6097
      %v6172 = vunpack.c.l.b16 %v6098
      %v6173 = vunpack.c.l.b16 %v6099
      %v6174 = vunpack.c.l.b16 %v6100
      %v6175 = vunpack.c.l.b16 %v6101
      %v6176 = vunpack.c.l.b16 %v6102
      %v6177 = vunpack.c.l.b16 %v6103
      %v6178 = vpack.c.b16 %v6142, %v6141
      %v6179 = vpack.c.b16 %v6144, %v6143
      %v6180 = vpack.c.b16 %v6146, %v6145
      %v6181 = vpack.c.b16 %v6148, %v6147
      %v6182 = vpack.c.b16 %v6150, %v6149
      %v6183 = vpack.c.b16 %v6152, %v6151
      %v6184 = vpack.c.b16 %v6154, %v6153
      %v6185 = vpack.c.b16 %v6156, %v6155
      %v6186 = vpack.c.b16 %v6158, %v6157
      %v6187 = vpack.c.b16 %v6160, %v6159
      %v6188 = vpack.c.b16 %v6162, %v6161
      %v6189 = vpack.c.b16 %v6164, %v6163
      %v6190 = vpack.c.b16 %v6166, %v6165
      %v6191 = vpack.c.b16 %v6168, %v6167
      %v6192 = vpack.c.b16 %v6170, %v6169
      %v6193 = vpack.c.b16 %v6172, %v6171
      %v6194 = vpack.c.b16 %v6174, %v6173
      %v6195 = vpack.c.b16 %v6176, %v6175
      %v6196 = vpack.c.b16 %v6177, %v6177
      %v6198 = vshrl.u32 %v6178, 16
      %v6200 = vrot.slane %v6198, 2
      %v6201 = vshll.u32 %v6178, 16
      %v6203 = vrot.slane %v6201, 3
      %v6204 = vor.u32 %v6200, %v6203
      %v6206 = vshrl.u32 %v6179, 16
      %v6208 = vrot.slane %v6206, 2
      %v6209 = vshll.u32 %v6179, 16
      %v6211 = vrot.slane %v6209, 3
      %v6212 = vor.u32 %v6208, %v6211
      %v6213 = vsel %vm2368, %v6204, %v6212
      %v6215 = vshrl.u32 %v6180, 16
      %v6217 = vrot.slane %v6215, 2
      %v6218 = vshll.u32 %v6180, 16
      %v6220 = vrot.slane %v6218, 3
      %v6221 = vor.u32 %v6217, %v6220
      %v6222 = vsel %vm2368, %v6212, %v6221
      %v6224 = vshrl.u32 %v6181, 16
      %v6226 = vrot.slane %v6224, 2
      %v6227 = vshll.u32 %v6181, 16
      %v6229 = vrot.slane %v6227, 3
      %v6230 = vor.u32 %v6226, %v6229
      %v6231 = vsel %vm2368, %v6221, %v6230
      %v6233 = vshrl.u32 %v6182, 16
      %v6235 = vrot.slane %v6233, 2
      %v6236 = vshll.u32 %v6182, 16
      %v6238 = vrot.slane %v6236, 3
      %v6239 = vor.u32 %v6235, %v6238
      %v6240 = vsel %vm2368, %v6230, %v6239
      %v6242 = vshrl.u32 %v6183, 16
      %v6244 = vrot.slane %v6242, 2
      %v6245 = vshll.u32 %v6183, 16
      %v6247 = vrot.slane %v6245, 3
      %v6248 = vor.u32 %v6244, %v6247
      %v6249 = vsel %vm2368, %v6239, %v6248
      %v6251 = vshrl.u32 %v6184, 16
      %v6253 = vrot.slane %v6251, 2
      %v6254 = vshll.u32 %v6184, 16
      %v6256 = vrot.slane %v6254, 3
      %v6257 = vor.u32 %v6253, %v6256
      %v6258 = vsel %vm2368, %v6248, %v6257
      %v6260 = vshrl.u32 %v6185, 16
      %v6262 = vrot.slane %v6260, 2
      %v6263 = vshll.u32 %v6185, 16
      %v6265 = vrot.slane %v6263, 3
      %v6266 = vor.u32 %v6262, %v6265
      %v6267 = vsel %vm2368, %v6257, %v6266
      %v6269 = vshrl.u32 %v6186, 16
      %v6271 = vrot.slane %v6269, 2
      %v6272 = vshll.u32 %v6186, 16
      %v6274 = vrot.slane %v6272, 3
      %v6275 = vor.u32 %v6271, %v6274
      %v6276 = vsel %vm2368, %v6266, %v6275
      %v6278 = vshrl.u32 %v6187, 16
      %v6280 = vrot.slane %v6278, 2
      %v6281 = vshll.u32 %v6187, 16
      %v6283 = vrot.slane %v6281, 3
      %v6284 = vor.u32 %v6280, %v6283
      %v6285 = vsel %vm2368, %v6275, %v6284
      %v6287 = vshrl.u32 %v6188, 16
      %v6289 = vrot.slane %v6287, 2
      %v6290 = vshll.u32 %v6188, 16
      %v6292 = vrot.slane %v6290, 3
      %v6293 = vor.u32 %v6289, %v6292
      %v6294 = vsel %vm2368, %v6284, %v6293
      %v6296 = vshrl.u32 %v6189, 16
      %v6298 = vrot.slane %v6296, 2
      %v6299 = vshll.u32 %v6189, 16
      %v6301 = vrot.slane %v6299, 3
      %v6302 = vor.u32 %v6298, %v6301
      %v6303 = vsel %vm2368, %v6293, %v6302
      %v6305 = vshrl.u32 %v6190, 16
      %v6307 = vrot.slane %v6305, 2
      %v6308 = vshll.u32 %v6190, 16
      %v6310 = vrot.slane %v6308, 3
      %v6311 = vor.u32 %v6307, %v6310
      %v6312 = vsel %vm2368, %v6302, %v6311
      %v6314 = vshrl.u32 %v6191, 16
      %v6316 = vrot.slane %v6314, 2
      %v6317 = vshll.u32 %v6191, 16
      %v6319 = vrot.slane %v6317, 3
      %v6320 = vor.u32 %v6316, %v6319
      %v6321 = vsel %vm2368, %v6311, %v6320
      %v6323 = vshrl.u32 %v6192, 16
      %v6325 = vrot.slane %v6323, 2
      %v6326 = vshll.u32 %v6192, 16
      %v6328 = vrot.slane %v6326, 3
      %v6329 = vor.u32 %v6325, %v6328
      %v6330 = vsel %vm2368, %v6320, %v6329
      %v6332 = vshrl.u32 %v6193, 16
      %v6334 = vrot.slane %v6332, 2
      %v6335 = vshll.u32 %v6193, 16
      %v6337 = vrot.slane %v6335, 3
      %v6338 = vor.u32 %v6334, %v6337
      %v6339 = vsel %vm2368, %v6329, %v6338
      %v6341 = vshrl.u32 %v6194, 16
      %v6343 = vrot.slane %v6341, 2
      %v6344 = vshll.u32 %v6194, 16
      %v6346 = vrot.slane %v6344, 3
      %v6347 = vor.u32 %v6343, %v6346
      %v6348 = vsel %vm2368, %v6338, %v6347
      %v6350 = vshrl.u32 %v6195, 16
      %v6352 = vrot.slane %v6350, 2
      %v6353 = vshll.u32 %v6195, 16
      %v6355 = vrot.slane %v6353, 3
      %v6356 = vor.u32 %v6352, %v6355
      %v6357 = vsel %vm2368, %v6347, %v6356
      %v6359 = vshrl.u32 %v6196, 16
      %v6361 = vrot.slane %v6359, 2
      %v6362 = vshll.u32 %v6196, 16
      %v6364 = vrot.slane %v6362, 3
      %v6365 = vor.u32 %v6361, %v6364
      %v6366 = vsel %vm2368, %v6356, %v6365
      %6367 = vrot.lane.b32.xlu0 %v6213, 96
      %v6368 = vpop.permute.xlu0 %6367
      %6369 = vrot.lane.b32.xlu0 %v6222, 96
      %v6370 = vpop.permute.xlu0 %6369
      %6371 = vrot.lane.b32.xlu0 %v6231, 96
      %v6372 = vpop.permute.xlu0 %6371
      %6373 = vrot.lane.b32.xlu0 %v6240, 96
      %v6374 = vpop.permute.xlu0 %6373
      %6375 = vrot.lane.b32.xlu0 %v6249, 96
      %v6376 = vpop.permute.xlu0 %6375
      %6377 = vrot.lane.b32.xlu0 %v6258, 96
      %v6378 = vpop.permute.xlu0 %6377
      %6379 = vrot.lane.b32.xlu0 %v6267, 96
      %v6380 = vpop.permute.xlu0 %6379
      %6381 = vrot.lane.b32.xlu0 %v6276, 96
      %v6382 = vpop.permute.xlu0 %6381
      %6383 = vrot.lane.b32.xlu0 %v6285, 96
      %v6384 = vpop.permute.xlu0 %6383
      %6385 = vrot.lane.b32.xlu0 %v6294, 96
      %v6386 = vpop.permute.xlu0 %6385
      %6387 = vrot.lane.b32.xlu0 %v6303, 96
      %v6388 = vpop.permute.xlu0 %6387
      %6389 = vrot.lane.b32.xlu0 %v6312, 96
      %v6390 = vpop.permute.xlu0 %6389
      %6391 = vrot.lane.b32.xlu0 %v6321, 96
      %v6392 = vpop.permute.xlu0 %6391
      %6393 = vrot.lane.b32.xlu0 %v6330, 96
      %v6394 = vpop.permute.xlu0 %6393
      %6395 = vrot.lane.b32.xlu0 %v6339, 96
      %v6396 = vpop.permute.xlu0 %6395
      %6397 = vrot.lane.b32.xlu0 %v6348, 96
      %v6398 = vpop.permute.xlu0 %6397
      %6399 = vrot.lane.b32.xlu0 %v6357, 96
      %v6400 = vpop.permute.xlu0 %6399
      %6401 = vrot.lane.b32.xlu0 %v6366, 96
      %v6402 = vpop.permute.xlu0 %6401
      %6421 = vst.msk [vmem:[#allocation2 + $0x8] sm:$0xff] %vm1403, %v6368
      %6422 = vst.msk [vmem:[#allocation2 + $0x20] sm:$0xff] %vm1403, %v6370
      %6423 = vst.msk [vmem:[#allocation2 + $0x38] sm:$0xff] %vm1403, %v6372
      %6424 = vst.msk [vmem:[#allocation2 + $0x50] sm:$0xff] %vm1403, %v6374
      %6425 = vst.msk [vmem:[#allocation2 + $0x68] sm:$0xff] %vm1403, %v6376
      %6426 = vst.msk [vmem:[#allocation2 + $0x80] sm:$0xff] %vm1403, %v6378
      %6427 = vst.msk [vmem:[#allocation2 + $0x98] sm:$0xff] %vm1403, %v6380
      %6428 = vst.msk [vmem:[#allocation2 + $0xb0] sm:$0xff] %vm1403, %v6382
      %6429 = vst.msk [vmem:[#allocation2 + $0xc8] sm:$0xff] %vm1403, %v6384
      %6430 = vst.msk [vmem:[#allocation2 + $0xe0] sm:$0xff] %vm1403, %v6386
      %6431 = vst.msk [vmem:[#allocation2 + $0xf8] sm:$0xff] %vm1403, %v6388
      %6432 = vst.msk [vmem:[#allocation2 + $0x110] sm:$0xff] %vm1403, %v6390
      %6433 = vst.msk [vmem:[#allocation2 + $0x128] sm:$0xff] %vm1403, %v6392
      %6434 = vst.msk [vmem:[#allocation2 + $0x140] sm:$0xff] %vm1403, %v6394
      %6435 = vst.msk [vmem:[#allocation2 + $0x158] sm:$0xff] %vm1403, %v6396
      %6436 = vst.msk [vmem:[#allocation2 + $0x170] sm:$0xff] %vm1403, %v6398
      %6437 = vst.msk [vmem:[#allocation2 + $0x188] sm:$0xff] %vm1403, %v6400
      %6438 = vst.msk [vmem:[#allocation2 + $0x1a0] sm:$0xff] %vm1403, %v6402
      %v6439 = vld [vmem:[#allocation3 + $0x10] sm:$0x8]
      %v6440 = vld [vmem:[#allocation3 + $0x14] sm:$0xf]
      %v6441 = vld [vmem:[#allocation3 + $0x18] sm:$0xf]
      %v6442 = vld [vmem:[#allocation3 + $0x1c] sm:$0xf]
      %v6443 = vld [vmem:[#allocation3 + $0x20] sm:$0xf]
      %v6444 = vld [vmem:[#allocation3 + $0x24] sm:$0xf]
      %v6445 = vld [vmem:[#allocation3 + $0x28] sm:$0xf]
      %v6446 = vld [vmem:[#allocation3 + $0x2c] sm:$0xf]
      %v6447 = vld [vmem:[#allocation3 + $0x30] sm:$0xf]
      %v6448 = vld [vmem:[#allocation3 + $0x34] sm:$0xf]
      %v6449 = vld [vmem:[#allocation3 + $0x38] sm:$0xf]
      %v6450 = vld [vmem:[#allocation3 + $0x3c] sm:$0xf]
      %v6451 = vld [vmem:[#allocation3 + $0x40] sm:$0xf]
      %v6452 = vld [vmem:[#allocation3 + $0x44] sm:$0xf]
      %v6453 = vld [vmem:[#allocation3 + $0x48] sm:$0xf]
      %v6454 = vld [vmem:[#allocation3 + $0x4c] sm:$0xf]
      %v6455 = vld [vmem:[#allocation3 + $0x50] sm:$0xf]
      %v6456 = vld [vmem:[#allocation3 + $0x54] sm:$0xf]
      %v6457 = vld [vmem:[#allocation3 + $0x58] sm:$0xf]
      %v6458 = vld [vmem:[#allocation3 + $0x5c] sm:$0xf]
      %v6459 = vld [vmem:[#allocation3 + $0x60] sm:$0xf]
      %v6460 = vld [vmem:[#allocation3 + $0x64] sm:$0xf]
      %v6461 = vld [vmem:[#allocation3 + $0x68] sm:$0xf]
      %v6462 = vld [vmem:[#allocation3 + $0x6c] sm:$0xf]
      %v6463 = vld [vmem:[#allocation3 + $0x70] sm:$0xf]
      %v6464 = vld [vmem:[#allocation3 + $0x74] sm:$0xf]
      %v6465 = vld [vmem:[#allocation3 + $0x78] sm:$0xf]
      %v6466 = vld [vmem:[#allocation3 + $0x7c] sm:$0xf]
      %v6467 = vld [vmem:[#allocation3 + $0x80] sm:$0xf]
      %v6468 = vld [vmem:[#allocation3 + $0x84] sm:$0xf]
      %v6469 = vld [vmem:[#allocation3 + $0x88] sm:$0xf]
      %v6470 = vld [vmem:[#allocation3 + $0x8c] sm:$0xf]
      %v6471 = vld [vmem:[#allocation3 + $0x90] sm:$0xf]
      %v6472 = vld [vmem:[#allocation3 + $0x94] sm:$0xf]
      %v6473 = vld [vmem:[#allocation3 + $0x98] sm:$0xf]
      %v6474 = vld [vmem:[#allocation3 + $0x9c] sm:$0xf]
      %v6475 = vld [vmem:[#allocation3 + $0xa0] sm:$0x7]
      %v6513 = vunpack.c.l.b16 %v6439
      %v6514 = vunpack.c.l.b16 %v6440
      %v6515 = vunpack.c.l.b16 %v6441
      %v6516 = vunpack.c.l.b16 %v6442
      %v6517 = vunpack.c.l.b16 %v6443
      %v6518 = vunpack.c.l.b16 %v6444
      %v6519 = vunpack.c.l.b16 %v6445
      %v6520 = vunpack.c.l.b16 %v6446
      %v6521 = vunpack.c.l.b16 %v6447
      %v6522 = vunpack.c.l.b16 %v6448
      %v6523 = vunpack.c.l.b16 %v6449
      %v6524 = vunpack.c.l.b16 %v6450
      %v6525 = vunpack.c.l.b16 %v6451
      %v6526 = vunpack.c.l.b16 %v6452
      %v6527 = vunpack.c.l.b16 %v6453
      %v6528 = vunpack.c.l.b16 %v6454
      %v6529 = vunpack.c.l.b16 %v6455
      %v6530 = vunpack.c.l.b16 %v6456
      %v6531 = vunpack.c.l.b16 %v6457
      %v6532 = vunpack.c.l.b16 %v6458
      %v6533 = vunpack.c.l.b16 %v6459
      %v6534 = vunpack.c.l.b16 %v6460
      %v6535 = vunpack.c.l.b16 %v6461
      %v6536 = vunpack.c.l.b16 %v6462
      %v6537 = vunpack.c.l.b16 %v6463
      %v6538 = vunpack.c.l.b16 %v6464
      %v6539 = vunpack.c.l.b16 %v6465
      %v6540 = vunpack.c.l.b16 %v6466
      %v6541 = vunpack.c.l.b16 %v6467
      %v6542 = vunpack.c.l.b16 %v6468
      %v6543 = vunpack.c.l.b16 %v6469
      %v6544 = vunpack.c.l.b16 %v6470
      %v6545 = vunpack.c.l.b16 %v6471
      %v6546 = vunpack.c.l.b16 %v6472
      %v6547 = vunpack.c.l.b16 %v6473
      %v6548 = vunpack.c.l.b16 %v6474
      %v6549 = vunpack.c.l.b16 %v6475
      %v6550 = vpack.c.b16 %v6514, %v6513
      %v6551 = vpack.c.b16 %v6516, %v6515
      %v6552 = vpack.c.b16 %v6518, %v6517
      %v6553 = vpack.c.b16 %v6520, %v6519
      %v6554 = vpack.c.b16 %v6522, %v6521
      %v6555 = vpack.c.b16 %v6524, %v6523
      %v6556 = vpack.c.b16 %v6526, %v6525
      %v6557 = vpack.c.b16 %v6528, %v6527
      %v6558 = vpack.c.b16 %v6530, %v6529
      %v6559 = vpack.c.b16 %v6532, %v6531
      %v6560 = vpack.c.b16 %v6534, %v6533
      %v6561 = vpack.c.b16 %v6536, %v6535
      %v6562 = vpack.c.b16 %v6538, %v6537
      %v6563 = vpack.c.b16 %v6540, %v6539
      %v6564 = vpack.c.b16 %v6542, %v6541
      %v6565 = vpack.c.b16 %v6544, %v6543
      %v6566 = vpack.c.b16 %v6546, %v6545
      %v6567 = vpack.c.b16 %v6548, %v6547
      %v6568 = vpack.c.b16 %v6549, %v6549
      %v6569 = vrot.slane %v6550, 3
      %v6570 = vrot.slane %v6551, 3
      %v6571 = vsel %vm2741, %v6569, %v6570
      %v6572 = vrot.slane %v6552, 3
      %v6573 = vsel %vm2741, %v6570, %v6572
      %v6574 = vrot.slane %v6553, 3
      %v6575 = vsel %vm2741, %v6572, %v6574
      %v6576 = vrot.slane %v6554, 3
      %v6577 = vsel %vm2741, %v6574, %v6576
      %v6578 = vrot.slane %v6555, 3
      %v6579 = vsel %vm2741, %v6576, %v6578
      %v6580 = vrot.slane %v6556, 3
      %v6581 = vsel %vm2741, %v6578, %v6580
      %v6582 = vrot.slane %v6557, 3
      %v6583 = vsel %vm2741, %v6580, %v6582
      %v6584 = vrot.slane %v6558, 3
      %v6585 = vsel %vm2741, %v6582, %v6584
      %v6586 = vrot.slane %v6559, 3
      %v6587 = vsel %vm2741, %v6584, %v6586
      %v6588 = vrot.slane %v6560, 3
      %v6589 = vsel %vm2741, %v6586, %v6588
      %v6590 = vrot.slane %v6561, 3
      %v6591 = vsel %vm2741, %v6588, %v6590
      %v6592 = vrot.slane %v6562, 3
      %v6593 = vsel %vm2741, %v6590, %v6592
      %v6594 = vrot.slane %v6563, 3
      %v6595 = vsel %vm2741, %v6592, %v6594
      %v6596 = vrot.slane %v6564, 3
      %v6597 = vsel %vm2741, %v6594, %v6596
      %v6598 = vrot.slane %v6565, 3
      %v6599 = vsel %vm2741, %v6596, %v6598
      %v6600 = vrot.slane %v6566, 3
      %v6601 = vsel %vm2741, %v6598, %v6600
      %v6602 = vrot.slane %v6567, 3
      %v6603 = vsel %vm2741, %v6600, %v6602
      %v6604 = vrot.slane %v6568, 3
      %v6605 = vsel %vm2741, %v6602, %v6604
      %6624 = vst.msk [vmem:[#allocation2 + $0x10] sm:$0xff] %vm570, %v6571
      %6625 = vst.msk [vmem:[#allocation2 + $0x28] sm:$0xff] %vm570, %v6573
      %6626 = vst.msk [vmem:[#allocation2 + $0x40] sm:$0xff] %vm570, %v6575
      %6627 = vst.msk [vmem:[#allocation2 + $0x58] sm:$0xff] %vm570, %v6577
      %6628 = vst.msk [vmem:[#allocation2 + $0x70] sm:$0xff] %vm570, %v6579
      %6629 = vst.msk [vmem:[#allocation2 + $0x88] sm:$0xff] %vm570, %v6581
      %6630 = vst.msk [vmem:[#allocation2 + $0xa0] sm:$0xff] %vm570, %v6583
      %6631 = vst.msk [vmem:[#allocation2 + $0xb8] sm:$0xff] %vm570, %v6585
      %6632 = vst.msk [vmem:[#allocation2 + $0xd0] sm:$0xff] %vm570, %v6587
      %6633 = vst.msk [vmem:[#allocation2 + $0xe8] sm:$0xff] %vm570, %v6589
      %6634 = vst.msk [vmem:[#allocation2 + $0x100] sm:$0xff] %vm570, %v6591
      %6635 = vst.msk [vmem:[#allocation2 + $0x118] sm:$0xff] %vm570, %v6593
      %6636 = vst.msk [vmem:[#allocation2 + $0x130] sm:$0xff] %vm570, %v6595
      %6637 = vst.msk [vmem:[#allocation2 + $0x148] sm:$0xff] %vm570, %v6597
      %6638 = vst.msk [vmem:[#allocation2 + $0x160] sm:$0xff] %vm570, %v6599
      %6639 = vst.msk [vmem:[#allocation2 + $0x178] sm:$0xff] %vm570, %v6601
      %6640 = vst.msk [vmem:[#allocation2 + $0x190] sm:$0xff] %vm570, %v6603
      %6641 = vst.msk [vmem:[#allocation2 + $0x1a8] sm:$0xff] %vm570, %v6605
      %v6642 = vld [vmem:[#allocation2] sm:$0xff]
      %v6643 = vld [vmem:[#allocation2 + $0x8] sm:$0xff]
      %v6644 = vld [vmem:[#allocation2 + $0x10] sm:$0xff]
      %v6645 = vld [vmem:[#allocation2 + $0x18] sm:$0xff]
      %v6646 = vld [vmem:[#allocation2 + $0x20] sm:$0xff]
      %v6647 = vld [vmem:[#allocation2 + $0x28] sm:$0xff]
      %v6648 = vld [vmem:[#allocation2 + $0x30] sm:$0xff]
      %v6649 = vld [vmem:[#allocation2 + $0x38] sm:$0xff]
      %v6650 = vld [vmem:[#allocation2 + $0x40] sm:$0xff]
      %v6651 = vld [vmem:[#allocation2 + $0x48] sm:$0xff]
      %v6652 = vld [vmem:[#allocation2 + $0x50] sm:$0xff]
      %v6653 = vld [vmem:[#allocation2 + $0x58] sm:$0xff]
      %v6654 = vld [vmem:[#allocation2 + $0x60] sm:$0xff]
      %v6655 = vld [vmem:[#allocation2 + $0x68] sm:$0xff]
      %v6656 = vld [vmem:[#allocation2 + $0x70] sm:$0xff]
      %v6657 = vld [vmem:[#allocation2 + $0x78] sm:$0xff]
      %v6658 = vld [vmem:[#allocation2 + $0x80] sm:$0xff]
      %v6659 = vld [vmem:[#allocation2 + $0x88] sm:$0xff]
      %v6660 = vld [vmem:[#allocation2 + $0x90] sm:$0xff]
      %v6661 = vld [vmem:[#allocation2 + $0x98] sm:$0xff]
      %v6662 = vld [vmem:[#allocation2 + $0xa0] sm:$0xff]
      %v6663 = vld [vmem:[#allocation2 + $0xa8] sm:$0xff]
      %v6664 = vld [vmem:[#allocation2 + $0xb0] sm:$0xff]
      %v6665 = vld [vmem:[#allocation2 + $0xb8] sm:$0xff]
      %v6666 = vld [vmem:[#allocation2 + $0xc0] sm:$0xff]
      %v6667 = vld [vmem:[#allocation2 + $0xc8] sm:$0xff]
      %v6668 = vld [vmem:[#allocation2 + $0xd0] sm:$0xff]
      %v6669 = vld [vmem:[#allocation2 + $0xd8] sm:$0xff]
      %v6670 = vld [vmem:[#allocation2 + $0xe0] sm:$0xff]
      %v6671 = vld [vmem:[#allocation2 + $0xe8] sm:$0xff]
      %v6672 = vld [vmem:[#allocation2 + $0xf0] sm:$0xff]
      %v6673 = vld [vmem:[#allocation2 + $0xf8] sm:$0xff]
      %v6674 = vld [vmem:[#allocation2 + $0x100] sm:$0xff]
      %v6675 = vld [vmem:[#allocation2 + $0x108] sm:$0xff]
      %v6676 = vld [vmem:[#allocation2 + $0x110] sm:$0xff]
      %v6677 = vld [vmem:[#allocation2 + $0x118] sm:$0xff]
      %v6678 = vld [vmem:[#allocation2 + $0x120] sm:$0xff]
      %v6679 = vld [vmem:[#allocation2 + $0x128] sm:$0xff]
      %v6680 = vld [vmem:[#allocation2 + $0x130] sm:$0xff]
      %v6681 = vld [vmem:[#allocation2 + $0x138] sm:$0xff]
      %v6682 = vld [vmem:[#allocation2 + $0x140] sm:$0xff]
      %v6683 = vld [vmem:[#allocation2 + $0x148] sm:$0xff]
      %v6684 = vld [vmem:[#allocation2 + $0x150] sm:$0xff]
      %v6685 = vld [vmem:[#allocation2 + $0x158] sm:$0xff]
      %v6686 = vld [vmem:[#allocation2 + $0x160] sm:$0xff]
      %v6687 = vld [vmem:[#allocation2 + $0x168] sm:$0xff]
      %v6688 = vld [vmem:[#allocation2 + $0x170] sm:$0xff]
      %v6689 = vld [vmem:[#allocation2 + $0x178] sm:$0xff]
      %v6690 = vld [vmem:[#allocation2 + $0x180] sm:$0xff]
      %v6691 = vld [vmem:[#allocation2 + $0x188] sm:$0xff]
      %v6692 = vld [vmem:[#allocation2 + $0x190] sm:$0xff]
      %v6693 = vld [vmem:[#allocation2 + $0x198] sm:$0xff]
      %v6694 = vld [vmem:[#allocation2 + $0x1a0] sm:$0xff]
      %v6695 = vld [vmem:[#allocation2 + $0x1a8] sm:$0xff]
      %v6696 = vld [vmem:[%s5] sm:$0xf]
      %v6697 = vld [vmem:[%s5 + $0x4] sm:$0xf]
      %v6698 = vld [vmem:[%s5 + $0x8] sm:$0xf]
      %v6699 = vld [vmem:[%s5 + $0xc] sm:$0xf]
      %v6700 = vld [vmem:[%s5 + $0x10] sm:$0xf]
      %v6701 = vld [vmem:[%s5 + $0x14] sm:$0xf]
      %v6702 = vld [vmem:[%s5 + $0x18] sm:$0xf]
      %v6703 = vld [vmem:[%s5 + $0x1c] sm:$0xf]
      %v6704 = vld [vmem:[%s5 + $0x20] sm:$0xf]
      %v6705 = vld [vmem:[%s5 + $0x24] sm:$0xf]
      %v6706 = vld [vmem:[%s5 + $0x28] sm:$0xf]
      %v6707 = vld [vmem:[%s5 + $0x2c] sm:$0xf]
      %v6708 = vld [vmem:[%s5 + $0x30] sm:$0xf]
      %v6709 = vld [vmem:[%s5 + $0x34] sm:$0xf]
      %v6710 = vld [vmem:[%s5 + $0x38] sm:$0xf]
      %v6711 = vld [vmem:[%s5 + $0x3c] sm:$0xf]
      %v6712 = vld [vmem:[%s5 + $0x40] sm:$0xf]
      %v6713 = vld [vmem:[%s5 + $0x44] sm:$0xf]
      %v6714 = vld [vmem:[%s5 + $0x48] sm:$0xf]
      %v6715 = vld [vmem:[%s5 + $0x4c] sm:$0xf]
      %v6716 = vld [vmem:[%s5 + $0x50] sm:$0xf]
      %v6717 = vld [vmem:[%s5 + $0x54] sm:$0xf]
      %v6718 = vld [vmem:[%s5 + $0x58] sm:$0xf]
      %v6719 = vld [vmem:[%s5 + $0x5c] sm:$0xf]
      %v6720 = vld [vmem:[%s5 + $0x60] sm:$0xf]
      %v6721 = vld [vmem:[%s5 + $0x64] sm:$0xf]
      %v6722 = vld [vmem:[%s5 + $0x68] sm:$0xf]
      %v6723 = vld [vmem:[%s5 + $0x6c] sm:$0xf]
      %v6724 = vld [vmem:[%s5 + $0x70] sm:$0xf]
      %v6725 = vld [vmem:[%s5 + $0x74] sm:$0xf]
      %v6726 = vld [vmem:[%s5 + $0x78] sm:$0xf]
      %v6727 = vld [vmem:[%s5 + $0x7c] sm:$0xf]
      %v6728 = vld [vmem:[%s5 + $0x80] sm:$0xf]
      %v6729 = vld [vmem:[%s5 + $0x84] sm:$0xf]
      %v6730 = vld [vmem:[%s5 + $0x88] sm:$0xf]
      %v6731 = vld [vmem:[%s5 + $0x8c] sm:$0xf]
      %v6732 = vld [vmem:[%s6] sm:$0x1]
      %v6734 = vlaneseq
      %v6735 = vshrl.u32 %v6734, 7
      %v6736 = vsub.s32 0, %v6735
      %v6737 = vrot.slane %v6732, %v6736
      %v6775 = vunpack.c.l.b16 %v6696
      %v6776 = vunpack.c.l.b16 %v6697
      %v6777 = vunpack.c.l.b16 %v6698
      %v6778 = vunpack.c.l.b16 %v6699
      %v6779 = vunpack.c.l.b16 %v6700
      %v6780 = vunpack.c.l.b16 %v6701
      %v6781 = vunpack.c.l.b16 %v6702
      %v6782 = vunpack.c.l.b16 %v6703
      %v6783 = vunpack.c.l.b16 %v6704
      %v6784 = vunpack.c.l.b16 %v6705
      %v6785 = vunpack.c.l.b16 %v6706
      %v6786 = vunpack.c.l.b16 %v6707
      %v6787 = vunpack.c.l.b16 %v6708
      %v6788 = vunpack.c.l.b16 %v6709
      %v6789 = vunpack.c.l.b16 %v6710
      %v6790 = vunpack.c.l.b16 %v6711
      %v6791 = vunpack.c.l.b16 %v6712
      %v6792 = vunpack.c.l.b16 %v6713
      %v6793 = vunpack.c.l.b16 %v6714
      %v6794 = vunpack.c.l.b16 %v6715
      %v6795 = vunpack.c.l.b16 %v6716
      %v6796 = vunpack.c.l.b16 %v6717
      %v6797 = vunpack.c.l.b16 %v6718
      %v6798 = vunpack.c.l.b16 %v6719
      %v6799 = vunpack.c.l.b16 %v6720
      %v6800 = vunpack.c.l.b16 %v6721
      %v6801 = vunpack.c.l.b16 %v6722
      %v6802 = vunpack.c.l.b16 %v6723
      %v6803 = vunpack.c.l.b16 %v6724
      %v6804 = vunpack.c.l.b16 %v6725
      %v6805 = vunpack.c.l.b16 %v6726
      %v6806 = vunpack.c.l.b16 %v6727
      %v6807 = vunpack.c.l.b16 %v6728
      %v6808 = vunpack.c.l.b16 %v6729
      %v6809 = vunpack.c.l.b16 %v6730
      %v6810 = vunpack.c.l.b16 %v6731
      %v6811 = vpack.c.b16 %v6776, %v6775
      %v6812 = vpack.c.b16 %v6778, %v6777
      %v6813 = vpack.c.b16 %v6780, %v6779
      %v6814 = vpack.c.b16 %v6782, %v6781
      %v6815 = vpack.c.b16 %v6784, %v6783
      %v6816 = vpack.c.b16 %v6786, %v6785
      %v6817 = vpack.c.b16 %v6788, %v6787
      %v6818 = vpack.c.b16 %v6790, %v6789
      %v6819 = vpack.c.b16 %v6792, %v6791
      %v6820 = vpack.c.b16 %v6794, %v6793
      %v6821 = vpack.c.b16 %v6796, %v6795
      %v6822 = vpack.c.b16 %v6798, %v6797
      %v6823 = vpack.c.b16 %v6800, %v6799
      %v6824 = vpack.c.b16 %v6802, %v6801
      %v6825 = vpack.c.b16 %v6804, %v6803
      %v6826 = vpack.c.b16 %v6806, %v6805
      %v6827 = vpack.c.b16 %v6808, %v6807
      %v6828 = vpack.c.b16 %v6810, %v6809
      %v6848 = vsel %vm570, %v6644, 0
      %v6851 = vsel %vm570, %v6647, 0
      %v6854 = vsel %vm570, %v6650, 0
      %v6857 = vsel %vm570, %v6653, 0
      %v6860 = vsel %vm570, %v6656, 0
      %v6863 = vsel %vm570, %v6659, 0
      %v6866 = vsel %vm570, %v6662, 0
      %v6869 = vsel %vm570, %v6665, 0
      %v6872 = vsel %vm570, %v6668, 0
      %v6875 = vsel %vm570, %v6671, 0
      %v6878 = vsel %vm570, %v6674, 0
      %v6881 = vsel %vm570, %v6677, 0
      %v6884 = vsel %vm570, %v6680, 0
      %v6887 = vsel %vm570, %v6683, 0
      %v6890 = vsel %vm570, %v6686, 0
      %v6893 = vsel %vm570, %v6689, 0
      %v6896 = vsel %vm570, %v6692, 0
      %v6899 = vsel %vm570, %v6695, 0
      %6901 = vmatprep.subr.bf16.mxu0 0
      %6902 = vmatpush1.bf16.msra.mxu0 %v6811
      %6903 = vmatprep.subr.bf16.mxu0 0
      %6904 = vmatpush1.bf16.msra.mxu0 %v6812
      %6905 = vmatprep.subr.bf16.mxu0 0
      %6906 = vmatpush1.bf16.msra.mxu0 %v6813
      %6907 = vmatprep.subr.bf16.mxu0 0
      %6908 = vmatpush1.bf16.msra.mxu0 %v6814
      %6909 = vmatprep.subr.bf16.mxu0 0
      %6910 = vmatpush1.bf16.msra.mxu0 %v6815
      %6911 = vmatprep.subr.bf16.mxu0 0
      %6912 = vmatpush1.bf16.msra.mxu0 %v6816
      %6913 = vmatprep.subr.bf16.mxu0 0
      %6914 = vmatpush1.bf16.msra.mxu0 %v6817
      %6915 = vmatprep.subr.bf16.mxu0 0
      %6916 = vmatpush1.bf16.msra.mxu0 %v6818
      %6917 = vmatprep.subr.bf16.mxu0 0
      %6918 = vmatpush1.bf16.msra.mxu0 %v6819
      %6919 = vmatprep.subr.bf16.mxu0 0
      %6920 = vmatpush1.bf16.msra.mxu0 %v6820
      %6921 = vmatprep.subr.bf16.mxu0 0
      %6922 = vmatpush1.bf16.msra.mxu0 %v6821
      %6923 = vmatprep.subr.bf16.mxu0 0
      %6924 = vmatpush1.bf16.msra.mxu0 %v6822
      %6925 = vmatprep.subr.bf16.mxu0 0
      %6926 = vmatpush1.bf16.msra.mxu0 %v6823
      %6927 = vmatprep.subr.bf16.mxu0 0
      %6928 = vmatpush1.bf16.msra.mxu0 %v6824
      %6929 = vmatprep.subr.bf16.mxu0 0
      %6930 = vmatpush1.bf16.msra.mxu0 %v6825
      %6931 = vmatprep.subr.bf16.mxu0 0
      %6932 = vmatpush1.bf16.msra.mxu0 %v6826
      %6933 = vmatprep.mubr.bf16.mxu0 %v6643
      %6934 = vmatmul.mubr.bf16.gmra.mrb[0].mxu0 %v6642
      %v6935 = vpop.f32.mrb[0].mxu0
      %v6936 = vadd.f32 %v6737, %v6935
      %v6937 = vpop.f32.mrb[0].mxu0
      %v6938 = vpop.f32.mrb[0].mxu0
      %v6939 = vadd.f32 %v6737, %v6938
      %v6940 = vpop.f32.mrb[0].mxu0
      %6941 = vmatprep.mubr.bf16.mxu0 %v6646
      %6942 = vmatmul.mubr.bf16.gmra.mrb[0].mxu0 %v6645
      %v6943 = vpop.f32.mrb[0].mxu0
      %v6944 = vadd.f32 %v6737, %v6943
      %v6945 = vpop.f32.mrb[0].mxu0
      %v6946 = vpop.f32.mrb[0].mxu0
      %v6947 = vadd.f32 %v6737, %v6946
      %v6948 = vpop.f32.mrb[0].mxu0
      %6949 = vmatprep.mubr.bf16.mxu0 %v6649
      %6950 = vmatmul.mubr.bf16.gmra.mrb[0].mxu0 %v6648
      %v6951 = vpop.f32.mrb[0].mxu0
      %v6952 = vadd.f32 %v6737, %v6951
      %v6953 = vpop.f32.mrb[0].mxu0
      %v6954 = vpop.f32.mrb[0].mxu0
      %v6955 = vadd.f32 %v6737, %v6954
      %v6956 = vpop.f32.mrb[0].mxu0
      %6957 = vmatprep.mubr.bf16.mxu0 %v6652
      %6958 = vmatmul.mubr.bf16.gmra.mrb[0].mxu0 %v6651
      %v6959 = vpop.f32.mrb[0].mxu0
      %v6960 = vadd.f32 %v6737, %v6959
      %v6961 = vpop.f32.mrb[0].mxu0
      %v6962 = vpop.f32.mrb[0].mxu0
      %v6963 = vadd.f32 %v6737, %v6962
      %v6964 = vpop.f32.mrb[0].mxu0
      %6965 = vmatprep.mubr.bf16.mxu0 %v6655
      %6966 = vmatmul.mubr.bf16.gmra.mrb[0].mxu0 %v6654
      %v6967 = vpop.f32.mrb[0].mxu0
      %v6968 = vadd.f32 %v6737, %v6967
      %v6969 = vpop.f32.mrb[0].mxu0
      %v6970 = vpop.f32.mrb[0].mxu0
      %v6971 = vadd.f32 %v6737, %v6970
      %v6972 = vpop.f32.mrb[0].mxu0
      %6973 = vmatprep.mubr.bf16.mxu0 %v6658
      %6974 = vmatmul.mubr.bf16.gmra.mrb[0].mxu0 %v6657
      %v6975 = vpop.f32.mrb[0].mxu0
      %v6976 = vadd.f32 %v6737, %v6975
      %v6977 = vpop.f32.mrb[0].mxu0
      %v6978 = vpop.f32.mrb[0].mxu0
      %v6979 = vadd.f32 %v6737, %v6978
      %v6980 = vpop.f32.mrb[0].mxu0
      %6981 = vmatprep.mubr.bf16.mxu0 %v6661
      %6982 = vmatmul.mubr.bf16.gmra.mrb[0].mxu0 %v6660
      %v6983 = vpop.f32.mrb[0].mxu0
      %v6984 = vadd.f32 %v6737, %v6983
      %v6985 = vpop.f32.mrb[0].mxu0
      %v6986 = vpop.f32.mrb[0].mxu0
      %v6987 = vadd.f32 %v6737, %v6986
      %v6988 = vpop.f32.mrb[0].mxu0
      %6989 = vmatprep.mubr.bf16.mxu0 %v6664
      %6990 = vmatmul.mubr.bf16.gmra.mrb[0].mxu0 %v6663
      %v6991 = vpop.f32.mrb[0].mxu0
      %v6992 = vadd.f32 %v6737, %v6991
      %v6993 = vpop.f32.mrb[0].mxu0
      %v6994 = vpop.f32.mrb[0].mxu0
      %v6995 = vadd.f32 %v6737, %v6994
      %v6996 = vpop.f32.mrb[0].mxu0
      %6997 = vmatprep.mubr.bf16.mxu0 %v6667
      %6998 = vmatmul.mubr.bf16.gmra.mrb[0].mxu0 %v6666
      %v6999 = vpop.f32.mrb[0].mxu0
      %v7000 = vadd.f32 %v6737, %v6999
      %v7001 = vpop.f32.mrb[0].mxu0
      %v7002 = vpop.f32.mrb[0].mxu0
      %v7003 = vadd.f32 %v6737, %v7002
      %v7004 = vpop.f32.mrb[0].mxu0
      %7005 = vmatprep.mubr.bf16.mxu0 %v6670
      %7006 = vmatmul.mubr.bf16.gmra.mrb[0].mxu0 %v6669
      %v7007 = vpop.f32.mrb[0].mxu0
      %v7008 = vadd.f32 %v6737, %v7007
      %v7009 = vpop.f32.mrb[0].mxu0
      %v7010 = vpop.f32.mrb[0].mxu0
      %v7011 = vadd.f32 %v6737, %v7010
      %v7012 = vpop.f32.mrb[0].mxu0
      %7013 = vmatprep.mubr.bf16.mxu0 %v6673
      %7014 = vmatmul.mubr.bf16.gmra.mrb[0].mxu0 %v6672
      %v7015 = vpop.f32.mrb[0].mxu0
      %v7016 = vadd.f32 %v6737, %v7015
      %v7017 = vpop.f32.mrb[0].mxu0
      %v7018 = vpop.f32.mrb[0].mxu0
      %v7019 = vadd.f32 %v6737, %v7018
      %v7020 = vpop.f32.mrb[0].mxu0
      %7021 = vmatprep.mubr.bf16.mxu0 %v6676
      %7022 = vmatmul.mubr.bf16.gmra.mrb[0].mxu0 %v6675
      %v7023 = vpop.f32.mrb[0].mxu0
      %v7024 = vadd.f32 %v6737, %v7023
      %v7025 = vpop.f32.mrb[0].mxu0
      %v7026 = vpop.f32.mrb[0].mxu0
      %v7027 = vadd.f32 %v6737, %v7026
      %v7028 = vpop.f32.mrb[0].mxu0
      %7029 = vmatprep.mubr.bf16.mxu0 %v6679
      %7030 = vmatmul.mubr.bf16.gmra.mrb[0].mxu0 %v6678
      %v7031 = vpop.f32.mrb[0].mxu0
      %v7032 = vadd.f32 %v6737, %v7031
      %v7033 = vpop.f32.mrb[0].mxu0
      %v7034 = vpop.f32.mrb[0].mxu0
      %v7035 = vadd.f32 %v6737, %v7034
      %v7036 = vpop.f32.mrb[0].mxu0
      %7037 = vmatprep.mubr.bf16.mxu0 %v6682
      %7038 = vmatmul.mubr.bf16.gmra.mrb[0].mxu0 %v6681
      %v7039 = vpop.f32.mrb[0].mxu0
      %v7040 = vadd.f32 %v6737, %v7039
      %v7041 = vpop.f32.mrb[0].mxu0
      %v7042 = vpop.f32.mrb[0].mxu0
      %v7043 = vadd.f32 %v6737, %v7042
      %v7044 = vpop.f32.mrb[0].mxu0
      %7045 = vmatprep.mubr.bf16.mxu0 %v6685
      %7046 = vmatmul.mubr.bf16.gmra.mrb[0].mxu0 %v6684
      %v7047 = vpop.f32.mrb[0].mxu0
      %v7048 = vadd.f32 %v6737, %v7047
      %v7049 = vpop.f32.mrb[0].mxu0
      %v7050 = vpop.f32.mrb[0].mxu0
      %v7051 = vadd.f32 %v6737, %v7050
      %v7052 = vpop.f32.mrb[0].mxu0
      %7053 = vmatprep.mubr.bf16.mxu0 %v6688
      %7054 = vmatmul.mubr.bf16.gmra.mrb[0].mxu0 %v6687
      %v7055 = vpop.f32.mrb[0].mxu0
      %v7056 = vadd.f32 %v6737, %v7055
      %v7057 = vpop.f32.mrb[0].mxu0
      %v7058 = vpop.f32.mrb[0].mxu0
      %v7059 = vadd.f32 %v6737, %v7058
      %v7060 = vpop.f32.mrb[0].mxu0
      %7061 = vmatprep.mubr.bf16.mxu0 %v6691
      %7062 = vmatmul.mubr.bf16.gmra.mrb[0].mxu0 %v6690
      %v7063 = vpop.f32.mrb[0].mxu0
      %v7064 = vadd.f32 %v6737, %v7063
      %v7065 = vpop.f32.mrb[0].mxu0
      %v7066 = vpop.f32.mrb[0].mxu0
      %v7067 = vadd.f32 %v6737, %v7066
      %v7068 = vpop.f32.mrb[0].mxu0
      %7069 = vmatprep.mubr.bf16.mxu0 %v6694
      %7070 = vmatmul.mubr.bf16.gmra.mrb[0].mxu0 %v6693
      %v7071 = vpop.f32.mrb[0].mxu0
      %v7072 = vadd.f32 %v6737, %v7071
      %v7073 = vpop.f32.mrb[0].mxu0
      %v7074 = vpop.f32.mrb[0].mxu0
      %v7075 = vadd.f32 %v6737, %v7074
      %v7076 = vpop.f32.mrb[0].mxu0
      %7077 = vdwg.mxu0
      %7078 = vmatprep.subr.bf16.mxu0 0
      %7079 = vmatpush1.bf16.msra.mxu0 %v6827
      %7080 = vmatprep.subr.bf16.mxu0 0
      %7081 = vmatpush1.bf16.msra.mxu0 %v6828
      %7082 = vmatprep.subr.bf16.mxu0 0
      %7083 = vmatpush1.bf16.msra.mxu0 0
      %7084 = vmatprep.subr.bf16.mxu0 0
      %7085 = vmatpush1.bf16.msra.mxu0 0
      %7086 = vmatprep.subr.bf16.mxu0 0
      %7087 = vmatpush1.bf16.msra.mxu0 0
      %7088 = vmatprep.subr.bf16.mxu0 0
      %7089 = vmatpush1.bf16.msra.mxu0 0
      %7090 = vmatprep.subr.bf16.mxu0 0
      %7091 = vmatpush1.bf16.msra.mxu0 0
      %7092 = vmatprep.subr.bf16.mxu0 0
      %7093 = vmatpush1.bf16.msra.mxu0 0
      %7094 = vmatprep.subr.bf16.mxu0 0
      %7095 = vmatpush1.bf16.msra.mxu0 0
      %7096 = vmatprep.subr.bf16.mxu0 0
      %7097 = vmatpush1.bf16.msra.mxu0 0
      %7098 = vmatprep.subr.bf16.mxu0 0
      %7099 = vmatpush1.bf16.msra.mxu0 0
      %7100 = vmatprep.subr.bf16.mxu0 0
      %7101 = vmatpush1.bf16.msra.mxu0 0
      %7102 = vmatprep.subr.bf16.mxu0 0
      %7103 = vmatpush1.bf16.msra.mxu0 0
      %7104 = vmatprep.subr.bf16.mxu0 0
      %7105 = vmatpush1.bf16.msra.mxu0 0
      %7106 = vmatprep.subr.bf16.mxu0 0
      %7107 = vmatpush1.bf16.msra.mxu0 0
      %7108 = vmatprep.subr.bf16.mxu0 0
      %7109 = vmatpush1.bf16.msra.mxu0 0
      %7110 = vmatprep.mubr.bf16.mxu0 0
      %7111 = vmatmul.mubr.bf16.gmra.mrb[0].mxu0 %v6848
      %v7112 = vpop.f32.mrb[0].mxu0
      %v7113 = vadd.f32 %v6936, %v7112
      %v7114 = vpop.f32.mrb[0].mxu0
      %v7115 = vpop.f32.mrb[0].mxu0
      %v7116 = vadd.f32 %v6939, %v7115
      %v7117 = vpop.f32.mrb[0].mxu0
      %7118 = vmatprep.mubr.bf16.mxu0 0
      %7119 = vmatmul.mubr.bf16.gmra.mrb[0].mxu0 %v6851
      %v7120 = vpop.f32.mrb[0].mxu0
      %v7121 = vadd.f32 %v6944, %v7120
      %v7122 = vpop.f32.mrb[0].mxu0
      %v7123 = vpop.f32.mrb[0].mxu0
      %v7124 = vadd.f32 %v6947, %v7123
      %v7125 = vpop.f32.mrb[0].mxu0
      %7126 = vmatprep.mubr.bf16.mxu0 0
      %7127 = vmatmul.mubr.bf16.gmra.mrb[0].mxu0 %v6854
      %v7128 = vpop.f32.mrb[0].mxu0
      %v7129 = vadd.f32 %v6952, %v7128
      %v7130 = vpop.f32.mrb[0].mxu0
      %v7131 = vpop.f32.mrb[0].mxu0
      %v7132 = vadd.f32 %v6955, %v7131
      %v7133 = vpop.f32.mrb[0].mxu0
      %7134 = vmatprep.mubr.bf16.mxu0 0
      %7135 = vmatmul.mubr.bf16.gmra.mrb[0].mxu0 %v6857
      %v7136 = vpop.f32.mrb[0].mxu0
      %v7137 = vadd.f32 %v6960, %v7136
      %v7138 = vpop.f32.mrb[0].mxu0
      %v7139 = vpop.f32.mrb[0].mxu0
      %v7140 = vadd.f32 %v6963, %v7139
      %v7141 = vpop.f32.mrb[0].mxu0
      %7142 = vmatprep.mubr.bf16.mxu0 0
      %7143 = vmatmul.mubr.bf16.gmra.mrb[0].mxu0 %v6860
      %v7144 = vpop.f32.mrb[0].mxu0
      %v7145 = vadd.f32 %v6968, %v7144
      %v7146 = vpop.f32.mrb[0].mxu0
      %v7147 = vpop.f32.mrb[0].mxu0
      %v7148 = vadd.f32 %v6971, %v7147
      %v7149 = vpop.f32.mrb[0].mxu0
      %7150 = vmatprep.mubr.bf16.mxu0 0
      %7151 = vmatmul.mubr.bf16.gmra.mrb[0].mxu0 %v6863
      %v7152 = vpop.f32.mrb[0].mxu0
      %v7153 = vadd.f32 %v6976, %v7152
      %v7154 = vpop.f32.mrb[0].mxu0
      %v7155 = vpop.f32.mrb[0].mxu0
      %v7156 = vadd.f32 %v6979, %v7155
      %v7157 = vpop.f32.mrb[0].mxu0
      %7158 = vmatprep.mubr.bf16.mxu0 0
      %7159 = vmatmul.mubr.bf16.gmra.mrb[0].mxu0 %v6866
      %v7160 = vpop.f32.mrb[0].mxu0
      %v7161 = vadd.f32 %v6984, %v7160
      %v7162 = vpop.f32.mrb[0].mxu0
      %v7163 = vpop.f32.mrb[0].mxu0
      %v7164 = vadd.f32 %v6987, %v7163
      %v7165 = vpop.f32.mrb[0].mxu0
      %7166 = vmatprep.mubr.bf16.mxu0 0
      %7167 = vmatmul.mubr.bf16.gmra.mrb[0].mxu0 %v6869
      %v7168 = vpop.f32.mrb[0].mxu0
      %v7169 = vadd.f32 %v6992, %v7168
      %v7170 = vpop.f32.mrb[0].mxu0
      %v7171 = vpop.f32.mrb[0].mxu0
      %v7172 = vadd.f32 %v6995, %v7171
      %v7173 = vpop.f32.mrb[0].mxu0
      %7174 = vmatprep.mubr.bf16.mxu0 0
      %7175 = vmatmul.mubr.bf16.gmra.mrb[0].mxu0 %v6872
      %v7176 = vpop.f32.mrb[0].mxu0
      %v7177 = vadd.f32 %v7000, %v7176
      %v7178 = vpop.f32.mrb[0].mxu0
      %v7179 = vpop.f32.mrb[0].mxu0
      %v7180 = vadd.f32 %v7003, %v7179
      %v7181 = vpop.f32.mrb[0].mxu0
      %7182 = vmatprep.mubr.bf16.mxu0 0
      %7183 = vmatmul.mubr.bf16.gmra.mrb[0].mxu0 %v6875
      %v7184 = vpop.f32.mrb[0].mxu0
      %v7185 = vadd.f32 %v7008, %v7184
      %v7186 = vpop.f32.mrb[0].mxu0
      %v7187 = vpop.f32.mrb[0].mxu0
      %v7188 = vadd.f32 %v7011, %v7187
      %v7189 = vpop.f32.mrb[0].mxu0
      %7190 = vmatprep.mubr.bf16.mxu0 0
      %7191 = vmatmul.mubr.bf16.gmra.mrb[0].mxu0 %v6878
      %v7192 = vpop.f32.mrb[0].mxu0
      %v7193 = vadd.f32 %v7016, %v7192
      %v7194 = vpop.f32.mrb[0].mxu0
      %v7195 = vpop.f32.mrb[0].mxu0
      %v7196 = vadd.f32 %v7019, %v7195
      %v7197 = vpop.f32.mrb[0].mxu0
      %7198 = vmatprep.mubr.bf16.mxu0 0
      %7199 = vmatmul.mubr.bf16.gmra.mrb[0].mxu0 %v6881
      %v7200 = vpop.f32.mrb[0].mxu0
      %v7201 = vadd.f32 %v7024, %v7200
      %v7202 = vpop.f32.mrb[0].mxu0
      %v7203 = vpop.f32.mrb[0].mxu0
      %v7204 = vadd.f32 %v7027, %v7203
      %v7205 = vpop.f32.mrb[0].mxu0
      %7206 = vmatprep.mubr.bf16.mxu0 0
      %7207 = vmatmul.mubr.bf16.gmra.mrb[0].mxu0 %v6884
      %v7208 = vpop.f32.mrb[0].mxu0
      %v7209 = vadd.f32 %v7032, %v7208
      %v7210 = vpop.f32.mrb[0].mxu0
      %v7211 = vpop.f32.mrb[0].mxu0
      %v7212 = vadd.f32 %v7035, %v7211
      %v7213 = vpop.f32.mrb[0].mxu0
      %7214 = vmatprep.mubr.bf16.mxu0 0
      %7215 = vmatmul.mubr.bf16.gmra.mrb[0].mxu0 %v6887
      %v7216 = vpop.f32.mrb[0].mxu0
      %v7217 = vadd.f32 %v7040, %v7216
      %v7218 = vpop.f32.mrb[0].mxu0
      %v7219 = vpop.f32.mrb[0].mxu0
      %v7220 = vadd.f32 %v7043, %v7219
      %v7221 = vpop.f32.mrb[0].mxu0
      %7222 = vmatprep.mubr.bf16.mxu0 0
      %7223 = vmatmul.mubr.bf16.gmra.mrb[0].mxu0 %v6890
      %v7224 = vpop.f32.mrb[0].mxu0
      %v7225 = vadd.f32 %v7048, %v7224
      %v7226 = vpop.f32.mrb[0].mxu0
      %v7227 = vpop.f32.mrb[0].mxu0
      %v7228 = vadd.f32 %v7051, %v7227
      %v7229 = vpop.f32.mrb[0].mxu0
      %7230 = vmatprep.mubr.bf16.mxu0 0
      %7231 = vmatmul.mubr.bf16.gmra.mrb[0].mxu0 %v6893
      %v7232 = vpop.f32.mrb[0].mxu0
      %v7233 = vadd.f32 %v7056, %v7232
      %v7234 = vpop.f32.mrb[0].mxu0
      %v7235 = vpop.f32.mrb[0].mxu0
      %v7236 = vadd.f32 %v7059, %v7235
      %v7237 = vpop.f32.mrb[0].mxu0
      %7238 = vmatprep.mubr.bf16.mxu0 0
      %7239 = vmatmul.mubr.bf16.gmra.mrb[0].mxu0 %v6896
      %v7240 = vpop.f32.mrb[0].mxu0
      %v7241 = vadd.f32 %v7064, %v7240
      %v7242 = vpop.f32.mrb[0].mxu0
      %v7243 = vpop.f32.mrb[0].mxu0
      %v7244 = vadd.f32 %v7067, %v7243
      %v7245 = vpop.f32.mrb[0].mxu0
      %7246 = vmatprep.mubr.bf16.mxu0 0
      %7247 = vmatmul.mubr.bf16.gmra.mrb[0].mxu0 %v6899
      %v7248 = vpop.f32.mrb[0].mxu0
      %v7249 = vadd.f32 %v7072, %v7248
      %v7250 = vpop.f32.mrb[0].mxu0
      %v7251 = vpop.f32.mrb[0].mxu0
      %v7252 = vadd.f32 %v7075, %v7251
      %v7253 = vpop.f32.mrb[0].mxu0
      %7254 = vdwg.mxu0
      %7255 = vst.msk [vmem:[#allocation4] sm:$0xff] %vm570, %v7113
      %7256 = vst.msk [vmem:[#allocation4 + $0x8] sm:$0xff] %vm570, %v7116
      %7257 = vst.msk [vmem:[#allocation4 + $0x10] sm:$0xff] %vm570, %v7121
      %7258 = vst.msk [vmem:[#allocation4 + $0x18] sm:$0xff] %vm570, %v7124
      %7259 = vst.msk [vmem:[#allocation4 + $0x20] sm:$0xff] %vm570, %v7129
      %7260 = vst.msk [vmem:[#allocation4 + $0x28] sm:$0xff] %vm570, %v7132
      %7261 = vst.msk [vmem:[#allocation4 + $0x30] sm:$0xff] %vm570, %v7137
      %7262 = vst.msk [vmem:[#allocation4 + $0x38] sm:$0xff] %vm570, %v7140
      %7263 = vst.msk [vmem:[#allocation4 + $0x40] sm:$0xff] %vm570, %v7145
      %7264 = vst.msk [vmem:[#allocation4 + $0x48] sm:$0xff] %vm570, %v7148
      %7265 = vst.msk [vmem:[#allocation4 + $0x50] sm:$0xff] %vm570, %v7153
      %7266 = vst.msk [vmem:[#allocation4 + $0x58] sm:$0xff] %vm570, %v7156
      %7267 = vst.msk [vmem:[#allocation4 + $0x60] sm:$0xff] %vm570, %v7161
      %7268 = vst.msk [vmem:[#allocation4 + $0x68] sm:$0xff] %vm570, %v7164
      %7269 = vst.msk [vmem:[#allocation4 + $0x70] sm:$0xff] %vm570, %v7169
      %7270 = vst.msk [vmem:[#allocation4 + $0x78] sm:$0xff] %vm570, %v7172
      %7271 = vst.msk [vmem:[#allocation4 + $0x80] sm:$0xff] %vm570, %v7177
      %7272 = vst.msk [vmem:[#allocation4 + $0x88] sm:$0xff] %vm570, %v7180
      %7273 = vst.msk [vmem:[#allocation4 + $0x90] sm:$0xff] %vm570, %v7185
      %7274 = vst.msk [vmem:[#allocation4 + $0x98] sm:$0xff] %vm570, %v7188
      %7275 = vst.msk [vmem:[#allocation4 + $0xa0] sm:$0xff] %vm570, %v7193
      %7276 = vst.msk [vmem:[#allocation4 + $0xa8] sm:$0xff] %vm570, %v7196
      %7277 = vst.msk [vmem:[#allocation4 + $0xb0] sm:$0xff] %vm570, %v7201
      %7278 = vst.msk [vmem:[#allocation4 + $0xb8] sm:$0xff] %vm570, %v7204
      %7279 = vst.msk [vmem:[#allocation4 + $0xc0] sm:$0xff] %vm570, %v7209
      %7280 = vst.msk [vmem:[#allocation4 + $0xc8] sm:$0xff] %vm570, %v7212
      %7281 = vst.msk [vmem:[#allocation4 + $0xd0] sm:$0xff] %vm570, %v7217
      %7282 = vst.msk [vmem:[#allocation4 + $0xd8] sm:$0xff] %vm570, %v7220
      %7283 = vst.msk [vmem:[#allocation4 + $0xe0] sm:$0xff] %vm570, %v7225
      %7284 = vst.msk [vmem:[#allocation4 + $0xe8] sm:$0xff] %vm570, %v7228
      %7285 = vst.msk [vmem:[#allocation4 + $0xf0] sm:$0xff] %vm570, %v7233
      %7286 = vst.msk [vmem:[#allocation4 + $0xf8] sm:$0xff] %vm570, %v7236
      %7287 = vst.msk [vmem:[#allocation4 + $0x100] sm:$0xff] %vm570, %v7241
      %7288 = vst.msk [vmem:[#allocation4 + $0x108] sm:$0xff] %vm570, %v7244
      %7289 = vst.msk [vmem:[#allocation4 + $0x110] sm:$0xff] %vm570, %v7249
      %7290 = vst.msk [vmem:[#allocation4 + $0x118] sm:$0xff] %vm570, %v7252
      %v7291 = vld [vmem:[#allocation4] sm:$0xff]
      %v7292 = vld [vmem:[#allocation4 + $0x8] sm:$0xff]
      %v7293 = vld [vmem:[#allocation4 + $0x10] sm:$0xff]
      %v7294 = vld [vmem:[#allocation4 + $0x18] sm:$0xff]
      %v7295 = vld [vmem:[#allocation4 + $0x20] sm:$0xff]
      %v7296 = vld [vmem:[#allocation4 + $0x28] sm:$0xff]
      %v7297 = vld [vmem:[#allocation4 + $0x30] sm:$0xff]
      %v7298 = vld [vmem:[#allocation4 + $0x38] sm:$0xff]
      %v7299 = vld [vmem:[#allocation4 + $0x40] sm:$0xff]
      %v7300 = vld [vmem:[#allocation4 + $0x48] sm:$0xff]
      %v7301 = vld [vmem:[#allocation4 + $0x50] sm:$0xff]
      %v7302 = vld [vmem:[#allocation4 + $0x58] sm:$0xff]
      %v7303 = vld [vmem:[#allocation4 + $0x60] sm:$0xff]
      %v7304 = vld [vmem:[#allocation4 + $0x68] sm:$0xff]
      %v7305 = vld [vmem:[#allocation4 + $0x70] sm:$0xff]
      %v7306 = vld [vmem:[#allocation4 + $0x78] sm:$0xff]
      %v7307 = vld [vmem:[#allocation4 + $0x80] sm:$0xff]
      %v7308 = vld [vmem:[#allocation4 + $0x88] sm:$0xff]
      %v7309 = vld [vmem:[#allocation4 + $0x90] sm:$0xff]
      %v7310 = vld [vmem:[#allocation4 + $0x98] sm:$0xff]
      %v7311 = vld [vmem:[#allocation4 + $0xa0] sm:$0xff]
      %v7312 = vld [vmem:[#allocation4 + $0xa8] sm:$0xff]
      %v7313 = vld [vmem:[#allocation4 + $0xb0] sm:$0xff]
      %v7314 = vld [vmem:[#allocation4 + $0xb8] sm:$0xff]
      %v7315 = vld [vmem:[#allocation4 + $0xc0] sm:$0xff]
      %v7316 = vld [vmem:[#allocation4 + $0xc8] sm:$0xff]
      %v7317 = vld [vmem:[#allocation4 + $0xd0] sm:$0xff]
      %v7318 = vld [vmem:[#allocation4 + $0xd8] sm:$0xff]
      %v7319 = vld [vmem:[#allocation4 + $0xe0] sm:$0xff]
      %v7320 = vld [vmem:[#allocation4 + $0xe8] sm:$0xff]
      %v7321 = vld [vmem:[#allocation4 + $0xf0] sm:$0xff]
      %v7322 = vld [vmem:[#allocation4 + $0xf8] sm:$0xff]
      %v7323 = vld [vmem:[#allocation4 + $0x100] sm:$0xff]
      %v7324 = vld [vmem:[#allocation4 + $0x108] sm:$0xff]
      %v7325 = vld [vmem:[#allocation4 + $0x110] sm:$0xff]
      %v7326 = vld [vmem:[#allocation4 + $0x118] sm:$0xff]
      %v7327 = vld [vmem:[%s2] sm:$0xff]
      %v7328 = vld [vmem:[%s2 + $0x8] sm:$0xff]
      %v7329 = vld [vmem:[%s2 + $0x10] sm:$0xff]
      %v7330 = vld [vmem:[%s2 + $0x18] sm:$0xff]
      %v7331 = vld [vmem:[%s2 + $0x20] sm:$0xff]
      %v7332 = vld [vmem:[%s2 + $0x28] sm:$0xff]
      %v7333 = vld [vmem:[%s2 + $0x30] sm:$0xff]
      %v7334 = vld [vmem:[%s2 + $0x38] sm:$0xff]
      %v7335 = vld [vmem:[%s2 + $0x40] sm:$0xff]
      %v7336 = vld [vmem:[%s2 + $0x48] sm:$0xff]
      %v7337 = vld [vmem:[%s2 + $0x50] sm:$0xff]
      %v7338 = vld [vmem:[%s2 + $0x58] sm:$0xff]
      %v7339 = vld [vmem:[%s2 + $0x60] sm:$0xff]
      %v7340 = vld [vmem:[%s2 + $0x68] sm:$0xff]
      %v7341 = vld [vmem:[%s2 + $0x70] sm:$0xff]
      %v7342 = vld [vmem:[%s2 + $0x78] sm:$0xff]
      %v7343 = vld [vmem:[%s2 + $0x80] sm:$0xff]
      %v7344 = vld [vmem:[%s2 + $0x88] sm:$0xff]
      %v7345 = vld [vmem:[%s2 + $0x90] sm:$0xff]
      %v7346 = vld [vmem:[%s2 + $0x98] sm:$0xff]
      %v7347 = vld [vmem:[%s2 + $0xa0] sm:$0xff]
      %v7348 = vld [vmem:[%s2 + $0xa8] sm:$0xff]
      %v7349 = vld [vmem:[%s2 + $0xb0] sm:$0xff]
      %v7350 = vld [vmem:[%s2 + $0xb8] sm:$0xff]
      %v7351 = vld [vmem:[%s2 + $0xc0] sm:$0xff]
      %v7352 = vld [vmem:[%s2 + $0xc8] sm:$0xff]
      %v7353 = vld [vmem:[%s2 + $0xd0] sm:$0xff]
      %v7354 = vld [vmem:[%s2 + $0xd8] sm:$0xff]
      %v7355 = vld [vmem:[%s2 + $0xe0] sm:$0xff]
      %v7356 = vld [vmem:[%s2 + $0xe8] sm:$0xff]
      %v7357 = vld [vmem:[%s2 + $0xf0] sm:$0xff]
      %v7358 = vld [vmem:[%s2 + $0xf8] sm:$0xff]
      %v7359 = vld [vmem:[%s2 + $0x100] sm:$0xff]
      %v7360 = vld [vmem:[%s2 + $0x108] sm:$0xff]
      %v7361 = vld [vmem:[%s2 + $0x110] sm:$0xff]
      %v7362 = vld [vmem:[%s2 + $0x118] sm:$0xff]
      %7364 = vset.pattern.permute.xlu0 0
      %7365 = vperm.xlu0 %7364, %v7327
      %v7366 = vpop.permute.xlu0 %7365
      %7369 = vset.pattern.permute.xlu0 0
      %7370 = vperm.xlu0 %7369, %v7328
      %v7371 = vpop.permute.xlu0 %7370
      %7374 = vset.pattern.permute.xlu0 0
      %7375 = vperm.xlu0 %7374, %v7329
      %v7376 = vpop.permute.xlu0 %7375
      %7379 = vset.pattern.permute.xlu0 0
      %7380 = vperm.xlu0 %7379, %v7330
      %v7381 = vpop.permute.xlu0 %7380
      %7384 = vset.pattern.permute.xlu0 0
      %7385 = vperm.xlu0 %7384, %v7331
      %v7386 = vpop.permute.xlu0 %7385
      %7389 = vset.pattern.permute.xlu0 0
      %7390 = vperm.xlu0 %7389, %v7332
      %v7391 = vpop.permute.xlu0 %7390
      %7394 = vset.pattern.permute.xlu0 0
      %7395 = vperm.xlu0 %7394, %v7333
      %v7396 = vpop.permute.xlu0 %7395
      %7399 = vset.pattern.permute.xlu0 0
      %7400 = vperm.xlu0 %7399, %v7334
      %v7401 = vpop.permute.xlu0 %7400
      %7404 = vset.pattern.permute.xlu0 0
      %7405 = vperm.xlu0 %7404, %v7335
      %v7406 = vpop.permute.xlu0 %7405
      %7409 = vset.pattern.permute.xlu0 0
      %7410 = vperm.xlu0 %7409, %v7336
      %v7411 = vpop.permute.xlu0 %7410
      %7414 = vset.pattern.permute.xlu0 0
      %7415 = vperm.xlu0 %7414, %v7337
      %v7416 = vpop.permute.xlu0 %7415
      %7419 = vset.pattern.permute.xlu0 0
      %7420 = vperm.xlu0 %7419, %v7338
      %v7421 = vpop.permute.xlu0 %7420
      %7424 = vset.pattern.permute.xlu0 0
      %7425 = vperm.xlu0 %7424, %v7339
      %v7426 = vpop.permute.xlu0 %7425
      %7429 = vset.pattern.permute.xlu0 0
      %7430 = vperm.xlu0 %7429, %v7340
      %v7431 = vpop.permute.xlu0 %7430
      %7434 = vset.pattern.permute.xlu0 0
      %7435 = vperm.xlu0 %7434, %v7341
      %v7436 = vpop.permute.xlu0 %7435
      %7439 = vset.pattern.permute.xlu0 0
      %7440 = vperm.xlu0 %7439, %v7342
      %v7441 = vpop.permute.xlu0 %7440
      %7444 = vset.pattern.permute.xlu0 0
      %7445 = vperm.xlu0 %7444, %v7343
      %v7446 = vpop.permute.xlu0 %7445
      %7449 = vset.pattern.permute.xlu0 0
      %7450 = vperm.xlu0 %7449, %v7344
      %v7451 = vpop.permute.xlu0 %7450
      %7454 = vset.pattern.permute.xlu0 0
      %7455 = vperm.xlu0 %7454, %v7345
      %v7456 = vpop.permute.xlu0 %7455
      %7459 = vset.pattern.permute.xlu0 0
      %7460 = vperm.xlu0 %7459, %v7346
      %v7461 = vpop.permute.xlu0 %7460
      %7464 = vset.pattern.permute.xlu0 0
      %7465 = vperm.xlu0 %7464, %v7347
      %v7466 = vpop.permute.xlu0 %7465
      %7469 = vset.pattern.permute.xlu0 0
      %7470 = vperm.xlu0 %7469, %v7348
      %v7471 = vpop.permute.xlu0 %7470
      %7474 = vset.pattern.permute.xlu0 0
      %7475 = vperm.xlu0 %7474, %v7349
      %v7476 = vpop.permute.xlu0 %7475
      %7479 = vset.pattern.permute.xlu0 0
      %7480 = vperm.xlu0 %7479, %v7350
      %v7481 = vpop.permute.xlu0 %7480
      %7484 = vset.pattern.permute.xlu0 0
      %7485 = vperm.xlu0 %7484, %v7351
      %v7486 = vpop.permute.xlu0 %7485
      %7489 = vset.pattern.permute.xlu0 0
      %7490 = vperm.xlu0 %7489, %v7352
      %v7491 = vpop.permute.xlu0 %7490
      %7494 = vset.pattern.permute.xlu0 0
      %7495 = vperm.xlu0 %7494, %v7353
      %v7496 = vpop.permute.xlu0 %7495
      %7499 = vset.pattern.permute.xlu0 0
      %7500 = vperm.xlu0 %7499, %v7354
      %v7501 = vpop.permute.xlu0 %7500
      %7504 = vset.pattern.permute.xlu0 0
      %7505 = vperm.xlu0 %7504, %v7355
      %v7506 = vpop.permute.xlu0 %7505
      %7509 = vset.pattern.permute.xlu0 0
      %7510 = vperm.xlu0 %7509, %v7356
      %v7511 = vpop.permute.xlu0 %7510
      %7514 = vset.pattern.permute.xlu0 0
      %7515 = vperm.xlu0 %7514, %v7357
      %v7516 = vpop.permute.xlu0 %7515
      %7519 = vset.pattern.permute.xlu0 0
      %7520 = vperm.xlu0 %7519, %v7358
      %v7521 = vpop.permute.xlu0 %7520
      %7524 = vset.pattern.permute.xlu0 0
      %7525 = vperm.xlu0 %7524, %v7359
      %v7526 = vpop.permute.xlu0 %7525
      %7529 = vset.pattern.permute.xlu0 0
      %7530 = vperm.xlu0 %7529, %v7360
      %v7531 = vpop.permute.xlu0 %7530
      %7534 = vset.pattern.permute.xlu0 0
      %7535 = vperm.xlu0 %7534, %v7361
      %v7536 = vpop.permute.xlu0 %7535
      %7539 = vset.pattern.permute.xlu0 0
      %7540 = vperm.xlu0 %7539, %v7362
      %v7541 = vpop.permute.xlu0 %7540
      %v7543 = vmul.f32 %v7291, %v7366
      %v7544 = vmul.f32 %v7292, %v7371
      %v7545 = vmul.f32 %v7293, %v7376
      %v7546 = vmul.f32 %v7294, %v7381
      %v7547 = vmul.f32 %v7295, %v7386
      %v7548 = vmul.f32 %v7296, %v7391
      %v7549 = vmul.f32 %v7297, %v7396
      %v7550 = vmul.f32 %v7298, %v7401
      %v7551 = vmul.f32 %v7299, %v7406
      %v7552 = vmul.f32 %v7300, %v7411
      %v7553 = vmul.f32 %v7301, %v7416
      %v7554 = vmul.f32 %v7302, %v7421
      %v7555 = vmul.f32 %v7303, %v7426
      %v7556 = vmul.f32 %v7304, %v7431
      %v7557 = vmul.f32 %v7305, %v7436
      %v7558 = vmul.f32 %v7306, %v7441
      %v7559 = vmul.f32 %v7307, %v7446
      %v7560 = vmul.f32 %v7308, %v7451
      %v7561 = vmul.f32 %v7309, %v7456
      %v7562 = vmul.f32 %v7310, %v7461
      %v7563 = vmul.f32 %v7311, %v7466
      %v7564 = vmul.f32 %v7312, %v7471
      %v7565 = vmul.f32 %v7313, %v7476
      %v7566 = vmul.f32 %v7314, %v7481
      %v7567 = vmul.f32 %v7315, %v7486
      %v7568 = vmul.f32 %v7316, %v7491
      %v7569 = vmul.f32 %v7317, %v7496
      %v7570 = vmul.f32 %v7318, %v7501
      %v7571 = vmul.f32 %v7319, %v7506
      %v7572 = vmul.f32 %v7320, %v7511
      %v7573 = vmul.f32 %v7321, %v7516
      %v7574 = vmul.f32 %v7322, %v7521
      %v7575 = vmul.f32 %v7323, %v7526
      %v7576 = vmul.f32 %v7324, %v7531
      %v7577 = vmul.f32 %v7325, %v7536
      %v7578 = vmul.f32 %v7326, %v7541
      %v7579 = vsel %vm570, %v7543, 0.0
      %v7580 = vsel %vm570, %v7544, 0.0
      %v7581 = vadd.f32 %v7579, %v7580
      %v7582 = vsel %vm570, %v7545, 0.0
      %v7583 = vadd.f32 %v7581, %v7582
      %v7584 = vsel %vm570, %v7546, 0.0
      %v7585 = vadd.f32 %v7583, %v7584
      %v7586 = vsel %vm570, %v7547, 0.0
      %v7587 = vadd.f32 %v7585, %v7586
      %v7588 = vsel %vm570, %v7548, 0.0
      %v7589 = vadd.f32 %v7587, %v7588
      %v7590 = vsel %vm570, %v7549, 0.0
      %v7591 = vadd.f32 %v7589, %v7590
      %v7592 = vsel %vm570, %v7550, 0.0
      %v7593 = vadd.f32 %v7591, %v7592
      %v7594 = vsel %vm570, %v7551, 0.0
      %v7595 = vadd.f32 %v7593, %v7594
      %v7596 = vsel %vm570, %v7552, 0.0
      %v7597 = vadd.f32 %v7595, %v7596
      %v7598 = vsel %vm570, %v7553, 0.0
      %v7599 = vadd.f32 %v7597, %v7598
      %v7600 = vsel %vm570, %v7554, 0.0
      %v7601 = vadd.f32 %v7599, %v7600
      %v7602 = vsel %vm570, %v7555, 0.0
      %v7603 = vadd.f32 %v7601, %v7602
      %v7604 = vsel %vm570, %v7556, 0.0
      %v7605 = vadd.f32 %v7603, %v7604
      %v7606 = vsel %vm570, %v7557, 0.0
      %v7607 = vadd.f32 %v7605, %v7606
      %v7608 = vsel %vm570, %v7558, 0.0
      %v7609 = vadd.f32 %v7607, %v7608
      %v7610 = vsel %vm570, %v7559, 0.0
      %v7611 = vadd.f32 %v7609, %v7610
      %v7612 = vsel %vm570, %v7560, 0.0
      %v7613 = vadd.f32 %v7611, %v7612
      %v7614 = vsel %vm570, %v7561, 0.0
      %v7615 = vadd.f32 %v7613, %v7614
      %v7616 = vsel %vm570, %v7562, 0.0
      %v7617 = vadd.f32 %v7615, %v7616
      %v7618 = vsel %vm570, %v7563, 0.0
      %v7619 = vadd.f32 %v7617, %v7618
      %v7620 = vsel %vm570, %v7564, 0.0
      %v7621 = vadd.f32 %v7619, %v7620
      %v7622 = vsel %vm570, %v7565, 0.0
      %v7623 = vadd.f32 %v7621, %v7622
      %v7624 = vsel %vm570, %v7566, 0.0
      %v7625 = vadd.f32 %v7623, %v7624
      %v7626 = vsel %vm570, %v7567, 0.0
      %v7627 = vadd.f32 %v7625, %v7626
      %v7628 = vsel %vm570, %v7568, 0.0
      %v7629 = vadd.f32 %v7627, %v7628
      %v7630 = vsel %vm570, %v7569, 0.0
      %v7631 = vadd.f32 %v7629, %v7630
      %v7632 = vsel %vm570, %v7570, 0.0
      %v7633 = vadd.f32 %v7631, %v7632
      %v7634 = vsel %vm570, %v7571, 0.0
      %v7635 = vadd.f32 %v7633, %v7634
      %v7636 = vsel %vm570, %v7572, 0.0
      %v7637 = vadd.f32 %v7635, %v7636
      %v7638 = vsel %vm570, %v7573, 0.0
      %v7639 = vadd.f32 %v7637, %v7638
      %v7640 = vsel %vm570, %v7574, 0.0
      %v7641 = vadd.f32 %v7639, %v7640
      %v7642 = vsel %vm570, %v7575, 0.0
      %v7643 = vadd.f32 %v7641, %v7642
      %v7644 = vsel %vm570, %v7576, 0.0
      %v7645 = vadd.f32 %v7643, %v7644
      %v7646 = vsel %vm570, %v7577, 0.0
      %v7647 = vadd.f32 %v7645, %v7646
      %v7648 = vsel %vm570, %v7578, 0.0
      %v7649 = vadd.f32 %v7647, %v7648
      %v7650 = vrot.slane %v7649, 4
      %v7651 = vadd.f32 %v7649, %v7650
      %v7652 = vrot.slane %v7651, 2
      %v7653 = vadd.f32 %v7651, %v7652
      %v7654 = vrot.slane %v7653, 1
      %v7655 = vadd.f32 %v7653, %v7654
      %v7656 = vmul.f32 %v7655, 0.00390625
      %v7657 = vld [vmem:[%s7] sm:$0x3]
      %v7658 = vmul.f32 %v7656, %v7657
      %vm7659 = vcmask 254976
      %v7660 = vsel %vm7659, %v7658, 0.0
      %7661 = vadd.xlane.f32.xlu0 %v7660
      %v7662 = vpop.xlane.xlu0 %7661
      %v7663 = vld [vmem:[%s8] sm:$0x3]
      %v7664 = vadd.f32 %v7662, %v7663
      %v7665 = vmax.f32 %v7664, 0.0
      %v7666 = vld [vmem:[%s9] sm:$0x3]
      %7668 = vset.pattern.permute.xlu0 0
      %7669 = vperm.xlu0 %7668, %v7665
      %v7670 = vpop.permute.xlu0 %7669
      %v7672 = vmul.f32 %v7670, %v7666
      %v7673 = vsel %vm7659, %v7672, 0.0
      %v7674 = vrot.slane %v7673, 4
      %v7675 = vadd.f32 %v7673, %v7674
      %v7676 = vrot.slane %v7675, 2
      %v7677 = vadd.f32 %v7675, %v7676
      %v7678 = vrot.slane %v7677, 1
      %v7679 = vadd.f32 %v7677, %v7678
      %v7680 = vld [vmem:[%s10] sm:$0x1]
      %v7681 = vadd.f32 %v7679, %v7680
      %v7682 = vxor.u32 %v7681, 2147483648
      %v7683 = vmul.f32 %v7682, 1.442695
      %v7684 = vpow.pop %v7683
      %v7685 = vadd.f32 %v7684, 1.0
      %v7686 = vrcp.pop %v7685
      %v7687 = vmul.f32 1.0, %v7686
      %v7688 = vld [vmem:[%s401] sm:$0xff]
      %v7689 = vld [vmem:[%s401 + $0x8] sm:$0xff]
      %v7690 = vld [vmem:[%s401 + $0x10] sm:$0xff]
      %v7691 = vld [vmem:[%s401 + $0x18] sm:$0xff]
      %v7692 = vld [vmem:[%s401 + $0x20] sm:$0xff]
      %v7693 = vld [vmem:[%s401 + $0x28] sm:$0xff]
      %v7694 = vld [vmem:[%s401 + $0x30] sm:$0xff]
      %v7695 = vld [vmem:[%s401 + $0x38] sm:$0xff]
      %v7696 = vld [vmem:[%s401 + $0x40] sm:$0xff]
      %v7697 = vld [vmem:[%s401 + $0x48] sm:$0xff]
      %v7698 = vld [vmem:[%s401 + $0x50] sm:$0xff]
      %v7699 = vld [vmem:[%s401 + $0x58] sm:$0xff]
      %v7700 = vld [vmem:[%s401 + $0x60] sm:$0xff]
      %v7701 = vld [vmem:[%s401 + $0x68] sm:$0xff]
      %v7702 = vld [vmem:[%s401 + $0x70] sm:$0xff]
      %v7703 = vld [vmem:[%s401 + $0x78] sm:$0xff]
      %v7704 = vld [vmem:[%s401 + $0x80] sm:$0xff]
      %v7705 = vld [vmem:[%s401 + $0x88] sm:$0xff]
      %v7706 = vld [vmem:[%s401 + $0x90] sm:$0xff]
      %v7707 = vld [vmem:[%s401 + $0x98] sm:$0xff]
      %v7708 = vld [vmem:[%s401 + $0xa0] sm:$0xff]
      %v7709 = vld [vmem:[%s401 + $0xa8] sm:$0xff]
      %v7710 = vld [vmem:[%s401 + $0xb0] sm:$0xff]
      %v7711 = vld [vmem:[%s401 + $0xb8] sm:$0xff]
      %v7712 = vld [vmem:[%s401 + $0xc0] sm:$0xff]
      %v7713 = vld [vmem:[%s401 + $0xc8] sm:$0xff]
      %v7714 = vld [vmem:[%s401 + $0xd0] sm:$0xff]
      %v7715 = vld [vmem:[%s401 + $0xd8] sm:$0xff]
      %v7716 = vld [vmem:[%s401 + $0xe0] sm:$0xff]
      %v7717 = vld [vmem:[%s401 + $0xe8] sm:$0xff]
      %v7718 = vld [vmem:[%s401 + $0xf0] sm:$0xff]
      %v7719 = vld [vmem:[%s401 + $0xf8] sm:$0xff]
      %v7720 = vld [vmem:[%s401 + $0x100] sm:$0xff]
      %v7721 = vld [vmem:[%s401 + $0x108] sm:$0xff]
      %v7722 = vld [vmem:[%s401 + $0x110] sm:$0xff]
      %v7723 = vld [vmem:[%s401 + $0x118] sm:$0xff]
      %v7724 = vlaneseq
      %v7725 = vshrl.u32 %v7724, 7
      %v7726 = vsub.s32 0, %v7725
      %v7727 = vrot.slane %v7687, %v7726
      %v7728 = vmul.f32 %v7291, %v7727
      %v7729 = vmul.f32 %v7292, %v7727
      %v7730 = vmul.f32 %v7293, %v7727
      %v7731 = vmul.f32 %v7294, %v7727
      %v7732 = vmul.f32 %v7295, %v7727
      %v7733 = vmul.f32 %v7296, %v7727
      %v7734 = vmul.f32 %v7297, %v7727
      %v7735 = vmul.f32 %v7298, %v7727
      %v7736 = vmul.f32 %v7299, %v7727
      %v7737 = vmul.f32 %v7300, %v7727
      %v7738 = vmul.f32 %v7301, %v7727
      %v7739 = vmul.f32 %v7302, %v7727
      %v7740 = vmul.f32 %v7303, %v7727
      %v7741 = vmul.f32 %v7304, %v7727
      %v7742 = vmul.f32 %v7305, %v7727
      %v7743 = vmul.f32 %v7306, %v7727
      %v7744 = vmul.f32 %v7307, %v7727
      %v7745 = vmul.f32 %v7308, %v7727
      %v7746 = vmul.f32 %v7309, %v7727
      %v7747 = vmul.f32 %v7310, %v7727
      %v7748 = vmul.f32 %v7311, %v7727
      %v7749 = vmul.f32 %v7312, %v7727
      %v7750 = vmul.f32 %v7313, %v7727
      %v7751 = vmul.f32 %v7314, %v7727
      %v7752 = vmul.f32 %v7315, %v7727
      %v7753 = vmul.f32 %v7316, %v7727
      %v7754 = vmul.f32 %v7317, %v7727
      %v7755 = vmul.f32 %v7318, %v7727
      %v7756 = vmul.f32 %v7319, %v7727
      %v7757 = vmul.f32 %v7320, %v7727
      %v7758 = vmul.f32 %v7321, %v7727
      %v7759 = vmul.f32 %v7322, %v7727
      %v7760 = vmul.f32 %v7323, %v7727
      %v7761 = vmul.f32 %v7324, %v7727
      %v7762 = vmul.f32 %v7325, %v7727
      %v7763 = vmul.f32 %v7326, %v7727
      %v7764 = vmul.f32 %v7728, 0.5
      %v7765 = vmul.f32 %v7729, 0.5
      %v7766 = vmul.f32 %v7730, 0.5
      %v7767 = vmul.f32 %v7731, 0.5
      %v7768 = vmul.f32 %v7732, 0.5
      %v7769 = vmul.f32 %v7733, 0.5
      %v7770 = vmul.f32 %v7734, 0.5
      %v7771 = vmul.f32 %v7735, 0.5
      %v7772 = vmul.f32 %v7736, 0.5
      %v7773 = vmul.f32 %v7737, 0.5
      %v7774 = vmul.f32 %v7738, 0.5
      %v7775 = vmul.f32 %v7739, 0.5
      %v7776 = vmul.f32 %v7740, 0.5
      %v7777 = vmul.f32 %v7741, 0.5
      %v7778 = vmul.f32 %v7742, 0.5
      %v7779 = vmul.f32 %v7743, 0.5
      %v7780 = vmul.f32 %v7744, 0.5
      %v7781 = vmul.f32 %v7745, 0.5
      %v7782 = vmul.f32 %v7746, 0.5
      %v7783 = vmul.f32 %v7747, 0.5
      %v7784 = vmul.f32 %v7748, 0.5
      %v7785 = vmul.f32 %v7749, 0.5
      %v7786 = vmul.f32 %v7750, 0.5
      %v7787 = vmul.f32 %v7751, 0.5
      %v7788 = vmul.f32 %v7752, 0.5
      %v7789 = vmul.f32 %v7753, 0.5
      %v7790 = vmul.f32 %v7754, 0.5
      %v7791 = vmul.f32 %v7755, 0.5
      %v7792 = vmul.f32 %v7756, 0.5
      %v7793 = vmul.f32 %v7757, 0.5
      %v7794 = vmul.f32 %v7758, 0.5
      %v7795 = vmul.f32 %v7759, 0.5
      %v7796 = vmul.f32 %v7760, 0.5
      %v7797 = vmul.f32 %v7761, 0.5
      %v7798 = vmul.f32 %v7762, 0.5
      %v7799 = vmul.f32 %v7763, 0.5
      %v7800 = vadd.f32 %v7688, %v7764
      %v7801 = vadd.f32 %v7689, %v7765
      %v7802 = vadd.f32 %v7690, %v7766
      %v7803 = vadd.f32 %v7691, %v7767
      %v7804 = vadd.f32 %v7692, %v7768
      %v7805 = vadd.f32 %v7693, %v7769
      %v7806 = vadd.f32 %v7694, %v7770
      %v7807 = vadd.f32 %v7695, %v7771
      %v7808 = vadd.f32 %v7696, %v7772
      %v7809 = vadd.f32 %v7697, %v7773
      %v7810 = vadd.f32 %v7698, %v7774
      %v7811 = vadd.f32 %v7699, %v7775
      %v7812 = vadd.f32 %v7700, %v7776
      %v7813 = vadd.f32 %v7701, %v7777
      %v7814 = vadd.f32 %v7702, %v7778
      %v7815 = vadd.f32 %v7703, %v7779
      %v7816 = vadd.f32 %v7704, %v7780
      %v7817 = vadd.f32 %v7705, %v7781
      %v7818 = vadd.f32 %v7706, %v7782
      %v7819 = vadd.f32 %v7707, %v7783
      %v7820 = vadd.f32 %v7708, %v7784
      %v7821 = vadd.f32 %v7709, %v7785
      %v7822 = vadd.f32 %v7710, %v7786
      %v7823 = vadd.f32 %v7711, %v7787
      %v7824 = vadd.f32 %v7712, %v7788
      %v7825 = vadd.f32 %v7713, %v7789
      %v7826 = vadd.f32 %v7714, %v7790
      %v7827 = vadd.f32 %v7715, %v7791
      %v7828 = vadd.f32 %v7716, %v7792
      %v7829 = vadd.f32 %v7717, %v7793
      %v7830 = vadd.f32 %v7718, %v7794
      %v7831 = vadd.f32 %v7719, %v7795
      %v7832 = vadd.f32 %v7720, %v7796
      %v7833 = vadd.f32 %v7721, %v7797
      %v7834 = vadd.f32 %v7722, %v7798
      %v7835 = vadd.f32 %v7723, %v7799
      %7836 = vst.msk [vmem:[%s406] sm:$0xff] %vm570, %v7800
      %7837 = vst.msk [vmem:[%s406 + $0x8] sm:$0xff] %vm570, %v7801
      %7838 = vst.msk [vmem:[%s406 + $0x10] sm:$0xff] %vm570, %v7802
      %7839 = vst.msk [vmem:[%s406 + $0x18] sm:$0xff] %vm570, %v7803
      %7840 = vst.msk [vmem:[%s406 + $0x20] sm:$0xff] %vm570, %v7804
      %7841 = vst.msk [vmem:[%s406 + $0x28] sm:$0xff] %vm570, %v7805
      %7842 = vst.msk [vmem:[%s406 + $0x30] sm:$0xff] %vm570, %v7806
      %7843 = vst.msk [vmem:[%s406 + $0x38] sm:$0xff] %vm570, %v7807
      %7844 = vst.msk [vmem:[%s406 + $0x40] sm:$0xff] %vm570, %v7808
      %7845 = vst.msk [vmem:[%s406 + $0x48] sm:$0xff] %vm570, %v7809
      %7846 = vst.msk [vmem:[%s406 + $0x50] sm:$0xff] %vm570, %v7810
      %7847 = vst.msk [vmem:[%s406 + $0x58] sm:$0xff] %vm570, %v7811
      %7848 = vst.msk [vmem:[%s406 + $0x60] sm:$0xff] %vm570, %v7812
      %7849 = vst.msk [vmem:[%s406 + $0x68] sm:$0xff] %vm570, %v7813
      %7850 = vst.msk [vmem:[%s406 + $0x70] sm:$0xff] %vm570, %v7814
      %7851 = vst.msk [vmem:[%s406 + $0x78] sm:$0xff] %vm570, %v7815
      %7852 = vst.msk [vmem:[%s406 + $0x80] sm:$0xff] %vm570, %v7816
      %7853 = vst.msk [vmem:[%s406 + $0x88] sm:$0xff] %vm570, %v7817
      %7854 = vst.msk [vmem:[%s406 + $0x90] sm:$0xff] %vm570, %v7818
      %7855 = vst.msk [vmem:[%s406 + $0x98] sm:$0xff] %vm570, %v7819
      %7856 = vst.msk [vmem:[%s406 + $0xa0] sm:$0xff] %vm570, %v7820
      %7857 = vst.msk [vmem:[%s406 + $0xa8] sm:$0xff] %vm570, %v7821
      %7858 = vst.msk [vmem:[%s406 + $0xb0] sm:$0xff] %vm570, %v7822
      %7859 = vst.msk [vmem:[%s406 + $0xb8] sm:$0xff] %vm570, %v7823
      %7860 = vst.msk [vmem:[%s406 + $0xc0] sm:$0xff] %vm570, %v7824
      %7861 = vst.msk [vmem:[%s406 + $0xc8] sm:$0xff] %vm570, %v7825
      %7862 = vst.msk [vmem:[%s406 + $0xd0] sm:$0xff] %vm570, %v7826
      %7863 = vst.msk [vmem:[%s406 + $0xd8] sm:$0xff] %vm570, %v7827
      %7864 = vst.msk [vmem:[%s406 + $0xe0] sm:$0xff] %vm570, %v7828
      %7865 = vst.msk [vmem:[%s406 + $0xe8] sm:$0xff] %vm570, %v7829
      %7866 = vst.msk [vmem:[%s406 + $0xf0] sm:$0xff] %vm570, %v7830
      %7867 = vst.msk [vmem:[%s406 + $0xf8] sm:$0xff] %vm570, %v7831
      %7868 = vst.msk [vmem:[%s406 + $0x100] sm:$0xff] %vm570, %v7832
      %7869 = vst.msk [vmem:[%s406 + $0x108] sm:$0xff] %vm570, %v7833
      %7870 = vst.msk [vmem:[%s406 + $0x110] sm:$0xff] %vm570, %v7834
      %7871 = vst.msk [vmem:[%s406 + $0x118] sm:$0xff] %vm570, %v7835
      %p7872 = scmp.lt.s32.totalorder %s22, 1
      %s7873 = scalar_select %p7872, %s22, 1
      %s7874 = smul.addr %s7873, 36
      %s7875 = smul.addr %s7874, 8
      %s7876 = scalar_lea.vmem %s11, %s7875
      // Predicated region
      $region65: #{tpu_custom_call.1} parent=63 // pred_check
        %p7877 = pneg %p281
      $region66: #{tpu_custom_call.1} parent=63 // pred_check_branch
        %7879 = sbr.rel (%p7877) target = $region68
      $region67: #{tpu_custom_call.1} parent=63 // pred_region
        _
      $region68: #{tpu_custom_call.1} parent=63 // pred_fallthru
        _
    $region64: #{tpu_custom_call.1} parent=5 // pred_fallthru
      _
    %p7880 = scmp.le.s32.totalorder 2, %s17
    // Predicated region
    $region69: #{tpu_custom_call.1} parent=5 // pred_check
      %p7881 = pneg %p7880
    $region70: #{tpu_custom_call.1} parent=5 // pred_check_branch
      %7883 = sbr.rel (%p7881) target = $region72
    $region71: #{tpu_custom_call.1} parent=5 // pred_region
      %s7884 = ssub.s32 %s17, 2
      // Predicated region
      $region73: #{tpu_custom_call.1} parent=71 // pred_check
        %p7885 = pneg %p287
      $region74: #{tpu_custom_call.1} parent=71 // pred_check_branch
        %7887 = sbr.rel (%p7885) target = $region76
      $region75: #{tpu_custom_call.1} parent=71 // pred_region
        %p7888 = scmp.lt.s32.totalorder %s23, 1
        %s7889 = scalar_select %p7888, %s23, 1
        %s7890 = smul.addr %s7889, 36
        %s7891 = smul.addr %s7890, 8
        %s7892 = scalar_lea.vmem %s11, %s7891
      $region76: #{tpu_custom_call.1} parent=71 // pred_fallthru
        _
    $region72: #{tpu_custom_call.1} parent=5 // pred_fallthru
      _
  $region6: #{tpu_custom_call.1} parent=0 // loop_footer
    %s21 = sadd.s32 1, %s17
  $region7: #{tpu_custom_call.1} parent=0 // loop_footer_branch
    %16 = sbr.rel target = $region3
  $region8: #{tpu_custom_call.1} parent=0 // loop_exit
    _

</llo_original>
